<compile_context>
chip_gen: v5e
topology: v5e:2x2
jax: 0.10.0
libtpu: 0.0.40
codegen_flags: <defaults>
</compile_context>

<pallas_src>
import functools

import jax
import jax.numpy as jnp
import numpy as np
from jax.experimental import pallas as pl
from jax.experimental.pallas import tpu as pltpu

H1, H2, H3, H4 = 256, 128, 128, 256
LAYER_DIMS = [(1, H1), (H1, H2), (H2, H3), (H3, H4)]  # (input_size, hidden_size)


def mygru_kernel(x_ref,
                 w_ih1, w_hh1, bx1, bhn1,
                 w_ih2, w_hh2, bx2, bhn2,
                 w_ih3, w_hh3, bx3, bhn3,
                 w_ih4, w_hh4, bx4, bhn4,
                 w_lin, b_lin,
                 out_ref, seq_ref, *, seq_len, batch_p):
    T, Bp = seq_len, batch_p

    def recurrence(gx_all, w_hh_ref, b_hn_ref, H):
        """Serial part of one GRU layer.

        gx_all : (T*Bp, 3H) f32 value, input-to-hidden activations with the
                 r/z hidden biases already folded in.
        Writes the T hidden states into seq_ref[:, :H] (time-major, f32).
        """
        w_hh = w_hh_ref[...]                                   # (H, 3H) bf16
        b_hn = b_hn_ref[...]                                   # (1, H)  f32
        h = jnp.zeros((Bp, H), jnp.float32)
        for t in range(T):
            gx = gx_all[t * Bp:(t + 1) * Bp]                   # (Bp, 3H)
            gh = jnp.dot(h.astype(jnp.bfloat16), w_hh,
                         preferred_element_type=jnp.float32)   # (Bp, 3H)
            r = jax.nn.sigmoid(gx[:, :H] + gh[:, :H])
            z = jax.nn.sigmoid(gx[:, H:2 * H] + gh[:, H:2 * H])
            n = jnp.tanh(gx[:, 2 * H:] + r * (gh[:, 2 * H:] + b_hn))
            h = (1.0 - z) * n + z * h
            seq_ref[pl.ds(t * Bp, Bp), :H] = h                 # aligned store

    # Layer 1 (input_size == 1): hoisted input transform is one broadcast
    # multiply over all T*Bp scalars (VPU), off the recurrent chain.
    gx_all = x_ref[...] * w_ih1[...] + bx1[...]                # (T*Bp, 3*H1)
    recurrence(gx_all, w_hh1, bhn1, H1)

    # Layers 2..4: one hoisted (T*Bp, I) x (I, 3H) bf16 MXU matmul per layer.
    for w_ih, w_hh, bx, bhn, I, H in ((w_ih2, w_hh2, bx2, bhn2, H1, H2),
                                      (w_ih3, w_hh3, bx3, bhn3, H2, H3),
                                      (w_ih4, w_hh4, bx4, bhn4, H3, H4)):
        prev = seq_ref[:, :I].astype(jnp.bfloat16)             # (T*Bp, I)
        gx_all = jnp.dot(prev, w_ih[...],
                         preferred_element_type=jnp.float32) + bx[...]
        recurrence(gx_all, w_hh, bhn, H)

    # TODO(synk): W_hh could be held weight-stationary across timesteps via
    # pltpu.matmul_push_rhs / matmul_acc_lhs; kept as jnp.dot for portable,
    # robust lowering across v5e/v6e/v7x.

    # TimeDistributed Linear: one (T*Bp, 256) x (256, 1) matmul + one store.
    out_ref[...] = jnp.dot(seq_ref[:, :H4], w_lin[...],
                           preferred_element_type=jnp.float32) + b_lin[...]


def mygru_forward(x, params):
    """x: (B, T) float32 -> (B, T) float32 (matches torch myGRU.forward)."""
    B, T = x.shape
    Bp = ((B + 7) // 8) * 8                     # sublane-align the batch
    x_p = jnp.zeros((Bp, T), x.dtype).at[:B].set(x)
    # time-major flat column: row t*Bp + b holds x[b, t]
    x_col = jnp.transpose(x_p, (1, 0)).reshape(T * Bp, 1)
    flat_inputs = [x_col] + list(params)

    out = pl.pallas_call(
        functools.partial(mygru_kernel, seq_len=T, batch_p=Bp),
        out_shape=jax.ShapeDtypeStruct((T * Bp, 1), jnp.float32),
        in_specs=[pl.BlockSpec(memory_space=pltpu.MemorySpace.VMEM)]
        * len(flat_inputs),
        out_specs=pl.BlockSpec(memory_space=pltpu.MemorySpace.VMEM),
        scratch_shapes=[pltpu.VMEM((T * Bp, 256), jnp.float32)],
        compiler_params=pltpu.CompilerParams(vmem_limit_bytes=16 << 20),
    )(*flat_inputs)

    return jnp.transpose(out.reshape(T, Bp), (1, 0))[:B]       # (B, T)


def init_raw_params(key):
    """PyTorch-layout parameters with U(-1/sqrt(H), 1/sqrt(H)) init."""
    layers = []
    for I, H in LAYER_DIMS:
        bound = 1.0 / float(H) ** 0.5
        key, k0, k1, k2, k3 = jax.random.split(key, 5)
        w_ih = jax.random.uniform(k0, (3 * H, I), jnp.float32, -bound, bound)
        w_hh = jax.random.uniform(k1, (3 * H, H), jnp.float32, -bound, bound)
        b_ih = jax.random.uniform(k2, (3 * H,), jnp.float32, -bound, bound)
        b_hh = jax.random.uniform(k3, (3 * H,), jnp.float32, -bound, bound)
        layers.append((w_ih, w_hh, b_ih, b_hh))
    bound = 1.0 / 256.0 ** 0.5
    key, k0, k1 = jax.random.split(key, 3)
    w_lin = jax.random.uniform(k0, (1, 256), jnp.float32, -bound, bound)
    b_lin = jax.random.uniform(k1, (1,), jnp.float32, -bound, bound)
    return layers, w_lin, b_lin


def pack_params(layers, w_lin, b_lin):
    """Kernel layout: transpose weights, cast MXU weights to bf16, and fold the
    hidden r/z biases into the input bias (they only ever appear summed)."""
    packed = []
    for li, (w_ih, w_hh, b_ih, b_hh) in enumerate(layers):
        H = w_hh.shape[1]
        b_x = b_ih + jnp.concatenate(
            [b_hh[:2 * H], jnp.zeros((H,), jnp.float32)])
        w_ih_t = w_ih.T
        if li > 0:                     # layer 1's W_ih is a VPU broadcast (f32)
            w_ih_t = w_ih_t.astype(jnp.bfloat16)
        packed += [w_ih_t,
                   w_hh.T.astype(jnp.bfloat16),
                   b_x.reshape(1, 3 * H),
                   b_hh[2 * H:].reshape(1, H)]
    packed += [w_lin.T, b_lin.reshape(1, 1)]
    return packed


def mygru_reference(x, layers, w_lin, b_lin):
    """Pure-JAX f32 reference implementing the PyTorch module exactly."""
    B, T = x.shape
    seq = x.reshape(B, T, 1)
    for w_ih, w_hh, b_ih, b_hh in layers:
        H = w_hh.shape[1]
        h = jnp.zeros((B, H), jnp.float32)
        outs = []
        for t in range(T):
            x_t = seq[:, t, :]
            gx = x_t @ w_ih.T + b_ih
            gh = h @ w_hh.T + b_hh
            r = jax.nn.sigmoid(gx[:, :H] + gh[:, :H])
            z = jax.nn.sigmoid(gx[:, H:2 * H] + gh[:, H:2 * H])
            n = jnp.tanh(gx[:, 2 * H:] + r * gh[:, 2 * H:])
            h = (1.0 - z) * n + z * h
            outs.append(h)
        seq = jnp.stack(outs, axis=1)                                  # (B, T, H)
    y = seq @ w_lin.T + b_lin                                          # (B, T, 1)
    return y[..., 0]


if __name__ == "__main__":
    key = jax.random.PRNGKey(0)
    kx, kp = jax.random.split(key)
    B, T = 2, 8
    x = jax.random.normal(kx, (B, T), jnp.float32)

    layers, w_lin, b_lin = init_raw_params(kp)
    params = pack_params(layers, w_lin, b_lin)

    y = mygru_forward(x, params)
    y = jax.block_until_ready(y)
    assert y.shape == (B, T) and y.dtype == jnp.float32

    # bf16 matmuls vs f32 reference -> generous tolerance; catches structural bugs.
    y_ref = mygru_reference(x, layers, w_lin, b_lin)
    np.testing.assert_allclose(np.asarray(y), np.asarray(y_ref),
                               atol=5e-2, rtol=5e-2)
    print("KERNEL_OK")
</pallas_src>

<mosaic_0001>
module attributes {stable_mosaic.version = 11 : i64} {
  func.func @mygru_kernel(%arg0: memref<64x1xf32, #tpu.memory_space<vmem>>, %arg1: memref<1x768xf32, #tpu.memory_space<vmem>>, %arg2: memref<256x768xbf16, #tpu.memory_space<vmem>>, %arg3: memref<1x768xf32, #tpu.memory_space<vmem>>, %arg4: memref<1x256xf32, #tpu.memory_space<vmem>>, %arg5: memref<256x384xbf16, #tpu.memory_space<vmem>>, %arg6: memref<128x384xbf16, #tpu.memory_space<vmem>>, %arg7: memref<1x384xf32, #tpu.memory_space<vmem>>, %arg8: memref<1x128xf32, #tpu.memory_space<vmem>>, %arg9: memref<128x384xbf16, #tpu.memory_space<vmem>>, %arg10: memref<128x384xbf16, #tpu.memory_space<vmem>>, %arg11: memref<1x384xf32, #tpu.memory_space<vmem>>, %arg12: memref<1x128xf32, #tpu.memory_space<vmem>>, %arg13: memref<128x768xbf16, #tpu.memory_space<vmem>>, %arg14: memref<256x768xbf16, #tpu.memory_space<vmem>>, %arg15: memref<1x768xf32, #tpu.memory_space<vmem>>, %arg16: memref<1x256xf32, #tpu.memory_space<vmem>>, %arg17: memref<256x1xf32, #tpu.memory_space<vmem>>, %arg18: memref<1x1xf32, #tpu.memory_space<vmem>>, %arg19: memref<64x1xf32, #tpu.memory_space<vmem>>, %arg20: memref<64x256xf32, #tpu.memory_space<vmem>>) attributes {dimension_semantics = [], scalar_prefetch = 0 : i64, scratch_operands = 1 : i64, tpu.core_type = #tpu.core_type<tc>} {
    %c0 = arith.constant 0 : index
    %c0_0 = arith.constant 0 : index
    %0 = vector.load %arg0[%c0, %c0_0] : memref<64x1xf32, #tpu.memory_space<vmem>>, vector<64x1xf32>
    %c0_1 = arith.constant 0 : index
    %c0_2 = arith.constant 0 : index
    %1 = vector.load %arg1[%c0_1, %c0_2] : memref<1x768xf32, #tpu.memory_space<vmem>>, vector<1x768xf32>
    %2 = vector.broadcast %0 : vector<64x1xf32> to vector<64x768xf32>
    %3 = vector.broadcast %1 : vector<1x768xf32> to vector<64x768xf32>
    %4 = arith.mulf %2, %3 : vector<64x768xf32>
    %c0_3 = arith.constant 0 : index
    %c0_4 = arith.constant 0 : index
    %5 = vector.load %arg3[%c0_3, %c0_4] : memref<1x768xf32, #tpu.memory_space<vmem>>, vector<1x768xf32>
    %6 = vector.broadcast %5 : vector<1x768xf32> to vector<64x768xf32>
    %7 = arith.addf %4, %6 : vector<64x768xf32>
    %c0_5 = arith.constant 0 : index
    %c0_6 = arith.constant 0 : index
    %8 = vector.load %arg2[%c0_5, %c0_6] : memref<256x768xbf16, #tpu.memory_space<vmem>>, vector<256x768xbf16>
    %c0_7 = arith.constant 0 : index
    %c0_8 = arith.constant 0 : index
    %9 = vector.load %arg4[%c0_7, %c0_8] : memref<1x256xf32, #tpu.memory_space<vmem>>, vector<1x256xf32>
    %cst = arith.constant 0.000000e+00 : f32
    %10 = vector.broadcast %cst : f32 to vector<8x256xf32>
    %11 = vector.extract_strided_slice %7 {offsets = [0, 0], sizes = [8, 768], strides = [1, 1]} : vector<64x768xf32> to vector<8x768xf32>
    %12 = arith.truncf %10 : vector<8x256xf32> to vector<8x256xbf16>
    %cst_9 = arith.constant dense<0.000000e+00> : vector<8x768xf32>
    %13 = tpu.matmul %12, %8, %cst_9 {dimension_numbers = #tpu.dot_dimension_numbers<[1], [0], [0], [1], [0, 0, 1, 1], [], []>} : vector<8x256xbf16>, vector<256x768xbf16>, vector<8x768xf32> -> vector<8x768xf32>
    %14 = vector.extract_strided_slice %11 {offsets = [0, 0], sizes = [8, 256], strides = [1, 1]} : vector<8x768xf32> to vector<8x256xf32>
    %15 = vector.extract_strided_slice %13 {offsets = [0, 0], sizes = [8, 256], strides = [1, 1]} : vector<8x768xf32> to vector<8x256xf32>
    %16 = arith.addf %14, %15 : vector<8x256xf32>
    %17 = arith.negf %16 : vector<8x256xf32>
    %18 = math.exp %17 : vector<8x256xf32>
    %cst_10 = arith.constant 1.000000e+00 : f32
    %19 = vector.broadcast %cst_10 : f32 to vector<8x256xf32>
    %20 = arith.addf %19, %18 : vector<8x256xf32>
    %21 = arith.divf %19, %20 : vector<8x256xf32>
    %22 = vector.extract_strided_slice %11 {offsets = [0, 256], sizes = [8, 256], strides = [1, 1]} : vector<8x768xf32> to vector<8x256xf32>
    %23 = vector.extract_strided_slice %13 {offsets = [0, 256], sizes = [8, 256], strides = [1, 1]} : vector<8x768xf32> to vector<8x256xf32>
    %24 = arith.addf %22, %23 : vector<8x256xf32>
    %25 = arith.negf %24 : vector<8x256xf32>
    %26 = math.exp %25 : vector<8x256xf32>
    %cst_11 = arith.constant 1.000000e+00 : f32
    %27 = vector.broadcast %cst_11 : f32 to vector<8x256xf32>
    %28 = arith.addf %27, %26 : vector<8x256xf32>
    %29 = arith.divf %27, %28 : vector<8x256xf32>
    %30 = vector.extract_strided_slice %11 {offsets = [0, 512], sizes = [8, 256], strides = [1, 1]} : vector<8x768xf32> to vector<8x256xf32>
    %31 = vector.extract_strided_slice %13 {offsets = [0, 512], sizes = [8, 256], strides = [1, 1]} : vector<8x768xf32> to vector<8x256xf32>
    %32 = vector.broadcast %9 : vector<1x256xf32> to vector<8x256xf32>
    %33 = arith.addf %31, %32 : vector<8x256xf32>
    %34 = arith.mulf %21, %33 : vector<8x256xf32>
    %35 = arith.addf %30, %34 : vector<8x256xf32>
    %36 = math.tanh %35 : vector<8x256xf32>
    %cst_12 = arith.constant 1.000000e+00 : f32
    %37 = vector.broadcast %cst_12 : f32 to vector<8x256xf32>
    %38 = arith.subf %37, %29 : vector<8x256xf32>
    %39 = arith.mulf %38, %36 : vector<8x256xf32>
    %40 = arith.mulf %29, %10 : vector<8x256xf32>
    %41 = arith.addf %39, %40 : vector<8x256xf32>
    %c0_13 = arith.constant 0 : index
    %c0_14 = arith.constant 0 : index
    %42 = vector.load %arg20[%c0_13, %c0_14] : memref<64x256xf32, #tpu.memory_space<vmem>>, vector<8x256xf32>
    tpu.vector_store %arg20[%c0_13, %c0_14], %41 {strides = array<i32>} : memref<64x256xf32, #tpu.memory_space<vmem>>, vector<8x256xf32>,
    %43 = vector.extract_strided_slice %7 {offsets = [8, 0], sizes = [8, 768], strides = [1, 1]} : vector<64x768xf32> to vector<8x768xf32>
    %44 = arith.truncf %41 : vector<8x256xf32> to vector<8x256xbf16>
    %cst_15 = arith.constant dense<0.000000e+00> : vector<8x768xf32>
    %45 = tpu.matmul %44, %8, %cst_15 {dimension_numbers = #tpu.dot_dimension_numbers<[1], [0], [0], [1], [0, 0, 1, 1], [], []>} : vector<8x256xbf16>, vector<256x768xbf16>, vector<8x768xf32> -> vector<8x768xf32>
    %46 = vector.extract_strided_slice %43 {offsets = [0, 0], sizes = [8, 256], strides = [1, 1]} : vector<8x768xf32> to vector<8x256xf32>
    %47 = vector.extract_strided_slice %45 {offsets = [0, 0], sizes = [8, 256], strides = [1, 1]} : vector<8x768xf32> to vector<8x256xf32>
    %48 = arith.addf %46, %47 : vector<8x256xf32>
    %49 = arith.negf %48 : vector<8x256xf32>
    %50 = math.exp %49 : vector<8x256xf32>
    %cst_16 = arith.constant 1.000000e+00 : f32
    %51 = vector.broadcast %cst_16 : f32 to vector<8x256xf32>
    %52 = arith.addf %51, %50 : vector<8x256xf32>
    %53 = arith.divf %51, %52 : vector<8x256xf32>
    %54 = vector.extract_strided_slice %43 {offsets = [0, 256], sizes = [8, 256], strides = [1, 1]} : vector<8x768xf32> to vector<8x256xf32>
    %55 = vector.extract_strided_slice %45 {offsets = [0, 256], sizes = [8, 256], strides = [1, 1]} : vector<8x768xf32> to vector<8x256xf32>
    %56 = arith.addf %54, %55 : vector<8x256xf32>
    %57 = arith.negf %56 : vector<8x256xf32>
    %58 = math.exp %57 : vector<8x256xf32>
    %cst_17 = arith.constant 1.000000e+00 : f32
    %59 = vector.broadcast %cst_17 : f32 to vector<8x256xf32>
    %60 = arith.addf %59, %58 : vector<8x256xf32>
    %61 = arith.divf %59, %60 : vector<8x256xf32>
    %62 = vector.extract_strided_slice %43 {offsets = [0, 512], sizes = [8, 256], strides = [1, 1]} : vector<8x768xf32> to vector<8x256xf32>
    %63 = vector.extract_strided_slice %45 {offsets = [0, 512], sizes = [8, 256], strides = [1, 1]} : vector<8x768xf32> to vector<8x256xf32>
    %64 = vector.broadcast %9 : vector<1x256xf32> to vector<8x256xf32>
    %65 = arith.addf %63, %64 : vector<8x256xf32>
    %66 = arith.mulf %53, %65 : vector<8x256xf32>
    %67 = arith.addf %62, %66 : vector<8x256xf32>
    %68 = math.tanh %67 : vector<8x256xf32>
    %cst_18 = arith.constant 1.000000e+00 : f32
    %69 = vector.broadcast %cst_18 : f32 to vector<8x256xf32>
    %70 = arith.subf %69, %61 : vector<8x256xf32>
    %71 = arith.mulf %70, %68 : vector<8x256xf32>
    %72 = arith.mulf %61, %41 : vector<8x256xf32>
    %73 = arith.addf %71, %72 : vector<8x256xf32>
    %c8 = arith.constant 8 : index
    %c0_19 = arith.constant 0 : index
    %74 = vector.load %arg20[%c8, %c0_19] : memref<64x256xf32, #tpu.memory_space<vmem>>, vector<8x256xf32>
    tpu.vector_store %arg20[%c8, %c0_19], %73 {strides = array<i32>} : memref<64x256xf32, #tpu.memory_space<vmem>>, vector<8x256xf32>,
    %75 = vector.extract_strided_slice %7 {offsets = [16, 0], sizes = [8, 768], strides = [1, 1]} : vector<64x768xf32> to vector<8x768xf32>
    %76 = arith.truncf %73 : vector<8x256xf32> to vector<8x256xbf16>
    %cst_20 = arith.constant dense<0.000000e+00> : vector<8x768xf32>
    %77 = tpu.matmul %76, %8, %cst_20 {dimension_numbers = #tpu.dot_dimension_numbers<[1], [0], [0], [1], [0, 0, 1, 1], [], []>} : vector<8x256xbf16>, vector<256x768xbf16>, vector<8x768xf32> -> vector<8x768xf32>
    %78 = vector.extract_strided_slice %75 {offsets = [0, 0], sizes = [8, 256], strides = [1, 1]} : vector<8x768xf32> to vector<8x256xf32>
    %79 = vector.extract_strided_slice %77 {offsets = [0, 0], sizes = [8, 256], strides = [1, 1]} : vector<8x768xf32> to vector<8x256xf32>
    %80 = arith.addf %78, %79 : vector<8x256xf32>
    %81 = arith.negf %80 : vector<8x256xf32>
    %82 = math.exp %81 : vector<8x256xf32>
    %cst_21 = arith.constant 1.000000e+00 : f32
    %83 = vector.broadcast %cst_21 : f32 to vector<8x256xf32>
    %84 = arith.addf %83, %82 : vector<8x256xf32>
    %85 = arith.divf %83, %84 : vector<8x256xf32>
    %86 = vector.extract_strided_slice %75 {offsets = [0, 256], sizes = [8, 256], strides = [1, 1]} : vector<8x768xf32> to vector<8x256xf32>
    %87 = vector.extract_strided_slice %77 {offsets = [0, 256], sizes = [8, 256], strides = [1, 1]} : vector<8x768xf32> to vector<8x256xf32>
    %88 = arith.addf %86, %87 : vector<8x256xf32>
    %89 = arith.negf %88 : vector<8x256xf32>
    %90 = math.exp %89 : vector<8x256xf32>
    %cst_22 = arith.constant 1.000000e+00 : f32
    %91 = vector.broadcast %cst_22 : f32 to vector<8x256xf32>
    %92 = arith.addf %91, %90 : vector<8x256xf32>
    %93 = arith.divf %91, %92 : vector<8x256xf32>
    %94 = vector.extract_strided_slice %75 {offsets = [0, 512], sizes = [8, 256], strides = [1, 1]} : vector<8x768xf32> to vector<8x256xf32>
    %95 = vector.extract_strided_slice %77 {offsets = [0, 512], sizes = [8, 256], strides = [1, 1]} : vector<8x768xf32> to vector<8x256xf32>
    %96 = vector.broadcast %9 : vector<1x256xf32> to vector<8x256xf32>
    %97 = arith.addf %95, %96 : vector<8x256xf32>
    %98 = arith.mulf %85, %97 : vector<8x256xf32>
    %99 = arith.addf %94, %98 : vector<8x256xf32>
    %100 = math.tanh %99 : vector<8x256xf32>
    %cst_23 = arith.constant 1.000000e+00 : f32
    %101 = vector.broadcast %cst_23 : f32 to vector<8x256xf32>
    %102 = arith.subf %101, %93 : vector<8x256xf32>
    %103 = arith.mulf %102, %100 : vector<8x256xf32>
    %104 = arith.mulf %93, %73 : vector<8x256xf32>
    %105 = arith.addf %103, %104 : vector<8x256xf32>
    %c16 = arith.constant 16 : index
    %c0_24 = arith.constant 0 : index
    %106 = vector.load %arg20[%c16, %c0_24] : memref<64x256xf32, #tpu.memory_space<vmem>>, vector<8x256xf32>
    tpu.vector_store %arg20[%c16, %c0_24], %105 {strides = array<i32>} : memref<64x256xf32, #tpu.memory_space<vmem>>, vector<8x256xf32>,
    %107 = vector.extract_strided_slice %7 {offsets = [24, 0], sizes = [8, 768], strides = [1, 1]} : vector<64x768xf32> to vector<8x768xf32>
    %108 = arith.truncf %105 : vector<8x256xf32> to vector<8x256xbf16>
    %cst_25 = arith.constant dense<0.000000e+00> : vector<8x768xf32>
    %109 = tpu.matmul %108, %8, %cst_25 {dimension_numbers = #tpu.dot_dimension_numbers<[1], [0], [0], [1], [0, 0, 1, 1], [], []>} : vector<8x256xbf16>, vector<256x768xbf16>, vector<8x768xf32> -> vector<8x768xf32>
    %110 = vector.extract_strided_slice %107 {offsets = [0, 0], sizes = [8, 256], strides = [1, 1]} : vector<8x768xf32> to vector<8x256xf32>
    %111 = vector.extract_strided_slice %109 {offsets = [0, 0], sizes = [8, 256], strides = [1, 1]} : vector<8x768xf32> to vector<8x256xf32>
    %112 = arith.addf %110, %111 : vector<8x256xf32>
    %113 = arith.negf %112 : vector<8x256xf32>
    %114 = math.exp %113 : vector<8x256xf32>
    %cst_26 = arith.constant 1.000000e+00 : f32
    %115 = vector.broadcast %cst_26 : f32 to vector<8x256xf32>
    %116 = arith.addf %115, %114 : vector<8x256xf32>
    %117 = arith.divf %115, %116 : vector<8x256xf32>
    %118 = vector.extract_strided_slice %107 {offsets = [0, 256], sizes = [8, 256], strides = [1, 1]} : vector<8x768xf32> to vector<8x256xf32>
    %119 = vector.extract_strided_slice %109 {offsets = [0, 256], sizes = [8, 256], strides = [1, 1]} : vector<8x768xf32> to vector<8x256xf32>
    %120 = arith.addf %118, %119 : vector<8x256xf32>
    %121 = arith.negf %120 : vector<8x256xf32>
    %122 = math.exp %121 : vector<8x256xf32>
    %cst_27 = arith.constant 1.000000e+00 : f32
    %123 = vector.broadcast %cst_27 : f32 to vector<8x256xf32>
    %124 = arith.addf %123, %122 : vector<8x256xf32>
    %125 = arith.divf %123, %124 : vector<8x256xf32>
    %126 = vector.extract_strided_slice %107 {offsets = [0, 512], sizes = [8, 256], strides = [1, 1]} : vector<8x768xf32> to vector<8x256xf32>
    %127 = vector.extract_strided_slice %109 {offsets = [0, 512], sizes = [8, 256], strides = [1, 1]} : vector<8x768xf32> to vector<8x256xf32>
    %128 = vector.broadcast %9 : vector<1x256xf32> to vector<8x256xf32>
    %129 = arith.addf %127, %128 : vector<8x256xf32>
    %130 = arith.mulf %117, %129 : vector<8x256xf32>
    %131 = arith.addf %126, %130 : vector<8x256xf32>
    %132 = math.tanh %131 : vector<8x256xf32>
    %cst_28 = arith.constant 1.000000e+00 : f32
    %133 = vector.broadcast %cst_28 : f32 to vector<8x256xf32>
    %134 = arith.subf %133, %125 : vector<8x256xf32>
    %135 = arith.mulf %134, %132 : vector<8x256xf32>
    %136 = arith.mulf %125, %105 : vector<8x256xf32>
    %137 = arith.addf %135, %136 : vector<8x256xf32>
    %c24 = arith.constant 24 : index
    %c0_29 = arith.constant 0 : index
    %138 = vector.load %arg20[%c24, %c0_29] : memref<64x256xf32, #tpu.memory_space<vmem>>, vector<8x256xf32>
    tpu.vector_store %arg20[%c24, %c0_29], %137 {strides = array<i32>} : memref<64x256xf32, #tpu.memory_space<vmem>>, vector<8x256xf32>,
    %139 = vector.extract_strided_slice %7 {offsets = [32, 0], sizes = [8, 768], strides = [1, 1]} : vector<64x768xf32> to vector<8x768xf32>
    %140 = arith.truncf %137 : vector<8x256xf32> to vector<8x256xbf16>
    %cst_30 = arith.constant dense<0.000000e+00> : vector<8x768xf32>
    %141 = tpu.matmul %140, %8, %cst_30 {dimension_numbers = #tpu.dot_dimension_numbers<[1], [0], [0], [1], [0, 0, 1, 1], [], []>} : vector<8x256xbf16>, vector<256x768xbf16>, vector<8x768xf32> -> vector<8x768xf32>
    %142 = vector.extract_strided_slice %139 {offsets = [0, 0], sizes = [8, 256], strides = [1, 1]} : vector<8x768xf32> to vector<8x256xf32>
    %143 = vector.extract_strided_slice %141 {offsets = [0, 0], sizes = [8, 256], strides = [1, 1]} : vector<8x768xf32> to vector<8x256xf32>
    %144 = arith.addf %142, %143 : vector<8x256xf32>
    %145 = arith.negf %144 : vector<8x256xf32>
    %146 = math.exp %145 : vector<8x256xf32>
    %cst_31 = arith.constant 1.000000e+00 : f32
    %147 = vector.broadcast %cst_31 : f32 to vector<8x256xf32>
    %148 = arith.addf %147, %146 : vector<8x256xf32>
    %149 = arith.divf %147, %148 : vector<8x256xf32>
    %150 = vector.extract_strided_slice %139 {offsets = [0, 256], sizes = [8, 256], strides = [1, 1]} : vector<8x768xf32> to vector<8x256xf32>
    %151 = vector.extract_strided_slice %141 {offsets = [0, 256], sizes = [8, 256], strides = [1, 1]} : vector<8x768xf32> to vector<8x256xf32>
    %152 = arith.addf %150, %151 : vector<8x256xf32>
    %153 = arith.negf %152 : vector<8x256xf32>
    %154 = math.exp %153 : vector<8x256xf32>
    %cst_32 = arith.constant 1.000000e+00 : f32
    %155 = vector.broadcast %cst_32 : f32 to vector<8x256xf32>
    %156 = arith.addf %155, %154 : vector<8x256xf32>
    %157 = arith.divf %155, %156 : vector<8x256xf32>
    %158 = vector.extract_strided_slice %139 {offsets = [0, 512], sizes = [8, 256], strides = [1, 1]} : vector<8x768xf32> to vector<8x256xf32>
    %159 = vector.extract_strided_slice %141 {offsets = [0, 512], sizes = [8, 256], strides = [1, 1]} : vector<8x768xf32> to vector<8x256xf32>
    %160 = vector.broadcast %9 : vector<1x256xf32> to vector<8x256xf32>
    %161 = arith.addf %159, %160 : vector<8x256xf32>
    %162 = arith.mulf %149, %161 : vector<8x256xf32>
    %163 = arith.addf %158, %162 : vector<8x256xf32>
    %164 = math.tanh %163 : vector<8x256xf32>
    %cst_33 = arith.constant 1.000000e+00 : f32
    %165 = vector.broadcast %cst_33 : f32 to vector<8x256xf32>
    %166 = arith.subf %165, %157 : vector<8x256xf32>
    %167 = arith.mulf %166, %164 : vector<8x256xf32>
    %168 = arith.mulf %157, %137 : vector<8x256xf32>
    %169 = arith.addf %167, %168 : vector<8x256xf32>
    %c32 = arith.constant 32 : index
    %c0_34 = arith.constant 0 : index
    %170 = vector.load %arg20[%c32, %c0_34] : memref<64x256xf32, #tpu.memory_space<vmem>>, vector<8x256xf32>
    tpu.vector_store %arg20[%c32, %c0_34], %169 {strides = array<i32>} : memref<64x256xf32, #tpu.memory_space<vmem>>, vector<8x256xf32>,
    %171 = vector.extract_strided_slice %7 {offsets = [40, 0], sizes = [8, 768], strides = [1, 1]} : vector<64x768xf32> to vector<8x768xf32>
    %172 = arith.truncf %169 : vector<8x256xf32> to vector<8x256xbf16>
    %cst_35 = arith.constant dense<0.000000e+00> : vector<8x768xf32>
    %173 = tpu.matmul %172, %8, %cst_35 {dimension_numbers = #tpu.dot_dimension_numbers<[1], [0], [0], [1], [0, 0, 1, 1], [], []>} : vector<8x256xbf16>, vector<256x768xbf16>, vector<8x768xf32> -> vector<8x768xf32>
    %174 = vector.extract_strided_slice %171 {offsets = [0, 0], sizes = [8, 256], strides = [1, 1]} : vector<8x768xf32> to vector<8x256xf32>
    %175 = vector.extract_strided_slice %173 {offsets = [0, 0], sizes = [8, 256], strides = [1, 1]} : vector<8x768xf32> to vector<8x256xf32>
    %176 = arith.addf %174, %175 : vector<8x256xf32>
    %177 = arith.negf %176 : vector<8x256xf32>
    %178 = math.exp %177 : vector<8x256xf32>
    %cst_36 = arith.constant 1.000000e+00 : f32
    %179 = vector.broadcast %cst_36 : f32 to vector<8x256xf32>
    %180 = arith.addf %179, %178 : vector<8x256xf32>
    %181 = arith.divf %179, %180 : vector<8x256xf32>
    %182 = vector.extract_strided_slice %171 {offsets = [0, 256], sizes = [8, 256], strides = [1, 1]} : vector<8x768xf32> to vector<8x256xf32>
    %183 = vector.extract_strided_slice %173 {offsets = [0, 256], sizes = [8, 256], strides = [1, 1]} : vector<8x768xf32> to vector<8x256xf32>
    %184 = arith.addf %182, %183 : vector<8x256xf32>
    %185 = arith.negf %184 : vector<8x256xf32>
    %186 = math.exp %185 : vector<8x256xf32>
    %cst_37 = arith.constant 1.000000e+00 : f32
    %187 = vector.broadcast %cst_37 : f32 to vector<8x256xf32>
    %188 = arith.addf %187, %186 : vector<8x256xf32>
    %189 = arith.divf %187, %188 : vector<8x256xf32>
    %190 = vector.extract_strided_slice %171 {offsets = [0, 512], sizes = [8, 256], strides = [1, 1]} : vector<8x768xf32> to vector<8x256xf32>
    %191 = vector.extract_strided_slice %173 {offsets = [0, 512], sizes = [8, 256], strides = [1, 1]} : vector<8x768xf32> to vector<8x256xf32>
    %192 = vector.broadcast %9 : vector<1x256xf32> to vector<8x256xf32>
    %193 = arith.addf %191, %192 : vector<8x256xf32>
    %194 = arith.mulf %181, %193 : vector<8x256xf32>
    %195 = arith.addf %190, %194 : vector<8x256xf32>
    %196 = math.tanh %195 : vector<8x256xf32>
    %cst_38 = arith.constant 1.000000e+00 : f32
    %197 = vector.broadcast %cst_38 : f32 to vector<8x256xf32>
    %198 = arith.subf %197, %189 : vector<8x256xf32>
    %199 = arith.mulf %198, %196 : vector<8x256xf32>
    %200 = arith.mulf %189, %169 : vector<8x256xf32>
    %201 = arith.addf %199, %200 : vector<8x256xf32>
    %c40 = arith.constant 40 : index
    %c0_39 = arith.constant 0 : index
    %202 = vector.load %arg20[%c40, %c0_39] : memref<64x256xf32, #tpu.memory_space<vmem>>, vector<8x256xf32>
    tpu.vector_store %arg20[%c40, %c0_39], %201 {strides = array<i32>} : memref<64x256xf32, #tpu.memory_space<vmem>>, vector<8x256xf32>,
    %203 = vector.extract_strided_slice %7 {offsets = [48, 0], sizes = [8, 768], strides = [1, 1]} : vector<64x768xf32> to vector<8x768xf32>
    %204 = arith.truncf %201 : vector<8x256xf32> to vector<8x256xbf16>
    %cst_40 = arith.constant dense<0.000000e+00> : vector<8x768xf32>
    %205 = tpu.matmul %204, %8, %cst_40 {dimension_numbers = #tpu.dot_dimension_numbers<[1], [0], [0], [1], [0, 0, 1, 1], [], []>} : vector<8x256xbf16>, vector<256x768xbf16>, vector<8x768xf32> -> vector<8x768xf32>
    %206 = vector.extract_strided_slice %203 {offsets = [0, 0], sizes = [8, 256], strides = [1, 1]} : vector<8x768xf32> to vector<8x256xf32>
    %207 = vector.extract_strided_slice %205 {offsets = [0, 0], sizes = [8, 256], strides = [1, 1]} : vector<8x768xf32> to vector<8x256xf32>
    %208 = arith.addf %206, %207 : vector<8x256xf32>
    %209 = arith.negf %208 : vector<8x256xf32>
    %210 = math.exp %209 : vector<8x256xf32>
    %cst_41 = arith.constant 1.000000e+00 : f32
    %211 = vector.broadcast %cst_41 : f32 to vector<8x256xf32>
    %212 = arith.addf %211, %210 : vector<8x256xf32>
    %213 = arith.divf %211, %212 : vector<8x256xf32>
    %214 = vector.extract_strided_slice %203 {offsets = [0, 256], sizes = [8, 256], strides = [1, 1]} : vector<8x768xf32> to vector<8x256xf32>
    %215 = vector.extract_strided_slice %205 {offsets = [0, 256], sizes = [8, 256], strides = [1, 1]} : vector<8x768xf32> to vector<8x256xf32>
    %216 = arith.addf %214, %215 : vector<8x256xf32>
    %217 = arith.negf %216 : vector<8x256xf32>
    %218 = math.exp %217 : vector<8x256xf32>
    %cst_42 = arith.constant 1.000000e+00 : f32
    %219 = vector.broadcast %cst_42 : f32 to vector<8x256xf32>
    %220 = arith.addf %219, %218 : vector<8x256xf32>
    %221 = arith.divf %219, %220 : vector<8x256xf32>
    %222 = vector.extract_strided_slice %203 {offsets = [0, 512], sizes = [8, 256], strides = [1, 1]} : vector<8x768xf32> to vector<8x256xf32>
    %223 = vector.extract_strided_slice %205 {offsets = [0, 512], sizes = [8, 256], strides = [1, 1]} : vector<8x768xf32> to vector<8x256xf32>
    %224 = vector.broadcast %9 : vector<1x256xf32> to vector<8x256xf32>
    %225 = arith.addf %223, %224 : vector<8x256xf32>
    %226 = arith.mulf %213, %225 : vector<8x256xf32>
    %227 = arith.addf %222, %226 : vector<8x256xf32>
    %228 = math.tanh %227 : vector<8x256xf32>
    %cst_43 = arith.constant 1.000000e+00 : f32
    %229 = vector.broadcast %cst_43 : f32 to vector<8x256xf32>
    %230 = arith.subf %229, %221 : vector<8x256xf32>
    %231 = arith.mulf %230, %228 : vector<8x256xf32>
    %232 = arith.mulf %221, %201 : vector<8x256xf32>
    %233 = arith.addf %231, %232 : vector<8x256xf32>
    %c48 = arith.constant 48 : index
    %c0_44 = arith.constant 0 : index
    %234 = vector.load %arg20[%c48, %c0_44] : memref<64x256xf32, #tpu.memory_space<vmem>>, vector<8x256xf32>
    tpu.vector_store %arg20[%c48, %c0_44], %233 {strides = array<i32>} : memref<64x256xf32, #tpu.memory_space<vmem>>, vector<8x256xf32>,
    %235 = vector.extract_strided_slice %7 {offsets = [56, 0], sizes = [8, 768], strides = [1, 1]} : vector<64x768xf32> to vector<8x768xf32>
    %236 = arith.truncf %233 : vector<8x256xf32> to vector<8x256xbf16>
    %cst_45 = arith.constant dense<0.000000e+00> : vector<8x768xf32>
    %237 = tpu.matmul %236, %8, %cst_45 {dimension_numbers = #tpu.dot_dimension_numbers<[1], [0], [0], [1], [0, 0, 1, 1], [], []>} : vector<8x256xbf16>, vector<256x768xbf16>, vector<8x768xf32> -> vector<8x768xf32>
    %238 = vector.extract_strided_slice %235 {offsets = [0, 0], sizes = [8, 256], strides = [1, 1]} : vector<8x768xf32> to vector<8x256xf32>
    %239 = vector.extract_strided_slice %237 {offsets = [0, 0], sizes = [8, 256], strides = [1, 1]} : vector<8x768xf32> to vector<8x256xf32>
    %240 = arith.addf %238, %239 : vector<8x256xf32>
    %241 = arith.negf %240 : vector<8x256xf32>
    %242 = math.exp %241 : vector<8x256xf32>
    %cst_46 = arith.constant 1.000000e+00 : f32
    %243 = vector.broadcast %cst_46 : f32 to vector<8x256xf32>
    %244 = arith.addf %243, %242 : vector<8x256xf32>
    %245 = arith.divf %243, %244 : vector<8x256xf32>
    %246 = vector.extract_strided_slice %235 {offsets = [0, 256], sizes = [8, 256], strides = [1, 1]} : vector<8x768xf32> to vector<8x256xf32>
    %247 = vector.extract_strided_slice %237 {offsets = [0, 256], sizes = [8, 256], strides = [1, 1]} : vector<8x768xf32> to vector<8x256xf32>
    %248 = arith.addf %246, %247 : vector<8x256xf32>
    %249 = arith.negf %248 : vector<8x256xf32>
    %250 = math.exp %249 : vector<8x256xf32>
    %cst_47 = arith.constant 1.000000e+00 : f32
    %251 = vector.broadcast %cst_47 : f32 to vector<8x256xf32>
    %252 = arith.addf %251, %250 : vector<8x256xf32>
    %253 = arith.divf %251, %252 : vector<8x256xf32>
    %254 = vector.extract_strided_slice %235 {offsets = [0, 512], sizes = [8, 256], strides = [1, 1]} : vector<8x768xf32> to vector<8x256xf32>
    %255 = vector.extract_strided_slice %237 {offsets = [0, 512], sizes = [8, 256], strides = [1, 1]} : vector<8x768xf32> to vector<8x256xf32>
    %256 = vector.broadcast %9 : vector<1x256xf32> to vector<8x256xf32>
    %257 = arith.addf %255, %256 : vector<8x256xf32>
    %258 = arith.mulf %245, %257 : vector<8x256xf32>
    %259 = arith.addf %254, %258 : vector<8x256xf32>
    %260 = math.tanh %259 : vector<8x256xf32>
    %cst_48 = arith.constant 1.000000e+00 : f32
    %261 = vector.broadcast %cst_48 : f32 to vector<8x256xf32>
    %262 = arith.subf %261, %253 : vector<8x256xf32>
    %263 = arith.mulf %262, %260 : vector<8x256xf32>
    %264 = arith.mulf %253, %233 : vector<8x256xf32>
    %265 = arith.addf %263, %264 : vector<8x256xf32>
    %c56 = arith.constant 56 : index
    %c0_49 = arith.constant 0 : index
    %266 = vector.load %arg20[%c56, %c0_49] : memref<64x256xf32, #tpu.memory_space<vmem>>, vector<8x256xf32>
    tpu.vector_store %arg20[%c56, %c0_49], %265 {strides = array<i32>} : memref<64x256xf32, #tpu.memory_space<vmem>>, vector<8x256xf32>,
    %c0_50 = arith.constant 0 : index
    %c0_51 = arith.constant 0 : index
    %267 = vector.load %arg20[%c0_50, %c0_51] : memref<64x256xf32, #tpu.memory_space<vmem>>, vector<64x256xf32>
    %268 = arith.truncf %267 : vector<64x256xf32> to vector<64x256xbf16>
    %c0_52 = arith.constant 0 : index
    %c0_53 = arith.constant 0 : index
    %269 = vector.load %arg5[%c0_52, %c0_53] : memref<256x384xbf16, #tpu.memory_space<vmem>>, vector<256x384xbf16>
    %cst_54 = arith.constant dense<0.000000e+00> : vector<64x384xf32>
    %270 = tpu.matmul %268, %269, %cst_54 {dimension_numbers = #tpu.dot_dimension_numbers<[1], [0], [0], [1], [0, 0, 1, 1], [], []>} : vector<64x256xbf16>, vector<256x384xbf16>, vector<64x384xf32> -> vector<64x384xf32>
    %c0_55 = arith.constant 0 : index
    %c0_56 = arith.constant 0 : index
    %271 = vector.load %arg7[%c0_55, %c0_56] : memref<1x384xf32, #tpu.memory_space<vmem>>, vector<1x384xf32>
    %272 = vector.broadcast %271 : vector<1x384xf32> to vector<64x384xf32>
    %273 = arith.addf %270, %272 : vector<64x384xf32>
    %c0_57 = arith.constant 0 : index
    %c0_58 = arith.constant 0 : index
    %274 = vector.load %arg6[%c0_57, %c0_58] : memref<128x384xbf16, #tpu.memory_space<vmem>>, vector<128x384xbf16>
    %c0_59 = arith.constant 0 : index
    %c0_60 = arith.constant 0 : index
    %275 = vector.load %arg8[%c0_59, %c0_60] : memref<1x128xf32, #tpu.memory_space<vmem>>, vector<1x128xf32>
    %cst_61 = arith.constant 0.000000e+00 : f32
    %276 = vector.broadcast %cst_61 : f32 to vector<8x128xf32>
    %277 = vector.extract_strided_slice %273 {offsets = [0, 0], sizes = [8, 384], strides = [1, 1]} : vector<64x384xf32> to vector<8x384xf32>
    %278 = arith.truncf %276 : vector<8x128xf32> to vector<8x128xbf16>
    %cst_62 = arith.constant dense<0.000000e+00> : vector<8x384xf32>
    %279 = tpu.matmul %278, %274, %cst_62 {dimension_numbers = #tpu.dot_dimension_numbers<[1], [0], [0], [1], [0, 0, 1, 1], [], []>} : vector<8x128xbf16>, vector<128x384xbf16>, vector<8x384xf32> -> vector<8x384xf32>
    %280 = vector.extract_strided_slice %277 {offsets = [0, 0], sizes = [8, 128], strides = [1, 1]} : vector<8x384xf32> to vector<8x128xf32>
    %281 = vector.extract_strided_slice %279 {offsets = [0, 0], sizes = [8, 128], strides = [1, 1]} : vector<8x384xf32> to vector<8x128xf32>
    %282 = arith.addf %280, %281 : vector<8x128xf32>
    %283 = arith.negf %282 : vector<8x128xf32>
    %284 = math.exp %283 : vector<8x128xf32>
    %cst_63 = arith.constant 1.000000e+00 : f32
    %285 = vector.broadcast %cst_63 : f32 to vector<8x128xf32>
    %286 = arith.addf %285, %284 : vector<8x128xf32>
    %287 = arith.divf %285, %286 : vector<8x128xf32>
    %288 = vector.extract_strided_slice %277 {offsets = [0, 128], sizes = [8, 128], strides = [1, 1]} : vector<8x384xf32> to vector<8x128xf32>
    %289 = vector.extract_strided_slice %279 {offsets = [0, 128], sizes = [8, 128], strides = [1, 1]} : vector<8x384xf32> to vector<8x128xf32>
    %290 = arith.addf %288, %289 : vector<8x128xf32>
    %291 = arith.negf %290 : vector<8x128xf32>
    %292 = math.exp %291 : vector<8x128xf32>
    %cst_64 = arith.constant 1.000000e+00 : f32
    %293 = vector.broadcast %cst_64 : f32 to vector<8x128xf32>
    %294 = arith.addf %293, %292 : vector<8x128xf32>
    %295 = arith.divf %293, %294 : vector<8x128xf32>
    %296 = vector.extract_strided_slice %277 {offsets = [0, 256], sizes = [8, 128], strides = [1, 1]} : vector<8x384xf32> to vector<8x128xf32>
    %297 = vector.extract_strided_slice %279 {offsets = [0, 256], sizes = [8, 128], strides = [1, 1]} : vector<8x384xf32> to vector<8x128xf32>
    %298 = vector.broadcast %275 : vector<1x128xf32> to vector<8x128xf32>
    %299 = arith.addf %297, %298 : vector<8x128xf32>
    %300 = arith.mulf %287, %299 : vector<8x128xf32>
    %301 = arith.addf %296, %300 : vector<8x128xf32>
    %302 = math.tanh %301 : vector<8x128xf32>
    %cst_65 = arith.constant 1.000000e+00 : f32
    %303 = vector.broadcast %cst_65 : f32 to vector<8x128xf32>
    %304 = arith.subf %303, %295 : vector<8x128xf32>
    %305 = arith.mulf %304, %302 : vector<8x128xf32>
    %306 = arith.mulf %295, %276 : vector<8x128xf32>
    %307 = arith.addf %305, %306 : vector<8x128xf32>
    %c0_66 = arith.constant 0 : index
    %c0_67 = arith.constant 0 : index
    %308 = vector.load %arg20[%c0_66, %c0_67] : memref<64x256xf32, #tpu.memory_space<vmem>>, vector<8x128xf32>
    tpu.vector_store %arg20[%c0_66, %c0_67], %307 {strides = array<i32>} : memref<64x256xf32, #tpu.memory_space<vmem>>, vector<8x128xf32>,
    %309 = vector.extract_strided_slice %273 {offsets = [8, 0], sizes = [8, 384], strides = [1, 1]} : vector<64x384xf32> to vector<8x384xf32>
    %310 = arith.truncf %307 : vector<8x128xf32> to vector<8x128xbf16>
    %cst_68 = arith.constant dense<0.000000e+00> : vector<8x384xf32>
    %311 = tpu.matmul %310, %274, %cst_68 {dimension_numbers = #tpu.dot_dimension_numbers<[1], [0], [0], [1], [0, 0, 1, 1], [], []>} : vector<8x128xbf16>, vector<128x384xbf16>, vector<8x384xf32> -> vector<8x384xf32>
    %312 = vector.extract_strided_slice %309 {offsets = [0, 0], sizes = [8, 128], strides = [1, 1]} : vector<8x384xf32> to vector<8x128xf32>
    %313 = vector.extract_strided_slice %311 {offsets = [0, 0], sizes = [8, 128], strides = [1, 1]} : vector<8x384xf32> to vector<8x128xf32>
    %314 = arith.addf %312, %313 : vector<8x128xf32>
    %315 = arith.negf %314 : vector<8x128xf32>
    %316 = math.exp %315 : vector<8x128xf32>
    %cst_69 = arith.constant 1.000000e+00 : f32
    %317 = vector.broadcast %cst_69 : f32 to vector<8x128xf32>
    %318 = arith.addf %317, %316 : vector<8x128xf32>
    %319 = arith.divf %317, %318 : vector<8x128xf32>
    %320 = vector.extract_strided_slice %309 {offsets = [0, 128], sizes = [8, 128], strides = [1, 1]} : vector<8x384xf32> to vector<8x128xf32>
    %321 = vector.extract_strided_slice %311 {offsets = [0, 128], sizes = [8, 128], strides = [1, 1]} : vector<8x384xf32> to vector<8x128xf32>
    %322 = arith.addf %320, %321 : vector<8x128xf32>
    %323 = arith.negf %322 : vector<8x128xf32>
    %324 = math.exp %323 : vector<8x128xf32>
    %cst_70 = arith.constant 1.000000e+00 : f32
    %325 = vector.broadcast %cst_70 : f32 to vector<8x128xf32>
    %326 = arith.addf %325, %324 : vector<8x128xf32>
    %327 = arith.divf %325, %326 : vector<8x128xf32>
    %328 = vector.extract_strided_slice %309 {offsets = [0, 256], sizes = [8, 128], strides = [1, 1]} : vector<8x384xf32> to vector<8x128xf32>
    %329 = vector.extract_strided_slice %311 {offsets = [0, 256], sizes = [8, 128], strides = [1, 1]} : vector<8x384xf32> to vector<8x128xf32>
    %330 = vector.broadcast %275 : vector<1x128xf32> to vector<8x128xf32>
    %331 = arith.addf %329, %330 : vector<8x128xf32>
    %332 = arith.mulf %319, %331 : vector<8x128xf32>
    %333 = arith.addf %328, %332 : vector<8x128xf32>
    %334 = math.tanh %333 : vector<8x128xf32>
    %cst_71 = arith.constant 1.000000e+00 : f32
    %335 = vector.broadcast %cst_71 : f32 to vector<8x128xf32>
    %336 = arith.subf %335, %327 : vector<8x128xf32>
    %337 = arith.mulf %336, %334 : vector<8x128xf32>
    %338 = arith.mulf %327, %307 : vector<8x128xf32>
    %339 = arith.addf %337, %338 : vector<8x128xf32>
    %c8_72 = arith.constant 8 : index
    %c0_73 = arith.constant 0 : index
    %340 = vector.load %arg20[%c8_72, %c0_73] : memref<64x256xf32, #tpu.memory_space<vmem>>, vector<8x128xf32>
    tpu.vector_store %arg20[%c8_72, %c0_73], %339 {strides = array<i32>} : memref<64x256xf32, #tpu.memory_space<vmem>>, vector<8x128xf32>,
    %341 = vector.extract_strided_slice %273 {offsets = [16, 0], sizes = [8, 384], strides = [1, 1]} : vector<64x384xf32> to vector<8x384xf32>
    %342 = arith.truncf %339 : vector<8x128xf32> to vector<8x128xbf16>
    %cst_74 = arith.constant dense<0.000000e+00> : vector<8x384xf32>
    %343 = tpu.matmul %342, %274, %cst_74 {dimension_numbers = #tpu.dot_dimension_numbers<[1], [0], [0], [1], [0, 0, 1, 1], [], []>} : vector<8x128xbf16>, vector<128x384xbf16>, vector<8x384xf32> -> vector<8x384xf32>
    %344 = vector.extract_strided_slice %341 {offsets = [0, 0], sizes = [8, 128], strides = [1, 1]} : vector<8x384xf32> to vector<8x128xf32>
    %345 = vector.extract_strided_slice %343 {offsets = [0, 0], sizes = [8, 128], strides = [1, 1]} : vector<8x384xf32> to vector<8x128xf32>
    %346 = arith.addf %344, %345 : vector<8x128xf32>
    %347 = arith.negf %346 : vector<8x128xf32>
    %348 = math.exp %347 : vector<8x128xf32>
    %cst_75 = arith.constant 1.000000e+00 : f32
    %349 = vector.broadcast %cst_75 : f32 to vector<8x128xf32>
    %350 = arith.addf %349, %348 : vector<8x128xf32>
    %351 = arith.divf %349, %350 : vector<8x128xf32>
    %352 = vector.extract_strided_slice %341 {offsets = [0, 128], sizes = [8, 128], strides = [1, 1]} : vector<8x384xf32> to vector<8x128xf32>
    %353 = vector.extract_strided_slice %343 {offsets = [0, 128], sizes = [8, 128], strides = [1, 1]} : vector<8x384xf32> to vector<8x128xf32>
    %354 = arith.addf %352, %353 : vector<8x128xf32>
    %355 = arith.negf %354 : vector<8x128xf32>
    %356 = math.exp %355 : vector<8x128xf32>
    %cst_76 = arith.constant 1.000000e+00 : f32
    %357 = vector.broadcast %cst_76 : f32 to vector<8x128xf32>
    %358 = arith.addf %357, %356 : vector<8x128xf32>
    %359 = arith.divf %357, %358 : vector<8x128xf32>
    %360 = vector.extract_strided_slice %341 {offsets = [0, 256], sizes = [8, 128], strides = [1, 1]} : vector<8x384xf32> to vector<8x128xf32>
    %361 = vector.extract_strided_slice %343 {offsets = [0, 256], sizes = [8, 128], strides = [1, 1]} : vector<8x384xf32> to vector<8x128xf32>
    %362 = vector.broadcast %275 : vector<1x128xf32> to vector<8x128xf32>
    %363 = arith.addf %361, %362 : vector<8x128xf32>
    %364 = arith.mulf %351, %363 : vector<8x128xf32>
    %365 = arith.addf %360, %364 : vector<8x128xf32>
    %366 = math.tanh %365 : vector<8x128xf32>
    %cst_77 = arith.constant 1.000000e+00 : f32
    %367 = vector.broadcast %cst_77 : f32 to vector<8x128xf32>
    %368 = arith.subf %367, %359 : vector<8x128xf32>
    %369 = arith.mulf %368, %366 : vector<8x128xf32>
    %370 = arith.mulf %359, %339 : vector<8x128xf32>
    %371 = arith.addf %369, %370 : vector<8x128xf32>
    %c16_78 = arith.constant 16 : index
    %c0_79 = arith.constant 0 : index
    %372 = vector.load %arg20[%c16_78, %c0_79] : memref<64x256xf32, #tpu.memory_space<vmem>>, vector<8x128xf32>
    tpu.vector_store %arg20[%c16_78, %c0_79], %371 {strides = array<i32>} : memref<64x256xf32, #tpu.memory_space<vmem>>, vector<8x128xf32>,
    %373 = vector.extract_strided_slice %273 {offsets = [24, 0], sizes = [8, 384], strides = [1, 1]} : vector<64x384xf32> to vector<8x384xf32>
    %374 = arith.truncf %371 : vector<8x128xf32> to vector<8x128xbf16>
    %cst_80 = arith.constant dense<0.000000e+00> : vector<8x384xf32>
    %375 = tpu.matmul %374, %274, %cst_80 {dimension_numbers = #tpu.dot_dimension_numbers<[1], [0], [0], [1], [0, 0, 1, 1], [], []>} : vector<8x128xbf16>, vector<128x384xbf16>, vector<8x384xf32> -> vector<8x384xf32>
    %376 = vector.extract_strided_slice %373 {offsets = [0, 0], sizes = [8, 128], strides = [1, 1]} : vector<8x384xf32> to vector<8x128xf32>
    %377 = vector.extract_strided_slice %375 {offsets = [0, 0], sizes = [8, 128], strides = [1, 1]} : vector<8x384xf32> to vector<8x128xf32>
    %378 = arith.addf %376, %377 : vector<8x128xf32>
    %379 = arith.negf %378 : vector<8x128xf32>
    %380 = math.exp %379 : vector<8x128xf32>
    %cst_81 = arith.constant 1.000000e+00 : f32
    %381 = vector.broadcast %cst_81 : f32 to vector<8x128xf32>
    %382 = arith.addf %381, %380 : vector<8x128xf32>
    %383 = arith.divf %381, %382 : vector<8x128xf32>
    %384 = vector.extract_strided_slice %373 {offsets = [0, 128], sizes = [8, 128], strides = [1, 1]} : vector<8x384xf32> to vector<8x128xf32>
    %385 = vector.extract_strided_slice %375 {offsets = [0, 128], sizes = [8, 128], strides = [1, 1]} : vector<8x384xf32> to vector<8x128xf32>
    %386 = arith.addf %384, %385 : vector<8x128xf32>
    %387 = arith.negf %386 : vector<8x128xf32>
    %388 = math.exp %387 : vector<8x128xf32>
    %cst_82 = arith.constant 1.000000e+00 : f32
    %389 = vector.broadcast %cst_82 : f32 to vector<8x128xf32>
    %390 = arith.addf %389, %388 : vector<8x128xf32>
    %391 = arith.divf %389, %390 : vector<8x128xf32>
    %392 = vector.extract_strided_slice %373 {offsets = [0, 256], sizes = [8, 128], strides = [1, 1]} : vector<8x384xf32> to vector<8x128xf32>
    %393 = vector.extract_strided_slice %375 {offsets = [0, 256], sizes = [8, 128], strides = [1, 1]} : vector<8x384xf32> to vector<8x128xf32>
    %394 = vector.broadcast %275 : vector<1x128xf32> to vector<8x128xf32>
    %395 = arith.addf %393, %394 : vector<8x128xf32>
    %396 = arith.mulf %383, %395 : vector<8x128xf32>
    %397 = arith.addf %392, %396 : vector<8x128xf32>
    %398 = math.tanh %397 : vector<8x128xf32>
    %cst_83 = arith.constant 1.000000e+00 : f32
    %399 = vector.broadcast %cst_83 : f32 to vector<8x128xf32>
    %400 = arith.subf %399, %391 : vector<8x128xf32>
    %401 = arith.mulf %400, %398 : vector<8x128xf32>
    %402 = arith.mulf %391, %371 : vector<8x128xf32>
    %403 = arith.addf %401, %402 : vector<8x128xf32>
    %c24_84 = arith.constant 24 : index
    %c0_85 = arith.constant 0 : index
    %404 = vector.load %arg20[%c24_84, %c0_85] : memref<64x256xf32, #tpu.memory_space<vmem>>, vector<8x128xf32>
    tpu.vector_store %arg20[%c24_84, %c0_85], %403 {strides = array<i32>} : memref<64x256xf32, #tpu.memory_space<vmem>>, vector<8x128xf32>,
    %405 = vector.extract_strided_slice %273 {offsets = [32, 0], sizes = [8, 384], strides = [1, 1]} : vector<64x384xf32> to vector<8x384xf32>
    %406 = arith.truncf %403 : vector<8x128xf32> to vector<8x128xbf16>
    %cst_86 = arith.constant dense<0.000000e+00> : vector<8x384xf32>
    %407 = tpu.matmul %406, %274, %cst_86 {dimension_numbers = #tpu.dot_dimension_numbers<[1], [0], [0], [1], [0, 0, 1, 1], [], []>} : vector<8x128xbf16>, vector<128x384xbf16>, vector<8x384xf32> -> vector<8x384xf32>
    %408 = vector.extract_strided_slice %405 {offsets = [0, 0], sizes = [8, 128], strides = [1, 1]} : vector<8x384xf32> to vector<8x128xf32>
    %409 = vector.extract_strided_slice %407 {offsets = [0, 0], sizes = [8, 128], strides = [1, 1]} : vector<8x384xf32> to vector<8x128xf32>
    %410 = arith.addf %408, %409 : vector<8x128xf32>
    %411 = arith.negf %410 : vector<8x128xf32>
    %412 = math.exp %411 : vector<8x128xf32>
    %cst_87 = arith.constant 1.000000e+00 : f32
    %413 = vector.broadcast %cst_87 : f32 to vector<8x128xf32>
    %414 = arith.addf %413, %412 : vector<8x128xf32>
    %415 = arith.divf %413, %414 : vector<8x128xf32>
    %416 = vector.extract_strided_slice %405 {offsets = [0, 128], sizes = [8, 128], strides = [1, 1]} : vector<8x384xf32> to vector<8x128xf32>
    %417 = vector.extract_strided_slice %407 {offsets = [0, 128], sizes = [8, 128], strides = [1, 1]} : vector<8x384xf32> to vector<8x128xf32>
    %418 = arith.addf %416, %417 : vector<8x128xf32>
    %419 = arith.negf %418 : vector<8x128xf32>
    %420 = math.exp %419 : vector<8x128xf32>
    %cst_88 = arith.constant 1.000000e+00 : f32
    %421 = vector.broadcast %cst_88 : f32 to vector<8x128xf32>
    %422 = arith.addf %421, %420 : vector<8x128xf32>
    %423 = arith.divf %421, %422 : vector<8x128xf32>
    %424 = vector.extract_strided_slice %405 {offsets = [0, 256], sizes = [8, 128], strides = [1, 1]} : vector<8x384xf32> to vector<8x128xf32>
    %425 = vector.extract_strided_slice %407 {offsets = [0, 256], sizes = [8, 128], strides = [1, 1]} : vector<8x384xf32> to vector<8x128xf32>
    %426 = vector.broadcast %275 : vector<1x128xf32> to vector<8x128xf32>
    %427 = arith.addf %425, %426 : vector<8x128xf32>
    %428 = arith.mulf %415, %427 : vector<8x128xf32>
    %429 = arith.addf %424, %428 : vector<8x128xf32>
    %430 = math.tanh %429 : vector<8x128xf32>
    %cst_89 = arith.constant 1.000000e+00 : f32
    %431 = vector.broadcast %cst_89 : f32 to vector<8x128xf32>
    %432 = arith.subf %431, %423 : vector<8x128xf32>
    %433 = arith.mulf %432, %430 : vector<8x128xf32>
    %434 = arith.mulf %423, %403 : vector<8x128xf32>
    %435 = arith.addf %433, %434 : vector<8x128xf32>
    %c32_90 = arith.constant 32 : index
    %c0_91 = arith.constant 0 : index
    %436 = vector.load %arg20[%c32_90, %c0_91] : memref<64x256xf32, #tpu.memory_space<vmem>>, vector<8x128xf32>
    tpu.vector_store %arg20[%c32_90, %c0_91], %435 {strides = array<i32>} : memref<64x256xf32, #tpu.memory_space<vmem>>, vector<8x128xf32>,
    %437 = vector.extract_strided_slice %273 {offsets = [40, 0], sizes = [8, 384], strides = [1, 1]} : vector<64x384xf32> to vector<8x384xf32>
    %438 = arith.truncf %435 : vector<8x128xf32> to vector<8x128xbf16>
    %cst_92 = arith.constant dense<0.000000e+00> : vector<8x384xf32>
    %439 = tpu.matmul %438, %274, %cst_92 {dimension_numbers = #tpu.dot_dimension_numbers<[1], [0], [0], [1], [0, 0, 1, 1], [], []>} : vector<8x128xbf16>, vector<128x384xbf16>, vector<8x384xf32> -> vector<8x384xf32>
    %440 = vector.extract_strided_slice %437 {offsets = [0, 0], sizes = [8, 128], strides = [1, 1]} : vector<8x384xf32> to vector<8x128xf32>
    %441 = vector.extract_strided_slice %439 {offsets = [0, 0], sizes = [8, 128], strides = [1, 1]} : vector<8x384xf32> to vector<8x128xf32>
    %442 = arith.addf %440, %441 : vector<8x128xf32>
    %443 = arith.negf %442 : vector<8x128xf32>
    %444 = math.exp %443 : vector<8x128xf32>
    %cst_93 = arith.constant 1.000000e+00 : f32
    %445 = vector.broadcast %cst_93 : f32 to vector<8x128xf32>
    %446 = arith.addf %445, %444 : vector<8x128xf32>
    %447 = arith.divf %445, %446 : vector<8x128xf32>
    %448 = vector.extract_strided_slice %437 {offsets = [0, 128], sizes = [8, 128], strides = [1, 1]} : vector<8x384xf32> to vector<8x128xf32>
    %449 = vector.extract_strided_slice %439 {offsets = [0, 128], sizes = [8, 128], strides = [1, 1]} : vector<8x384xf32> to vector<8x128xf32>
    %450 = arith.addf %448, %449 : vector<8x128xf32>
    %451 = arith.negf %450 : vector<8x128xf32>
    %452 = math.exp %451 : vector<8x128xf32>
    %cst_94 = arith.constant 1.000000e+00 : f32
    %453 = vector.broadcast %cst_94 : f32 to vector<8x128xf32>
    %454 = arith.addf %453, %452 : vector<8x128xf32>
    %455 = arith.divf %453, %454 : vector<8x128xf32>
    %456 = vector.extract_strided_slice %437 {offsets = [0, 256], sizes = [8, 128], strides = [1, 1]} : vector<8x384xf32> to vector<8x128xf32>
    %457 = vector.extract_strided_slice %439 {offsets = [0, 256], sizes = [8, 128], strides = [1, 1]} : vector<8x384xf32> to vector<8x128xf32>
    %458 = vector.broadcast %275 : vector<1x128xf32> to vector<8x128xf32>
    %459 = arith.addf %457, %458 : vector<8x128xf32>
    %460 = arith.mulf %447, %459 : vector<8x128xf32>
    %461 = arith.addf %456, %460 : vector<8x128xf32>
    %462 = math.tanh %461 : vector<8x128xf32>
    %cst_95 = arith.constant 1.000000e+00 : f32
    %463 = vector.broadcast %cst_95 : f32 to vector<8x128xf32>
    %464 = arith.subf %463, %455 : vector<8x128xf32>
    %465 = arith.mulf %464, %462 : vector<8x128xf32>
    %466 = arith.mulf %455, %435 : vector<8x128xf32>
    %467 = arith.addf %465, %466 : vector<8x128xf32>
    %c40_96 = arith.constant 40 : index
    %c0_97 = arith.constant 0 : index
    %468 = vector.load %arg20[%c40_96, %c0_97] : memref<64x256xf32, #tpu.memory_space<vmem>>, vector<8x128xf32>
    tpu.vector_store %arg20[%c40_96, %c0_97], %467 {strides = array<i32>} : memref<64x256xf32, #tpu.memory_space<vmem>>, vector<8x128xf32>,
    %469 = vector.extract_strided_slice %273 {offsets = [48, 0], sizes = [8, 384], strides = [1, 1]} : vector<64x384xf32> to vector<8x384xf32>
    %470 = arith.truncf %467 : vector<8x128xf32> to vector<8x128xbf16>
    %cst_98 = arith.constant dense<0.000000e+00> : vector<8x384xf32>
    %471 = tpu.matmul %470, %274, %cst_98 {dimension_numbers = #tpu.dot_dimension_numbers<[1], [0], [0], [1], [0, 0, 1, 1], [], []>} : vector<8x128xbf16>, vector<128x384xbf16>, vector<8x384xf32> -> vector<8x384xf32>
    %472 = vector.extract_strided_slice %469 {offsets = [0, 0], sizes = [8, 128], strides = [1, 1]} : vector<8x384xf32> to vector<8x128xf32>
    %473 = vector.extract_strided_slice %471 {offsets = [0, 0], sizes = [8, 128], strides = [1, 1]} : vector<8x384xf32> to vector<8x128xf32>
    %474 = arith.addf %472, %473 : vector<8x128xf32>
    %475 = arith.negf %474 : vector<8x128xf32>
    %476 = math.exp %475 : vector<8x128xf32>
    %cst_99 = arith.constant 1.000000e+00 : f32
    %477 = vector.broadcast %cst_99 : f32 to vector<8x128xf32>
    %478 = arith.addf %477, %476 : vector<8x128xf32>
    %479 = arith.divf %477, %478 : vector<8x128xf32>
    %480 = vector.extract_strided_slice %469 {offsets = [0, 128], sizes = [8, 128], strides = [1, 1]} : vector<8x384xf32> to vector<8x128xf32>
    %481 = vector.extract_strided_slice %471 {offsets = [0, 128], sizes = [8, 128], strides = [1, 1]} : vector<8x384xf32> to vector<8x128xf32>
    %482 = arith.addf %480, %481 : vector<8x128xf32>
    %483 = arith.negf %482 : vector<8x128xf32>
    %484 = math.exp %483 : vector<8x128xf32>
    %cst_100 = arith.constant 1.000000e+00 : f32
    %485 = vector.broadcast %cst_100 : f32 to vector<8x128xf32>
    %486 = arith.addf %485, %484 : vector<8x128xf32>
    %487 = arith.divf %485, %486 : vector<8x128xf32>
    %488 = vector.extract_strided_slice %469 {offsets = [0, 256], sizes = [8, 128], strides = [1, 1]} : vector<8x384xf32> to vector<8x128xf32>
    %489 = vector.extract_strided_slice %471 {offsets = [0, 256], sizes = [8, 128], strides = [1, 1]} : vector<8x384xf32> to vector<8x128xf32>
    %490 = vector.broadcast %275 : vector<1x128xf32> to vector<8x128xf32>
    %491 = arith.addf %489, %490 : vector<8x128xf32>
    %492 = arith.mulf %479, %491 : vector<8x128xf32>
    %493 = arith.addf %488, %492 : vector<8x128xf32>
    %494 = math.tanh %493 : vector<8x128xf32>
    %cst_101 = arith.constant 1.000000e+00 : f32
    %495 = vector.broadcast %cst_101 : f32 to vector<8x128xf32>
    %496 = arith.subf %495, %487 : vector<8x128xf32>
    %497 = arith.mulf %496, %494 : vector<8x128xf32>
    %498 = arith.mulf %487, %467 : vector<8x128xf32>
    %499 = arith.addf %497, %498 : vector<8x128xf32>
    %c48_102 = arith.constant 48 : index
    %c0_103 = arith.constant 0 : index
    %500 = vector.load %arg20[%c48_102, %c0_103] : memref<64x256xf32, #tpu.memory_space<vmem>>, vector<8x128xf32>
    tpu.vector_store %arg20[%c48_102, %c0_103], %499 {strides = array<i32>} : memref<64x256xf32, #tpu.memory_space<vmem>>, vector<8x128xf32>,
    %501 = vector.extract_strided_slice %273 {offsets = [56, 0], sizes = [8, 384], strides = [1, 1]} : vector<64x384xf32> to vector<8x384xf32>
    %502 = arith.truncf %499 : vector<8x128xf32> to vector<8x128xbf16>
    %cst_104 = arith.constant dense<0.000000e+00> : vector<8x384xf32>
    %503 = tpu.matmul %502, %274, %cst_104 {dimension_numbers = #tpu.dot_dimension_numbers<[1], [0], [0], [1], [0, 0, 1, 1], [], []>} : vector<8x128xbf16>, vector<128x384xbf16>, vector<8x384xf32> -> vector<8x384xf32>
    %504 = vector.extract_strided_slice %501 {offsets = [0, 0], sizes = [8, 128], strides = [1, 1]} : vector<8x384xf32> to vector<8x128xf32>
    %505 = vector.extract_strided_slice %503 {offsets = [0, 0], sizes = [8, 128], strides = [1, 1]} : vector<8x384xf32> to vector<8x128xf32>
    %506 = arith.addf %504, %505 : vector<8x128xf32>
    %507 = arith.negf %506 : vector<8x128xf32>
    %508 = math.exp %507 : vector<8x128xf32>
    %cst_105 = arith.constant 1.000000e+00 : f32
    %509 = vector.broadcast %cst_105 : f32 to vector<8x128xf32>
    %510 = arith.addf %509, %508 : vector<8x128xf32>
    %511 = arith.divf %509, %510 : vector<8x128xf32>
    %512 = vector.extract_strided_slice %501 {offsets = [0, 128], sizes = [8, 128], strides = [1, 1]} : vector<8x384xf32> to vector<8x128xf32>
    %513 = vector.extract_strided_slice %503 {offsets = [0, 128], sizes = [8, 128], strides = [1, 1]} : vector<8x384xf32> to vector<8x128xf32>
    %514 = arith.addf %512, %513 : vector<8x128xf32>
    %515 = arith.negf %514 : vector<8x128xf32>
    %516 = math.exp %515 : vector<8x128xf32>
    %cst_106 = arith.constant 1.000000e+00 : f32
    %517 = vector.broadcast %cst_106 : f32 to vector<8x128xf32>
    %518 = arith.addf %517, %516 : vector<8x128xf32>
    %519 = arith.divf %517, %518 : vector<8x128xf32>
    %520 = vector.extract_strided_slice %501 {offsets = [0, 256], sizes = [8, 128], strides = [1, 1]} : vector<8x384xf32> to vector<8x128xf32>
    %521 = vector.extract_strided_slice %503 {offsets = [0, 256], sizes = [8, 128], strides = [1, 1]} : vector<8x384xf32> to vector<8x128xf32>
    %522 = vector.broadcast %275 : vector<1x128xf32> to vector<8x128xf32>
    %523 = arith.addf %521, %522 : vector<8x128xf32>
    %524 = arith.mulf %511, %523 : vector<8x128xf32>
    %525 = arith.addf %520, %524 : vector<8x128xf32>
    %526 = math.tanh %525 : vector<8x128xf32>
    %cst_107 = arith.constant 1.000000e+00 : f32
    %527 = vector.broadcast %cst_107 : f32 to vector<8x128xf32>
    %528 = arith.subf %527, %519 : vector<8x128xf32>
    %529 = arith.mulf %528, %526 : vector<8x128xf32>
    %530 = arith.mulf %519, %499 : vector<8x128xf32>
    %531 = arith.addf %529, %530 : vector<8x128xf32>
    %c56_108 = arith.constant 56 : index
    %c0_109 = arith.constant 0 : index
    %532 = vector.load %arg20[%c56_108, %c0_109] : memref<64x256xf32, #tpu.memory_space<vmem>>, vector<8x128xf32>
    tpu.vector_store %arg20[%c56_108, %c0_109], %531 {strides = array<i32>} : memref<64x256xf32, #tpu.memory_space<vmem>>, vector<8x128xf32>,
    %c0_110 = arith.constant 0 : index
    %c0_111 = arith.constant 0 : index
    %533 = vector.load %arg20[%c0_110, %c0_111] : memref<64x256xf32, #tpu.memory_space<vmem>>, vector<64x128xf32>
    %534 = arith.truncf %533 : vector<64x128xf32> to vector<64x128xbf16>
    %c0_112 = arith.constant 0 : index
    %c0_113 = arith.constant 0 : index
    %535 = vector.load %arg9[%c0_112, %c0_113] : memref<128x384xbf16, #tpu.memory_space<vmem>>, vector<128x384xbf16>
    %cst_114 = arith.constant dense<0.000000e+00> : vector<64x384xf32>
    %536 = tpu.matmul %534, %535, %cst_114 {dimension_numbers = #tpu.dot_dimension_numbers<[1], [0], [0], [1], [0, 0, 1, 1], [], []>} : vector<64x128xbf16>, vector<128x384xbf16>, vector<64x384xf32> -> vector<64x384xf32>
    %c0_115 = arith.constant 0 : index
    %c0_116 = arith.constant 0 : index
    %537 = vector.load %arg11[%c0_115, %c0_116] : memref<1x384xf32, #tpu.memory_space<vmem>>, vector<1x384xf32>
    %538 = vector.broadcast %537 : vector<1x384xf32> to vector<64x384xf32>
    %539 = arith.addf %536, %538 : vector<64x384xf32>
    %c0_117 = arith.constant 0 : index
    %c0_118 = arith.constant 0 : index
    %540 = vector.load %arg10[%c0_117, %c0_118] : memref<128x384xbf16, #tpu.memory_space<vmem>>, vector<128x384xbf16>
    %c0_119 = arith.constant 0 : index
    %c0_120 = arith.constant 0 : index
    %541 = vector.load %arg12[%c0_119, %c0_120] : memref<1x128xf32, #tpu.memory_space<vmem>>, vector<1x128xf32>
    %cst_121 = arith.constant 0.000000e+00 : f32
    %542 = vector.broadcast %cst_121 : f32 to vector<8x128xf32>
    %543 = vector.extract_strided_slice %539 {offsets = [0, 0], sizes = [8, 384], strides = [1, 1]} : vector<64x384xf32> to vector<8x384xf32>
    %544 = arith.truncf %542 : vector<8x128xf32> to vector<8x128xbf16>
    %cst_122 = arith.constant dense<0.000000e+00> : vector<8x384xf32>
    %545 = tpu.matmul %544, %540, %cst_122 {dimension_numbers = #tpu.dot_dimension_numbers<[1], [0], [0], [1], [0, 0, 1, 1], [], []>} : vector<8x128xbf16>, vector<128x384xbf16>, vector<8x384xf32> -> vector<8x384xf32>
    %546 = vector.extract_strided_slice %543 {offsets = [0, 0], sizes = [8, 128], strides = [1, 1]} : vector<8x384xf32> to vector<8x128xf32>
    %547 = vector.extract_strided_slice %545 {offsets = [0, 0], sizes = [8, 128], strides = [1, 1]} : vector<8x384xf32> to vector<8x128xf32>
    %548 = arith.addf %546, %547 : vector<8x128xf32>
    %549 = arith.negf %548 : vector<8x128xf32>
    %550 = math.exp %549 : vector<8x128xf32>
    %cst_123 = arith.constant 1.000000e+00 : f32
    %551 = vector.broadcast %cst_123 : f32 to vector<8x128xf32>
    %552 = arith.addf %551, %550 : vector<8x128xf32>
    %553 = arith.divf %551, %552 : vector<8x128xf32>
    %554 = vector.extract_strided_slice %543 {offsets = [0, 128], sizes = [8, 128], strides = [1, 1]} : vector<8x384xf32> to vector<8x128xf32>
    %555 = vector.extract_strided_slice %545 {offsets = [0, 128], sizes = [8, 128], strides = [1, 1]} : vector<8x384xf32> to vector<8x128xf32>
    %556 = arith.addf %554, %555 : vector<8x128xf32>
    %557 = arith.negf %556 : vector<8x128xf32>
    %558 = math.exp %557 : vector<8x128xf32>
    %cst_124 = arith.constant 1.000000e+00 : f32
    %559 = vector.broadcast %cst_124 : f32 to vector<8x128xf32>
    %560 = arith.addf %559, %558 : vector<8x128xf32>
    %561 = arith.divf %559, %560 : vector<8x128xf32>
    %562 = vector.extract_strided_slice %543 {offsets = [0, 256], sizes = [8, 128], strides = [1, 1]} : vector<8x384xf32> to vector<8x128xf32>
    %563 = vector.extract_strided_slice %545 {offsets = [0, 256], sizes = [8, 128], strides = [1, 1]} : vector<8x384xf32> to vector<8x128xf32>
    %564 = vector.broadcast %541 : vector<1x128xf32> to vector<8x128xf32>
    %565 = arith.addf %563, %564 : vector<8x128xf32>
    %566 = arith.mulf %553, %565 : vector<8x128xf32>
    %567 = arith.addf %562, %566 : vector<8x128xf32>
    %568 = math.tanh %567 : vector<8x128xf32>
    %cst_125 = arith.constant 1.000000e+00 : f32
    %569 = vector.broadcast %cst_125 : f32 to vector<8x128xf32>
    %570 = arith.subf %569, %561 : vector<8x128xf32>
    %571 = arith.mulf %570, %568 : vector<8x128xf32>
    %572 = arith.mulf %561, %542 : vector<8x128xf32>
    %573 = arith.addf %571, %572 : vector<8x128xf32>
    %c0_126 = arith.constant 0 : index
    %c0_127 = arith.constant 0 : index
    %574 = vector.load %arg20[%c0_126, %c0_127] : memref<64x256xf32, #tpu.memory_space<vmem>>, vector<8x128xf32>
    tpu.vector_store %arg20[%c0_126, %c0_127], %573 {strides = array<i32>} : memref<64x256xf32, #tpu.memory_space<vmem>>, vector<8x128xf32>,
    %575 = vector.extract_strided_slice %539 {offsets = [8, 0], sizes = [8, 384], strides = [1, 1]} : vector<64x384xf32> to vector<8x384xf32>
    %576 = arith.truncf %573 : vector<8x128xf32> to vector<8x128xbf16>
    %cst_128 = arith.constant dense<0.000000e+00> : vector<8x384xf32>
    %577 = tpu.matmul %576, %540, %cst_128 {dimension_numbers = #tpu.dot_dimension_numbers<[1], [0], [0], [1], [0, 0, 1, 1], [], []>} : vector<8x128xbf16>, vector<128x384xbf16>, vector<8x384xf32> -> vector<8x384xf32>
    %578 = vector.extract_strided_slice %575 {offsets = [0, 0], sizes = [8, 128], strides = [1, 1]} : vector<8x384xf32> to vector<8x128xf32>
    %579 = vector.extract_strided_slice %577 {offsets = [0, 0], sizes = [8, 128], strides = [1, 1]} : vector<8x384xf32> to vector<8x128xf32>
    %580 = arith.addf %578, %579 : vector<8x128xf32>
    %581 = arith.negf %580 : vector<8x128xf32>
    %582 = math.exp %581 : vector<8x128xf32>
    %cst_129 = arith.constant 1.000000e+00 : f32
    %583 = vector.broadcast %cst_129 : f32 to vector<8x128xf32>
    %584 = arith.addf %583, %582 : vector<8x128xf32>
    %585 = arith.divf %583, %584 : vector<8x128xf32>
    %586 = vector.extract_strided_slice %575 {offsets = [0, 128], sizes = [8, 128], strides = [1, 1]} : vector<8x384xf32> to vector<8x128xf32>
    %587 = vector.extract_strided_slice %577 {offsets = [0, 128], sizes = [8, 128], strides = [1, 1]} : vector<8x384xf32> to vector<8x128xf32>
    %588 = arith.addf %586, %587 : vector<8x128xf32>
    %589 = arith.negf %588 : vector<8x128xf32>
    %590 = math.exp %589 : vector<8x128xf32>
    %cst_130 = arith.constant 1.000000e+00 : f32
    %591 = vector.broadcast %cst_130 : f32 to vector<8x128xf32>
    %592 = arith.addf %591, %590 : vector<8x128xf32>
    %593 = arith.divf %591, %592 : vector<8x128xf32>
    %594 = vector.extract_strided_slice %575 {offsets = [0, 256], sizes = [8, 128], strides = [1, 1]} : vector<8x384xf32> to vector<8x128xf32>
    %595 = vector.extract_strided_slice %577 {offsets = [0, 256], sizes = [8, 128], strides = [1, 1]} : vector<8x384xf32> to vector<8x128xf32>
    %596 = vector.broadcast %541 : vector<1x128xf32> to vector<8x128xf32>
    %597 = arith.addf %595, %596 : vector<8x128xf32>
    %598 = arith.mulf %585, %597 : vector<8x128xf32>
    %599 = arith.addf %594, %598 : vector<8x128xf32>
    %600 = math.tanh %599 : vector<8x128xf32>
    %cst_131 = arith.constant 1.000000e+00 : f32
    %601 = vector.broadcast %cst_131 : f32 to vector<8x128xf32>
    %602 = arith.subf %601, %593 : vector<8x128xf32>
    %603 = arith.mulf %602, %600 : vector<8x128xf32>
    %604 = arith.mulf %593, %573 : vector<8x128xf32>
    %605 = arith.addf %603, %604 : vector<8x128xf32>
    %c8_132 = arith.constant 8 : index
    %c0_133 = arith.constant 0 : index
    %606 = vector.load %arg20[%c8_132, %c0_133] : memref<64x256xf32, #tpu.memory_space<vmem>>, vector<8x128xf32>
    tpu.vector_store %arg20[%c8_132, %c0_133], %605 {strides = array<i32>} : memref<64x256xf32, #tpu.memory_space<vmem>>, vector<8x128xf32>,
    %607 = vector.extract_strided_slice %539 {offsets = [16, 0], sizes = [8, 384], strides = [1, 1]} : vector<64x384xf32> to vector<8x384xf32>
    %608 = arith.truncf %605 : vector<8x128xf32> to vector<8x128xbf16>
    %cst_134 = arith.constant dense<0.000000e+00> : vector<8x384xf32>
    %609 = tpu.matmul %608, %540, %cst_134 {dimension_numbers = #tpu.dot_dimension_numbers<[1], [0], [0], [1], [0, 0, 1, 1], [], []>} : vector<8x128xbf16>, vector<128x384xbf16>, vector<8x384xf32> -> vector<8x384xf32>
    %610 = vector.extract_strided_slice %607 {offsets = [0, 0], sizes = [8, 128], strides = [1, 1]} : vector<8x384xf32> to vector<8x128xf32>
    %611 = vector.extract_strided_slice %609 {offsets = [0, 0], sizes = [8, 128], strides = [1, 1]} : vector<8x384xf32> to vector<8x128xf32>
    %612 = arith.addf %610, %611 : vector<8x128xf32>
    %613 = arith.negf %612 : vector<8x128xf32>
    %614 = math.exp %613 : vector<8x128xf32>
    %cst_135 = arith.constant 1.000000e+00 : f32
    %615 = vector.broadcast %cst_135 : f32 to vector<8x128xf32>
    %616 = arith.addf %615, %614 : vector<8x128xf32>
    %617 = arith.divf %615, %616 : vector<8x128xf32>
    %618 = vector.extract_strided_slice %607 {offsets = [0, 128], sizes = [8, 128], strides = [1, 1]} : vector<8x384xf32> to vector<8x128xf32>
    %619 = vector.extract_strided_slice %609 {offsets = [0, 128], sizes = [8, 128], strides = [1, 1]} : vector<8x384xf32> to vector<8x128xf32>
    %620 = arith.addf %618, %619 : vector<8x128xf32>
    %621 = arith.negf %620 : vector<8x128xf32>
    %622 = math.exp %621 : vector<8x128xf32>
    %cst_136 = arith.constant 1.000000e+00 : f32
    %623 = vector.broadcast %cst_136 : f32 to vector<8x128xf32>
    %624 = arith.addf %623, %622 : vector<8x128xf32>
    %625 = arith.divf %623, %624 : vector<8x128xf32>
    %626 = vector.extract_strided_slice %607 {offsets = [0, 256], sizes = [8, 128], strides = [1, 1]} : vector<8x384xf32> to vector<8x128xf32>
    %627 = vector.extract_strided_slice %609 {offsets = [0, 256], sizes = [8, 128], strides = [1, 1]} : vector<8x384xf32> to vector<8x128xf32>
    %628 = vector.broadcast %541 : vector<1x128xf32> to vector<8x128xf32>
    %629 = arith.addf %627, %628 : vector<8x128xf32>
    %630 = arith.mulf %617, %629 : vector<8x128xf32>
    %631 = arith.addf %626, %630 : vector<8x128xf32>
    %632 = math.tanh %631 : vector<8x128xf32>
    %cst_137 = arith.constant 1.000000e+00 : f32
    %633 = vector.broadcast %cst_137 : f32 to vector<8x128xf32>
    %634 = arith.subf %633, %625 : vector<8x128xf32>
    %635 = arith.mulf %634, %632 : vector<8x128xf32>
    %636 = arith.mulf %625, %605 : vector<8x128xf32>
    %637 = arith.addf %635, %636 : vector<8x128xf32>
    %c16_138 = arith.constant 16 : index
    %c0_139 = arith.constant 0 : index
    %638 = vector.load %arg20[%c16_138, %c0_139] : memref<64x256xf32, #tpu.memory_space<vmem>>, vector<8x128xf32>
    tpu.vector_store %arg20[%c16_138, %c0_139], %637 {strides = array<i32>} : memref<64x256xf32, #tpu.memory_space<vmem>>, vector<8x128xf32>,
    %639 = vector.extract_strided_slice %539 {offsets = [24, 0], sizes = [8, 384], strides = [1, 1]} : vector<64x384xf32> to vector<8x384xf32>
    %640 = arith.truncf %637 : vector<8x128xf32> to vector<8x128xbf16>
    %cst_140 = arith.constant dense<0.000000e+00> : vector<8x384xf32>
    %641 = tpu.matmul %640, %540, %cst_140 {dimension_numbers = #tpu.dot_dimension_numbers<[1], [0], [0], [1], [0, 0, 1, 1], [], []>} : vector<8x128xbf16>, vector<128x384xbf16>, vector<8x384xf32> -> vector<8x384xf32>
    %642 = vector.extract_strided_slice %639 {offsets = [0, 0], sizes = [8, 128], strides = [1, 1]} : vector<8x384xf32> to vector<8x128xf32>
    %643 = vector.extract_strided_slice %641 {offsets = [0, 0], sizes = [8, 128], strides = [1, 1]} : vector<8x384xf32> to vector<8x128xf32>
    %644 = arith.addf %642, %643 : vector<8x128xf32>
    %645 = arith.negf %644 : vector<8x128xf32>
    %646 = math.exp %645 : vector<8x128xf32>
    %cst_141 = arith.constant 1.000000e+00 : f32
    %647 = vector.broadcast %cst_141 : f32 to vector<8x128xf32>
    %648 = arith.addf %647, %646 : vector<8x128xf32>
    %649 = arith.divf %647, %648 : vector<8x128xf32>
    %650 = vector.extract_strided_slice %639 {offsets = [0, 128], sizes = [8, 128], strides = [1, 1]} : vector<8x384xf32> to vector<8x128xf32>
    %651 = vector.extract_strided_slice %641 {offsets = [0, 128], sizes = [8, 128], strides = [1, 1]} : vector<8x384xf32> to vector<8x128xf32>
    %652 = arith.addf %650, %651 : vector<8x128xf32>
    %653 = arith.negf %652 : vector<8x128xf32>
    %654 = math.exp %653 : vector<8x128xf32>
    %cst_142 = arith.constant 1.000000e+00 : f32
    %655 = vector.broadcast %cst_142 : f32 to vector<8x128xf32>
    %656 = arith.addf %655, %654 : vector<8x128xf32>
    %657 = arith.divf %655, %656 : vector<8x128xf32>
    %658 = vector.extract_strided_slice %639 {offsets = [0, 256], sizes = [8, 128], strides = [1, 1]} : vector<8x384xf32> to vector<8x128xf32>
    %659 = vector.extract_strided_slice %641 {offsets = [0, 256], sizes = [8, 128], strides = [1, 1]} : vector<8x384xf32> to vector<8x128xf32>
    %660 = vector.broadcast %541 : vector<1x128xf32> to vector<8x128xf32>
    %661 = arith.addf %659, %660 : vector<8x128xf32>
    %662 = arith.mulf %649, %661 : vector<8x128xf32>
    %663 = arith.addf %658, %662 : vector<8x128xf32>
    %664 = math.tanh %663 : vector<8x128xf32>
    %cst_143 = arith.constant 1.000000e+00 : f32
    %665 = vector.broadcast %cst_143 : f32 to vector<8x128xf32>
    %666 = arith.subf %665, %657 : vector<8x128xf32>
    %667 = arith.mulf %666, %664 : vector<8x128xf32>
    %668 = arith.mulf %657, %637 : vector<8x128xf32>
    %669 = arith.addf %667, %668 : vector<8x128xf32>
    %c24_144 = arith.constant 24 : index
    %c0_145 = arith.constant 0 : index
    %670 = vector.load %arg20[%c24_144, %c0_145] : memref<64x256xf32, #tpu.memory_space<vmem>>, vector<8x128xf32>
    tpu.vector_store %arg20[%c24_144, %c0_145], %669 {strides = array<i32>} : memref<64x256xf32, #tpu.memory_space<vmem>>, vector<8x128xf32>,
    %671 = vector.extract_strided_slice %539 {offsets = [32, 0], sizes = [8, 384], strides = [1, 1]} : vector<64x384xf32> to vector<8x384xf32>
    %672 = arith.truncf %669 : vector<8x128xf32> to vector<8x128xbf16>
    %cst_146 = arith.constant dense<0.000000e+00> : vector<8x384xf32>
    %673 = tpu.matmul %672, %540, %cst_146 {dimension_numbers = #tpu.dot_dimension_numbers<[1], [0], [0], [1], [0, 0, 1, 1], [], []>} : vector<8x128xbf16>, vector<128x384xbf16>, vector<8x384xf32> -> vector<8x384xf32>
    %674 = vector.extract_strided_slice %671 {offsets = [0, 0], sizes = [8, 128], strides = [1, 1]} : vector<8x384xf32> to vector<8x128xf32>
    %675 = vector.extract_strided_slice %673 {offsets = [0, 0], sizes = [8, 128], strides = [1, 1]} : vector<8x384xf32> to vector<8x128xf32>
    %676 = arith.addf %674, %675 : vector<8x128xf32>
    %677 = arith.negf %676 : vector<8x128xf32>
    %678 = math.exp %677 : vector<8x128xf32>
    %cst_147 = arith.constant 1.000000e+00 : f32
    %679 = vector.broadcast %cst_147 : f32 to vector<8x128xf32>
    %680 = arith.addf %679, %678 : vector<8x128xf32>
    %681 = arith.divf %679, %680 : vector<8x128xf32>
    %682 = vector.extract_strided_slice %671 {offsets = [0, 128], sizes = [8, 128], strides = [1, 1]} : vector<8x384xf32> to vector<8x128xf32>
    %683 = vector.extract_strided_slice %673 {offsets = [0, 128], sizes = [8, 128], strides = [1, 1]} : vector<8x384xf32> to vector<8x128xf32>
    %684 = arith.addf %682, %683 : vector<8x128xf32>
    %685 = arith.negf %684 : vector<8x128xf32>
    %686 = math.exp %685 : vector<8x128xf32>
    %cst_148 = arith.constant 1.000000e+00 : f32
    %687 = vector.broadcast %cst_148 : f32 to vector<8x128xf32>
    %688 = arith.addf %687, %686 : vector<8x128xf32>
    %689 = arith.divf %687, %688 : vector<8x128xf32>
    %690 = vector.extract_strided_slice %671 {offsets = [0, 256], sizes = [8, 128], strides = [1, 1]} : vector<8x384xf32> to vector<8x128xf32>
    %691 = vector.extract_strided_slice %673 {offsets = [0, 256], sizes = [8, 128], strides = [1, 1]} : vector<8x384xf32> to vector<8x128xf32>
    %692 = vector.broadcast %541 : vector<1x128xf32> to vector<8x128xf32>
    %693 = arith.addf %691, %692 : vector<8x128xf32>
    %694 = arith.mulf %681, %693 : vector<8x128xf32>
    %695 = arith.addf %690, %694 : vector<8x128xf32>
    %696 = math.tanh %695 : vector<8x128xf32>
    %cst_149 = arith.constant 1.000000e+00 : f32
    %697 = vector.broadcast %cst_149 : f32 to vector<8x128xf32>
    %698 = arith.subf %697, %689 : vector<8x128xf32>
    %699 = arith.mulf %698, %696 : vector<8x128xf32>
    %700 = arith.mulf %689, %669 : vector<8x128xf32>
    %701 = arith.addf %699, %700 : vector<8x128xf32>
    %c32_150 = arith.constant 32 : index
    %c0_151 = arith.constant 0 : index
    %702 = vector.load %arg20[%c32_150, %c0_151] : memref<64x256xf32, #tpu.memory_space<vmem>>, vector<8x128xf32>
    tpu.vector_store %arg20[%c32_150, %c0_151], %701 {strides = array<i32>} : memref<64x256xf32, #tpu.memory_space<vmem>>, vector<8x128xf32>,
    %703 = vector.extract_strided_slice %539 {offsets = [40, 0], sizes = [8, 384], strides = [1, 1]} : vector<64x384xf32> to vector<8x384xf32>
    %704 = arith.truncf %701 : vector<8x128xf32> to vector<8x128xbf16>
    %cst_152 = arith.constant dense<0.000000e+00> : vector<8x384xf32>
    %705 = tpu.matmul %704, %540, %cst_152 {dimension_numbers = #tpu.dot_dimension_numbers<[1], [0], [0], [1], [0, 0, 1, 1], [], []>} : vector<8x128xbf16>, vector<128x384xbf16>, vector<8x384xf32> -> vector<8x384xf32>
    %706 = vector.extract_strided_slice %703 {offsets = [0, 0], sizes = [8, 128], strides = [1, 1]} : vector<8x384xf32> to vector<8x128xf32>
    %707 = vector.extract_strided_slice %705 {offsets = [0, 0], sizes = [8, 128], strides = [1, 1]} : vector<8x384xf32> to vector<8x128xf32>
    %708 = arith.addf %706, %707 : vector<8x128xf32>
    %709 = arith.negf %708 : vector<8x128xf32>
    %710 = math.exp %709 : vector<8x128xf32>
    %cst_153 = arith.constant 1.000000e+00 : f32
    %711 = vector.broadcast %cst_153 : f32 to vector<8x128xf32>
    %712 = arith.addf %711, %710 : vector<8x128xf32>
    %713 = arith.divf %711, %712 : vector<8x128xf32>
    %714 = vector.extract_strided_slice %703 {offsets = [0, 128], sizes = [8, 128], strides = [1, 1]} : vector<8x384xf32> to vector<8x128xf32>
    %715 = vector.extract_strided_slice %705 {offsets = [0, 128], sizes = [8, 128], strides = [1, 1]} : vector<8x384xf32> to vector<8x128xf32>
    %716 = arith.addf %714, %715 : vector<8x128xf32>
    %717 = arith.negf %716 : vector<8x128xf32>
    %718 = math.exp %717 : vector<8x128xf32>
    %cst_154 = arith.constant 1.000000e+00 : f32
    %719 = vector.broadcast %cst_154 : f32 to vector<8x128xf32>
    %720 = arith.addf %719, %718 : vector<8x128xf32>
    %721 = arith.divf %719, %720 : vector<8x128xf32>
    %722 = vector.extract_strided_slice %703 {offsets = [0, 256], sizes = [8, 128], strides = [1, 1]} : vector<8x384xf32> to vector<8x128xf32>
    %723 = vector.extract_strided_slice %705 {offsets = [0, 256], sizes = [8, 128], strides = [1, 1]} : vector<8x384xf32> to vector<8x128xf32>
    %724 = vector.broadcast %541 : vector<1x128xf32> to vector<8x128xf32>
    %725 = arith.addf %723, %724 : vector<8x128xf32>
    %726 = arith.mulf %713, %725 : vector<8x128xf32>
    %727 = arith.addf %722, %726 : vector<8x128xf32>
    %728 = math.tanh %727 : vector<8x128xf32>
    %cst_155 = arith.constant 1.000000e+00 : f32
    %729 = vector.broadcast %cst_155 : f32 to vector<8x128xf32>
    %730 = arith.subf %729, %721 : vector<8x128xf32>
    %731 = arith.mulf %730, %728 : vector<8x128xf32>
    %732 = arith.mulf %721, %701 : vector<8x128xf32>
    %733 = arith.addf %731, %732 : vector<8x128xf32>
    %c40_156 = arith.constant 40 : index
    %c0_157 = arith.constant 0 : index
    %734 = vector.load %arg20[%c40_156, %c0_157] : memref<64x256xf32, #tpu.memory_space<vmem>>, vector<8x128xf32>
    tpu.vector_store %arg20[%c40_156, %c0_157], %733 {strides = array<i32>} : memref<64x256xf32, #tpu.memory_space<vmem>>, vector<8x128xf32>,
    %735 = vector.extract_strided_slice %539 {offsets = [48, 0], sizes = [8, 384], strides = [1, 1]} : vector<64x384xf32> to vector<8x384xf32>
    %736 = arith.truncf %733 : vector<8x128xf32> to vector<8x128xbf16>
    %cst_158 = arith.constant dense<0.000000e+00> : vector<8x384xf32>
    %737 = tpu.matmul %736, %540, %cst_158 {dimension_numbers = #tpu.dot_dimension_numbers<[1], [0], [0], [1], [0, 0, 1, 1], [], []>} : vector<8x128xbf16>, vector<128x384xbf16>, vector<8x384xf32> -> vector<8x384xf32>
    %738 = vector.extract_strided_slice %735 {offsets = [0, 0], sizes = [8, 128], strides = [1, 1]} : vector<8x384xf32> to vector<8x128xf32>
    %739 = vector.extract_strided_slice %737 {offsets = [0, 0], sizes = [8, 128], strides = [1, 1]} : vector<8x384xf32> to vector<8x128xf32>
    %740 = arith.addf %738, %739 : vector<8x128xf32>
    %741 = arith.negf %740 : vector<8x128xf32>
    %742 = math.exp %741 : vector<8x128xf32>
    %cst_159 = arith.constant 1.000000e+00 : f32
    %743 = vector.broadcast %cst_159 : f32 to vector<8x128xf32>
    %744 = arith.addf %743, %742 : vector<8x128xf32>
    %745 = arith.divf %743, %744 : vector<8x128xf32>
    %746 = vector.extract_strided_slice %735 {offsets = [0, 128], sizes = [8, 128], strides = [1, 1]} : vector<8x384xf32> to vector<8x128xf32>
    %747 = vector.extract_strided_slice %737 {offsets = [0, 128], sizes = [8, 128], strides = [1, 1]} : vector<8x384xf32> to vector<8x128xf32>
    %748 = arith.addf %746, %747 : vector<8x128xf32>
    %749 = arith.negf %748 : vector<8x128xf32>
    %750 = math.exp %749 : vector<8x128xf32>
    %cst_160 = arith.constant 1.000000e+00 : f32
    %751 = vector.broadcast %cst_160 : f32 to vector<8x128xf32>
    %752 = arith.addf %751, %750 : vector<8x128xf32>
    %753 = arith.divf %751, %752 : vector<8x128xf32>
    %754 = vector.extract_strided_slice %735 {offsets = [0, 256], sizes = [8, 128], strides = [1, 1]} : vector<8x384xf32> to vector<8x128xf32>
    %755 = vector.extract_strided_slice %737 {offsets = [0, 256], sizes = [8, 128], strides = [1, 1]} : vector<8x384xf32> to vector<8x128xf32>
    %756 = vector.broadcast %541 : vector<1x128xf32> to vector<8x128xf32>
    %757 = arith.addf %755, %756 : vector<8x128xf32>
    %758 = arith.mulf %745, %757 : vector<8x128xf32>
    %759 = arith.addf %754, %758 : vector<8x128xf32>
    %760 = math.tanh %759 : vector<8x128xf32>
    %cst_161 = arith.constant 1.000000e+00 : f32
    %761 = vector.broadcast %cst_161 : f32 to vector<8x128xf32>
    %762 = arith.subf %761, %753 : vector<8x128xf32>
    %763 = arith.mulf %762, %760 : vector<8x128xf32>
    %764 = arith.mulf %753, %733 : vector<8x128xf32>
    %765 = arith.addf %763, %764 : vector<8x128xf32>
    %c48_162 = arith.constant 48 : index
    %c0_163 = arith.constant 0 : index
    %766 = vector.load %arg20[%c48_162, %c0_163] : memref<64x256xf32, #tpu.memory_space<vmem>>, vector<8x128xf32>
    tpu.vector_store %arg20[%c48_162, %c0_163], %765 {strides = array<i32>} : memref<64x256xf32, #tpu.memory_space<vmem>>, vector<8x128xf32>,
    %767 = vector.extract_strided_slice %539 {offsets = [56, 0], sizes = [8, 384], strides = [1, 1]} : vector<64x384xf32> to vector<8x384xf32>
    %768 = arith.truncf %765 : vector<8x128xf32> to vector<8x128xbf16>
    %cst_164 = arith.constant dense<0.000000e+00> : vector<8x384xf32>
    %769 = tpu.matmul %768, %540, %cst_164 {dimension_numbers = #tpu.dot_dimension_numbers<[1], [0], [0], [1], [0, 0, 1, 1], [], []>} : vector<8x128xbf16>, vector<128x384xbf16>, vector<8x384xf32> -> vector<8x384xf32>
    %770 = vector.extract_strided_slice %767 {offsets = [0, 0], sizes = [8, 128], strides = [1, 1]} : vector<8x384xf32> to vector<8x128xf32>
    %771 = vector.extract_strided_slice %769 {offsets = [0, 0], sizes = [8, 128], strides = [1, 1]} : vector<8x384xf32> to vector<8x128xf32>
    %772 = arith.addf %770, %771 : vector<8x128xf32>
    %773 = arith.negf %772 : vector<8x128xf32>
    %774 = math.exp %773 : vector<8x128xf32>
    %cst_165 = arith.constant 1.000000e+00 : f32
    %775 = vector.broadcast %cst_165 : f32 to vector<8x128xf32>
    %776 = arith.addf %775, %774 : vector<8x128xf32>
    %777 = arith.divf %775, %776 : vector<8x128xf32>
    %778 = vector.extract_strided_slice %767 {offsets = [0, 128], sizes = [8, 128], strides = [1, 1]} : vector<8x384xf32> to vector<8x128xf32>
    %779 = vector.extract_strided_slice %769 {offsets = [0, 128], sizes = [8, 128], strides = [1, 1]} : vector<8x384xf32> to vector<8x128xf32>
    %780 = arith.addf %778, %779 : vector<8x128xf32>
    %781 = arith.negf %780 : vector<8x128xf32>
    %782 = math.exp %781 : vector<8x128xf32>
    %cst_166 = arith.constant 1.000000e+00 : f32
    %783 = vector.broadcast %cst_166 : f32 to vector<8x128xf32>
    %784 = arith.addf %783, %782 : vector<8x128xf32>
    %785 = arith.divf %783, %784 : vector<8x128xf32>
    %786 = vector.extract_strided_slice %767 {offsets = [0, 256], sizes = [8, 128], strides = [1, 1]} : vector<8x384xf32> to vector<8x128xf32>
    %787 = vector.extract_strided_slice %769 {offsets = [0, 256], sizes = [8, 128], strides = [1, 1]} : vector<8x384xf32> to vector<8x128xf32>
    %788 = vector.broadcast %541 : vector<1x128xf32> to vector<8x128xf32>
    %789 = arith.addf %787, %788 : vector<8x128xf32>
    %790 = arith.mulf %777, %789 : vector<8x128xf32>
    %791 = arith.addf %786, %790 : vector<8x128xf32>
    %792 = math.tanh %791 : vector<8x128xf32>
    %cst_167 = arith.constant 1.000000e+00 : f32
    %793 = vector.broadcast %cst_167 : f32 to vector<8x128xf32>
    %794 = arith.subf %793, %785 : vector<8x128xf32>
    %795 = arith.mulf %794, %792 : vector<8x128xf32>
    %796 = arith.mulf %785, %765 : vector<8x128xf32>
    %797 = arith.addf %795, %796 : vector<8x128xf32>
    %c56_168 = arith.constant 56 : index
    %c0_169 = arith.constant 0 : index
    %798 = vector.load %arg20[%c56_168, %c0_169] : memref<64x256xf32, #tpu.memory_space<vmem>>, vector<8x128xf32>
    tpu.vector_store %arg20[%c56_168, %c0_169], %797 {strides = array<i32>} : memref<64x256xf32, #tpu.memory_space<vmem>>, vector<8x128xf32>,
    %c0_170 = arith.constant 0 : index
    %c0_171 = arith.constant 0 : index
    %799 = vector.load %arg20[%c0_170, %c0_171] : memref<64x256xf32, #tpu.memory_space<vmem>>, vector<64x128xf32>
    %800 = arith.truncf %799 : vector<64x128xf32> to vector<64x128xbf16>
    %c0_172 = arith.constant 0 : index
    %c0_173 = arith.constant 0 : index
    %801 = vector.load %arg13[%c0_172, %c0_173] : memref<128x768xbf16, #tpu.memory_space<vmem>>, vector<128x768xbf16>
    %cst_174 = arith.constant dense<0.000000e+00> : vector<64x768xf32>
    %802 = tpu.matmul %800, %801, %cst_174 {dimension_numbers = #tpu.dot_dimension_numbers<[1], [0], [0], [1], [0, 0, 1, 1], [], []>} : vector<64x128xbf16>, vector<128x768xbf16>, vector<64x768xf32> -> vector<64x768xf32>
    %c0_175 = arith.constant 0 : index
    %c0_176 = arith.constant 0 : index
    %803 = vector.load %arg15[%c0_175, %c0_176] : memref<1x768xf32, #tpu.memory_space<vmem>>, vector<1x768xf32>
    %804 = vector.broadcast %803 : vector<1x768xf32> to vector<64x768xf32>
    %805 = arith.addf %802, %804 : vector<64x768xf32>
    %c0_177 = arith.constant 0 : index
    %c0_178 = arith.constant 0 : index
    %806 = vector.load %arg14[%c0_177, %c0_178] : memref<256x768xbf16, #tpu.memory_space<vmem>>, vector<256x768xbf16>
    %c0_179 = arith.constant 0 : index
    %c0_180 = arith.constant 0 : index
    %807 = vector.load %arg16[%c0_179, %c0_180] : memref<1x256xf32, #tpu.memory_space<vmem>>, vector<1x256xf32>
    %cst_181 = arith.constant 0.000000e+00 : f32
    %808 = vector.broadcast %cst_181 : f32 to vector<8x256xf32>
    %809 = vector.extract_strided_slice %805 {offsets = [0, 0], sizes = [8, 768], strides = [1, 1]} : vector<64x768xf32> to vector<8x768xf32>
    %810 = arith.truncf %808 : vector<8x256xf32> to vector<8x256xbf16>
    %cst_182 = arith.constant dense<0.000000e+00> : vector<8x768xf32>
    %811 = tpu.matmul %810, %806, %cst_182 {dimension_numbers = #tpu.dot_dimension_numbers<[1], [0], [0], [1], [0, 0, 1, 1], [], []>} : vector<8x256xbf16>, vector<256x768xbf16>, vector<8x768xf32> -> vector<8x768xf32>
    %812 = vector.extract_strided_slice %809 {offsets = [0, 0], sizes = [8, 256], strides = [1, 1]} : vector<8x768xf32> to vector<8x256xf32>
    %813 = vector.extract_strided_slice %811 {offsets = [0, 0], sizes = [8, 256], strides = [1, 1]} : vector<8x768xf32> to vector<8x256xf32>
    %814 = arith.addf %812, %813 : vector<8x256xf32>
    %815 = arith.negf %814 : vector<8x256xf32>
    %816 = math.exp %815 : vector<8x256xf32>
    %cst_183 = arith.constant 1.000000e+00 : f32
    %817 = vector.broadcast %cst_183 : f32 to vector<8x256xf32>
    %818 = arith.addf %817, %816 : vector<8x256xf32>
    %819 = arith.divf %817, %818 : vector<8x256xf32>
    %820 = vector.extract_strided_slice %809 {offsets = [0, 256], sizes = [8, 256], strides = [1, 1]} : vector<8x768xf32> to vector<8x256xf32>
    %821 = vector.extract_strided_slice %811 {offsets = [0, 256], sizes = [8, 256], strides = [1, 1]} : vector<8x768xf32> to vector<8x256xf32>
    %822 = arith.addf %820, %821 : vector<8x256xf32>
    %823 = arith.negf %822 : vector<8x256xf32>
    %824 = math.exp %823 : vector<8x256xf32>
    %cst_184 = arith.constant 1.000000e+00 : f32
    %825 = vector.broadcast %cst_184 : f32 to vector<8x256xf32>
    %826 = arith.addf %825, %824 : vector<8x256xf32>
    %827 = arith.divf %825, %826 : vector<8x256xf32>
    %828 = vector.extract_strided_slice %809 {offsets = [0, 512], sizes = [8, 256], strides = [1, 1]} : vector<8x768xf32> to vector<8x256xf32>
    %829 = vector.extract_strided_slice %811 {offsets = [0, 512], sizes = [8, 256], strides = [1, 1]} : vector<8x768xf32> to vector<8x256xf32>
    %830 = vector.broadcast %807 : vector<1x256xf32> to vector<8x256xf32>
    %831 = arith.addf %829, %830 : vector<8x256xf32>
    %832 = arith.mulf %819, %831 : vector<8x256xf32>
    %833 = arith.addf %828, %832 : vector<8x256xf32>
    %834 = math.tanh %833 : vector<8x256xf32>
    %cst_185 = arith.constant 1.000000e+00 : f32
    %835 = vector.broadcast %cst_185 : f32 to vector<8x256xf32>
    %836 = arith.subf %835, %827 : vector<8x256xf32>
    %837 = arith.mulf %836, %834 : vector<8x256xf32>
    %838 = arith.mulf %827, %808 : vector<8x256xf32>
    %839 = arith.addf %837, %838 : vector<8x256xf32>
    %c0_186 = arith.constant 0 : index
    %c0_187 = arith.constant 0 : index
    %840 = vector.load %arg20[%c0_186, %c0_187] : memref<64x256xf32, #tpu.memory_space<vmem>>, vector<8x256xf32>
    tpu.vector_store %arg20[%c0_186, %c0_187], %839 {strides = array<i32>} : memref<64x256xf32, #tpu.memory_space<vmem>>, vector<8x256xf32>,
    %841 = vector.extract_strided_slice %805 {offsets = [8, 0], sizes = [8, 768], strides = [1, 1]} : vector<64x768xf32> to vector<8x768xf32>
    %842 = arith.truncf %839 : vector<8x256xf32> to vector<8x256xbf16>
    %cst_188 = arith.constant dense<0.000000e+00> : vector<8x768xf32>
    %843 = tpu.matmul %842, %806, %cst_188 {dimension_numbers = #tpu.dot_dimension_numbers<[1], [0], [0], [1], [0, 0, 1, 1], [], []>} : vector<8x256xbf16>, vector<256x768xbf16>, vector<8x768xf32> -> vector<8x768xf32>
    %844 = vector.extract_strided_slice %841 {offsets = [0, 0], sizes = [8, 256], strides = [1, 1]} : vector<8x768xf32> to vector<8x256xf32>
    %845 = vector.extract_strided_slice %843 {offsets = [0, 0], sizes = [8, 256], strides = [1, 1]} : vector<8x768xf32> to vector<8x256xf32>
    %846 = arith.addf %844, %845 : vector<8x256xf32>
    %847 = arith.negf %846 : vector<8x256xf32>
    %848 = math.exp %847 : vector<8x256xf32>
    %cst_189 = arith.constant 1.000000e+00 : f32
    %849 = vector.broadcast %cst_189 : f32 to vector<8x256xf32>
    %850 = arith.addf %849, %848 : vector<8x256xf32>
    %851 = arith.divf %849, %850 : vector<8x256xf32>
    %852 = vector.extract_strided_slice %841 {offsets = [0, 256], sizes = [8, 256], strides = [1, 1]} : vector<8x768xf32> to vector<8x256xf32>
    %853 = vector.extract_strided_slice %843 {offsets = [0, 256], sizes = [8, 256], strides = [1, 1]} : vector<8x768xf32> to vector<8x256xf32>
    %854 = arith.addf %852, %853 : vector<8x256xf32>
    %855 = arith.negf %854 : vector<8x256xf32>
    %856 = math.exp %855 : vector<8x256xf32>
    %cst_190 = arith.constant 1.000000e+00 : f32
    %857 = vector.broadcast %cst_190 : f32 to vector<8x256xf32>
    %858 = arith.addf %857, %856 : vector<8x256xf32>
    %859 = arith.divf %857, %858 : vector<8x256xf32>
    %860 = vector.extract_strided_slice %841 {offsets = [0, 512], sizes = [8, 256], strides = [1, 1]} : vector<8x768xf32> to vector<8x256xf32>
    %861 = vector.extract_strided_slice %843 {offsets = [0, 512], sizes = [8, 256], strides = [1, 1]} : vector<8x768xf32> to vector<8x256xf32>
    %862 = vector.broadcast %807 : vector<1x256xf32> to vector<8x256xf32>
    %863 = arith.addf %861, %862 : vector<8x256xf32>
    %864 = arith.mulf %851, %863 : vector<8x256xf32>
    %865 = arith.addf %860, %864 : vector<8x256xf32>
    %866 = math.tanh %865 : vector<8x256xf32>
    %cst_191 = arith.constant 1.000000e+00 : f32
    %867 = vector.broadcast %cst_191 : f32 to vector<8x256xf32>
    %868 = arith.subf %867, %859 : vector<8x256xf32>
    %869 = arith.mulf %868, %866 : vector<8x256xf32>
    %870 = arith.mulf %859, %839 : vector<8x256xf32>
    %871 = arith.addf %869, %870 : vector<8x256xf32>
    %c8_192 = arith.constant 8 : index
    %c0_193 = arith.constant 0 : index
    %872 = vector.load %arg20[%c8_192, %c0_193] : memref<64x256xf32, #tpu.memory_space<vmem>>, vector<8x256xf32>
    tpu.vector_store %arg20[%c8_192, %c0_193], %871 {strides = array<i32>} : memref<64x256xf32, #tpu.memory_space<vmem>>, vector<8x256xf32>,
    %873 = vector.extract_strided_slice %805 {offsets = [16, 0], sizes = [8, 768], strides = [1, 1]} : vector<64x768xf32> to vector<8x768xf32>
    %874 = arith.truncf %871 : vector<8x256xf32> to vector<8x256xbf16>
    %cst_194 = arith.constant dense<0.000000e+00> : vector<8x768xf32>
    %875 = tpu.matmul %874, %806, %cst_194 {dimension_numbers = #tpu.dot_dimension_numbers<[1], [0], [0], [1], [0, 0, 1, 1], [], []>} : vector<8x256xbf16>, vector<256x768xbf16>, vector<8x768xf32> -> vector<8x768xf32>
    %876 = vector.extract_strided_slice %873 {offsets = [0, 0], sizes = [8, 256], strides = [1, 1]} : vector<8x768xf32> to vector<8x256xf32>
    %877 = vector.extract_strided_slice %875 {offsets = [0, 0], sizes = [8, 256], strides = [1, 1]} : vector<8x768xf32> to vector<8x256xf32>
    %878 = arith.addf %876, %877 : vector<8x256xf32>
    %879 = arith.negf %878 : vector<8x256xf32>
    %880 = math.exp %879 : vector<8x256xf32>
    %cst_195 = arith.constant 1.000000e+00 : f32
    %881 = vector.broadcast %cst_195 : f32 to vector<8x256xf32>
    %882 = arith.addf %881, %880 : vector<8x256xf32>
    %883 = arith.divf %881, %882 : vector<8x256xf32>
    %884 = vector.extract_strided_slice %873 {offsets = [0, 256], sizes = [8, 256], strides = [1, 1]} : vector<8x768xf32> to vector<8x256xf32>
    %885 = vector.extract_strided_slice %875 {offsets = [0, 256], sizes = [8, 256], strides = [1, 1]} : vector<8x768xf32> to vector<8x256xf32>
    %886 = arith.addf %884, %885 : vector<8x256xf32>
    %887 = arith.negf %886 : vector<8x256xf32>
    %888 = math.exp %887 : vector<8x256xf32>
    %cst_196 = arith.constant 1.000000e+00 : f32
    %889 = vector.broadcast %cst_196 : f32 to vector<8x256xf32>
    %890 = arith.addf %889, %888 : vector<8x256xf32>
    %891 = arith.divf %889, %890 : vector<8x256xf32>
    %892 = vector.extract_strided_slice %873 {offsets = [0, 512], sizes = [8, 256], strides = [1, 1]} : vector<8x768xf32> to vector<8x256xf32>
    %893 = vector.extract_strided_slice %875 {offsets = [0, 512], sizes = [8, 256], strides = [1, 1]} : vector<8x768xf32> to vector<8x256xf32>
    %894 = vector.broadcast %807 : vector<1x256xf32> to vector<8x256xf32>
    %895 = arith.addf %893, %894 : vector<8x256xf32>
    %896 = arith.mulf %883, %895 : vector<8x256xf32>
    %897 = arith.addf %892, %896 : vector<8x256xf32>
    %898 = math.tanh %897 : vector<8x256xf32>
    %cst_197 = arith.constant 1.000000e+00 : f32
    %899 = vector.broadcast %cst_197 : f32 to vector<8x256xf32>
    %900 = arith.subf %899, %891 : vector<8x256xf32>
    %901 = arith.mulf %900, %898 : vector<8x256xf32>
    %902 = arith.mulf %891, %871 : vector<8x256xf32>
    %903 = arith.addf %901, %902 : vector<8x256xf32>
    %c16_198 = arith.constant 16 : index
    %c0_199 = arith.constant 0 : index
    %904 = vector.load %arg20[%c16_198, %c0_199] : memref<64x256xf32, #tpu.memory_space<vmem>>, vector<8x256xf32>
    tpu.vector_store %arg20[%c16_198, %c0_199], %903 {strides = array<i32>} : memref<64x256xf32, #tpu.memory_space<vmem>>, vector<8x256xf32>,
    %905 = vector.extract_strided_slice %805 {offsets = [24, 0], sizes = [8, 768], strides = [1, 1]} : vector<64x768xf32> to vector<8x768xf32>
    %906 = arith.truncf %903 : vector<8x256xf32> to vector<8x256xbf16>
    %cst_200 = arith.constant dense<0.000000e+00> : vector<8x768xf32>
    %907 = tpu.matmul %906, %806, %cst_200 {dimension_numbers = #tpu.dot_dimension_numbers<[1], [0], [0], [1], [0, 0, 1, 1], [], []>} : vector<8x256xbf16>, vector<256x768xbf16>, vector<8x768xf32> -> vector<8x768xf32>
    %908 = vector.extract_strided_slice %905 {offsets = [0, 0], sizes = [8, 256], strides = [1, 1]} : vector<8x768xf32> to vector<8x256xf32>
    %909 = vector.extract_strided_slice %907 {offsets = [0, 0], sizes = [8, 256], strides = [1, 1]} : vector<8x768xf32> to vector<8x256xf32>
    %910 = arith.addf %908, %909 : vector<8x256xf32>
    %911 = arith.negf %910 : vector<8x256xf32>
    %912 = math.exp %911 : vector<8x256xf32>
    %cst_201 = arith.constant 1.000000e+00 : f32
    %913 = vector.broadcast %cst_201 : f32 to vector<8x256xf32>
    %914 = arith.addf %913, %912 : vector<8x256xf32>
    %915 = arith.divf %913, %914 : vector<8x256xf32>
    %916 = vector.extract_strided_slice %905 {offsets = [0, 256], sizes = [8, 256], strides = [1, 1]} : vector<8x768xf32> to vector<8x256xf32>
    %917 = vector.extract_strided_slice %907 {offsets = [0, 256], sizes = [8, 256], strides = [1, 1]} : vector<8x768xf32> to vector<8x256xf32>
    %918 = arith.addf %916, %917 : vector<8x256xf32>
    %919 = arith.negf %918 : vector<8x256xf32>
    %920 = math.exp %919 : vector<8x256xf32>
    %cst_202 = arith.constant 1.000000e+00 : f32
    %921 = vector.broadcast %cst_202 : f32 to vector<8x256xf32>
    %922 = arith.addf %921, %920 : vector<8x256xf32>
    %923 = arith.divf %921, %922 : vector<8x256xf32>
    %924 = vector.extract_strided_slice %905 {offsets = [0, 512], sizes = [8, 256], strides = [1, 1]} : vector<8x768xf32> to vector<8x256xf32>
    %925 = vector.extract_strided_slice %907 {offsets = [0, 512], sizes = [8, 256], strides = [1, 1]} : vector<8x768xf32> to vector<8x256xf32>
    %926 = vector.broadcast %807 : vector<1x256xf32> to vector<8x256xf32>
    %927 = arith.addf %925, %926 : vector<8x256xf32>
    %928 = arith.mulf %915, %927 : vector<8x256xf32>
    %929 = arith.addf %924, %928 : vector<8x256xf32>
    %930 = math.tanh %929 : vector<8x256xf32>
    %cst_203 = arith.constant 1.000000e+00 : f32
    %931 = vector.broadcast %cst_203 : f32 to vector<8x256xf32>
    %932 = arith.subf %931, %923 : vector<8x256xf32>
    %933 = arith.mulf %932, %930 : vector<8x256xf32>
    %934 = arith.mulf %923, %903 : vector<8x256xf32>
    %935 = arith.addf %933, %934 : vector<8x256xf32>
    %c24_204 = arith.constant 24 : index
    %c0_205 = arith.constant 0 : index
    %936 = vector.load %arg20[%c24_204, %c0_205] : memref<64x256xf32, #tpu.memory_space<vmem>>, vector<8x256xf32>
    tpu.vector_store %arg20[%c24_204, %c0_205], %935 {strides = array<i32>} : memref<64x256xf32, #tpu.memory_space<vmem>>, vector<8x256xf32>,
    %937 = vector.extract_strided_slice %805 {offsets = [32, 0], sizes = [8, 768], strides = [1, 1]} : vector<64x768xf32> to vector<8x768xf32>
    %938 = arith.truncf %935 : vector<8x256xf32> to vector<8x256xbf16>
    %cst_206 = arith.constant dense<0.000000e+00> : vector<8x768xf32>
    %939 = tpu.matmul %938, %806, %cst_206 {dimension_numbers = #tpu.dot_dimension_numbers<[1], [0], [0], [1], [0, 0, 1, 1], [], []>} : vector<8x256xbf16>, vector<256x768xbf16>, vector<8x768xf32> -> vector<8x768xf32>
    %940 = vector.extract_strided_slice %937 {offsets = [0, 0], sizes = [8, 256], strides = [1, 1]} : vector<8x768xf32> to vector<8x256xf32>
    %941 = vector.extract_strided_slice %939 {offsets = [0, 0], sizes = [8, 256], strides = [1, 1]} : vector<8x768xf32> to vector<8x256xf32>
    %942 = arith.addf %940, %941 : vector<8x256xf32>
    %943 = arith.negf %942 : vector<8x256xf32>
    %944 = math.exp %943 : vector<8x256xf32>
    %cst_207 = arith.constant 1.000000e+00 : f32
    %945 = vector.broadcast %cst_207 : f32 to vector<8x256xf32>
    %946 = arith.addf %945, %944 : vector<8x256xf32>
    %947 = arith.divf %945, %946 : vector<8x256xf32>
    %948 = vector.extract_strided_slice %937 {offsets = [0, 256], sizes = [8, 256], strides = [1, 1]} : vector<8x768xf32> to vector<8x256xf32>
    %949 = vector.extract_strided_slice %939 {offsets = [0, 256], sizes = [8, 256], strides = [1, 1]} : vector<8x768xf32> to vector<8x256xf32>
    %950 = arith.addf %948, %949 : vector<8x256xf32>
    %951 = arith.negf %950 : vector<8x256xf32>
    %952 = math.exp %951 : vector<8x256xf32>
    %cst_208 = arith.constant 1.000000e+00 : f32
    %953 = vector.broadcast %cst_208 : f32 to vector<8x256xf32>
    %954 = arith.addf %953, %952 : vector<8x256xf32>
    %955 = arith.divf %953, %954 : vector<8x256xf32>
    %956 = vector.extract_strided_slice %937 {offsets = [0, 512], sizes = [8, 256], strides = [1, 1]} : vector<8x768xf32> to vector<8x256xf32>
    %957 = vector.extract_strided_slice %939 {offsets = [0, 512], sizes = [8, 256], strides = [1, 1]} : vector<8x768xf32> to vector<8x256xf32>
    %958 = vector.broadcast %807 : vector<1x256xf32> to vector<8x256xf32>
    %959 = arith.addf %957, %958 : vector<8x256xf32>
    %960 = arith.mulf %947, %959 : vector<8x256xf32>
    %961 = arith.addf %956, %960 : vector<8x256xf32>
    %962 = math.tanh %961 : vector<8x256xf32>
    %cst_209 = arith.constant 1.000000e+00 : f32
    %963 = vector.broadcast %cst_209 : f32 to vector<8x256xf32>
    %964 = arith.subf %963, %955 : vector<8x256xf32>
    %965 = arith.mulf %964, %962 : vector<8x256xf32>
    %966 = arith.mulf %955, %935 : vector<8x256xf32>
    %967 = arith.addf %965, %966 : vector<8x256xf32>
    %c32_210 = arith.constant 32 : index
    %c0_211 = arith.constant 0 : index
    %968 = vector.load %arg20[%c32_210, %c0_211] : memref<64x256xf32, #tpu.memory_space<vmem>>, vector<8x256xf32>
    tpu.vector_store %arg20[%c32_210, %c0_211], %967 {strides = array<i32>} : memref<64x256xf32, #tpu.memory_space<vmem>>, vector<8x256xf32>,
    %969 = vector.extract_strided_slice %805 {offsets = [40, 0], sizes = [8, 768], strides = [1, 1]} : vector<64x768xf32> to vector<8x768xf32>
    %970 = arith.truncf %967 : vector<8x256xf32> to vector<8x256xbf16>
    %cst_212 = arith.constant dense<0.000000e+00> : vector<8x768xf32>
    %971 = tpu.matmul %970, %806, %cst_212 {dimension_numbers = #tpu.dot_dimension_numbers<[1], [0], [0], [1], [0, 0, 1, 1], [], []>} : vector<8x256xbf16>, vector<256x768xbf16>, vector<8x768xf32> -> vector<8x768xf32>
    %972 = vector.extract_strided_slice %969 {offsets = [0, 0], sizes = [8, 256], strides = [1, 1]} : vector<8x768xf32> to vector<8x256xf32>
    %973 = vector.extract_strided_slice %971 {offsets = [0, 0], sizes = [8, 256], strides = [1, 1]} : vector<8x768xf32> to vector<8x256xf32>
    %974 = arith.addf %972, %973 : vector<8x256xf32>
    %975 = arith.negf %974 : vector<8x256xf32>
    %976 = math.exp %975 : vector<8x256xf32>
    %cst_213 = arith.constant 1.000000e+00 : f32
    %977 = vector.broadcast %cst_213 : f32 to vector<8x256xf32>
    %978 = arith.addf %977, %976 : vector<8x256xf32>
    %979 = arith.divf %977, %978 : vector<8x256xf32>
    %980 = vector.extract_strided_slice %969 {offsets = [0, 256], sizes = [8, 256], strides = [1, 1]} : vector<8x768xf32> to vector<8x256xf32>
    %981 = vector.extract_strided_slice %971 {offsets = [0, 256], sizes = [8, 256], strides = [1, 1]} : vector<8x768xf32> to vector<8x256xf32>
    %982 = arith.addf %980, %981 : vector<8x256xf32>
    %983 = arith.negf %982 : vector<8x256xf32>
    %984 = math.exp %983 : vector<8x256xf32>
    %cst_214 = arith.constant 1.000000e+00 : f32
    %985 = vector.broadcast %cst_214 : f32 to vector<8x256xf32>
    %986 = arith.addf %985, %984 : vector<8x256xf32>
    %987 = arith.divf %985, %986 : vector<8x256xf32>
    %988 = vector.extract_strided_slice %969 {offsets = [0, 512], sizes = [8, 256], strides = [1, 1]} : vector<8x768xf32> to vector<8x256xf32>
    %989 = vector.extract_strided_slice %971 {offsets = [0, 512], sizes = [8, 256], strides = [1, 1]} : vector<8x768xf32> to vector<8x256xf32>
    %990 = vector.broadcast %807 : vector<1x256xf32> to vector<8x256xf32>
    %991 = arith.addf %989, %990 : vector<8x256xf32>
    %992 = arith.mulf %979, %991 : vector<8x256xf32>
    %993 = arith.addf %988, %992 : vector<8x256xf32>
    %994 = math.tanh %993 : vector<8x256xf32>
    %cst_215 = arith.constant 1.000000e+00 : f32
    %995 = vector.broadcast %cst_215 : f32 to vector<8x256xf32>
    %996 = arith.subf %995, %987 : vector<8x256xf32>
    %997 = arith.mulf %996, %994 : vector<8x256xf32>
    %998 = arith.mulf %987, %967 : vector<8x256xf32>
    %999 = arith.addf %997, %998 : vector<8x256xf32>
    %c40_216 = arith.constant 40 : index
    %c0_217 = arith.constant 0 : index
    %1000 = vector.load %arg20[%c40_216, %c0_217] : memref<64x256xf32, #tpu.memory_space<vmem>>, vector<8x256xf32>
    tpu.vector_store %arg20[%c40_216, %c0_217], %999 {strides = array<i32>} : memref<64x256xf32, #tpu.memory_space<vmem>>, vector<8x256xf32>,
    %1001 = vector.extract_strided_slice %805 {offsets = [48, 0], sizes = [8, 768], strides = [1, 1]} : vector<64x768xf32> to vector<8x768xf32>
    %1002 = arith.truncf %999 : vector<8x256xf32> to vector<8x256xbf16>
    %cst_218 = arith.constant dense<0.000000e+00> : vector<8x768xf32>
    %1003 = tpu.matmul %1002, %806, %cst_218 {dimension_numbers = #tpu.dot_dimension_numbers<[1], [0], [0], [1], [0, 0, 1, 1], [], []>} : vector<8x256xbf16>, vector<256x768xbf16>, vector<8x768xf32> -> vector<8x768xf32>
    %1004 = vector.extract_strided_slice %1001 {offsets = [0, 0], sizes = [8, 256], strides = [1, 1]} : vector<8x768xf32> to vector<8x256xf32>
    %1005 = vector.extract_strided_slice %1003 {offsets = [0, 0], sizes = [8, 256], strides = [1, 1]} : vector<8x768xf32> to vector<8x256xf32>
    %1006 = arith.addf %1004, %1005 : vector<8x256xf32>
    %1007 = arith.negf %1006 : vector<8x256xf32>
    %1008 = math.exp %1007 : vector<8x256xf32>
    %cst_219 = arith.constant 1.000000e+00 : f32
    %1009 = vector.broadcast %cst_219 : f32 to vector<8x256xf32>
    %1010 = arith.addf %1009, %1008 : vector<8x256xf32>
    %1011 = arith.divf %1009, %1010 : vector<8x256xf32>
    %1012 = vector.extract_strided_slice %1001 {offsets = [0, 256], sizes = [8, 256], strides = [1, 1]} : vector<8x768xf32> to vector<8x256xf32>
    %1013 = vector.extract_strided_slice %1003 {offsets = [0, 256], sizes = [8, 256], strides = [1, 1]} : vector<8x768xf32> to vector<8x256xf32>
    %1014 = arith.addf %1012, %1013 : vector<8x256xf32>
    %1015 = arith.negf %1014 : vector<8x256xf32>
    %1016 = math.exp %1015 : vector<8x256xf32>
    %cst_220 = arith.constant 1.000000e+00 : f32
    %1017 = vector.broadcast %cst_220 : f32 to vector<8x256xf32>
    %1018 = arith.addf %1017, %1016 : vector<8x256xf32>
    %1019 = arith.divf %1017, %1018 : vector<8x256xf32>
    %1020 = vector.extract_strided_slice %1001 {offsets = [0, 512], sizes = [8, 256], strides = [1, 1]} : vector<8x768xf32> to vector<8x256xf32>
    %1021 = vector.extract_strided_slice %1003 {offsets = [0, 512], sizes = [8, 256], strides = [1, 1]} : vector<8x768xf32> to vector<8x256xf32>
    %1022 = vector.broadcast %807 : vector<1x256xf32> to vector<8x256xf32>
    %1023 = arith.addf %1021, %1022 : vector<8x256xf32>
    %1024 = arith.mulf %1011, %1023 : vector<8x256xf32>
    %1025 = arith.addf %1020, %1024 : vector<8x256xf32>
    %1026 = math.tanh %1025 : vector<8x256xf32>
    %cst_221 = arith.constant 1.000000e+00 : f32
    %1027 = vector.broadcast %cst_221 : f32 to vector<8x256xf32>
    %1028 = arith.subf %1027, %1019 : vector<8x256xf32>
    %1029 = arith.mulf %1028, %1026 : vector<8x256xf32>
    %1030 = arith.mulf %1019, %999 : vector<8x256xf32>
    %1031 = arith.addf %1029, %1030 : vector<8x256xf32>
    %c48_222 = arith.constant 48 : index
    %c0_223 = arith.constant 0 : index
    %1032 = vector.load %arg20[%c48_222, %c0_223] : memref<64x256xf32, #tpu.memory_space<vmem>>, vector<8x256xf32>
    tpu.vector_store %arg20[%c48_222, %c0_223], %1031 {strides = array<i32>} : memref<64x256xf32, #tpu.memory_space<vmem>>, vector<8x256xf32>,
    %1033 = vector.extract_strided_slice %805 {offsets = [56, 0], sizes = [8, 768], strides = [1, 1]} : vector<64x768xf32> to vector<8x768xf32>
    %1034 = arith.truncf %1031 : vector<8x256xf32> to vector<8x256xbf16>
    %cst_224 = arith.constant dense<0.000000e+00> : vector<8x768xf32>
    %1035 = tpu.matmul %1034, %806, %cst_224 {dimension_numbers = #tpu.dot_dimension_numbers<[1], [0], [0], [1], [0, 0, 1, 1], [], []>} : vector<8x256xbf16>, vector<256x768xbf16>, vector<8x768xf32> -> vector<8x768xf32>
    %1036 = vector.extract_strided_slice %1033 {offsets = [0, 0], sizes = [8, 256], strides = [1, 1]} : vector<8x768xf32> to vector<8x256xf32>
    %1037 = vector.extract_strided_slice %1035 {offsets = [0, 0], sizes = [8, 256], strides = [1, 1]} : vector<8x768xf32> to vector<8x256xf32>
    %1038 = arith.addf %1036, %1037 : vector<8x256xf32>
    %1039 = arith.negf %1038 : vector<8x256xf32>
    %1040 = math.exp %1039 : vector<8x256xf32>
    %cst_225 = arith.constant 1.000000e+00 : f32
    %1041 = vector.broadcast %cst_225 : f32 to vector<8x256xf32>
    %1042 = arith.addf %1041, %1040 : vector<8x256xf32>
    %1043 = arith.divf %1041, %1042 : vector<8x256xf32>
    %1044 = vector.extract_strided_slice %1033 {offsets = [0, 256], sizes = [8, 256], strides = [1, 1]} : vector<8x768xf32> to vector<8x256xf32>
    %1045 = vector.extract_strided_slice %1035 {offsets = [0, 256], sizes = [8, 256], strides = [1, 1]} : vector<8x768xf32> to vector<8x256xf32>
    %1046 = arith.addf %1044, %1045 : vector<8x256xf32>
    %1047 = arith.negf %1046 : vector<8x256xf32>
    %1048 = math.exp %1047 : vector<8x256xf32>
    %cst_226 = arith.constant 1.000000e+00 : f32
    %1049 = vector.broadcast %cst_226 : f32 to vector<8x256xf32>
    %1050 = arith.addf %1049, %1048 : vector<8x256xf32>
    %1051 = arith.divf %1049, %1050 : vector<8x256xf32>
    %1052 = vector.extract_strided_slice %1033 {offsets = [0, 512], sizes = [8, 256], strides = [1, 1]} : vector<8x768xf32> to vector<8x256xf32>
    %1053 = vector.extract_strided_slice %1035 {offsets = [0, 512], sizes = [8, 256], strides = [1, 1]} : vector<8x768xf32> to vector<8x256xf32>
    %1054 = vector.broadcast %807 : vector<1x256xf32> to vector<8x256xf32>
    %1055 = arith.addf %1053, %1054 : vector<8x256xf32>
    %1056 = arith.mulf %1043, %1055 : vector<8x256xf32>
    %1057 = arith.addf %1052, %1056 : vector<8x256xf32>
    %1058 = math.tanh %1057 : vector<8x256xf32>
    %cst_227 = arith.constant 1.000000e+00 : f32
    %1059 = vector.broadcast %cst_227 : f32 to vector<8x256xf32>
    %1060 = arith.subf %1059, %1051 : vector<8x256xf32>
    %1061 = arith.mulf %1060, %1058 : vector<8x256xf32>
    %1062 = arith.mulf %1051, %1031 : vector<8x256xf32>
    %1063 = arith.addf %1061, %1062 : vector<8x256xf32>
    %c56_228 = arith.constant 56 : index
    %c0_229 = arith.constant 0 : index
    %1064 = vector.load %arg20[%c56_228, %c0_229] : memref<64x256xf32, #tpu.memory_space<vmem>>, vector<8x256xf32>
    tpu.vector_store %arg20[%c56_228, %c0_229], %1063 {strides = array<i32>} : memref<64x256xf32, #tpu.memory_space<vmem>>, vector<8x256xf32>,
    %c0_230 = arith.constant 0 : index
    %c0_231 = arith.constant 0 : index
    %1065 = vector.load %arg20[%c0_230, %c0_231] : memref<64x256xf32, #tpu.memory_space<vmem>>, vector<64x256xf32>
    %c0_232 = arith.constant 0 : index
    %c0_233 = arith.constant 0 : index
    %1066 = vector.load %arg17[%c0_232, %c0_233] : memref<256x1xf32, #tpu.memory_space<vmem>>, vector<256x1xf32>
    %cst_234 = arith.constant dense<0.000000e+00> : vector<64x1xf32>
    %1067 = tpu.matmul %1065, %1066, %cst_234 {dimension_numbers = #tpu.dot_dimension_numbers<[1], [0], [0], [1], [0, 0, 1, 1], [], []>} : vector<64x256xf32>, vector<256x1xf32>, vector<64x1xf32> -> vector<64x1xf32>
    %c0_235 = arith.constant 0 : index
    %c0_236 = arith.constant 0 : index
    %1068 = vector.load %arg18[%c0_235, %c0_236] : memref<1x1xf32, #tpu.memory_space<vmem>>, vector<1x1xf32>
    %1069 = vector.broadcast %1068 : vector<1x1xf32> to vector<64x1xf32>
    %1070 = arith.addf %1067, %1069 : vector<64x1xf32>
    %c0_237 = arith.constant 0 : index
    %c0_238 = arith.constant 0 : index
    %1071 = vector.load %arg19[%c0_237, %c0_238] : memref<64x1xf32, #tpu.memory_space<vmem>>, vector<64x1xf32>
    tpu.vector_store %arg19[%c0_237, %c0_238], %1070 {strides = array<i32>} : memref<64x1xf32, #tpu.memory_space<vmem>>, vector<64x1xf32>,
    return
  }
}

</mosaic_0001>

<llo_original>
// kernel: tpu_custom_call.1
$region0: #{tpu_custom_call.1}
  #allocation0 [shape = 'u32[]', space=smem, size = 0x4, offset = 0x4, fixed_abs, tag = 'smem constant byte address 0x4 - core index']
  #allocation1 [shape = 'u32[72,128]{1,0:T(1,128)}', space=vmem, size = 0x9000, scoped, tag = 'internal scratch']
  #allocation2 [shape = 'f32[64,256]{1,0:T(8,128)}', space=vmem, size = 0x10000, scoped, tag = 'scratch operand']
  #allocation3 [shape = 'f32[1,1]{1,0:T(1,128)S(1)}', space=vmem, size = 0x200, scoped, tag = 'scoped memory for tpu_custom_call.1']
  %s0 = inlined_call_operand.vmem [shape: f32[64,1], index: 0, kind: input, shape index: {}]
  %s1 = inlined_call_operand.vmem [shape: f32[1,768], index: 1, kind: input, shape index: {}]
  %s2 = inlined_call_operand.hbm [shape: bf16[256,768], index: 2, kind: input, shape index: {}]
  %s3 = inlined_call_operand.vmem [shape: f32[1,768], index: 3, kind: input, shape index: {}]
  %s4 = inlined_call_operand.vmem [shape: f32[1,256], index: 4, kind: input, shape index: {}]
  %s5 = inlined_call_operand.hbm [shape: bf16[256,384], index: 5, kind: input, shape index: {}]
  %s6 = inlined_call_operand.vmem [shape: bf16[128,384], index: 6, kind: input, shape index: {}]
  %s7 = inlined_call_operand.vmem [shape: f32[1,384], index: 7, kind: input, shape index: {}]
  %s8 = inlined_call_operand.vmem [shape: f32[1,128], index: 8, kind: input, shape index: {}]
  %s9 = inlined_call_operand.hbm [shape: bf16[128,384], index: 9, kind: input, shape index: {}]
  %s10 = inlined_call_operand.hbm [shape: bf16[128,384], index: 10, kind: input, shape index: {}]
  %s11 = inlined_call_operand.vmem [shape: f32[1,384], index: 11, kind: input, shape index: {}]
  %s12 = inlined_call_operand.vmem [shape: f32[1,128], index: 12, kind: input, shape index: {}]
  %s13 = inlined_call_operand.hbm [shape: bf16[128,768], index: 13, kind: input, shape index: {}]
  %s14 = inlined_call_operand.hbm [shape: bf16[256,768], index: 14, kind: input, shape index: {}]
  %s15 = inlined_call_operand.vmem [shape: f32[1,768], index: 15, kind: input, shape index: {}]
  %s16 = inlined_call_operand.vmem [shape: f32[1,256], index: 16, kind: input, shape index: {}]
  %s17 = inlined_call_operand.vmem [shape: f32[256,1], index: 17, kind: input, shape index: {}]
  %s18 = inlined_call_operand.<no memory space> [shape: f32[1,1], index: 18, kind: input, shape index: {}]
  %s19 = inlined_call_operand.vmem [shape: f32[64,1], index: 19, kind: output, shape index: {}]
  %s20 = sld [smem:[#allocation0]]
  $region110: #{tpu_custom_call.1} parent=0
    _
  %s22 = ssub.s32 1, %s20
  %s23 = scalar_select 0, %s22, %s20
  %v24 = vstv %s18
  %25 = vst [vmem:[#allocation3] sm:$0x1] %v24
  $region1: #{tpu_custom_call.1} parent=0
    #allocation4 [shape = 'u8[393216]{0}', space=vmem, size = 0x60000, scoped, tag = 'input window, operand 2, single buffered']
    #allocation5 [shape = 's32[1]{0}', space=sflag, size = 0x4, scoped, tag = 'scoped memory for tpu_custom_call.1']
    #allocation6 [shape = 'u8[196608]{0}', space=vmem, size = 0x30000, scoped, tag = 'input window, operand 5, single buffered']
    #allocation7 [shape = 's32[1]{0}', space=sflag, size = 0x4, scoped, tag = 'scoped memory for tpu_custom_call.1']
    #allocation8 [shape = 'u8[98304]{0}', space=vmem, size = 0x18000, scoped, tag = 'input window, operand 9, single buffered']
    #allocation9 [shape = 'u8[98304]{0}', space=vmem, size = 0x18000, scoped, tag = 'input window, operand 10, single buffered']
    #allocation10 [shape = 's32[1]{0}', space=sflag, size = 0x4, scoped, tag = 'scoped memory for tpu_custom_call.1']
    #allocation11 [shape = 'u8[196608]{0}', space=vmem, size = 0x30000, scoped, tag = 'input window, operand 13, single buffered']
    #allocation12 [shape = 'u8[393216]{0}', space=vmem, size = 0x60000, scoped, tag = 'input window, operand 14, single buffered']
    #allocation13 [shape = 's32[1]{0}', space=sflag, size = 0x4, scoped, tag = 'scoped memory for tpu_custom_call.1']
    %26 = vsyncpa [#allocation5], 0
    %27 = vsyncpa [#allocation7], 0
    %28 = vsyncpa [#allocation10], 0
    %29 = vsyncpa [#allocation13], 0
    // Predicated region
    $region2: #{tpu_custom_call.1} parent=1 // pred_check
      _
    $region3: #{tpu_custom_call.1} parent=1 // pred_check_branch
      %31 = sbr.rel (0) target = $region5
    $region4: #{tpu_custom_call.1} parent=1 // pred_region
      _
    $region5: #{tpu_custom_call.1} parent=1 // pred_fallthru
      _
    // Predicated region
    $region6: #{tpu_custom_call.1} parent=1 // pred_check
      _
    $region7: #{tpu_custom_call.1} parent=1 // pred_check_branch
      %33 = sbr.rel (0) target = $region9
    $region8: #{tpu_custom_call.1} parent=1 // pred_region
      _
    $region9: #{tpu_custom_call.1} parent=1 // pred_fallthru
      _
    // Predicated region
    $region10: #{tpu_custom_call.1} parent=1 // pred_check
      _
    $region11: #{tpu_custom_call.1} parent=1 // pred_check_branch
      %35 = sbr.rel (0) target = $region13
    $region12: #{tpu_custom_call.1} parent=1 // pred_region
      %37 = vsyncadd [#allocation5], 0
      %s38 = sshll.u32 %s2, 4
      %s39 = int_to_ptr.hbm [resolvable:$true] %s38
      %s40 = sshll.u32 [#allocation4], 4
      %s41 = int_to_ptr.vmem [resolvable:$true] %s40
      %46 = dma.hbm_to_vmem [thread:$0]  %s39, 12288, %s41, [#allocation5], 384, 384, 24
    $region13: #{tpu_custom_call.1} parent=1 // pred_fallthru
      _
    // Predicated region
    $region14: #{tpu_custom_call.1} parent=1 // pred_check
      _
    $region15: #{tpu_custom_call.1} parent=1 // pred_check_branch
      %48 = sbr.rel (0) target = $region17
    $region16: #{tpu_custom_call.1} parent=1 // pred_region
      _
    $region17: #{tpu_custom_call.1} parent=1 // pred_fallthru
      _
    // Predicated region
    $region18: #{tpu_custom_call.1} parent=1 // pred_check
      _
    $region19: #{tpu_custom_call.1} parent=1 // pred_check_branch
      %50 = sbr.rel (0) target = $region21
    $region20: #{tpu_custom_call.1} parent=1 // pred_region
      _
    $region21: #{tpu_custom_call.1} parent=1 // pred_fallthru
      _
    // Predicated region
    $region22: #{tpu_custom_call.1} parent=1 // pred_check
      _
    $region23: #{tpu_custom_call.1} parent=1 // pred_check_branch
      %52 = sbr.rel (0) target = $region25
    $region24: #{tpu_custom_call.1} parent=1 // pred_region
      %54 = vsyncadd [#allocation7], 0
      %s55 = sshll.u32 %s5, 4
      %s56 = int_to_ptr.hbm [resolvable:$true] %s55
      %s57 = sshll.u32 [#allocation6], 4
      %s58 = int_to_ptr.vmem [resolvable:$true] %s57
      %63 = dma.hbm_to_vmem [thread:$0]  %s56, 6144, %s58, [#allocation7], 192, 192, 12
    $region25: #{tpu_custom_call.1} parent=1 // pred_fallthru
      _
    // Predicated region
    $region26: #{tpu_custom_call.1} parent=1 // pred_check
      _
    $region27: #{tpu_custom_call.1} parent=1 // pred_check_branch
      %65 = sbr.rel (0) target = $region29
    $region28: #{tpu_custom_call.1} parent=1 // pred_region
      _
    $region29: #{tpu_custom_call.1} parent=1 // pred_fallthru
      _
    // Predicated region
    $region30: #{tpu_custom_call.1} parent=1 // pred_check
      _
    $region31: #{tpu_custom_call.1} parent=1 // pred_check_branch
      %67 = sbr.rel (0) target = $region33
    $region32: #{tpu_custom_call.1} parent=1 // pred_region
      _
    $region33: #{tpu_custom_call.1} parent=1 // pred_fallthru
      _
    // Predicated region
    $region34: #{tpu_custom_call.1} parent=1 // pred_check
      _
    $region35: #{tpu_custom_call.1} parent=1 // pred_check_branch
      %69 = sbr.rel (0) target = $region37
    $region36: #{tpu_custom_call.1} parent=1 // pred_region
      _
    $region37: #{tpu_custom_call.1} parent=1 // pred_fallthru
      _
    // Predicated region
    $region38: #{tpu_custom_call.1} parent=1 // pred_check
      _
    $region39: #{tpu_custom_call.1} parent=1 // pred_check_branch
      %71 = sbr.rel (0) target = $region41
    $region40: #{tpu_custom_call.1} parent=1 // pred_region
      %73 = vsyncadd [#allocation7], 0
      %s74 = sshll.u32 %s9, 4
      %s75 = int_to_ptr.hbm [resolvable:$true] %s74
      %s76 = sshll.u32 [#allocation8], 4
      %s77 = int_to_ptr.vmem [resolvable:$true] %s76
      %82 = dma.hbm_to_vmem [thread:$0]  %s75, 3072, %s77, [#allocation7], 192, 192, 12
    $region41: #{tpu_custom_call.1} parent=1 // pred_fallthru
      _
    // Predicated region
    $region42: #{tpu_custom_call.1} parent=1 // pred_check
      _
    $region43: #{tpu_custom_call.1} parent=1 // pred_check_branch
      %84 = sbr.rel (0) target = $region45
    $region44: #{tpu_custom_call.1} parent=1 // pred_region
      %86 = vsyncadd [#allocation10], 0
      %s87 = sshll.u32 %s10, 4
      %s88 = int_to_ptr.hbm [resolvable:$true] %s87
      %s89 = sshll.u32 [#allocation9], 4
      %s90 = int_to_ptr.vmem [resolvable:$true] %s89
      %95 = dma.hbm_to_vmem [thread:$0]  %s88, 3072, %s90, [#allocation10], 192, 192, 12
    $region45: #{tpu_custom_call.1} parent=1 // pred_fallthru
      _
    // Predicated region
    $region46: #{tpu_custom_call.1} parent=1 // pred_check
      _
    $region47: #{tpu_custom_call.1} parent=1 // pred_check_branch
      %97 = sbr.rel (0) target = $region49
    $region48: #{tpu_custom_call.1} parent=1 // pred_region
      _
    $region49: #{tpu_custom_call.1} parent=1 // pred_fallthru
      _
    // Predicated region
    $region50: #{tpu_custom_call.1} parent=1 // pred_check
      _
    $region51: #{tpu_custom_call.1} parent=1 // pred_check_branch
      %99 = sbr.rel (0) target = $region53
    $region52: #{tpu_custom_call.1} parent=1 // pred_region
      _
    $region53: #{tpu_custom_call.1} parent=1 // pred_fallthru
      _
    // Predicated region
    $region54: #{tpu_custom_call.1} parent=1 // pred_check
      _
    $region55: #{tpu_custom_call.1} parent=1 // pred_check_branch
      %101 = sbr.rel (0) target = $region57
    $region56: #{tpu_custom_call.1} parent=1 // pred_region
      %103 = vsyncadd [#allocation10], 0
      %s104 = sshll.u32 %s13, 4
      %s105 = int_to_ptr.hbm [resolvable:$true] %s104
      %s106 = sshll.u32 [#allocation11], 4
      %s107 = int_to_ptr.vmem [resolvable:$true] %s106
      %112 = dma.hbm_to_vmem [thread:$0]  %s105, 6144, %s107, [#allocation10], 384, 384, 24
    $region57: #{tpu_custom_call.1} parent=1 // pred_fallthru
      _
    // Predicated region
    $region58: #{tpu_custom_call.1} parent=1 // pred_check
      _
    $region59: #{tpu_custom_call.1} parent=1 // pred_check_branch
      %114 = sbr.rel (0) target = $region61
    $region60: #{tpu_custom_call.1} parent=1 // pred_region
      %116 = vsyncadd [#allocation13], 0
      %s117 = sshll.u32 %s14, 4
      %s118 = int_to_ptr.hbm [resolvable:$true] %s117
      %s119 = sshll.u32 [#allocation12], 4
      %s120 = int_to_ptr.vmem [resolvable:$true] %s119
      %125 = dma.hbm_to_vmem [thread:$0]  %s118, 12288, %s120, [#allocation13], 384, 384, 24
    $region61: #{tpu_custom_call.1} parent=1 // pred_fallthru
      _
    // Predicated region
    $region62: #{tpu_custom_call.1} parent=1 // pred_check
      _
    $region63: #{tpu_custom_call.1} parent=1 // pred_check_branch
      %127 = sbr.rel (0) target = $region65
    $region64: #{tpu_custom_call.1} parent=1 // pred_region
      _
    $region65: #{tpu_custom_call.1} parent=1 // pred_fallthru
      _
    // Predicated region
    $region66: #{tpu_custom_call.1} parent=1 // pred_check
      _
    $region67: #{tpu_custom_call.1} parent=1 // pred_check_branch
      %129 = sbr.rel (0) target = $region69
    $region68: #{tpu_custom_call.1} parent=1 // pred_region
      _
    $region69: #{tpu_custom_call.1} parent=1 // pred_fallthru
      _
    // Predicated region
    $region70: #{tpu_custom_call.1} parent=1 // pred_check
      _
    $region71: #{tpu_custom_call.1} parent=1 // pred_check_branch
      %131 = sbr.rel (0) target = $region73
    $region72: #{tpu_custom_call.1} parent=1 // pred_region
      _
    $region73: #{tpu_custom_call.1} parent=1 // pred_fallthru
      _
    // Predicated region
    $region74: #{tpu_custom_call.1} parent=1 // pred_check
      _
    $region75: #{tpu_custom_call.1} parent=1 // pred_check_branch
      %133 = sbr.rel (0) target = $region77
    $region76: #{tpu_custom_call.1} parent=1 // pred_region
      _
    $region77: #{tpu_custom_call.1} parent=1 // pred_fallthru
      _
    // Predicated region
    $region78: #{tpu_custom_call.1} parent=1 // pred_check
      _
    $region79: #{tpu_custom_call.1} parent=1 // pred_check_branch
      %135 = sbr.rel (0) target = $region81
    $region80: #{tpu_custom_call.1} parent=1 // pred_region
      %137 = dma.done [#allocation5], 12288
    $region81: #{tpu_custom_call.1} parent=1 // pred_fallthru
      _
    // Predicated region
    $region82: #{tpu_custom_call.1} parent=1 // pred_check
      _
    $region83: #{tpu_custom_call.1} parent=1 // pred_check_branch
      %139 = sbr.rel (0) target = $region85
    $region84: #{tpu_custom_call.1} parent=1 // pred_region
      %141 = dma.done [#allocation7], 6144
    $region85: #{tpu_custom_call.1} parent=1 // pred_fallthru
      _
    // Predicated region
    $region86: #{tpu_custom_call.1} parent=1 // pred_check
      _
    $region87: #{tpu_custom_call.1} parent=1 // pred_check_branch
      %143 = sbr.rel (0) target = $region89
    $region88: #{tpu_custom_call.1} parent=1 // pred_region
      %145 = dma.done [#allocation7], 3072
    $region89: #{tpu_custom_call.1} parent=1 // pred_fallthru
      _
    // Predicated region
    $region90: #{tpu_custom_call.1} parent=1 // pred_check
      _
    $region91: #{tpu_custom_call.1} parent=1 // pred_check_branch
      %147 = sbr.rel (0) target = $region93
    $region92: #{tpu_custom_call.1} parent=1 // pred_region
      %149 = dma.done [#allocation10], 3072
    $region93: #{tpu_custom_call.1} parent=1 // pred_fallthru
      _
    // Predicated region
    $region94: #{tpu_custom_call.1} parent=1 // pred_check
      _
    $region95: #{tpu_custom_call.1} parent=1 // pred_check_branch
      %151 = sbr.rel (0) target = $region97
    $region96: #{tpu_custom_call.1} parent=1 // pred_region
      %153 = dma.done [#allocation10], 6144
    $region97: #{tpu_custom_call.1} parent=1 // pred_fallthru
      _
    // Predicated region
    $region98: #{tpu_custom_call.1} parent=1 // pred_check
      _
    $region99: #{tpu_custom_call.1} parent=1 // pred_check_branch
      %155 = sbr.rel (0) target = $region101
    $region100: #{tpu_custom_call.1} parent=1 // pred_region
      %157 = dma.done [#allocation13], 12288
    $region101: #{tpu_custom_call.1} parent=1 // pred_fallthru
      _
    %v159 = vld [vmem:[%s0] sm:$0xff]
    %v160 = vld [vmem:[%s0 + $0x8] sm:$0xff]
    %v161 = vld [vmem:[%s0 + $0x10] sm:$0xff]
    %v162 = vld [vmem:[%s0 + $0x18] sm:$0xff]
    %v163 = vld [vmem:[%s0 + $0x20] sm:$0xff]
    %v164 = vld [vmem:[%s0 + $0x28] sm:$0xff]
    %v165 = vld [vmem:[%s0 + $0x30] sm:$0xff]
    %v166 = vld [vmem:[%s0 + $0x38] sm:$0xff]
    %v167 = vld [vmem:[%s1] sm:$0x3f]
    %169 = vset.pattern.permute.xlu0 0
    %170 = vperm.xlu0 %169, %v159
    %v171 = vpop.permute.xlu0 %170
    %174 = vset.pattern.permute.xlu0 0
    %175 = vperm.xlu0 %174, %v160
    %v176 = vpop.permute.xlu0 %175
    %179 = vset.pattern.permute.xlu0 0
    %180 = vperm.xlu0 %179, %v161
    %v181 = vpop.permute.xlu0 %180
    %184 = vset.pattern.permute.xlu0 0
    %185 = vperm.xlu0 %184, %v162
    %v186 = vpop.permute.xlu0 %185
    %189 = vset.pattern.permute.xlu0 0
    %190 = vperm.xlu0 %189, %v163
    %v191 = vpop.permute.xlu0 %190
    %194 = vset.pattern.permute.xlu0 0
    %195 = vperm.xlu0 %194, %v164
    %v196 = vpop.permute.xlu0 %195
    %199 = vset.pattern.permute.xlu0 0
    %200 = vperm.xlu0 %199, %v165
    %v201 = vpop.permute.xlu0 %200
    %204 = vset.pattern.permute.xlu0 0
    %205 = vperm.xlu0 %204, %v166
    %v206 = vpop.permute.xlu0 %205
    %v209 = vperm.slane %v167, 0
    %v210 = vperm.slane %v167, 1
    %v211 = vperm.slane %v167, 2
    %v212 = vperm.slane %v167, 3
    %v213 = vperm.slane %v167, 4
    %v214 = vperm.slane %v167, 5
    %v221 = vmul.f32 %v171, %v209
    %v222 = vmul.f32 %v171, %v210
    %v223 = vmul.f32 %v171, %v211
    %v224 = vmul.f32 %v171, %v212
    %v225 = vmul.f32 %v171, %v213
    %v226 = vmul.f32 %v171, %v214
    %v227 = vmul.f32 %v176, %v209
    %v228 = vmul.f32 %v176, %v210
    %v229 = vmul.f32 %v176, %v211
    %v230 = vmul.f32 %v176, %v212
    %v231 = vmul.f32 %v176, %v213
    %v232 = vmul.f32 %v176, %v214
    %v233 = vmul.f32 %v181, %v209
    %v234 = vmul.f32 %v181, %v210
    %v235 = vmul.f32 %v181, %v211
    %v236 = vmul.f32 %v181, %v212
    %v237 = vmul.f32 %v181, %v213
    %v238 = vmul.f32 %v181, %v214
    %v239 = vmul.f32 %v186, %v209
    %v240 = vmul.f32 %v186, %v210
    %v241 = vmul.f32 %v186, %v211
    %v242 = vmul.f32 %v186, %v212
    %v243 = vmul.f32 %v186, %v213
    %v244 = vmul.f32 %v186, %v214
    %v245 = vmul.f32 %v191, %v209
    %v246 = vmul.f32 %v191, %v210
    %v247 = vmul.f32 %v191, %v211
    %v248 = vmul.f32 %v191, %v212
    %v249 = vmul.f32 %v191, %v213
    %v250 = vmul.f32 %v191, %v214
    %v251 = vmul.f32 %v196, %v209
    %v252 = vmul.f32 %v196, %v210
    %v253 = vmul.f32 %v196, %v211
    %v254 = vmul.f32 %v196, %v212
    %v255 = vmul.f32 %v196, %v213
    %v256 = vmul.f32 %v196, %v214
    %v257 = vmul.f32 %v201, %v209
    %v258 = vmul.f32 %v201, %v210
    %v259 = vmul.f32 %v201, %v211
    %v260 = vmul.f32 %v201, %v212
    %v261 = vmul.f32 %v201, %v213
    %v262 = vmul.f32 %v201, %v214
    %v263 = vmul.f32 %v206, %v209
    %v264 = vmul.f32 %v206, %v210
    %v265 = vmul.f32 %v206, %v211
    %v266 = vmul.f32 %v206, %v212
    %v267 = vmul.f32 %v206, %v213
    %v268 = vmul.f32 %v206, %v214
    %v269 = vld [vmem:[%s3] sm:$0x3f]
    %v271 = vperm.slane %v269, 0
    %v272 = vperm.slane %v269, 1
    %v273 = vperm.slane %v269, 2
    %v274 = vperm.slane %v269, 3
    %v275 = vperm.slane %v269, 4
    %v276 = vperm.slane %v269, 5
    %v283 = vadd.f32 %v221, %v271
    %v284 = vadd.f32 %v222, %v272
    %v285 = vadd.f32 %v223, %v273
    %v286 = vadd.f32 %v224, %v274
    %v287 = vadd.f32 %v225, %v275
    %v288 = vadd.f32 %v226, %v276
    %v289 = vadd.f32 %v227, %v271
    %v290 = vadd.f32 %v228, %v272
    %v291 = vadd.f32 %v229, %v273
    %v292 = vadd.f32 %v230, %v274
    %v293 = vadd.f32 %v231, %v275
    %v294 = vadd.f32 %v232, %v276
    %v295 = vadd.f32 %v233, %v271
    %v296 = vadd.f32 %v234, %v272
    %v297 = vadd.f32 %v235, %v273
    %v298 = vadd.f32 %v236, %v274
    %v299 = vadd.f32 %v237, %v275
    %v300 = vadd.f32 %v238, %v276
    %v301 = vadd.f32 %v239, %v271
    %v302 = vadd.f32 %v240, %v272
    %v303 = vadd.f32 %v241, %v273
    %v304 = vadd.f32 %v242, %v274
    %v305 = vadd.f32 %v243, %v275
    %v306 = vadd.f32 %v244, %v276
    %v307 = vadd.f32 %v245, %v271
    %v308 = vadd.f32 %v246, %v272
    %v309 = vadd.f32 %v247, %v273
    %v310 = vadd.f32 %v248, %v274
    %v311 = vadd.f32 %v249, %v275
    %v312 = vadd.f32 %v250, %v276
    %v313 = vadd.f32 %v251, %v271
    %v314 = vadd.f32 %v252, %v272
    %v315 = vadd.f32 %v253, %v273
    %v316 = vadd.f32 %v254, %v274
    %v317 = vadd.f32 %v255, %v275
    %v318 = vadd.f32 %v256, %v276
    %v319 = vadd.f32 %v257, %v271
    %v320 = vadd.f32 %v258, %v272
    %v321 = vadd.f32 %v259, %v273
    %v322 = vadd.f32 %v260, %v274
    %v323 = vadd.f32 %v261, %v275
    %v324 = vadd.f32 %v262, %v276
    %v325 = vadd.f32 %v263, %v271
    %v326 = vadd.f32 %v264, %v272
    %v327 = vadd.f32 %v265, %v273
    %v328 = vadd.f32 %v266, %v274
    %v329 = vadd.f32 %v267, %v275
    %v330 = vadd.f32 %v268, %v276
    %v331 = vld [vmem:[#allocation4] sm:$0xff]
    %v332 = vld [vmem:[#allocation4 + $0x8] sm:$0xff]
    %v333 = vld [vmem:[#allocation4 + $0x10] sm:$0xff]
    %v334 = vld [vmem:[#allocation4 + $0x18] sm:$0xff]
    %v335 = vld [vmem:[#allocation4 + $0x20] sm:$0xff]
    %v336 = vld [vmem:[#allocation4 + $0x28] sm:$0xff]
    %v337 = vld [vmem:[#allocation4 + $0x30] sm:$0xff]
    %v338 = vld [vmem:[#allocation4 + $0x38] sm:$0xff]
    %v339 = vld [vmem:[#allocation4 + $0x40] sm:$0xff]
    %v340 = vld [vmem:[#allocation4 + $0x48] sm:$0xff]
    %v341 = vld [vmem:[#allocation4 + $0x50] sm:$0xff]
    %v342 = vld [vmem:[#allocation4 + $0x58] sm:$0xff]
    %v343 = vld [vmem:[#allocation4 + $0x60] sm:$0xff]
    %v344 = vld [vmem:[#allocation4 + $0x68] sm:$0xff]
    %v345 = vld [vmem:[#allocation4 + $0x70] sm:$0xff]
    %v346 = vld [vmem:[#allocation4 + $0x78] sm:$0xff]
    %v347 = vld [vmem:[#allocation4 + $0x80] sm:$0xff]
    %v348 = vld [vmem:[#allocation4 + $0x88] sm:$0xff]
    %v349 = vld [vmem:[#allocation4 + $0x90] sm:$0xff]
    %v350 = vld [vmem:[#allocation4 + $0x98] sm:$0xff]
    %v351 = vld [vmem:[#allocation4 + $0xa0] sm:$0xff]
    %v352 = vld [vmem:[#allocation4 + $0xa8] sm:$0xff]
    %v353 = vld [vmem:[#allocation4 + $0xb0] sm:$0xff]
    %v354 = vld [vmem:[#allocation4 + $0xb8] sm:$0xff]
    %v355 = vld [vmem:[#allocation4 + $0xc0] sm:$0xff]
    %v356 = vld [vmem:[#allocation4 + $0xc8] sm:$0xff]
    %v357 = vld [vmem:[#allocation4 + $0xd0] sm:$0xff]
    %v358 = vld [vmem:[#allocation4 + $0xd8] sm:$0xff]
    %v359 = vld [vmem:[#allocation4 + $0xe0] sm:$0xff]
    %v360 = vld [vmem:[#allocation4 + $0xe8] sm:$0xff]
    %v361 = vld [vmem:[#allocation4 + $0xf0] sm:$0xff]
    %v362 = vld [vmem:[#allocation4 + $0xf8] sm:$0xff]
    %v363 = vld [vmem:[#allocation4 + $0x100] sm:$0xff]
    %v364 = vld [vmem:[#allocation4 + $0x108] sm:$0xff]
    %v365 = vld [vmem:[#allocation4 + $0x110] sm:$0xff]
    %v366 = vld [vmem:[#allocation4 + $0x118] sm:$0xff]
    %v367 = vld [vmem:[#allocation4 + $0x120] sm:$0xff]
    %v368 = vld [vmem:[#allocation4 + $0x128] sm:$0xff]
    %v369 = vld [vmem:[#allocation4 + $0x130] sm:$0xff]
    %v370 = vld [vmem:[#allocation4 + $0x138] sm:$0xff]
    %v371 = vld [vmem:[#allocation4 + $0x140] sm:$0xff]
    %v372 = vld [vmem:[#allocation4 + $0x148] sm:$0xff]
    %v373 = vld [vmem:[#allocation4 + $0x150] sm:$0xff]
    %v374 = vld [vmem:[#allocation4 + $0x158] sm:$0xff]
    %v375 = vld [vmem:[#allocation4 + $0x160] sm:$0xff]
    %v376 = vld [vmem:[#allocation4 + $0x168] sm:$0xff]
    %v377 = vld [vmem:[#allocation4 + $0x170] sm:$0xff]
    %v378 = vld [vmem:[#allocation4 + $0x178] sm:$0xff]
    %v379 = vld [vmem:[#allocation4 + $0x180] sm:$0xff]
    %v380 = vld [vmem:[#allocation4 + $0x188] sm:$0xff]
    %v381 = vld [vmem:[#allocation4 + $0x190] sm:$0xff]
    %v382 = vld [vmem:[#allocation4 + $0x198] sm:$0xff]
    %v383 = vld [vmem:[#allocation4 + $0x1a0] sm:$0xff]
    %v384 = vld [vmem:[#allocation4 + $0x1a8] sm:$0xff]
    %v385 = vld [vmem:[#allocation4 + $0x1b0] sm:$0xff]
    %v386 = vld [vmem:[#allocation4 + $0x1b8] sm:$0xff]
    %v387 = vld [vmem:[#allocation4 + $0x1c0] sm:$0xff]
    %v388 = vld [vmem:[#allocation4 + $0x1c8] sm:$0xff]
    %v389 = vld [vmem:[#allocation4 + $0x1d0] sm:$0xff]
    %v390 = vld [vmem:[#allocation4 + $0x1d8] sm:$0xff]
    %v391 = vld [vmem:[#allocation4 + $0x1e0] sm:$0xff]
    %v392 = vld [vmem:[#allocation4 + $0x1e8] sm:$0xff]
    %v393 = vld [vmem:[#allocation4 + $0x1f0] sm:$0xff]
    %v394 = vld [vmem:[#allocation4 + $0x1f8] sm:$0xff]
    %v395 = vld [vmem:[#allocation4 + $0x200] sm:$0xff]
    %v396 = vld [vmem:[#allocation4 + $0x208] sm:$0xff]
    %v397 = vld [vmem:[#allocation4 + $0x210] sm:$0xff]
    %v398 = vld [vmem:[#allocation4 + $0x218] sm:$0xff]
    %v399 = vld [vmem:[#allocation4 + $0x220] sm:$0xff]
    %v400 = vld [vmem:[#allocation4 + $0x228] sm:$0xff]
    %v401 = vld [vmem:[#allocation4 + $0x230] sm:$0xff]
    %v402 = vld [vmem:[#allocation4 + $0x238] sm:$0xff]
    %v403 = vld [vmem:[#allocation4 + $0x240] sm:$0xff]
    %v404 = vld [vmem:[#allocation4 + $0x248] sm:$0xff]
    %v405 = vld [vmem:[#allocation4 + $0x250] sm:$0xff]
    %v406 = vld [vmem:[#allocation4 + $0x258] sm:$0xff]
    %v407 = vld [vmem:[#allocation4 + $0x260] sm:$0xff]
    %v408 = vld [vmem:[#allocation4 + $0x268] sm:$0xff]
    %v409 = vld [vmem:[#allocation4 + $0x270] sm:$0xff]
    %v410 = vld [vmem:[#allocation4 + $0x278] sm:$0xff]
    %v411 = vld [vmem:[#allocation4 + $0x280] sm:$0xff]
    %v412 = vld [vmem:[#allocation4 + $0x288] sm:$0xff]
    %v413 = vld [vmem:[#allocation4 + $0x290] sm:$0xff]
    %v414 = vld [vmem:[#allocation4 + $0x298] sm:$0xff]
    %v415 = vld [vmem:[#allocation4 + $0x2a0] sm:$0xff]
    %v416 = vld [vmem:[#allocation4 + $0x2a8] sm:$0xff]
    %v417 = vld [vmem:[#allocation4 + $0x2b0] sm:$0xff]
    %v418 = vld [vmem:[#allocation4 + $0x2b8] sm:$0xff]
    %v419 = vld [vmem:[#allocation4 + $0x2c0] sm:$0xff]
    %v420 = vld [vmem:[#allocation4 + $0x2c8] sm:$0xff]
    %v421 = vld [vmem:[#allocation4 + $0x2d0] sm:$0xff]
    %v422 = vld [vmem:[#allocation4 + $0x2d8] sm:$0xff]
    %v423 = vld [vmem:[#allocation4 + $0x2e0] sm:$0xff]
    %v424 = vld [vmem:[#allocation4 + $0x2e8] sm:$0xff]
    %v425 = vld [vmem:[#allocation4 + $0x2f0] sm:$0xff]
    %v426 = vld [vmem:[#allocation4 + $0x2f8] sm:$0xff]
    %v427 = vld [vmem:[%s4] sm:$0x3]
    %v524 = vunpack.c.l.b16 %v331
    %v525 = vunpack.c.h.b16 %v331
    %v526 = vunpack.c.l.b16 %v332
    %v527 = vunpack.c.h.b16 %v332
    %v528 = vunpack.c.l.b16 %v333
    %v529 = vunpack.c.h.b16 %v333
    %v530 = vunpack.c.l.b16 %v334
    %v531 = vunpack.c.h.b16 %v334
    %v532 = vunpack.c.l.b16 %v335
    %v533 = vunpack.c.h.b16 %v335
    %v534 = vunpack.c.l.b16 %v336
    %v535 = vunpack.c.h.b16 %v336
    %v536 = vunpack.c.l.b16 %v337
    %v537 = vunpack.c.h.b16 %v337
    %v538 = vunpack.c.l.b16 %v338
    %v539 = vunpack.c.h.b16 %v338
    %v540 = vunpack.c.l.b16 %v339
    %v541 = vunpack.c.h.b16 %v339
    %v542 = vunpack.c.l.b16 %v340
    %v543 = vunpack.c.h.b16 %v340
    %v544 = vunpack.c.l.b16 %v341
    %v545 = vunpack.c.h.b16 %v341
    %v546 = vunpack.c.l.b16 %v342
    %v547 = vunpack.c.h.b16 %v342
    %v548 = vunpack.c.l.b16 %v343
    %v549 = vunpack.c.h.b16 %v343
    %v550 = vunpack.c.l.b16 %v344
    %v551 = vunpack.c.h.b16 %v344
    %v552 = vunpack.c.l.b16 %v345
    %v553 = vunpack.c.h.b16 %v345
    %v554 = vunpack.c.l.b16 %v346
    %v555 = vunpack.c.h.b16 %v346
    %v556 = vunpack.c.l.b16 %v347
    %v557 = vunpack.c.h.b16 %v347
    %v558 = vunpack.c.l.b16 %v348
    %v559 = vunpack.c.h.b16 %v348
    %v560 = vunpack.c.l.b16 %v349
    %v561 = vunpack.c.h.b16 %v349
    %v562 = vunpack.c.l.b16 %v350
    %v563 = vunpack.c.h.b16 %v350
    %v564 = vunpack.c.l.b16 %v351
    %v565 = vunpack.c.h.b16 %v351
    %v566 = vunpack.c.l.b16 %v352
    %v567 = vunpack.c.h.b16 %v352
    %v568 = vunpack.c.l.b16 %v353
    %v569 = vunpack.c.h.b16 %v353
    %v570 = vunpack.c.l.b16 %v354
    %v571 = vunpack.c.h.b16 %v354
    %v572 = vunpack.c.l.b16 %v355
    %v573 = vunpack.c.h.b16 %v355
    %v574 = vunpack.c.l.b16 %v356
    %v575 = vunpack.c.h.b16 %v356
    %v576 = vunpack.c.l.b16 %v357
    %v577 = vunpack.c.h.b16 %v357
    %v578 = vunpack.c.l.b16 %v358
    %v579 = vunpack.c.h.b16 %v358
    %v580 = vunpack.c.l.b16 %v359
    %v581 = vunpack.c.h.b16 %v359
    %v582 = vunpack.c.l.b16 %v360
    %v583 = vunpack.c.h.b16 %v360
    %v584 = vunpack.c.l.b16 %v361
    %v585 = vunpack.c.h.b16 %v361
    %v586 = vunpack.c.l.b16 %v362
    %v587 = vunpack.c.h.b16 %v362
    %v588 = vunpack.c.l.b16 %v363
    %v589 = vunpack.c.h.b16 %v363
    %v590 = vunpack.c.l.b16 %v364
    %v591 = vunpack.c.h.b16 %v364
    %v592 = vunpack.c.l.b16 %v365
    %v593 = vunpack.c.h.b16 %v365
    %v594 = vunpack.c.l.b16 %v366
    %v595 = vunpack.c.h.b16 %v366
    %v596 = vunpack.c.l.b16 %v367
    %v597 = vunpack.c.h.b16 %v367
    %v598 = vunpack.c.l.b16 %v368
    %v599 = vunpack.c.h.b16 %v368
    %v600 = vunpack.c.l.b16 %v369
    %v601 = vunpack.c.h.b16 %v369
    %v602 = vunpack.c.l.b16 %v370
    %v603 = vunpack.c.h.b16 %v370
    %v604 = vunpack.c.l.b16 %v371
    %v605 = vunpack.c.h.b16 %v371
    %v606 = vunpack.c.l.b16 %v372
    %v607 = vunpack.c.h.b16 %v372
    %v608 = vunpack.c.l.b16 %v373
    %v609 = vunpack.c.h.b16 %v373
    %v610 = vunpack.c.l.b16 %v374
    %v611 = vunpack.c.h.b16 %v374
    %v612 = vunpack.c.l.b16 %v375
    %v613 = vunpack.c.h.b16 %v375
    %v614 = vunpack.c.l.b16 %v376
    %v615 = vunpack.c.h.b16 %v376
    %v616 = vunpack.c.l.b16 %v377
    %v617 = vunpack.c.h.b16 %v377
    %v618 = vunpack.c.l.b16 %v378
    %v619 = vunpack.c.h.b16 %v378
    %v620 = vunpack.c.l.b16 %v379
    %v621 = vunpack.c.h.b16 %v379
    %v622 = vunpack.c.l.b16 %v380
    %v623 = vunpack.c.h.b16 %v380
    %v624 = vunpack.c.l.b16 %v381
    %v625 = vunpack.c.h.b16 %v381
    %v626 = vunpack.c.l.b16 %v382
    %v627 = vunpack.c.h.b16 %v382
    %v628 = vunpack.c.l.b16 %v383
    %v629 = vunpack.c.h.b16 %v383
    %v630 = vunpack.c.l.b16 %v384
    %v631 = vunpack.c.h.b16 %v384
    %v632 = vunpack.c.l.b16 %v385
    %v633 = vunpack.c.h.b16 %v385
    %v634 = vunpack.c.l.b16 %v386
    %v635 = vunpack.c.h.b16 %v386
    %v636 = vunpack.c.l.b16 %v387
    %v637 = vunpack.c.h.b16 %v387
    %v638 = vunpack.c.l.b16 %v388
    %v639 = vunpack.c.h.b16 %v388
    %v640 = vunpack.c.l.b16 %v389
    %v641 = vunpack.c.h.b16 %v389
    %v642 = vunpack.c.l.b16 %v390
    %v643 = vunpack.c.h.b16 %v390
    %v644 = vunpack.c.l.b16 %v391
    %v645 = vunpack.c.h.b16 %v391
    %v646 = vunpack.c.l.b16 %v392
    %v647 = vunpack.c.h.b16 %v392
    %v648 = vunpack.c.l.b16 %v393
    %v649 = vunpack.c.h.b16 %v393
    %v650 = vunpack.c.l.b16 %v394
    %v651 = vunpack.c.h.b16 %v394
    %v652 = vunpack.c.l.b16 %v395
    %v653 = vunpack.c.h.b16 %v395
    %v654 = vunpack.c.l.b16 %v396
    %v655 = vunpack.c.h.b16 %v396
    %v656 = vunpack.c.l.b16 %v397
    %v657 = vunpack.c.h.b16 %v397
    %v658 = vunpack.c.l.b16 %v398
    %v659 = vunpack.c.h.b16 %v398
    %v660 = vunpack.c.l.b16 %v399
    %v661 = vunpack.c.h.b16 %v399
    %v662 = vunpack.c.l.b16 %v400
    %v663 = vunpack.c.h.b16 %v400
    %v664 = vunpack.c.l.b16 %v401
    %v665 = vunpack.c.h.b16 %v401
    %v666 = vunpack.c.l.b16 %v402
    %v667 = vunpack.c.h.b16 %v402
    %v668 = vunpack.c.l.b16 %v403
    %v669 = vunpack.c.h.b16 %v403
    %v670 = vunpack.c.l.b16 %v404
    %v671 = vunpack.c.h.b16 %v404
    %v672 = vunpack.c.l.b16 %v405
    %v673 = vunpack.c.h.b16 %v405
    %v674 = vunpack.c.l.b16 %v406
    %v675 = vunpack.c.h.b16 %v406
    %v676 = vunpack.c.l.b16 %v407
    %v677 = vunpack.c.h.b16 %v407
    %v678 = vunpack.c.l.b16 %v408
    %v679 = vunpack.c.h.b16 %v408
    %v680 = vunpack.c.l.b16 %v409
    %v681 = vunpack.c.h.b16 %v409
    %v682 = vunpack.c.l.b16 %v410
    %v683 = vunpack.c.h.b16 %v410
    %v684 = vunpack.c.l.b16 %v411
    %v685 = vunpack.c.h.b16 %v411
    %v686 = vunpack.c.l.b16 %v412
    %v687 = vunpack.c.h.b16 %v412
    %v688 = vunpack.c.l.b16 %v413
    %v689 = vunpack.c.h.b16 %v413
    %v690 = vunpack.c.l.b16 %v414
    %v691 = vunpack.c.h.b16 %v414
    %v692 = vunpack.c.l.b16 %v415
    %v693 = vunpack.c.h.b16 %v415
    %v694 = vunpack.c.l.b16 %v416
    %v695 = vunpack.c.h.b16 %v416
    %v696 = vunpack.c.l.b16 %v417
    %v697 = vunpack.c.h.b16 %v417
    %v698 = vunpack.c.l.b16 %v418
    %v699 = vunpack.c.h.b16 %v418
    %v700 = vunpack.c.l.b16 %v419
    %v701 = vunpack.c.h.b16 %v419
    %v702 = vunpack.c.l.b16 %v420
    %v703 = vunpack.c.h.b16 %v420
    %v704 = vunpack.c.l.b16 %v421
    %v705 = vunpack.c.h.b16 %v421
    %v706 = vunpack.c.l.b16 %v422
    %v707 = vunpack.c.h.b16 %v422
    %v708 = vunpack.c.l.b16 %v423
    %v709 = vunpack.c.h.b16 %v423
    %v710 = vunpack.c.l.b16 %v424
    %v711 = vunpack.c.h.b16 %v424
    %v712 = vunpack.c.l.b16 %v425
    %v713 = vunpack.c.h.b16 %v425
    %v714 = vunpack.c.l.b16 %v426
    %v715 = vunpack.c.h.b16 %v426
    %v716 = vpack.c.b16 %v530, %v524
    %v717 = vpack.c.b16 %v531, %v525
    %v718 = vpack.c.b16 %v532, %v526
    %v719 = vpack.c.b16 %v533, %v527
    %v720 = vpack.c.b16 %v534, %v528
    %v721 = vpack.c.b16 %v535, %v529
    %v722 = vpack.c.b16 %v542, %v536
    %v723 = vpack.c.b16 %v543, %v537
    %v724 = vpack.c.b16 %v544, %v538
    %v725 = vpack.c.b16 %v545, %v539
    %v726 = vpack.c.b16 %v546, %v540
    %v727 = vpack.c.b16 %v547, %v541
    %v728 = vpack.c.b16 %v554, %v548
    %v729 = vpack.c.b16 %v555, %v549
    %v730 = vpack.c.b16 %v556, %v550
    %v731 = vpack.c.b16 %v557, %v551
    %v732 = vpack.c.b16 %v558, %v552
    %v733 = vpack.c.b16 %v559, %v553
    %v734 = vpack.c.b16 %v566, %v560
    %v735 = vpack.c.b16 %v567, %v561
    %v736 = vpack.c.b16 %v568, %v562
    %v737 = vpack.c.b16 %v569, %v563
    %v738 = vpack.c.b16 %v570, %v564
    %v739 = vpack.c.b16 %v571, %v565
    %v740 = vpack.c.b16 %v578, %v572
    %v741 = vpack.c.b16 %v579, %v573
    %v742 = vpack.c.b16 %v580, %v574
    %v743 = vpack.c.b16 %v581, %v575
    %v744 = vpack.c.b16 %v582, %v576
    %v745 = vpack.c.b16 %v583, %v577
    %v746 = vpack.c.b16 %v590, %v584
    %v747 = vpack.c.b16 %v591, %v585
    %v748 = vpack.c.b16 %v592, %v586
    %v749 = vpack.c.b16 %v593, %v587
    %v750 = vpack.c.b16 %v594, %v588
    %v751 = vpack.c.b16 %v595, %v589
    %v752 = vpack.c.b16 %v602, %v596
    %v753 = vpack.c.b16 %v603, %v597
    %v754 = vpack.c.b16 %v604, %v598
    %v755 = vpack.c.b16 %v605, %v599
    %v756 = vpack.c.b16 %v606, %v600
    %v757 = vpack.c.b16 %v607, %v601
    %v758 = vpack.c.b16 %v614, %v608
    %v759 = vpack.c.b16 %v615, %v609
    %v760 = vpack.c.b16 %v616, %v610
    %v761 = vpack.c.b16 %v617, %v611
    %v762 = vpack.c.b16 %v618, %v612
    %v763 = vpack.c.b16 %v619, %v613
    %v764 = vpack.c.b16 %v626, %v620
    %v765 = vpack.c.b16 %v627, %v621
    %v766 = vpack.c.b16 %v628, %v622
    %v767 = vpack.c.b16 %v629, %v623
    %v768 = vpack.c.b16 %v630, %v624
    %v769 = vpack.c.b16 %v631, %v625
    %v770 = vpack.c.b16 %v638, %v632
    %v771 = vpack.c.b16 %v639, %v633
    %v772 = vpack.c.b16 %v640, %v634
    %v773 = vpack.c.b16 %v641, %v635
    %v774 = vpack.c.b16 %v642, %v636
    %v775 = vpack.c.b16 %v643, %v637
    %v776 = vpack.c.b16 %v650, %v644
    %v777 = vpack.c.b16 %v651, %v645
    %v778 = vpack.c.b16 %v652, %v646
    %v779 = vpack.c.b16 %v653, %v647
    %v780 = vpack.c.b16 %v654, %v648
    %v781 = vpack.c.b16 %v655, %v649
    %v782 = vpack.c.b16 %v662, %v656
    %v783 = vpack.c.b16 %v663, %v657
    %v784 = vpack.c.b16 %v664, %v658
    %v785 = vpack.c.b16 %v665, %v659
    %v786 = vpack.c.b16 %v666, %v660
    %v787 = vpack.c.b16 %v667, %v661
    %v788 = vpack.c.b16 %v674, %v668
    %v789 = vpack.c.b16 %v675, %v669
    %v790 = vpack.c.b16 %v676, %v670
    %v791 = vpack.c.b16 %v677, %v671
    %v792 = vpack.c.b16 %v678, %v672
    %v793 = vpack.c.b16 %v679, %v673
    %v794 = vpack.c.b16 %v686, %v680
    %v795 = vpack.c.b16 %v687, %v681
    %v796 = vpack.c.b16 %v688, %v682
    %v797 = vpack.c.b16 %v689, %v683
    %v798 = vpack.c.b16 %v690, %v684
    %v799 = vpack.c.b16 %v691, %v685
    %v800 = vpack.c.b16 %v698, %v692
    %v801 = vpack.c.b16 %v699, %v693
    %v802 = vpack.c.b16 %v700, %v694
    %v803 = vpack.c.b16 %v701, %v695
    %v804 = vpack.c.b16 %v702, %v696
    %v805 = vpack.c.b16 %v703, %v697
    %v806 = vpack.c.b16 %v710, %v704
    %v807 = vpack.c.b16 %v711, %v705
    %v808 = vpack.c.b16 %v712, %v706
    %v809 = vpack.c.b16 %v713, %v707
    %v810 = vpack.c.b16 %v714, %v708
    %v811 = vpack.c.b16 %v715, %v709
    %908 = vmatpush.bf16.msra.mxu0 %v758
    %909 = vmatpush.bf16.msra.mxu0 %v752
    %910 = vmatpush.bf16.msra.mxu0 %v746
    %911 = vmatpush.bf16.msra.mxu0 %v740
    %912 = vmatpush.bf16.msra.mxu0 %v734
    %913 = vmatpush.bf16.msra.mxu0 %v728
    %914 = vmatpush.bf16.msra.mxu0 %v722
    %915 = vmatpush.bf16.msra.mxu0 %v716
    %916 = vmatmul.bf16.gmra.mxu0 0
    %v917 = vpop.f32.mrf.mxu0
    %v918 = vadd.f32 0.0, %v917
    %v919 = vpop.f32.mrf.mxu0
    %920 = vdwg.mxu0
    %921 = vmatpush.bf16.msra.mxu0 %v806
    %922 = vmatpush.bf16.msra.mxu0 %v800
    %923 = vmatpush.bf16.msra.mxu0 %v794
    %924 = vmatpush.bf16.msra.mxu0 %v788
    %925 = vmatpush.bf16.msra.mxu0 %v782
    %926 = vmatpush.bf16.msra.mxu0 %v776
    %927 = vmatpush.bf16.msra.mxu0 %v770
    %928 = vmatpush.bf16.msra.mxu0 %v764
    %929 = vmatmul.bf16.gmra.mxu0 0
    %v930 = vpop.f32.mrf.mxu0
    %v931 = vadd.f32 %v918, %v930
    %v932 = vpop.f32.mrf.mxu0
    %933 = vdwg.mxu0
    %934 = vmatpush.bf16.msra.mxu0 %v759
    %935 = vmatpush.bf16.msra.mxu0 %v753
    %936 = vmatpush.bf16.msra.mxu0 %v747
    %937 = vmatpush.bf16.msra.mxu0 %v741
    %938 = vmatpush.bf16.msra.mxu0 %v735
    %939 = vmatpush.bf16.msra.mxu0 %v729
    %940 = vmatpush.bf16.msra.mxu0 %v723
    %941 = vmatpush.bf16.msra.mxu0 %v717
    %942 = vmatmul.bf16.gmra.mxu0 0
    %v943 = vpop.f32.mrf.mxu0
    %v944 = vadd.f32 0.0, %v943
    %v945 = vpop.f32.mrf.mxu0
    %946 = vdwg.mxu0
    %947 = vmatpush.bf16.msra.mxu0 %v807
    %948 = vmatpush.bf16.msra.mxu0 %v801
    %949 = vmatpush.bf16.msra.mxu0 %v795
    %950 = vmatpush.bf16.msra.mxu0 %v789
    %951 = vmatpush.bf16.msra.mxu0 %v783
    %952 = vmatpush.bf16.msra.mxu0 %v777
    %953 = vmatpush.bf16.msra.mxu0 %v771
    %954 = vmatpush.bf16.msra.mxu0 %v765
    %955 = vmatmul.bf16.gmra.mxu0 0
    %v956 = vpop.f32.mrf.mxu0
    %v957 = vadd.f32 %v944, %v956
    %v958 = vpop.f32.mrf.mxu0
    %959 = vdwg.mxu0
    %960 = vmatpush.bf16.msra.mxu0 %v760
    %961 = vmatpush.bf16.msra.mxu0 %v754
    %962 = vmatpush.bf16.msra.mxu0 %v748
    %963 = vmatpush.bf16.msra.mxu0 %v742
    %964 = vmatpush.bf16.msra.mxu0 %v736
    %965 = vmatpush.bf16.msra.mxu0 %v730
    %966 = vmatpush.bf16.msra.mxu0 %v724
    %967 = vmatpush.bf16.msra.mxu0 %v718
    %968 = vmatmul.bf16.gmra.mxu0 0
    %v969 = vpop.f32.mrf.mxu0
    %v970 = vadd.f32 0.0, %v969
    %v971 = vpop.f32.mrf.mxu0
    %972 = vdwg.mxu0
    %973 = vmatpush.bf16.msra.mxu0 %v808
    %974 = vmatpush.bf16.msra.mxu0 %v802
    %975 = vmatpush.bf16.msra.mxu0 %v796
    %976 = vmatpush.bf16.msra.mxu0 %v790
    %977 = vmatpush.bf16.msra.mxu0 %v784
    %978 = vmatpush.bf16.msra.mxu0 %v778
    %979 = vmatpush.bf16.msra.mxu0 %v772
    %980 = vmatpush.bf16.msra.mxu0 %v766
    %981 = vmatmul.bf16.gmra.mxu0 0
    %v982 = vpop.f32.mrf.mxu0
    %v983 = vadd.f32 %v970, %v982
    %v984 = vpop.f32.mrf.mxu0
    %985 = vdwg.mxu0
    %986 = vmatpush.bf16.msra.mxu0 %v761
    %987 = vmatpush.bf16.msra.mxu0 %v755
    %988 = vmatpush.bf16.msra.mxu0 %v749
    %989 = vmatpush.bf16.msra.mxu0 %v743
    %990 = vmatpush.bf16.msra.mxu0 %v737
    %991 = vmatpush.bf16.msra.mxu0 %v731
    %992 = vmatpush.bf16.msra.mxu0 %v725
    %993 = vmatpush.bf16.msra.mxu0 %v719
    %994 = vmatmul.bf16.gmra.mxu0 0
    %v995 = vpop.f32.mrf.mxu0
    %v996 = vadd.f32 0.0, %v995
    %v997 = vpop.f32.mrf.mxu0
    %998 = vdwg.mxu0
    %999 = vmatpush.bf16.msra.mxu0 %v809
    %1000 = vmatpush.bf16.msra.mxu0 %v803
    %1001 = vmatpush.bf16.msra.mxu0 %v797
    %1002 = vmatpush.bf16.msra.mxu0 %v791
    %1003 = vmatpush.bf16.msra.mxu0 %v785
    %1004 = vmatpush.bf16.msra.mxu0 %v779
    %1005 = vmatpush.bf16.msra.mxu0 %v773
    %1006 = vmatpush.bf16.msra.mxu0 %v767
    %1007 = vmatmul.bf16.gmra.mxu0 0
    %v1008 = vpop.f32.mrf.mxu0
    %v1009 = vadd.f32 %v996, %v1008
    %v1010 = vpop.f32.mrf.mxu0
    %1011 = vdwg.mxu0
    %1012 = vmatpush.bf16.msra.mxu0 %v762
    %1013 = vmatpush.bf16.msra.mxu0 %v756
    %1014 = vmatpush.bf16.msra.mxu0 %v750
    %1015 = vmatpush.bf16.msra.mxu0 %v744
    %1016 = vmatpush.bf16.msra.mxu0 %v738
    %1017 = vmatpush.bf16.msra.mxu0 %v732
    %1018 = vmatpush.bf16.msra.mxu0 %v726
    %1019 = vmatpush.bf16.msra.mxu0 %v720
    %1020 = vmatmul.bf16.gmra.mxu0 0
    %v1021 = vpop.f32.mrf.mxu0
    %v1022 = vadd.f32 0.0, %v1021
    %v1023 = vpop.f32.mrf.mxu0
    %1024 = vdwg.mxu0
    %1025 = vmatpush.bf16.msra.mxu0 %v810
    %1026 = vmatpush.bf16.msra.mxu0 %v804
    %1027 = vmatpush.bf16.msra.mxu0 %v798
    %1028 = vmatpush.bf16.msra.mxu0 %v792
    %1029 = vmatpush.bf16.msra.mxu0 %v786
    %1030 = vmatpush.bf16.msra.mxu0 %v780
    %1031 = vmatpush.bf16.msra.mxu0 %v774
    %1032 = vmatpush.bf16.msra.mxu0 %v768
    %1033 = vmatmul.bf16.gmra.mxu0 0
    %v1034 = vpop.f32.mrf.mxu0
    %v1035 = vadd.f32 %v1022, %v1034
    %v1036 = vpop.f32.mrf.mxu0
    %1037 = vdwg.mxu0
    %1038 = vmatpush.bf16.msra.mxu0 %v763
    %1039 = vmatpush.bf16.msra.mxu0 %v757
    %1040 = vmatpush.bf16.msra.mxu0 %v751
    %1041 = vmatpush.bf16.msra.mxu0 %v745
    %1042 = vmatpush.bf16.msra.mxu0 %v739
    %1043 = vmatpush.bf16.msra.mxu0 %v733
    %1044 = vmatpush.bf16.msra.mxu0 %v727
    %1045 = vmatpush.bf16.msra.mxu0 %v721
    %1046 = vmatmul.bf16.gmra.mxu0 0
    %v1047 = vpop.f32.mrf.mxu0
    %v1048 = vadd.f32 0.0, %v1047
    %v1049 = vpop.f32.mrf.mxu0
    %1050 = vdwg.mxu0
    %1051 = vmatpush.bf16.msra.mxu0 %v811
    %1052 = vmatpush.bf16.msra.mxu0 %v805
    %1053 = vmatpush.bf16.msra.mxu0 %v799
    %1054 = vmatpush.bf16.msra.mxu0 %v793
    %1055 = vmatpush.bf16.msra.mxu0 %v787
    %1056 = vmatpush.bf16.msra.mxu0 %v781
    %1057 = vmatpush.bf16.msra.mxu0 %v775
    %1058 = vmatpush.bf16.msra.mxu0 %v769
    %1059 = vmatmul.bf16.gmra.mxu0 0
    %v1060 = vpop.f32.mrf.mxu0
    %v1061 = vadd.f32 %v1048, %v1060
    %v1062 = vpop.f32.mrf.mxu0
    %1063 = vdwg.mxu0
    %v1064 = vadd.f32 %v283, %v931
    %v1065 = vadd.f32 %v284, %v957
    %v1066 = vxor.u32 %v1064, 2147483648
    %v1067 = vxor.u32 %v1065, 2147483648
    %v1068 = vmul.f32 %v1066, 1.442695
    %v1069 = vpow.pop %v1068
    %v1070 = vmul.f32 %v1067, 1.442695
    %v1071 = vpow.pop %v1070
    %v1072 = vadd.f32 %v1069, 1.0
    %v1073 = vadd.f32 %v1071, 1.0
    %v1074 = vrcp.pop %v1072
    %v1075 = vmul.f32 %v1072, %v1074
    %v1076 = vsub.f32 1.0, %v1075
    %v1077 = vmul.f32 %v1074, %v1076
    %v1078 = vadd.f32 %v1074, %v1077
    %vm1079 = vweird.f32 %v1072
    %vm1080 = vweird.f32 %v1074
    %vm1081 = vmor %vm1079, %vm1080
    %v1082 = vsel %vm1081, %v1074, %v1078
    %v1083 = vand.u32 2147483647, %v1072
    %vm1084 = vcmp.eq.f32.partialorder %v1083, 8.507059e+37
    %v1085 = vand.u32 %v1072, 2147483648
    %v1086 = vor.u32 1.1754944e-38, %v1085
    %v1087 = vsel %vm1084, %v1086, %v1082
    %v1088 = vmul.f32 1.0, %v1087
    %v1089 = vrcp.pop %v1073
    %v1090 = vmul.f32 %v1073, %v1089
    %v1091 = vsub.f32 1.0, %v1090
    %v1092 = vmul.f32 %v1089, %v1091
    %v1093 = vadd.f32 %v1089, %v1092
    %vm1094 = vweird.f32 %v1073
    %vm1095 = vweird.f32 %v1089
    %vm1096 = vmor %vm1094, %vm1095
    %v1097 = vsel %vm1096, %v1089, %v1093
    %v1098 = vand.u32 2147483647, %v1073
    %vm1099 = vcmp.eq.f32.partialorder %v1098, 8.507059e+37
    %v1100 = vand.u32 %v1073, 2147483648
    %v1101 = vor.u32 1.1754944e-38, %v1100
    %v1102 = vsel %vm1099, %v1101, %v1097
    %v1103 = vmul.f32 1.0, %v1102
    %v1104 = vadd.f32 %v285, %v983
    %v1105 = vadd.f32 %v286, %v1009
    %v1106 = vxor.u32 %v1104, 2147483648
    %v1107 = vxor.u32 %v1105, 2147483648
    %v1108 = vmul.f32 %v1106, 1.442695
    %v1109 = vpow.pop %v1108
    %v1110 = vmul.f32 %v1107, 1.442695
    %v1111 = vpow.pop %v1110
    %v1112 = vadd.f32 %v1109, 1.0
    %v1113 = vadd.f32 %v1111, 1.0
    %v1114 = vrcp.pop %v1112
    %v1115 = vmul.f32 %v1112, %v1114
    %v1116 = vsub.f32 1.0, %v1115
    %v1117 = vmul.f32 %v1114, %v1116
    %v1118 = vadd.f32 %v1114, %v1117
    %vm1119 = vweird.f32 %v1112
    %vm1120 = vweird.f32 %v1114
    %vm1121 = vmor %vm1119, %vm1120
    %v1122 = vsel %vm1121, %v1114, %v1118
    %v1123 = vand.u32 2147483647, %v1112
    %vm1124 = vcmp.eq.f32.partialorder %v1123, 8.507059e+37
    %v1125 = vand.u32 %v1112, 2147483648
    %v1126 = vor.u32 1.1754944e-38, %v1125
    %v1127 = vsel %vm1124, %v1126, %v1122
    %v1128 = vmul.f32 1.0, %v1127
    %v1129 = vrcp.pop %v1113
    %v1130 = vmul.f32 %v1113, %v1129
    %v1131 = vsub.f32 1.0, %v1130
    %v1132 = vmul.f32 %v1129, %v1131
    %v1133 = vadd.f32 %v1129, %v1132
    %vm1134 = vweird.f32 %v1113
    %vm1135 = vweird.f32 %v1129
    %vm1136 = vmor %vm1134, %vm1135
    %v1137 = vsel %vm1136, %v1129, %v1133
    %v1138 = vand.u32 2147483647, %v1113
    %vm1139 = vcmp.eq.f32.partialorder %v1138, 8.507059e+37
    %v1140 = vand.u32 %v1113, 2147483648
    %v1141 = vor.u32 1.1754944e-38, %v1140
    %v1142 = vsel %vm1139, %v1141, %v1137
    %v1143 = vmul.f32 1.0, %v1142
    %v1145 = vperm.slane %v427, 0
    %v1146 = vperm.slane %v427, 1
    %v1149 = vadd.f32 %v1035, %v1145
    %v1150 = vadd.f32 %v1061, %v1146
    %v1151 = vmul.f32 %v1088, %v1149
    %v1152 = vmul.f32 %v1103, %v1150
    %v1153 = vadd.f32 %v287, %v1151
    %v1154 = vadd.f32 %v288, %v1152
    %v1155 = vtanh.pop %v1153
    %v1156 = vtanh.pop %v1154
    %v1157 = vsub.f32 1.0, %v1128
    %v1158 = vsub.f32 1.0, %v1143
    %v1159 = vmul.f32 %v1157, %v1155
    %v1160 = vmul.f32 %v1158, %v1156
    %v1161 = vmul.f32 %v1128, 0.0
    %v1162 = vmul.f32 %v1143, 0.0
    %v1163 = vadd.f32 %v1159, %v1161
    %v1164 = vadd.f32 %v1160, %v1162
    %1165 = vst [vmem:[#allocation2] sm:$0xff] %v1163
    %1166 = vst [vmem:[#allocation2 + $0x8] sm:$0xff] %v1164
    %v1167 = vpack.c.bf16 %v1163, %v1163
    %v1168 = vpack.c.bf16 %v1164, %v1164
    %1169 = vmatpush.bf16.msra.mxu0 %v758
    %1170 = vmatpush.bf16.msra.mxu0 %v752
    %1171 = vmatpush.bf16.msra.mxu0 %v746
    %1172 = vmatpush.bf16.msra.mxu0 %v740
    %1173 = vmatpush.bf16.msra.mxu0 %v734
    %1174 = vmatpush.bf16.msra.mxu0 %v728
    %1175 = vmatpush.bf16.msra.mxu0 %v722
    %1176 = vmatpush.bf16.msra.mxu0 %v716
    %1177 = vmatmul.bf16.gmra.mxu0 %v1167
    %v1178 = vpop.f32.mrf.mxu0
    %v1179 = vadd.f32 0.0, %v1178
    %v1180 = vpop.f32.mrf.mxu0
    %1181 = vdwg.mxu0
    %1182 = vmatpush.bf16.msra.mxu0 %v806
    %1183 = vmatpush.bf16.msra.mxu0 %v800
    %1184 = vmatpush.bf16.msra.mxu0 %v794
    %1185 = vmatpush.bf16.msra.mxu0 %v788
    %1186 = vmatpush.bf16.msra.mxu0 %v782
    %1187 = vmatpush.bf16.msra.mxu0 %v776
    %1188 = vmatpush.bf16.msra.mxu0 %v770
    %1189 = vmatpush.bf16.msra.mxu0 %v764
    %1190 = vmatmul.bf16.gmra.mxu0 %v1168
    %v1191 = vpop.f32.mrf.mxu0
    %v1192 = vadd.f32 %v1179, %v1191
    %v1193 = vpop.f32.mrf.mxu0
    %1194 = vdwg.mxu0
    %1195 = vmatpush.bf16.msra.mxu0 %v759
    %1196 = vmatpush.bf16.msra.mxu0 %v753
    %1197 = vmatpush.bf16.msra.mxu0 %v747
    %1198 = vmatpush.bf16.msra.mxu0 %v741
    %1199 = vmatpush.bf16.msra.mxu0 %v735
    %1200 = vmatpush.bf16.msra.mxu0 %v729
    %1201 = vmatpush.bf16.msra.mxu0 %v723
    %1202 = vmatpush.bf16.msra.mxu0 %v717
    %1203 = vmatmul.bf16.gmra.mxu0 %v1167
    %v1204 = vpop.f32.mrf.mxu0
    %v1205 = vadd.f32 0.0, %v1204
    %v1206 = vpop.f32.mrf.mxu0
    %1207 = vdwg.mxu0
    %1208 = vmatpush.bf16.msra.mxu0 %v807
    %1209 = vmatpush.bf16.msra.mxu0 %v801
    %1210 = vmatpush.bf16.msra.mxu0 %v795
    %1211 = vmatpush.bf16.msra.mxu0 %v789
    %1212 = vmatpush.bf16.msra.mxu0 %v783
    %1213 = vmatpush.bf16.msra.mxu0 %v777
    %1214 = vmatpush.bf16.msra.mxu0 %v771
    %1215 = vmatpush.bf16.msra.mxu0 %v765
    %1216 = vmatmul.bf16.gmra.mxu0 %v1168
    %v1217 = vpop.f32.mrf.mxu0
    %v1218 = vadd.f32 %v1205, %v1217
    %v1219 = vpop.f32.mrf.mxu0
    %1220 = vdwg.mxu0
    %1221 = vmatpush.bf16.msra.mxu0 %v760
    %1222 = vmatpush.bf16.msra.mxu0 %v754
    %1223 = vmatpush.bf16.msra.mxu0 %v748
    %1224 = vmatpush.bf16.msra.mxu0 %v742
    %1225 = vmatpush.bf16.msra.mxu0 %v736
    %1226 = vmatpush.bf16.msra.mxu0 %v730
    %1227 = vmatpush.bf16.msra.mxu0 %v724
    %1228 = vmatpush.bf16.msra.mxu0 %v718
    %1229 = vmatmul.bf16.gmra.mxu0 %v1167
    %v1230 = vpop.f32.mrf.mxu0
    %v1231 = vadd.f32 0.0, %v1230
    %v1232 = vpop.f32.mrf.mxu0
    %1233 = vdwg.mxu0
    %1234 = vmatpush.bf16.msra.mxu0 %v808
    %1235 = vmatpush.bf16.msra.mxu0 %v802
    %1236 = vmatpush.bf16.msra.mxu0 %v796
    %1237 = vmatpush.bf16.msra.mxu0 %v790
    %1238 = vmatpush.bf16.msra.mxu0 %v784
    %1239 = vmatpush.bf16.msra.mxu0 %v778
    %1240 = vmatpush.bf16.msra.mxu0 %v772
    %1241 = vmatpush.bf16.msra.mxu0 %v766
    %1242 = vmatmul.bf16.gmra.mxu0 %v1168
    %v1243 = vpop.f32.mrf.mxu0
    %v1244 = vadd.f32 %v1231, %v1243
    %v1245 = vpop.f32.mrf.mxu0
    %1246 = vdwg.mxu0
    %1247 = vmatpush.bf16.msra.mxu0 %v761
    %1248 = vmatpush.bf16.msra.mxu0 %v755
    %1249 = vmatpush.bf16.msra.mxu0 %v749
    %1250 = vmatpush.bf16.msra.mxu0 %v743
    %1251 = vmatpush.bf16.msra.mxu0 %v737
    %1252 = vmatpush.bf16.msra.mxu0 %v731
    %1253 = vmatpush.bf16.msra.mxu0 %v725
    %1254 = vmatpush.bf16.msra.mxu0 %v719
    %1255 = vmatmul.bf16.gmra.mxu0 %v1167
    %v1256 = vpop.f32.mrf.mxu0
    %v1257 = vadd.f32 0.0, %v1256
    %v1258 = vpop.f32.mrf.mxu0
    %1259 = vdwg.mxu0
    %1260 = vmatpush.bf16.msra.mxu0 %v809
    %1261 = vmatpush.bf16.msra.mxu0 %v803
    %1262 = vmatpush.bf16.msra.mxu0 %v797
    %1263 = vmatpush.bf16.msra.mxu0 %v791
    %1264 = vmatpush.bf16.msra.mxu0 %v785
    %1265 = vmatpush.bf16.msra.mxu0 %v779
    %1266 = vmatpush.bf16.msra.mxu0 %v773
    %1267 = vmatpush.bf16.msra.mxu0 %v767
    %1268 = vmatmul.bf16.gmra.mxu0 %v1168
    %v1269 = vpop.f32.mrf.mxu0
    %v1270 = vadd.f32 %v1257, %v1269
    %v1271 = vpop.f32.mrf.mxu0
    %1272 = vdwg.mxu0
    %1273 = vmatpush.bf16.msra.mxu0 %v762
    %1274 = vmatpush.bf16.msra.mxu0 %v756
    %1275 = vmatpush.bf16.msra.mxu0 %v750
    %1276 = vmatpush.bf16.msra.mxu0 %v744
    %1277 = vmatpush.bf16.msra.mxu0 %v738
    %1278 = vmatpush.bf16.msra.mxu0 %v732
    %1279 = vmatpush.bf16.msra.mxu0 %v726
    %1280 = vmatpush.bf16.msra.mxu0 %v720
    %1281 = vmatmul.bf16.gmra.mxu0 %v1167
    %v1282 = vpop.f32.mrf.mxu0
    %v1283 = vadd.f32 0.0, %v1282
    %v1284 = vpop.f32.mrf.mxu0
    %1285 = vdwg.mxu0
    %1286 = vmatpush.bf16.msra.mxu0 %v810
    %1287 = vmatpush.bf16.msra.mxu0 %v804
    %1288 = vmatpush.bf16.msra.mxu0 %v798
    %1289 = vmatpush.bf16.msra.mxu0 %v792
    %1290 = vmatpush.bf16.msra.mxu0 %v786
    %1291 = vmatpush.bf16.msra.mxu0 %v780
    %1292 = vmatpush.bf16.msra.mxu0 %v774
    %1293 = vmatpush.bf16.msra.mxu0 %v768
    %1294 = vmatmul.bf16.gmra.mxu0 %v1168
    %v1295 = vpop.f32.mrf.mxu0
    %v1296 = vadd.f32 %v1283, %v1295
    %v1297 = vpop.f32.mrf.mxu0
    %1298 = vdwg.mxu0
    %1299 = vmatpush.bf16.msra.mxu0 %v763
    %1300 = vmatpush.bf16.msra.mxu0 %v757
    %1301 = vmatpush.bf16.msra.mxu0 %v751
    %1302 = vmatpush.bf16.msra.mxu0 %v745
    %1303 = vmatpush.bf16.msra.mxu0 %v739
    %1304 = vmatpush.bf16.msra.mxu0 %v733
    %1305 = vmatpush.bf16.msra.mxu0 %v727
    %1306 = vmatpush.bf16.msra.mxu0 %v721
    %1307 = vmatmul.bf16.gmra.mxu0 %v1167
    %v1308 = vpop.f32.mrf.mxu0
    %v1309 = vadd.f32 0.0, %v1308
    %v1310 = vpop.f32.mrf.mxu0
    %1311 = vdwg.mxu0
    %1312 = vmatpush.bf16.msra.mxu0 %v811
    %1313 = vmatpush.bf16.msra.mxu0 %v805
    %1314 = vmatpush.bf16.msra.mxu0 %v799
    %1315 = vmatpush.bf16.msra.mxu0 %v793
    %1316 = vmatpush.bf16.msra.mxu0 %v787
    %1317 = vmatpush.bf16.msra.mxu0 %v781
    %1318 = vmatpush.bf16.msra.mxu0 %v775
    %1319 = vmatpush.bf16.msra.mxu0 %v769
    %1320 = vmatmul.bf16.gmra.mxu0 %v1168
    %v1321 = vpop.f32.mrf.mxu0
    %v1322 = vadd.f32 %v1309, %v1321
    %v1323 = vpop.f32.mrf.mxu0
    %1324 = vdwg.mxu0
    %v1325 = vadd.f32 %v289, %v1192
    %v1326 = vadd.f32 %v290, %v1218
    %v1327 = vxor.u32 %v1325, 2147483648
    %v1328 = vxor.u32 %v1326, 2147483648
    %v1329 = vmul.f32 %v1327, 1.442695
    %v1330 = vpow.pop %v1329
    %v1331 = vmul.f32 %v1328, 1.442695
    %v1332 = vpow.pop %v1331
    %v1333 = vadd.f32 %v1330, 1.0
    %v1334 = vadd.f32 %v1332, 1.0
    %v1335 = vrcp.pop %v1333
    %v1336 = vmul.f32 %v1333, %v1335
    %v1337 = vsub.f32 1.0, %v1336
    %v1338 = vmul.f32 %v1335, %v1337
    %v1339 = vadd.f32 %v1335, %v1338
    %vm1340 = vweird.f32 %v1333
    %vm1341 = vweird.f32 %v1335
    %vm1342 = vmor %vm1340, %vm1341
    %v1343 = vsel %vm1342, %v1335, %v1339
    %v1344 = vand.u32 2147483647, %v1333
    %vm1345 = vcmp.eq.f32.partialorder %v1344, 8.507059e+37
    %v1346 = vand.u32 %v1333, 2147483648
    %v1347 = vor.u32 1.1754944e-38, %v1346
    %v1348 = vsel %vm1345, %v1347, %v1343
    %v1349 = vmul.f32 1.0, %v1348
    %v1350 = vrcp.pop %v1334
    %v1351 = vmul.f32 %v1334, %v1350
    %v1352 = vsub.f32 1.0, %v1351
    %v1353 = vmul.f32 %v1350, %v1352
    %v1354 = vadd.f32 %v1350, %v1353
    %vm1355 = vweird.f32 %v1334
    %vm1356 = vweird.f32 %v1350
    %vm1357 = vmor %vm1355, %vm1356
    %v1358 = vsel %vm1357, %v1350, %v1354
    %v1359 = vand.u32 2147483647, %v1334
    %vm1360 = vcmp.eq.f32.partialorder %v1359, 8.507059e+37
    %v1361 = vand.u32 %v1334, 2147483648
    %v1362 = vor.u32 1.1754944e-38, %v1361
    %v1363 = vsel %vm1360, %v1362, %v1358
    %v1364 = vmul.f32 1.0, %v1363
    %v1365 = vadd.f32 %v291, %v1244
    %v1366 = vadd.f32 %v292, %v1270
    %v1367 = vxor.u32 %v1365, 2147483648
    %v1368 = vxor.u32 %v1366, 2147483648
    %v1369 = vmul.f32 %v1367, 1.442695
    %v1370 = vpow.pop %v1369
    %v1371 = vmul.f32 %v1368, 1.442695
    %v1372 = vpow.pop %v1371
    %v1373 = vadd.f32 %v1370, 1.0
    %v1374 = vadd.f32 %v1372, 1.0
    %v1375 = vrcp.pop %v1373
    %v1376 = vmul.f32 %v1373, %v1375
    %v1377 = vsub.f32 1.0, %v1376
    %v1378 = vmul.f32 %v1375, %v1377
    %v1379 = vadd.f32 %v1375, %v1378
    %vm1380 = vweird.f32 %v1373
    %vm1381 = vweird.f32 %v1375
    %vm1382 = vmor %vm1380, %vm1381
    %v1383 = vsel %vm1382, %v1375, %v1379
    %v1384 = vand.u32 2147483647, %v1373
    %vm1385 = vcmp.eq.f32.partialorder %v1384, 8.507059e+37
    %v1386 = vand.u32 %v1373, 2147483648
    %v1387 = vor.u32 1.1754944e-38, %v1386
    %v1388 = vsel %vm1385, %v1387, %v1383
    %v1389 = vmul.f32 1.0, %v1388
    %v1390 = vrcp.pop %v1374
    %v1391 = vmul.f32 %v1374, %v1390
    %v1392 = vsub.f32 1.0, %v1391
    %v1393 = vmul.f32 %v1390, %v1392
    %v1394 = vadd.f32 %v1390, %v1393
    %vm1395 = vweird.f32 %v1374
    %vm1396 = vweird.f32 %v1390
    %vm1397 = vmor %vm1395, %vm1396
    %v1398 = vsel %vm1397, %v1390, %v1394
    %v1399 = vand.u32 2147483647, %v1374
    %vm1400 = vcmp.eq.f32.partialorder %v1399, 8.507059e+37
    %v1401 = vand.u32 %v1374, 2147483648
    %v1402 = vor.u32 1.1754944e-38, %v1401
    %v1403 = vsel %vm1400, %v1402, %v1398
    %v1404 = vmul.f32 1.0, %v1403
    %v1405 = vadd.f32 %v1296, %v1145
    %v1406 = vadd.f32 %v1322, %v1146
    %v1407 = vmul.f32 %v1349, %v1405
    %v1408 = vmul.f32 %v1364, %v1406
    %v1409 = vadd.f32 %v293, %v1407
    %v1410 = vadd.f32 %v294, %v1408
    %v1411 = vtanh.pop %v1409
    %v1412 = vtanh.pop %v1410
    %v1413 = vsub.f32 1.0, %v1389
    %v1414 = vsub.f32 1.0, %v1404
    %v1415 = vmul.f32 %v1413, %v1411
    %v1416 = vmul.f32 %v1414, %v1412
    %v1417 = vmul.f32 %v1389, %v1163
    %v1418 = vmul.f32 %v1404, %v1164
    %v1419 = vadd.f32 %v1415, %v1417
    %v1420 = vadd.f32 %v1416, %v1418
    %1421 = vst [vmem:[#allocation2 + $0x10] sm:$0xff] %v1419
    %1422 = vst [vmem:[#allocation2 + $0x18] sm:$0xff] %v1420
    %v1423 = vpack.c.bf16 %v1419, %v1419
    %v1424 = vpack.c.bf16 %v1420, %v1420
    %1425 = vmatpush.bf16.msra.mxu0 %v758
    %1426 = vmatpush.bf16.msra.mxu0 %v752
    %1427 = vmatpush.bf16.msra.mxu0 %v746
    %1428 = vmatpush.bf16.msra.mxu0 %v740
    %1429 = vmatpush.bf16.msra.mxu0 %v734
    %1430 = vmatpush.bf16.msra.mxu0 %v728
    %1431 = vmatpush.bf16.msra.mxu0 %v722
    %1432 = vmatpush.bf16.msra.mxu0 %v716
    %1433 = vmatmul.bf16.gmra.mxu0 %v1423
    %v1434 = vpop.f32.mrf.mxu0
    %v1435 = vadd.f32 0.0, %v1434
    %v1436 = vpop.f32.mrf.mxu0
    %1437 = vdwg.mxu0
    %1438 = vmatpush.bf16.msra.mxu0 %v806
    %1439 = vmatpush.bf16.msra.mxu0 %v800
    %1440 = vmatpush.bf16.msra.mxu0 %v794
    %1441 = vmatpush.bf16.msra.mxu0 %v788
    %1442 = vmatpush.bf16.msra.mxu0 %v782
    %1443 = vmatpush.bf16.msra.mxu0 %v776
    %1444 = vmatpush.bf16.msra.mxu0 %v770
    %1445 = vmatpush.bf16.msra.mxu0 %v764
    %1446 = vmatmul.bf16.gmra.mxu0 %v1424
    %v1447 = vpop.f32.mrf.mxu0
    %v1448 = vadd.f32 %v1435, %v1447
    %v1449 = vpop.f32.mrf.mxu0
    %1450 = vdwg.mxu0
    %1451 = vmatpush.bf16.msra.mxu0 %v759
    %1452 = vmatpush.bf16.msra.mxu0 %v753
    %1453 = vmatpush.bf16.msra.mxu0 %v747
    %1454 = vmatpush.bf16.msra.mxu0 %v741
    %1455 = vmatpush.bf16.msra.mxu0 %v735
    %1456 = vmatpush.bf16.msra.mxu0 %v729
    %1457 = vmatpush.bf16.msra.mxu0 %v723
    %1458 = vmatpush.bf16.msra.mxu0 %v717
    %1459 = vmatmul.bf16.gmra.mxu0 %v1423
    %v1460 = vpop.f32.mrf.mxu0
    %v1461 = vadd.f32 0.0, %v1460
    %v1462 = vpop.f32.mrf.mxu0
    %1463 = vdwg.mxu0
    %1464 = vmatpush.bf16.msra.mxu0 %v807
    %1465 = vmatpush.bf16.msra.mxu0 %v801
    %1466 = vmatpush.bf16.msra.mxu0 %v795
    %1467 = vmatpush.bf16.msra.mxu0 %v789
    %1468 = vmatpush.bf16.msra.mxu0 %v783
    %1469 = vmatpush.bf16.msra.mxu0 %v777
    %1470 = vmatpush.bf16.msra.mxu0 %v771
    %1471 = vmatpush.bf16.msra.mxu0 %v765
    %1472 = vmatmul.bf16.gmra.mxu0 %v1424
    %v1473 = vpop.f32.mrf.mxu0
    %v1474 = vadd.f32 %v1461, %v1473
    %v1475 = vpop.f32.mrf.mxu0
    %1476 = vdwg.mxu0
    %1477 = vmatpush.bf16.msra.mxu0 %v760
    %1478 = vmatpush.bf16.msra.mxu0 %v754
    %1479 = vmatpush.bf16.msra.mxu0 %v748
    %1480 = vmatpush.bf16.msra.mxu0 %v742
    %1481 = vmatpush.bf16.msra.mxu0 %v736
    %1482 = vmatpush.bf16.msra.mxu0 %v730
    %1483 = vmatpush.bf16.msra.mxu0 %v724
    %1484 = vmatpush.bf16.msra.mxu0 %v718
    %1485 = vmatmul.bf16.gmra.mxu0 %v1423
    %v1486 = vpop.f32.mrf.mxu0
    %v1487 = vadd.f32 0.0, %v1486
    %v1488 = vpop.f32.mrf.mxu0
    %1489 = vdwg.mxu0
    %1490 = vmatpush.bf16.msra.mxu0 %v808
    %1491 = vmatpush.bf16.msra.mxu0 %v802
    %1492 = vmatpush.bf16.msra.mxu0 %v796
    %1493 = vmatpush.bf16.msra.mxu0 %v790
    %1494 = vmatpush.bf16.msra.mxu0 %v784
    %1495 = vmatpush.bf16.msra.mxu0 %v778
    %1496 = vmatpush.bf16.msra.mxu0 %v772
    %1497 = vmatpush.bf16.msra.mxu0 %v766
    %1498 = vmatmul.bf16.gmra.mxu0 %v1424
    %v1499 = vpop.f32.mrf.mxu0
    %v1500 = vadd.f32 %v1487, %v1499
    %v1501 = vpop.f32.mrf.mxu0
    %1502 = vdwg.mxu0
    %1503 = vmatpush.bf16.msra.mxu0 %v761
    %1504 = vmatpush.bf16.msra.mxu0 %v755
    %1505 = vmatpush.bf16.msra.mxu0 %v749
    %1506 = vmatpush.bf16.msra.mxu0 %v743
    %1507 = vmatpush.bf16.msra.mxu0 %v737
    %1508 = vmatpush.bf16.msra.mxu0 %v731
    %1509 = vmatpush.bf16.msra.mxu0 %v725
    %1510 = vmatpush.bf16.msra.mxu0 %v719
    %1511 = vmatmul.bf16.gmra.mxu0 %v1423
    %v1512 = vpop.f32.mrf.mxu0
    %v1513 = vadd.f32 0.0, %v1512
    %v1514 = vpop.f32.mrf.mxu0
    %1515 = vdwg.mxu0
    %1516 = vmatpush.bf16.msra.mxu0 %v809
    %1517 = vmatpush.bf16.msra.mxu0 %v803
    %1518 = vmatpush.bf16.msra.mxu0 %v797
    %1519 = vmatpush.bf16.msra.mxu0 %v791
    %1520 = vmatpush.bf16.msra.mxu0 %v785
    %1521 = vmatpush.bf16.msra.mxu0 %v779
    %1522 = vmatpush.bf16.msra.mxu0 %v773
    %1523 = vmatpush.bf16.msra.mxu0 %v767
    %1524 = vmatmul.bf16.gmra.mxu0 %v1424
    %v1525 = vpop.f32.mrf.mxu0
    %v1526 = vadd.f32 %v1513, %v1525
    %v1527 = vpop.f32.mrf.mxu0
    %1528 = vdwg.mxu0
    %1529 = vmatpush.bf16.msra.mxu0 %v762
    %1530 = vmatpush.bf16.msra.mxu0 %v756
    %1531 = vmatpush.bf16.msra.mxu0 %v750
    %1532 = vmatpush.bf16.msra.mxu0 %v744
    %1533 = vmatpush.bf16.msra.mxu0 %v738
    %1534 = vmatpush.bf16.msra.mxu0 %v732
    %1535 = vmatpush.bf16.msra.mxu0 %v726
    %1536 = vmatpush.bf16.msra.mxu0 %v720
    %1537 = vmatmul.bf16.gmra.mxu0 %v1423
    %v1538 = vpop.f32.mrf.mxu0
    %v1539 = vadd.f32 0.0, %v1538
    %v1540 = vpop.f32.mrf.mxu0
    %1541 = vdwg.mxu0
    %1542 = vmatpush.bf16.msra.mxu0 %v810
    %1543 = vmatpush.bf16.msra.mxu0 %v804
    %1544 = vmatpush.bf16.msra.mxu0 %v798
    %1545 = vmatpush.bf16.msra.mxu0 %v792
    %1546 = vmatpush.bf16.msra.mxu0 %v786
    %1547 = vmatpush.bf16.msra.mxu0 %v780
    %1548 = vmatpush.bf16.msra.mxu0 %v774
    %1549 = vmatpush.bf16.msra.mxu0 %v768
    %1550 = vmatmul.bf16.gmra.mxu0 %v1424
    %v1551 = vpop.f32.mrf.mxu0
    %v1552 = vadd.f32 %v1539, %v1551
    %v1553 = vpop.f32.mrf.mxu0
    %1554 = vdwg.mxu0
    %1555 = vmatpush.bf16.msra.mxu0 %v763
    %1556 = vmatpush.bf16.msra.mxu0 %v757
    %1557 = vmatpush.bf16.msra.mxu0 %v751
    %1558 = vmatpush.bf16.msra.mxu0 %v745
    %1559 = vmatpush.bf16.msra.mxu0 %v739
    %1560 = vmatpush.bf16.msra.mxu0 %v733
    %1561 = vmatpush.bf16.msra.mxu0 %v727
    %1562 = vmatpush.bf16.msra.mxu0 %v721
    %1563 = vmatmul.bf16.gmra.mxu0 %v1423
    %v1564 = vpop.f32.mrf.mxu0
    %v1565 = vadd.f32 0.0, %v1564
    %v1566 = vpop.f32.mrf.mxu0
    %1567 = vdwg.mxu0
    %1568 = vmatpush.bf16.msra.mxu0 %v811
    %1569 = vmatpush.bf16.msra.mxu0 %v805
    %1570 = vmatpush.bf16.msra.mxu0 %v799
    %1571 = vmatpush.bf16.msra.mxu0 %v793
    %1572 = vmatpush.bf16.msra.mxu0 %v787
    %1573 = vmatpush.bf16.msra.mxu0 %v781
    %1574 = vmatpush.bf16.msra.mxu0 %v775
    %1575 = vmatpush.bf16.msra.mxu0 %v769
    %1576 = vmatmul.bf16.gmra.mxu0 %v1424
    %v1577 = vpop.f32.mrf.mxu0
    %v1578 = vadd.f32 %v1565, %v1577
    %v1579 = vpop.f32.mrf.mxu0
    %1580 = vdwg.mxu0
    %v1581 = vadd.f32 %v295, %v1448
    %v1582 = vadd.f32 %v296, %v1474
    %v1583 = vxor.u32 %v1581, 2147483648
    %v1584 = vxor.u32 %v1582, 2147483648
    %v1585 = vmul.f32 %v1583, 1.442695
    %v1586 = vpow.pop %v1585
    %v1587 = vmul.f32 %v1584, 1.442695
    %v1588 = vpow.pop %v1587
    %v1589 = vadd.f32 %v1586, 1.0
    %v1590 = vadd.f32 %v1588, 1.0
    %v1591 = vrcp.pop %v1589
    %v1592 = vmul.f32 %v1589, %v1591
    %v1593 = vsub.f32 1.0, %v1592
    %v1594 = vmul.f32 %v1591, %v1593
    %v1595 = vadd.f32 %v1591, %v1594
    %vm1596 = vweird.f32 %v1589
    %vm1597 = vweird.f32 %v1591
    %vm1598 = vmor %vm1596, %vm1597
    %v1599 = vsel %vm1598, %v1591, %v1595
    %v1600 = vand.u32 2147483647, %v1589
    %vm1601 = vcmp.eq.f32.partialorder %v1600, 8.507059e+37
    %v1602 = vand.u32 %v1589, 2147483648
    %v1603 = vor.u32 1.1754944e-38, %v1602
    %v1604 = vsel %vm1601, %v1603, %v1599
    %v1605 = vmul.f32 1.0, %v1604
    %v1606 = vrcp.pop %v1590
    %v1607 = vmul.f32 %v1590, %v1606
    %v1608 = vsub.f32 1.0, %v1607
    %v1609 = vmul.f32 %v1606, %v1608
    %v1610 = vadd.f32 %v1606, %v1609
    %vm1611 = vweird.f32 %v1590
    %vm1612 = vweird.f32 %v1606
    %vm1613 = vmor %vm1611, %vm1612
    %v1614 = vsel %vm1613, %v1606, %v1610
    %v1615 = vand.u32 2147483647, %v1590
    %vm1616 = vcmp.eq.f32.partialorder %v1615, 8.507059e+37
    %v1617 = vand.u32 %v1590, 2147483648
    %v1618 = vor.u32 1.1754944e-38, %v1617
    %v1619 = vsel %vm1616, %v1618, %v1614
    %v1620 = vmul.f32 1.0, %v1619
    %v1621 = vadd.f32 %v297, %v1500
    %v1622 = vadd.f32 %v298, %v1526
    %v1623 = vxor.u32 %v1621, 2147483648
    %v1624 = vxor.u32 %v1622, 2147483648
    %v1625 = vmul.f32 %v1623, 1.442695
    %v1626 = vpow.pop %v1625
    %v1627 = vmul.f32 %v1624, 1.442695
    %v1628 = vpow.pop %v1627
    %v1629 = vadd.f32 %v1626, 1.0
    %v1630 = vadd.f32 %v1628, 1.0
    %v1631 = vrcp.pop %v1629
    %v1632 = vmul.f32 %v1629, %v1631
    %v1633 = vsub.f32 1.0, %v1632
    %v1634 = vmul.f32 %v1631, %v1633
    %v1635 = vadd.f32 %v1631, %v1634
    %vm1636 = vweird.f32 %v1629
    %vm1637 = vweird.f32 %v1631
    %vm1638 = vmor %vm1636, %vm1637
    %v1639 = vsel %vm1638, %v1631, %v1635
    %v1640 = vand.u32 2147483647, %v1629
    %vm1641 = vcmp.eq.f32.partialorder %v1640, 8.507059e+37
    %v1642 = vand.u32 %v1629, 2147483648
    %v1643 = vor.u32 1.1754944e-38, %v1642
    %v1644 = vsel %vm1641, %v1643, %v1639
    %v1645 = vmul.f32 1.0, %v1644
    %v1646 = vrcp.pop %v1630
    %v1647 = vmul.f32 %v1630, %v1646
    %v1648 = vsub.f32 1.0, %v1647
    %v1649 = vmul.f32 %v1646, %v1648
    %v1650 = vadd.f32 %v1646, %v1649
    %vm1651 = vweird.f32 %v1630
    %vm1652 = vweird.f32 %v1646
    %vm1653 = vmor %vm1651, %vm1652
    %v1654 = vsel %vm1653, %v1646, %v1650
    %v1655 = vand.u32 2147483647, %v1630
    %vm1656 = vcmp.eq.f32.partialorder %v1655, 8.507059e+37
    %v1657 = vand.u32 %v1630, 2147483648
    %v1658 = vor.u32 1.1754944e-38, %v1657
    %v1659 = vsel %vm1656, %v1658, %v1654
    %v1660 = vmul.f32 1.0, %v1659
    %v1661 = vadd.f32 %v1552, %v1145
    %v1662 = vadd.f32 %v1578, %v1146
    %v1663 = vmul.f32 %v1605, %v1661
    %v1664 = vmul.f32 %v1620, %v1662
    %v1665 = vadd.f32 %v299, %v1663
    %v1666 = vadd.f32 %v300, %v1664
    %v1667 = vtanh.pop %v1665
    %v1668 = vtanh.pop %v1666
    %v1669 = vsub.f32 1.0, %v1645
    %v1670 = vsub.f32 1.0, %v1660
    %v1671 = vmul.f32 %v1669, %v1667
    %v1672 = vmul.f32 %v1670, %v1668
    %v1673 = vmul.f32 %v1645, %v1419
    %v1674 = vmul.f32 %v1660, %v1420
    %v1675 = vadd.f32 %v1671, %v1673
    %v1676 = vadd.f32 %v1672, %v1674
    %1677 = vst [vmem:[#allocation2 + $0x20] sm:$0xff] %v1675
    %1678 = vst [vmem:[#allocation2 + $0x28] sm:$0xff] %v1676
    %v1679 = vpack.c.bf16 %v1675, %v1675
    %v1680 = vpack.c.bf16 %v1676, %v1676
    %1681 = vmatpush.bf16.msra.mxu0 %v758
    %1682 = vmatpush.bf16.msra.mxu0 %v752
    %1683 = vmatpush.bf16.msra.mxu0 %v746
    %1684 = vmatpush.bf16.msra.mxu0 %v740
    %1685 = vmatpush.bf16.msra.mxu0 %v734
    %1686 = vmatpush.bf16.msra.mxu0 %v728
    %1687 = vmatpush.bf16.msra.mxu0 %v722
    %1688 = vmatpush.bf16.msra.mxu0 %v716
    %1689 = vmatmul.bf16.gmra.mxu0 %v1679
    %v1690 = vpop.f32.mrf.mxu0
    %v1691 = vadd.f32 0.0, %v1690
    %v1692 = vpop.f32.mrf.mxu0
    %1693 = vdwg.mxu0
    %1694 = vmatpush.bf16.msra.mxu0 %v806
    %1695 = vmatpush.bf16.msra.mxu0 %v800
    %1696 = vmatpush.bf16.msra.mxu0 %v794
    %1697 = vmatpush.bf16.msra.mxu0 %v788
    %1698 = vmatpush.bf16.msra.mxu0 %v782
    %1699 = vmatpush.bf16.msra.mxu0 %v776
    %1700 = vmatpush.bf16.msra.mxu0 %v770
    %1701 = vmatpush.bf16.msra.mxu0 %v764
    %1702 = vmatmul.bf16.gmra.mxu0 %v1680
    %v1703 = vpop.f32.mrf.mxu0
    %v1704 = vadd.f32 %v1691, %v1703
    %v1705 = vpop.f32.mrf.mxu0
    %1706 = vdwg.mxu0
    %1707 = vmatpush.bf16.msra.mxu0 %v759
    %1708 = vmatpush.bf16.msra.mxu0 %v753
    %1709 = vmatpush.bf16.msra.mxu0 %v747
    %1710 = vmatpush.bf16.msra.mxu0 %v741
    %1711 = vmatpush.bf16.msra.mxu0 %v735
    %1712 = vmatpush.bf16.msra.mxu0 %v729
    %1713 = vmatpush.bf16.msra.mxu0 %v723
    %1714 = vmatpush.bf16.msra.mxu0 %v717
    %1715 = vmatmul.bf16.gmra.mxu0 %v1679
    %v1716 = vpop.f32.mrf.mxu0
    %v1717 = vadd.f32 0.0, %v1716
    %v1718 = vpop.f32.mrf.mxu0
    %1719 = vdwg.mxu0
    %1720 = vmatpush.bf16.msra.mxu0 %v807
    %1721 = vmatpush.bf16.msra.mxu0 %v801
    %1722 = vmatpush.bf16.msra.mxu0 %v795
    %1723 = vmatpush.bf16.msra.mxu0 %v789
    %1724 = vmatpush.bf16.msra.mxu0 %v783
    %1725 = vmatpush.bf16.msra.mxu0 %v777
    %1726 = vmatpush.bf16.msra.mxu0 %v771
    %1727 = vmatpush.bf16.msra.mxu0 %v765
    %1728 = vmatmul.bf16.gmra.mxu0 %v1680
    %v1729 = vpop.f32.mrf.mxu0
    %v1730 = vadd.f32 %v1717, %v1729
    %v1731 = vpop.f32.mrf.mxu0
    %1732 = vdwg.mxu0
    %1733 = vmatpush.bf16.msra.mxu0 %v760
    %1734 = vmatpush.bf16.msra.mxu0 %v754
    %1735 = vmatpush.bf16.msra.mxu0 %v748
    %1736 = vmatpush.bf16.msra.mxu0 %v742
    %1737 = vmatpush.bf16.msra.mxu0 %v736
    %1738 = vmatpush.bf16.msra.mxu0 %v730
    %1739 = vmatpush.bf16.msra.mxu0 %v724
    %1740 = vmatpush.bf16.msra.mxu0 %v718
    %1741 = vmatmul.bf16.gmra.mxu0 %v1679
    %v1742 = vpop.f32.mrf.mxu0
    %v1743 = vadd.f32 0.0, %v1742
    %v1744 = vpop.f32.mrf.mxu0
    %1745 = vdwg.mxu0
    %1746 = vmatpush.bf16.msra.mxu0 %v808
    %1747 = vmatpush.bf16.msra.mxu0 %v802
    %1748 = vmatpush.bf16.msra.mxu0 %v796
    %1749 = vmatpush.bf16.msra.mxu0 %v790
    %1750 = vmatpush.bf16.msra.mxu0 %v784
    %1751 = vmatpush.bf16.msra.mxu0 %v778
    %1752 = vmatpush.bf16.msra.mxu0 %v772
    %1753 = vmatpush.bf16.msra.mxu0 %v766
    %1754 = vmatmul.bf16.gmra.mxu0 %v1680
    %v1755 = vpop.f32.mrf.mxu0
    %v1756 = vadd.f32 %v1743, %v1755
    %v1757 = vpop.f32.mrf.mxu0
    %1758 = vdwg.mxu0
    %1759 = vmatpush.bf16.msra.mxu0 %v761
    %1760 = vmatpush.bf16.msra.mxu0 %v755
    %1761 = vmatpush.bf16.msra.mxu0 %v749
    %1762 = vmatpush.bf16.msra.mxu0 %v743
    %1763 = vmatpush.bf16.msra.mxu0 %v737
    %1764 = vmatpush.bf16.msra.mxu0 %v731
    %1765 = vmatpush.bf16.msra.mxu0 %v725
    %1766 = vmatpush.bf16.msra.mxu0 %v719
    %1767 = vmatmul.bf16.gmra.mxu0 %v1679
    %v1768 = vpop.f32.mrf.mxu0
    %v1769 = vadd.f32 0.0, %v1768
    %v1770 = vpop.f32.mrf.mxu0
    %1771 = vdwg.mxu0
    %1772 = vmatpush.bf16.msra.mxu0 %v809
    %1773 = vmatpush.bf16.msra.mxu0 %v803
    %1774 = vmatpush.bf16.msra.mxu0 %v797
    %1775 = vmatpush.bf16.msra.mxu0 %v791
    %1776 = vmatpush.bf16.msra.mxu0 %v785
    %1777 = vmatpush.bf16.msra.mxu0 %v779
    %1778 = vmatpush.bf16.msra.mxu0 %v773
    %1779 = vmatpush.bf16.msra.mxu0 %v767
    %1780 = vmatmul.bf16.gmra.mxu0 %v1680
    %v1781 = vpop.f32.mrf.mxu0
    %v1782 = vadd.f32 %v1769, %v1781
    %v1783 = vpop.f32.mrf.mxu0
    %1784 = vdwg.mxu0
    %1785 = vmatpush.bf16.msra.mxu0 %v762
    %1786 = vmatpush.bf16.msra.mxu0 %v756
    %1787 = vmatpush.bf16.msra.mxu0 %v750
    %1788 = vmatpush.bf16.msra.mxu0 %v744
    %1789 = vmatpush.bf16.msra.mxu0 %v738
    %1790 = vmatpush.bf16.msra.mxu0 %v732
    %1791 = vmatpush.bf16.msra.mxu0 %v726
    %1792 = vmatpush.bf16.msra.mxu0 %v720
    %1793 = vmatmul.bf16.gmra.mxu0 %v1679
    %v1794 = vpop.f32.mrf.mxu0
    %v1795 = vadd.f32 0.0, %v1794
    %v1796 = vpop.f32.mrf.mxu0
    %1797 = vdwg.mxu0
    %1798 = vmatpush.bf16.msra.mxu0 %v810
    %1799 = vmatpush.bf16.msra.mxu0 %v804
    %1800 = vmatpush.bf16.msra.mxu0 %v798
    %1801 = vmatpush.bf16.msra.mxu0 %v792
    %1802 = vmatpush.bf16.msra.mxu0 %v786
    %1803 = vmatpush.bf16.msra.mxu0 %v780
    %1804 = vmatpush.bf16.msra.mxu0 %v774
    %1805 = vmatpush.bf16.msra.mxu0 %v768
    %1806 = vmatmul.bf16.gmra.mxu0 %v1680
    %v1807 = vpop.f32.mrf.mxu0
    %v1808 = vadd.f32 %v1795, %v1807
    %v1809 = vpop.f32.mrf.mxu0
    %1810 = vdwg.mxu0
    %1811 = vmatpush.bf16.msra.mxu0 %v763
    %1812 = vmatpush.bf16.msra.mxu0 %v757
    %1813 = vmatpush.bf16.msra.mxu0 %v751
    %1814 = vmatpush.bf16.msra.mxu0 %v745
    %1815 = vmatpush.bf16.msra.mxu0 %v739
    %1816 = vmatpush.bf16.msra.mxu0 %v733
    %1817 = vmatpush.bf16.msra.mxu0 %v727
    %1818 = vmatpush.bf16.msra.mxu0 %v721
    %1819 = vmatmul.bf16.gmra.mxu0 %v1679
    %v1820 = vpop.f32.mrf.mxu0
    %v1821 = vadd.f32 0.0, %v1820
    %v1822 = vpop.f32.mrf.mxu0
    %1823 = vdwg.mxu0
    %1824 = vmatpush.bf16.msra.mxu0 %v811
    %1825 = vmatpush.bf16.msra.mxu0 %v805
    %1826 = vmatpush.bf16.msra.mxu0 %v799
    %1827 = vmatpush.bf16.msra.mxu0 %v793
    %1828 = vmatpush.bf16.msra.mxu0 %v787
    %1829 = vmatpush.bf16.msra.mxu0 %v781
    %1830 = vmatpush.bf16.msra.mxu0 %v775
    %1831 = vmatpush.bf16.msra.mxu0 %v769
    %1832 = vmatmul.bf16.gmra.mxu0 %v1680
    %v1833 = vpop.f32.mrf.mxu0
    %v1834 = vadd.f32 %v1821, %v1833
    %v1835 = vpop.f32.mrf.mxu0
    %1836 = vdwg.mxu0
    %v1837 = vadd.f32 %v301, %v1704
    %v1838 = vadd.f32 %v302, %v1730
    %v1839 = vxor.u32 %v1837, 2147483648
    %v1840 = vxor.u32 %v1838, 2147483648
    %v1841 = vmul.f32 %v1839, 1.442695
    %v1842 = vpow.pop %v1841
    %v1843 = vmul.f32 %v1840, 1.442695
    %v1844 = vpow.pop %v1843
    %v1845 = vadd.f32 %v1842, 1.0
    %v1846 = vadd.f32 %v1844, 1.0
    %v1847 = vrcp.pop %v1845
    %v1848 = vmul.f32 %v1845, %v1847
    %v1849 = vsub.f32 1.0, %v1848
    %v1850 = vmul.f32 %v1847, %v1849
    %v1851 = vadd.f32 %v1847, %v1850
    %vm1852 = vweird.f32 %v1845
    %vm1853 = vweird.f32 %v1847
    %vm1854 = vmor %vm1852, %vm1853
    %v1855 = vsel %vm1854, %v1847, %v1851
    %v1856 = vand.u32 2147483647, %v1845
    %vm1857 = vcmp.eq.f32.partialorder %v1856, 8.507059e+37
    %v1858 = vand.u32 %v1845, 2147483648
    %v1859 = vor.u32 1.1754944e-38, %v1858
    %v1860 = vsel %vm1857, %v1859, %v1855
    %v1861 = vmul.f32 1.0, %v1860
    %v1862 = vrcp.pop %v1846
    %v1863 = vmul.f32 %v1846, %v1862
    %v1864 = vsub.f32 1.0, %v1863
    %v1865 = vmul.f32 %v1862, %v1864
    %v1866 = vadd.f32 %v1862, %v1865
    %vm1867 = vweird.f32 %v1846
    %vm1868 = vweird.f32 %v1862
    %vm1869 = vmor %vm1867, %vm1868
    %v1870 = vsel %vm1869, %v1862, %v1866
    %v1871 = vand.u32 2147483647, %v1846
    %vm1872 = vcmp.eq.f32.partialorder %v1871, 8.507059e+37
    %v1873 = vand.u32 %v1846, 2147483648
    %v1874 = vor.u32 1.1754944e-38, %v1873
    %v1875 = vsel %vm1872, %v1874, %v1870
    %v1876 = vmul.f32 1.0, %v1875
    %v1877 = vadd.f32 %v303, %v1756
    %v1878 = vadd.f32 %v304, %v1782
    %v1879 = vxor.u32 %v1877, 2147483648
    %v1880 = vxor.u32 %v1878, 2147483648
    %v1881 = vmul.f32 %v1879, 1.442695
    %v1882 = vpow.pop %v1881
    %v1883 = vmul.f32 %v1880, 1.442695
    %v1884 = vpow.pop %v1883
    %v1885 = vadd.f32 %v1882, 1.0
    %v1886 = vadd.f32 %v1884, 1.0
    %v1887 = vrcp.pop %v1885
    %v1888 = vmul.f32 %v1885, %v1887
    %v1889 = vsub.f32 1.0, %v1888
    %v1890 = vmul.f32 %v1887, %v1889
    %v1891 = vadd.f32 %v1887, %v1890
    %vm1892 = vweird.f32 %v1885
    %vm1893 = vweird.f32 %v1887
    %vm1894 = vmor %vm1892, %vm1893
    %v1895 = vsel %vm1894, %v1887, %v1891
    %v1896 = vand.u32 2147483647, %v1885
    %vm1897 = vcmp.eq.f32.partialorder %v1896, 8.507059e+37
    %v1898 = vand.u32 %v1885, 2147483648
    %v1899 = vor.u32 1.1754944e-38, %v1898
    %v1900 = vsel %vm1897, %v1899, %v1895
    %v1901 = vmul.f32 1.0, %v1900
    %v1902 = vrcp.pop %v1886
    %v1903 = vmul.f32 %v1886, %v1902
    %v1904 = vsub.f32 1.0, %v1903
    %v1905 = vmul.f32 %v1902, %v1904
    %v1906 = vadd.f32 %v1902, %v1905
    %vm1907 = vweird.f32 %v1886
    %vm1908 = vweird.f32 %v1902
    %vm1909 = vmor %vm1907, %vm1908
    %v1910 = vsel %vm1909, %v1902, %v1906
    %v1911 = vand.u32 2147483647, %v1886
    %vm1912 = vcmp.eq.f32.partialorder %v1911, 8.507059e+37
    %v1913 = vand.u32 %v1886, 2147483648
    %v1914 = vor.u32 1.1754944e-38, %v1913
    %v1915 = vsel %vm1912, %v1914, %v1910
    %v1916 = vmul.f32 1.0, %v1915
    %v1917 = vadd.f32 %v1808, %v1145
    %v1918 = vadd.f32 %v1834, %v1146
    %v1919 = vmul.f32 %v1861, %v1917
    %v1920 = vmul.f32 %v1876, %v1918
    %v1921 = vadd.f32 %v305, %v1919
    %v1922 = vadd.f32 %v306, %v1920
    %v1923 = vtanh.pop %v1921
    %v1924 = vtanh.pop %v1922
    %v1925 = vsub.f32 1.0, %v1901
    %v1926 = vsub.f32 1.0, %v1916
    %v1927 = vmul.f32 %v1925, %v1923
    %v1928 = vmul.f32 %v1926, %v1924
    %v1929 = vmul.f32 %v1901, %v1675
    %v1930 = vmul.f32 %v1916, %v1676
    %v1931 = vadd.f32 %v1927, %v1929
    %v1932 = vadd.f32 %v1928, %v1930
    %1933 = vst [vmem:[#allocation2 + $0x30] sm:$0xff] %v1931
    %1934 = vst [vmem:[#allocation2 + $0x38] sm:$0xff] %v1932
    %v1935 = vpack.c.bf16 %v1931, %v1931
    %v1936 = vpack.c.bf16 %v1932, %v1932
    %1937 = vmatpush.bf16.msra.mxu0 %v758
    %1938 = vmatpush.bf16.msra.mxu0 %v752
    %1939 = vmatpush.bf16.msra.mxu0 %v746
    %1940 = vmatpush.bf16.msra.mxu0 %v740
    %1941 = vmatpush.bf16.msra.mxu0 %v734
    %1942 = vmatpush.bf16.msra.mxu0 %v728
    %1943 = vmatpush.bf16.msra.mxu0 %v722
    %1944 = vmatpush.bf16.msra.mxu0 %v716
    %1945 = vmatmul.bf16.gmra.mxu0 %v1935
    %v1946 = vpop.f32.mrf.mxu0
    %v1947 = vadd.f32 0.0, %v1946
    %v1948 = vpop.f32.mrf.mxu0
    %1949 = vdwg.mxu0
    %1950 = vmatpush.bf16.msra.mxu0 %v806
    %1951 = vmatpush.bf16.msra.mxu0 %v800
    %1952 = vmatpush.bf16.msra.mxu0 %v794
    %1953 = vmatpush.bf16.msra.mxu0 %v788
    %1954 = vmatpush.bf16.msra.mxu0 %v782
    %1955 = vmatpush.bf16.msra.mxu0 %v776
    %1956 = vmatpush.bf16.msra.mxu0 %v770
    %1957 = vmatpush.bf16.msra.mxu0 %v764
    %1958 = vmatmul.bf16.gmra.mxu0 %v1936
    %v1959 = vpop.f32.mrf.mxu0
    %v1960 = vadd.f32 %v1947, %v1959
    %v1961 = vpop.f32.mrf.mxu0
    %1962 = vdwg.mxu0
    %1963 = vmatpush.bf16.msra.mxu0 %v759
    %1964 = vmatpush.bf16.msra.mxu0 %v753
    %1965 = vmatpush.bf16.msra.mxu0 %v747
    %1966 = vmatpush.bf16.msra.mxu0 %v741
    %1967 = vmatpush.bf16.msra.mxu0 %v735
    %1968 = vmatpush.bf16.msra.mxu0 %v729
    %1969 = vmatpush.bf16.msra.mxu0 %v723
    %1970 = vmatpush.bf16.msra.mxu0 %v717
    %1971 = vmatmul.bf16.gmra.mxu0 %v1935
    %v1972 = vpop.f32.mrf.mxu0
    %v1973 = vadd.f32 0.0, %v1972
    %v1974 = vpop.f32.mrf.mxu0
    %1975 = vdwg.mxu0
    %1976 = vmatpush.bf16.msra.mxu0 %v807
    %1977 = vmatpush.bf16.msra.mxu0 %v801
    %1978 = vmatpush.bf16.msra.mxu0 %v795
    %1979 = vmatpush.bf16.msra.mxu0 %v789
    %1980 = vmatpush.bf16.msra.mxu0 %v783
    %1981 = vmatpush.bf16.msra.mxu0 %v777
    %1982 = vmatpush.bf16.msra.mxu0 %v771
    %1983 = vmatpush.bf16.msra.mxu0 %v765
    %1984 = vmatmul.bf16.gmra.mxu0 %v1936
    %v1985 = vpop.f32.mrf.mxu0
    %v1986 = vadd.f32 %v1973, %v1985
    %v1987 = vpop.f32.mrf.mxu0
    %1988 = vdwg.mxu0
    %1989 = vmatpush.bf16.msra.mxu0 %v760
    %1990 = vmatpush.bf16.msra.mxu0 %v754
    %1991 = vmatpush.bf16.msra.mxu0 %v748
    %1992 = vmatpush.bf16.msra.mxu0 %v742
    %1993 = vmatpush.bf16.msra.mxu0 %v736
    %1994 = vmatpush.bf16.msra.mxu0 %v730
    %1995 = vmatpush.bf16.msra.mxu0 %v724
    %1996 = vmatpush.bf16.msra.mxu0 %v718
    %1997 = vmatmul.bf16.gmra.mxu0 %v1935
    %v1998 = vpop.f32.mrf.mxu0
    %v1999 = vadd.f32 0.0, %v1998
    %v2000 = vpop.f32.mrf.mxu0
    %2001 = vdwg.mxu0
    %2002 = vmatpush.bf16.msra.mxu0 %v808
    %2003 = vmatpush.bf16.msra.mxu0 %v802
    %2004 = vmatpush.bf16.msra.mxu0 %v796
    %2005 = vmatpush.bf16.msra.mxu0 %v790
    %2006 = vmatpush.bf16.msra.mxu0 %v784
    %2007 = vmatpush.bf16.msra.mxu0 %v778
    %2008 = vmatpush.bf16.msra.mxu0 %v772
    %2009 = vmatpush.bf16.msra.mxu0 %v766
    %2010 = vmatmul.bf16.gmra.mxu0 %v1936
    %v2011 = vpop.f32.mrf.mxu0
    %v2012 = vadd.f32 %v1999, %v2011
    %v2013 = vpop.f32.mrf.mxu0
    %2014 = vdwg.mxu0
    %2015 = vmatpush.bf16.msra.mxu0 %v761
    %2016 = vmatpush.bf16.msra.mxu0 %v755
    %2017 = vmatpush.bf16.msra.mxu0 %v749
    %2018 = vmatpush.bf16.msra.mxu0 %v743
    %2019 = vmatpush.bf16.msra.mxu0 %v737
    %2020 = vmatpush.bf16.msra.mxu0 %v731
    %2021 = vmatpush.bf16.msra.mxu0 %v725
    %2022 = vmatpush.bf16.msra.mxu0 %v719
    %2023 = vmatmul.bf16.gmra.mxu0 %v1935
    %v2024 = vpop.f32.mrf.mxu0
    %v2025 = vadd.f32 0.0, %v2024
    %v2026 = vpop.f32.mrf.mxu0
    %2027 = vdwg.mxu0
    %2028 = vmatpush.bf16.msra.mxu0 %v809
    %2029 = vmatpush.bf16.msra.mxu0 %v803
    %2030 = vmatpush.bf16.msra.mxu0 %v797
    %2031 = vmatpush.bf16.msra.mxu0 %v791
    %2032 = vmatpush.bf16.msra.mxu0 %v785
    %2033 = vmatpush.bf16.msra.mxu0 %v779
    %2034 = vmatpush.bf16.msra.mxu0 %v773
    %2035 = vmatpush.bf16.msra.mxu0 %v767
    %2036 = vmatmul.bf16.gmra.mxu0 %v1936
    %v2037 = vpop.f32.mrf.mxu0
    %v2038 = vadd.f32 %v2025, %v2037
    %v2039 = vpop.f32.mrf.mxu0
    %2040 = vdwg.mxu0
    %2041 = vmatpush.bf16.msra.mxu0 %v762
    %2042 = vmatpush.bf16.msra.mxu0 %v756
    %2043 = vmatpush.bf16.msra.mxu0 %v750
    %2044 = vmatpush.bf16.msra.mxu0 %v744
    %2045 = vmatpush.bf16.msra.mxu0 %v738
    %2046 = vmatpush.bf16.msra.mxu0 %v732
    %2047 = vmatpush.bf16.msra.mxu0 %v726
    %2048 = vmatpush.bf16.msra.mxu0 %v720
    %2049 = vmatmul.bf16.gmra.mxu0 %v1935
    %v2050 = vpop.f32.mrf.mxu0
    %v2051 = vadd.f32 0.0, %v2050
    %v2052 = vpop.f32.mrf.mxu0
    %2053 = vdwg.mxu0
    %2054 = vmatpush.bf16.msra.mxu0 %v810
    %2055 = vmatpush.bf16.msra.mxu0 %v804
    %2056 = vmatpush.bf16.msra.mxu0 %v798
    %2057 = vmatpush.bf16.msra.mxu0 %v792
    %2058 = vmatpush.bf16.msra.mxu0 %v786
    %2059 = vmatpush.bf16.msra.mxu0 %v780
    %2060 = vmatpush.bf16.msra.mxu0 %v774
    %2061 = vmatpush.bf16.msra.mxu0 %v768
    %2062 = vmatmul.bf16.gmra.mxu0 %v1936
    %v2063 = vpop.f32.mrf.mxu0
    %v2064 = vadd.f32 %v2051, %v2063
    %v2065 = vpop.f32.mrf.mxu0
    %2066 = vdwg.mxu0
    %2067 = vmatpush.bf16.msra.mxu0 %v763
    %2068 = vmatpush.bf16.msra.mxu0 %v757
    %2069 = vmatpush.bf16.msra.mxu0 %v751
    %2070 = vmatpush.bf16.msra.mxu0 %v745
    %2071 = vmatpush.bf16.msra.mxu0 %v739
    %2072 = vmatpush.bf16.msra.mxu0 %v733
    %2073 = vmatpush.bf16.msra.mxu0 %v727
    %2074 = vmatpush.bf16.msra.mxu0 %v721
    %2075 = vmatmul.bf16.gmra.mxu0 %v1935
    %v2076 = vpop.f32.mrf.mxu0
    %v2077 = vadd.f32 0.0, %v2076
    %v2078 = vpop.f32.mrf.mxu0
    %2079 = vdwg.mxu0
    %2080 = vmatpush.bf16.msra.mxu0 %v811
    %2081 = vmatpush.bf16.msra.mxu0 %v805
    %2082 = vmatpush.bf16.msra.mxu0 %v799
    %2083 = vmatpush.bf16.msra.mxu0 %v793
    %2084 = vmatpush.bf16.msra.mxu0 %v787
    %2085 = vmatpush.bf16.msra.mxu0 %v781
    %2086 = vmatpush.bf16.msra.mxu0 %v775
    %2087 = vmatpush.bf16.msra.mxu0 %v769
    %2088 = vmatmul.bf16.gmra.mxu0 %v1936
    %v2089 = vpop.f32.mrf.mxu0
    %v2090 = vadd.f32 %v2077, %v2089
    %v2091 = vpop.f32.mrf.mxu0
    %2092 = vdwg.mxu0
    %v2093 = vadd.f32 %v307, %v1960
    %v2094 = vadd.f32 %v308, %v1986
    %v2095 = vxor.u32 %v2093, 2147483648
    %v2096 = vxor.u32 %v2094, 2147483648
    %v2097 = vmul.f32 %v2095, 1.442695
    %v2098 = vpow.pop %v2097
    %v2099 = vmul.f32 %v2096, 1.442695
    %v2100 = vpow.pop %v2099
    %v2101 = vadd.f32 %v2098, 1.0
    %v2102 = vadd.f32 %v2100, 1.0
    %v2103 = vrcp.pop %v2101
    %v2104 = vmul.f32 %v2101, %v2103
    %v2105 = vsub.f32 1.0, %v2104
    %v2106 = vmul.f32 %v2103, %v2105
    %v2107 = vadd.f32 %v2103, %v2106
    %vm2108 = vweird.f32 %v2101
    %vm2109 = vweird.f32 %v2103
    %vm2110 = vmor %vm2108, %vm2109
    %v2111 = vsel %vm2110, %v2103, %v2107
    %v2112 = vand.u32 2147483647, %v2101
    %vm2113 = vcmp.eq.f32.partialorder %v2112, 8.507059e+37
    %v2114 = vand.u32 %v2101, 2147483648
    %v2115 = vor.u32 1.1754944e-38, %v2114
    %v2116 = vsel %vm2113, %v2115, %v2111
    %v2117 = vmul.f32 1.0, %v2116
    %v2118 = vrcp.pop %v2102
    %v2119 = vmul.f32 %v2102, %v2118
    %v2120 = vsub.f32 1.0, %v2119
    %v2121 = vmul.f32 %v2118, %v2120
    %v2122 = vadd.f32 %v2118, %v2121
    %vm2123 = vweird.f32 %v2102
    %vm2124 = vweird.f32 %v2118
    %vm2125 = vmor %vm2123, %vm2124
    %v2126 = vsel %vm2125, %v2118, %v2122
    %v2127 = vand.u32 2147483647, %v2102
    %vm2128 = vcmp.eq.f32.partialorder %v2127, 8.507059e+37
    %v2129 = vand.u32 %v2102, 2147483648
    %v2130 = vor.u32 1.1754944e-38, %v2129
    %v2131 = vsel %vm2128, %v2130, %v2126
    %v2132 = vmul.f32 1.0, %v2131
    %v2133 = vadd.f32 %v309, %v2012
    %v2134 = vadd.f32 %v310, %v2038
    %v2135 = vxor.u32 %v2133, 2147483648
    %v2136 = vxor.u32 %v2134, 2147483648
    %v2137 = vmul.f32 %v2135, 1.442695
    %v2138 = vpow.pop %v2137
    %v2139 = vmul.f32 %v2136, 1.442695
    %v2140 = vpow.pop %v2139
    %v2141 = vadd.f32 %v2138, 1.0
    %v2142 = vadd.f32 %v2140, 1.0
    %v2143 = vrcp.pop %v2141
    %v2144 = vmul.f32 %v2141, %v2143
    %v2145 = vsub.f32 1.0, %v2144
    %v2146 = vmul.f32 %v2143, %v2145
    %v2147 = vadd.f32 %v2143, %v2146
    %vm2148 = vweird.f32 %v2141
    %vm2149 = vweird.f32 %v2143
    %vm2150 = vmor %vm2148, %vm2149
    %v2151 = vsel %vm2150, %v2143, %v2147
    %v2152 = vand.u32 2147483647, %v2141
    %vm2153 = vcmp.eq.f32.partialorder %v2152, 8.507059e+37
    %v2154 = vand.u32 %v2141, 2147483648
    %v2155 = vor.u32 1.1754944e-38, %v2154
    %v2156 = vsel %vm2153, %v2155, %v2151
    %v2157 = vmul.f32 1.0, %v2156
    %v2158 = vrcp.pop %v2142
    %v2159 = vmul.f32 %v2142, %v2158
    %v2160 = vsub.f32 1.0, %v2159
    %v2161 = vmul.f32 %v2158, %v2160
    %v2162 = vadd.f32 %v2158, %v2161
    %vm2163 = vweird.f32 %v2142
    %vm2164 = vweird.f32 %v2158
    %vm2165 = vmor %vm2163, %vm2164
    %v2166 = vsel %vm2165, %v2158, %v2162
    %v2167 = vand.u32 2147483647, %v2142
    %vm2168 = vcmp.eq.f32.partialorder %v2167, 8.507059e+37
    %v2169 = vand.u32 %v2142, 2147483648
    %v2170 = vor.u32 1.1754944e-38, %v2169
    %v2171 = vsel %vm2168, %v2170, %v2166
    %v2172 = vmul.f32 1.0, %v2171
    %v2173 = vadd.f32 %v2064, %v1145
    %v2174 = vadd.f32 %v2090, %v1146
    %v2175 = vmul.f32 %v2117, %v2173
    %v2176 = vmul.f32 %v2132, %v2174
    %v2177 = vadd.f32 %v311, %v2175
    %v2178 = vadd.f32 %v312, %v2176
    %v2179 = vtanh.pop %v2177
    %v2180 = vtanh.pop %v2178
    %v2181 = vsub.f32 1.0, %v2157
    %v2182 = vsub.f32 1.0, %v2172
    %v2183 = vmul.f32 %v2181, %v2179
    %v2184 = vmul.f32 %v2182, %v2180
    %v2185 = vmul.f32 %v2157, %v1931
    %v2186 = vmul.f32 %v2172, %v1932
    %v2187 = vadd.f32 %v2183, %v2185
    %v2188 = vadd.f32 %v2184, %v2186
    %2189 = vst [vmem:[#allocation2 + $0x40] sm:$0xff] %v2187
    %2190 = vst [vmem:[#allocation2 + $0x48] sm:$0xff] %v2188
    %v2191 = vpack.c.bf16 %v2187, %v2187
    %v2192 = vpack.c.bf16 %v2188, %v2188
    %2193 = vmatpush.bf16.msra.mxu0 %v758
    %2194 = vmatpush.bf16.msra.mxu0 %v752
    %2195 = vmatpush.bf16.msra.mxu0 %v746
    %2196 = vmatpush.bf16.msra.mxu0 %v740
    %2197 = vmatpush.bf16.msra.mxu0 %v734
    %2198 = vmatpush.bf16.msra.mxu0 %v728
    %2199 = vmatpush.bf16.msra.mxu0 %v722
    %2200 = vmatpush.bf16.msra.mxu0 %v716
    %2201 = vmatmul.bf16.gmra.mxu0 %v2191
    %v2202 = vpop.f32.mrf.mxu0
    %v2203 = vadd.f32 0.0, %v2202
    %v2204 = vpop.f32.mrf.mxu0
    %2205 = vdwg.mxu0
    %2206 = vmatpush.bf16.msra.mxu0 %v806
    %2207 = vmatpush.bf16.msra.mxu0 %v800
    %2208 = vmatpush.bf16.msra.mxu0 %v794
    %2209 = vmatpush.bf16.msra.mxu0 %v788
    %2210 = vmatpush.bf16.msra.mxu0 %v782
    %2211 = vmatpush.bf16.msra.mxu0 %v776
    %2212 = vmatpush.bf16.msra.mxu0 %v770
    %2213 = vmatpush.bf16.msra.mxu0 %v764
    %2214 = vmatmul.bf16.gmra.mxu0 %v2192
    %v2215 = vpop.f32.mrf.mxu0
    %v2216 = vadd.f32 %v2203, %v2215
    %v2217 = vpop.f32.mrf.mxu0
    %2218 = vdwg.mxu0
    %2219 = vmatpush.bf16.msra.mxu0 %v759
    %2220 = vmatpush.bf16.msra.mxu0 %v753
    %2221 = vmatpush.bf16.msra.mxu0 %v747
    %2222 = vmatpush.bf16.msra.mxu0 %v741
    %2223 = vmatpush.bf16.msra.mxu0 %v735
    %2224 = vmatpush.bf16.msra.mxu0 %v729
    %2225 = vmatpush.bf16.msra.mxu0 %v723
    %2226 = vmatpush.bf16.msra.mxu0 %v717
    %2227 = vmatmul.bf16.gmra.mxu0 %v2191
    %v2228 = vpop.f32.mrf.mxu0
    %v2229 = vadd.f32 0.0, %v2228
    %v2230 = vpop.f32.mrf.mxu0
    %2231 = vdwg.mxu0
    %2232 = vmatpush.bf16.msra.mxu0 %v807
    %2233 = vmatpush.bf16.msra.mxu0 %v801
    %2234 = vmatpush.bf16.msra.mxu0 %v795
    %2235 = vmatpush.bf16.msra.mxu0 %v789
    %2236 = vmatpush.bf16.msra.mxu0 %v783
    %2237 = vmatpush.bf16.msra.mxu0 %v777
    %2238 = vmatpush.bf16.msra.mxu0 %v771
    %2239 = vmatpush.bf16.msra.mxu0 %v765
    %2240 = vmatmul.bf16.gmra.mxu0 %v2192
    %v2241 = vpop.f32.mrf.mxu0
    %v2242 = vadd.f32 %v2229, %v2241
    %v2243 = vpop.f32.mrf.mxu0
    %2244 = vdwg.mxu0
    %2245 = vmatpush.bf16.msra.mxu0 %v760
    %2246 = vmatpush.bf16.msra.mxu0 %v754
    %2247 = vmatpush.bf16.msra.mxu0 %v748
    %2248 = vmatpush.bf16.msra.mxu0 %v742
    %2249 = vmatpush.bf16.msra.mxu0 %v736
    %2250 = vmatpush.bf16.msra.mxu0 %v730
    %2251 = vmatpush.bf16.msra.mxu0 %v724
    %2252 = vmatpush.bf16.msra.mxu0 %v718
    %2253 = vmatmul.bf16.gmra.mxu0 %v2191
    %v2254 = vpop.f32.mrf.mxu0
    %v2255 = vadd.f32 0.0, %v2254
    %v2256 = vpop.f32.mrf.mxu0
    %2257 = vdwg.mxu0
    %2258 = vmatpush.bf16.msra.mxu0 %v808
    %2259 = vmatpush.bf16.msra.mxu0 %v802
    %2260 = vmatpush.bf16.msra.mxu0 %v796
    %2261 = vmatpush.bf16.msra.mxu0 %v790
    %2262 = vmatpush.bf16.msra.mxu0 %v784
    %2263 = vmatpush.bf16.msra.mxu0 %v778
    %2264 = vmatpush.bf16.msra.mxu0 %v772
    %2265 = vmatpush.bf16.msra.mxu0 %v766
    %2266 = vmatmul.bf16.gmra.mxu0 %v2192
    %v2267 = vpop.f32.mrf.mxu0
    %v2268 = vadd.f32 %v2255, %v2267
    %v2269 = vpop.f32.mrf.mxu0
    %2270 = vdwg.mxu0
    %2271 = vmatpush.bf16.msra.mxu0 %v761
    %2272 = vmatpush.bf16.msra.mxu0 %v755
    %2273 = vmatpush.bf16.msra.mxu0 %v749
    %2274 = vmatpush.bf16.msra.mxu0 %v743
    %2275 = vmatpush.bf16.msra.mxu0 %v737
    %2276 = vmatpush.bf16.msra.mxu0 %v731
    %2277 = vmatpush.bf16.msra.mxu0 %v725
    %2278 = vmatpush.bf16.msra.mxu0 %v719
    %2279 = vmatmul.bf16.gmra.mxu0 %v2191
    %v2280 = vpop.f32.mrf.mxu0
    %v2281 = vadd.f32 0.0, %v2280
    %v2282 = vpop.f32.mrf.mxu0
    %2283 = vdwg.mxu0
    %2284 = vmatpush.bf16.msra.mxu0 %v809
    %2285 = vmatpush.bf16.msra.mxu0 %v803
    %2286 = vmatpush.bf16.msra.mxu0 %v797
    %2287 = vmatpush.bf16.msra.mxu0 %v791
    %2288 = vmatpush.bf16.msra.mxu0 %v785
    %2289 = vmatpush.bf16.msra.mxu0 %v779
    %2290 = vmatpush.bf16.msra.mxu0 %v773
    %2291 = vmatpush.bf16.msra.mxu0 %v767
    %2292 = vmatmul.bf16.gmra.mxu0 %v2192
    %v2293 = vpop.f32.mrf.mxu0
    %v2294 = vadd.f32 %v2281, %v2293
    %v2295 = vpop.f32.mrf.mxu0
    %2296 = vdwg.mxu0
    %2297 = vmatpush.bf16.msra.mxu0 %v762
    %2298 = vmatpush.bf16.msra.mxu0 %v756
    %2299 = vmatpush.bf16.msra.mxu0 %v750
    %2300 = vmatpush.bf16.msra.mxu0 %v744
    %2301 = vmatpush.bf16.msra.mxu0 %v738
    %2302 = vmatpush.bf16.msra.mxu0 %v732
    %2303 = vmatpush.bf16.msra.mxu0 %v726
    %2304 = vmatpush.bf16.msra.mxu0 %v720
    %2305 = vmatmul.bf16.gmra.mxu0 %v2191
    %v2306 = vpop.f32.mrf.mxu0
    %v2307 = vadd.f32 0.0, %v2306
    %v2308 = vpop.f32.mrf.mxu0
    %2309 = vdwg.mxu0
    %2310 = vmatpush.bf16.msra.mxu0 %v810
    %2311 = vmatpush.bf16.msra.mxu0 %v804
    %2312 = vmatpush.bf16.msra.mxu0 %v798
    %2313 = vmatpush.bf16.msra.mxu0 %v792
    %2314 = vmatpush.bf16.msra.mxu0 %v786
    %2315 = vmatpush.bf16.msra.mxu0 %v780
    %2316 = vmatpush.bf16.msra.mxu0 %v774
    %2317 = vmatpush.bf16.msra.mxu0 %v768
    %2318 = vmatmul.bf16.gmra.mxu0 %v2192
    %v2319 = vpop.f32.mrf.mxu0
    %v2320 = vadd.f32 %v2307, %v2319
    %v2321 = vpop.f32.mrf.mxu0
    %2322 = vdwg.mxu0
    %2323 = vmatpush.bf16.msra.mxu0 %v763
    %2324 = vmatpush.bf16.msra.mxu0 %v757
    %2325 = vmatpush.bf16.msra.mxu0 %v751
    %2326 = vmatpush.bf16.msra.mxu0 %v745
    %2327 = vmatpush.bf16.msra.mxu0 %v739
    %2328 = vmatpush.bf16.msra.mxu0 %v733
    %2329 = vmatpush.bf16.msra.mxu0 %v727
    %2330 = vmatpush.bf16.msra.mxu0 %v721
    %2331 = vmatmul.bf16.gmra.mxu0 %v2191
    %v2332 = vpop.f32.mrf.mxu0
    %v2333 = vadd.f32 0.0, %v2332
    %v2334 = vpop.f32.mrf.mxu0
    %2335 = vdwg.mxu0
    %2336 = vmatpush.bf16.msra.mxu0 %v811
    %2337 = vmatpush.bf16.msra.mxu0 %v805
    %2338 = vmatpush.bf16.msra.mxu0 %v799
    %2339 = vmatpush.bf16.msra.mxu0 %v793
    %2340 = vmatpush.bf16.msra.mxu0 %v787
    %2341 = vmatpush.bf16.msra.mxu0 %v781
    %2342 = vmatpush.bf16.msra.mxu0 %v775
    %2343 = vmatpush.bf16.msra.mxu0 %v769
    %2344 = vmatmul.bf16.gmra.mxu0 %v2192
    %v2345 = vpop.f32.mrf.mxu0
    %v2346 = vadd.f32 %v2333, %v2345
    %v2347 = vpop.f32.mrf.mxu0
    %2348 = vdwg.mxu0
    %v2349 = vadd.f32 %v313, %v2216
    %v2350 = vadd.f32 %v314, %v2242
    %v2351 = vxor.u32 %v2349, 2147483648
    %v2352 = vxor.u32 %v2350, 2147483648
    %v2353 = vmul.f32 %v2351, 1.442695
    %v2354 = vpow.pop %v2353
    %v2355 = vmul.f32 %v2352, 1.442695
    %v2356 = vpow.pop %v2355
    %v2357 = vadd.f32 %v2354, 1.0
    %v2358 = vadd.f32 %v2356, 1.0
    %v2359 = vrcp.pop %v2357
    %v2360 = vmul.f32 %v2357, %v2359
    %v2361 = vsub.f32 1.0, %v2360
    %v2362 = vmul.f32 %v2359, %v2361
    %v2363 = vadd.f32 %v2359, %v2362
    %vm2364 = vweird.f32 %v2357
    %vm2365 = vweird.f32 %v2359
    %vm2366 = vmor %vm2364, %vm2365
    %v2367 = vsel %vm2366, %v2359, %v2363
    %v2368 = vand.u32 2147483647, %v2357
    %vm2369 = vcmp.eq.f32.partialorder %v2368, 8.507059e+37
    %v2370 = vand.u32 %v2357, 2147483648
    %v2371 = vor.u32 1.1754944e-38, %v2370
    %v2372 = vsel %vm2369, %v2371, %v2367
    %v2373 = vmul.f32 1.0, %v2372
    %v2374 = vrcp.pop %v2358
    %v2375 = vmul.f32 %v2358, %v2374
    %v2376 = vsub.f32 1.0, %v2375
    %v2377 = vmul.f32 %v2374, %v2376
    %v2378 = vadd.f32 %v2374, %v2377
    %vm2379 = vweird.f32 %v2358
    %vm2380 = vweird.f32 %v2374
    %vm2381 = vmor %vm2379, %vm2380
    %v2382 = vsel %vm2381, %v2374, %v2378
    %v2383 = vand.u32 2147483647, %v2358
    %vm2384 = vcmp.eq.f32.partialorder %v2383, 8.507059e+37
    %v2385 = vand.u32 %v2358, 2147483648
    %v2386 = vor.u32 1.1754944e-38, %v2385
    %v2387 = vsel %vm2384, %v2386, %v2382
    %v2388 = vmul.f32 1.0, %v2387
    %v2389 = vadd.f32 %v315, %v2268
    %v2390 = vadd.f32 %v316, %v2294
    %v2391 = vxor.u32 %v2389, 2147483648
    %v2392 = vxor.u32 %v2390, 2147483648
    %v2393 = vmul.f32 %v2391, 1.442695
    %v2394 = vpow.pop %v2393
    %v2395 = vmul.f32 %v2392, 1.442695
    %v2396 = vpow.pop %v2395
    %v2397 = vadd.f32 %v2394, 1.0
    %v2398 = vadd.f32 %v2396, 1.0
    %v2399 = vrcp.pop %v2397
    %v2400 = vmul.f32 %v2397, %v2399
    %v2401 = vsub.f32 1.0, %v2400
    %v2402 = vmul.f32 %v2399, %v2401
    %v2403 = vadd.f32 %v2399, %v2402
    %vm2404 = vweird.f32 %v2397
    %vm2405 = vweird.f32 %v2399
    %vm2406 = vmor %vm2404, %vm2405
    %v2407 = vsel %vm2406, %v2399, %v2403
    %v2408 = vand.u32 2147483647, %v2397
    %vm2409 = vcmp.eq.f32.partialorder %v2408, 8.507059e+37
    %v2410 = vand.u32 %v2397, 2147483648
    %v2411 = vor.u32 1.1754944e-38, %v2410
    %v2412 = vsel %vm2409, %v2411, %v2407
    %v2413 = vmul.f32 1.0, %v2412
    %v2414 = vrcp.pop %v2398
    %v2415 = vmul.f32 %v2398, %v2414
    %v2416 = vsub.f32 1.0, %v2415
    %v2417 = vmul.f32 %v2414, %v2416
    %v2418 = vadd.f32 %v2414, %v2417
    %vm2419 = vweird.f32 %v2398
    %vm2420 = vweird.f32 %v2414
    %vm2421 = vmor %vm2419, %vm2420
    %v2422 = vsel %vm2421, %v2414, %v2418
    %v2423 = vand.u32 2147483647, %v2398
    %vm2424 = vcmp.eq.f32.partialorder %v2423, 8.507059e+37
    %v2425 = vand.u32 %v2398, 2147483648
    %v2426 = vor.u32 1.1754944e-38, %v2425
    %v2427 = vsel %vm2424, %v2426, %v2422
    %v2428 = vmul.f32 1.0, %v2427
    %v2429 = vadd.f32 %v2320, %v1145
    %v2430 = vadd.f32 %v2346, %v1146
    %v2431 = vmul.f32 %v2373, %v2429
    %v2432 = vmul.f32 %v2388, %v2430
    %v2433 = vadd.f32 %v317, %v2431
    %v2434 = vadd.f32 %v318, %v2432
    %v2435 = vtanh.pop %v2433
    %v2436 = vtanh.pop %v2434
    %v2437 = vsub.f32 1.0, %v2413
    %v2438 = vsub.f32 1.0, %v2428
    %v2439 = vmul.f32 %v2437, %v2435
    %v2440 = vmul.f32 %v2438, %v2436
    %v2441 = vmul.f32 %v2413, %v2187
    %v2442 = vmul.f32 %v2428, %v2188
    %v2443 = vadd.f32 %v2439, %v2441
    %v2444 = vadd.f32 %v2440, %v2442
    %2445 = vst [vmem:[#allocation2 + $0x50] sm:$0xff] %v2443
    %2446 = vst [vmem:[#allocation2 + $0x58] sm:$0xff] %v2444
    %v2447 = vpack.c.bf16 %v2443, %v2443
    %v2448 = vpack.c.bf16 %v2444, %v2444
    %2449 = vmatpush.bf16.msra.mxu0 %v758
    %2450 = vmatpush.bf16.msra.mxu0 %v752
    %2451 = vmatpush.bf16.msra.mxu0 %v746
    %2452 = vmatpush.bf16.msra.mxu0 %v740
    %2453 = vmatpush.bf16.msra.mxu0 %v734
    %2454 = vmatpush.bf16.msra.mxu0 %v728
    %2455 = vmatpush.bf16.msra.mxu0 %v722
    %2456 = vmatpush.bf16.msra.mxu0 %v716
    %2457 = vmatmul.bf16.gmra.mxu0 %v2447
    %v2458 = vpop.f32.mrf.mxu0
    %v2459 = vadd.f32 0.0, %v2458
    %v2460 = vpop.f32.mrf.mxu0
    %2461 = vdwg.mxu0
    %2462 = vmatpush.bf16.msra.mxu0 %v806
    %2463 = vmatpush.bf16.msra.mxu0 %v800
    %2464 = vmatpush.bf16.msra.mxu0 %v794
    %2465 = vmatpush.bf16.msra.mxu0 %v788
    %2466 = vmatpush.bf16.msra.mxu0 %v782
    %2467 = vmatpush.bf16.msra.mxu0 %v776
    %2468 = vmatpush.bf16.msra.mxu0 %v770
    %2469 = vmatpush.bf16.msra.mxu0 %v764
    %2470 = vmatmul.bf16.gmra.mxu0 %v2448
    %v2471 = vpop.f32.mrf.mxu0
    %v2472 = vadd.f32 %v2459, %v2471
    %v2473 = vpop.f32.mrf.mxu0
    %2474 = vdwg.mxu0
    %2475 = vmatpush.bf16.msra.mxu0 %v759
    %2476 = vmatpush.bf16.msra.mxu0 %v753
    %2477 = vmatpush.bf16.msra.mxu0 %v747
    %2478 = vmatpush.bf16.msra.mxu0 %v741
    %2479 = vmatpush.bf16.msra.mxu0 %v735
    %2480 = vmatpush.bf16.msra.mxu0 %v729
    %2481 = vmatpush.bf16.msra.mxu0 %v723
    %2482 = vmatpush.bf16.msra.mxu0 %v717
    %2483 = vmatmul.bf16.gmra.mxu0 %v2447
    %v2484 = vpop.f32.mrf.mxu0
    %v2485 = vadd.f32 0.0, %v2484
    %v2486 = vpop.f32.mrf.mxu0
    %2487 = vdwg.mxu0
    %2488 = vmatpush.bf16.msra.mxu0 %v807
    %2489 = vmatpush.bf16.msra.mxu0 %v801
    %2490 = vmatpush.bf16.msra.mxu0 %v795
    %2491 = vmatpush.bf16.msra.mxu0 %v789
    %2492 = vmatpush.bf16.msra.mxu0 %v783
    %2493 = vmatpush.bf16.msra.mxu0 %v777
    %2494 = vmatpush.bf16.msra.mxu0 %v771
    %2495 = vmatpush.bf16.msra.mxu0 %v765
    %2496 = vmatmul.bf16.gmra.mxu0 %v2448
    %v2497 = vpop.f32.mrf.mxu0
    %v2498 = vadd.f32 %v2485, %v2497
    %v2499 = vpop.f32.mrf.mxu0
    %2500 = vdwg.mxu0
    %2501 = vmatpush.bf16.msra.mxu0 %v760
    %2502 = vmatpush.bf16.msra.mxu0 %v754
    %2503 = vmatpush.bf16.msra.mxu0 %v748
    %2504 = vmatpush.bf16.msra.mxu0 %v742
    %2505 = vmatpush.bf16.msra.mxu0 %v736
    %2506 = vmatpush.bf16.msra.mxu0 %v730
    %2507 = vmatpush.bf16.msra.mxu0 %v724
    %2508 = vmatpush.bf16.msra.mxu0 %v718
    %2509 = vmatmul.bf16.gmra.mxu0 %v2447
    %v2510 = vpop.f32.mrf.mxu0
    %v2511 = vadd.f32 0.0, %v2510
    %v2512 = vpop.f32.mrf.mxu0
    %2513 = vdwg.mxu0
    %2514 = vmatpush.bf16.msra.mxu0 %v808
    %2515 = vmatpush.bf16.msra.mxu0 %v802
    %2516 = vmatpush.bf16.msra.mxu0 %v796
    %2517 = vmatpush.bf16.msra.mxu0 %v790
    %2518 = vmatpush.bf16.msra.mxu0 %v784
    %2519 = vmatpush.bf16.msra.mxu0 %v778
    %2520 = vmatpush.bf16.msra.mxu0 %v772
    %2521 = vmatpush.bf16.msra.mxu0 %v766
    %2522 = vmatmul.bf16.gmra.mxu0 %v2448
    %v2523 = vpop.f32.mrf.mxu0
    %v2524 = vadd.f32 %v2511, %v2523
    %v2525 = vpop.f32.mrf.mxu0
    %2526 = vdwg.mxu0
    %2527 = vmatpush.bf16.msra.mxu0 %v761
    %2528 = vmatpush.bf16.msra.mxu0 %v755
    %2529 = vmatpush.bf16.msra.mxu0 %v749
    %2530 = vmatpush.bf16.msra.mxu0 %v743
    %2531 = vmatpush.bf16.msra.mxu0 %v737
    %2532 = vmatpush.bf16.msra.mxu0 %v731
    %2533 = vmatpush.bf16.msra.mxu0 %v725
    %2534 = vmatpush.bf16.msra.mxu0 %v719
    %2535 = vmatmul.bf16.gmra.mxu0 %v2447
    %v2536 = vpop.f32.mrf.mxu0
    %v2537 = vadd.f32 0.0, %v2536
    %v2538 = vpop.f32.mrf.mxu0
    %2539 = vdwg.mxu0
    %2540 = vmatpush.bf16.msra.mxu0 %v809
    %2541 = vmatpush.bf16.msra.mxu0 %v803
    %2542 = vmatpush.bf16.msra.mxu0 %v797
    %2543 = vmatpush.bf16.msra.mxu0 %v791
    %2544 = vmatpush.bf16.msra.mxu0 %v785
    %2545 = vmatpush.bf16.msra.mxu0 %v779
    %2546 = vmatpush.bf16.msra.mxu0 %v773
    %2547 = vmatpush.bf16.msra.mxu0 %v767
    %2548 = vmatmul.bf16.gmra.mxu0 %v2448
    %v2549 = vpop.f32.mrf.mxu0
    %v2550 = vadd.f32 %v2537, %v2549
    %v2551 = vpop.f32.mrf.mxu0
    %2552 = vdwg.mxu0
    %2553 = vmatpush.bf16.msra.mxu0 %v762
    %2554 = vmatpush.bf16.msra.mxu0 %v756
    %2555 = vmatpush.bf16.msra.mxu0 %v750
    %2556 = vmatpush.bf16.msra.mxu0 %v744
    %2557 = vmatpush.bf16.msra.mxu0 %v738
    %2558 = vmatpush.bf16.msra.mxu0 %v732
    %2559 = vmatpush.bf16.msra.mxu0 %v726
    %2560 = vmatpush.bf16.msra.mxu0 %v720
    %2561 = vmatmul.bf16.gmra.mxu0 %v2447
    %v2562 = vpop.f32.mrf.mxu0
    %v2563 = vadd.f32 0.0, %v2562
    %v2564 = vpop.f32.mrf.mxu0
    %2565 = vdwg.mxu0
    %2566 = vmatpush.bf16.msra.mxu0 %v810
    %2567 = vmatpush.bf16.msra.mxu0 %v804
    %2568 = vmatpush.bf16.msra.mxu0 %v798
    %2569 = vmatpush.bf16.msra.mxu0 %v792
    %2570 = vmatpush.bf16.msra.mxu0 %v786
    %2571 = vmatpush.bf16.msra.mxu0 %v780
    %2572 = vmatpush.bf16.msra.mxu0 %v774
    %2573 = vmatpush.bf16.msra.mxu0 %v768
    %2574 = vmatmul.bf16.gmra.mxu0 %v2448
    %v2575 = vpop.f32.mrf.mxu0
    %v2576 = vadd.f32 %v2563, %v2575
    %v2577 = vpop.f32.mrf.mxu0
    %2578 = vdwg.mxu0
    %2579 = vmatpush.bf16.msra.mxu0 %v763
    %2580 = vmatpush.bf16.msra.mxu0 %v757
    %2581 = vmatpush.bf16.msra.mxu0 %v751
    %2582 = vmatpush.bf16.msra.mxu0 %v745
    %2583 = vmatpush.bf16.msra.mxu0 %v739
    %2584 = vmatpush.bf16.msra.mxu0 %v733
    %2585 = vmatpush.bf16.msra.mxu0 %v727
    %2586 = vmatpush.bf16.msra.mxu0 %v721
    %2587 = vmatmul.bf16.gmra.mxu0 %v2447
    %v2588 = vpop.f32.mrf.mxu0
    %v2589 = vadd.f32 0.0, %v2588
    %v2590 = vpop.f32.mrf.mxu0
    %2591 = vdwg.mxu0
    %2592 = vmatpush.bf16.msra.mxu0 %v811
    %2593 = vmatpush.bf16.msra.mxu0 %v805
    %2594 = vmatpush.bf16.msra.mxu0 %v799
    %2595 = vmatpush.bf16.msra.mxu0 %v793
    %2596 = vmatpush.bf16.msra.mxu0 %v787
    %2597 = vmatpush.bf16.msra.mxu0 %v781
    %2598 = vmatpush.bf16.msra.mxu0 %v775
    %2599 = vmatpush.bf16.msra.mxu0 %v769
    %2600 = vmatmul.bf16.gmra.mxu0 %v2448
    %v2601 = vpop.f32.mrf.mxu0
    %v2602 = vadd.f32 %v2589, %v2601
    %v2603 = vpop.f32.mrf.mxu0
    %2604 = vdwg.mxu0
    %v2605 = vadd.f32 %v319, %v2472
    %v2606 = vadd.f32 %v320, %v2498
    %v2607 = vxor.u32 %v2605, 2147483648
    %v2608 = vxor.u32 %v2606, 2147483648
    %v2609 = vmul.f32 %v2607, 1.442695
    %v2610 = vpow.pop %v2609
    %v2611 = vmul.f32 %v2608, 1.442695
    %v2612 = vpow.pop %v2611
    %v2613 = vadd.f32 %v2610, 1.0
    %v2614 = vadd.f32 %v2612, 1.0
    %v2615 = vrcp.pop %v2613
    %v2616 = vmul.f32 %v2613, %v2615
    %v2617 = vsub.f32 1.0, %v2616
    %v2618 = vmul.f32 %v2615, %v2617
    %v2619 = vadd.f32 %v2615, %v2618
    %vm2620 = vweird.f32 %v2613
    %vm2621 = vweird.f32 %v2615
    %vm2622 = vmor %vm2620, %vm2621
    %v2623 = vsel %vm2622, %v2615, %v2619
    %v2624 = vand.u32 2147483647, %v2613
    %vm2625 = vcmp.eq.f32.partialorder %v2624, 8.507059e+37
    %v2626 = vand.u32 %v2613, 2147483648
    %v2627 = vor.u32 1.1754944e-38, %v2626
    %v2628 = vsel %vm2625, %v2627, %v2623
    %v2629 = vmul.f32 1.0, %v2628
    %v2630 = vrcp.pop %v2614
    %v2631 = vmul.f32 %v2614, %v2630
    %v2632 = vsub.f32 1.0, %v2631
    %v2633 = vmul.f32 %v2630, %v2632
    %v2634 = vadd.f32 %v2630, %v2633
    %vm2635 = vweird.f32 %v2614
    %vm2636 = vweird.f32 %v2630
    %vm2637 = vmor %vm2635, %vm2636
    %v2638 = vsel %vm2637, %v2630, %v2634
    %v2639 = vand.u32 2147483647, %v2614
    %vm2640 = vcmp.eq.f32.partialorder %v2639, 8.507059e+37
    %v2641 = vand.u32 %v2614, 2147483648
    %v2642 = vor.u32 1.1754944e-38, %v2641
    %v2643 = vsel %vm2640, %v2642, %v2638
    %v2644 = vmul.f32 1.0, %v2643
    %v2645 = vadd.f32 %v321, %v2524
    %v2646 = vadd.f32 %v322, %v2550
    %v2647 = vxor.u32 %v2645, 2147483648
    %v2648 = vxor.u32 %v2646, 2147483648
    %v2649 = vmul.f32 %v2647, 1.442695
    %v2650 = vpow.pop %v2649
    %v2651 = vmul.f32 %v2648, 1.442695
    %v2652 = vpow.pop %v2651
    %v2653 = vadd.f32 %v2650, 1.0
    %v2654 = vadd.f32 %v2652, 1.0
    %v2655 = vrcp.pop %v2653
    %v2656 = vmul.f32 %v2653, %v2655
    %v2657 = vsub.f32 1.0, %v2656
    %v2658 = vmul.f32 %v2655, %v2657
    %v2659 = vadd.f32 %v2655, %v2658
    %vm2660 = vweird.f32 %v2653
    %vm2661 = vweird.f32 %v2655
    %vm2662 = vmor %vm2660, %vm2661
    %v2663 = vsel %vm2662, %v2655, %v2659
    %v2664 = vand.u32 2147483647, %v2653
    %vm2665 = vcmp.eq.f32.partialorder %v2664, 8.507059e+37
    %v2666 = vand.u32 %v2653, 2147483648
    %v2667 = vor.u32 1.1754944e-38, %v2666
    %v2668 = vsel %vm2665, %v2667, %v2663
    %v2669 = vmul.f32 1.0, %v2668
    %v2670 = vrcp.pop %v2654
    %v2671 = vmul.f32 %v2654, %v2670
    %v2672 = vsub.f32 1.0, %v2671
    %v2673 = vmul.f32 %v2670, %v2672
    %v2674 = vadd.f32 %v2670, %v2673
    %vm2675 = vweird.f32 %v2654
    %vm2676 = vweird.f32 %v2670
    %vm2677 = vmor %vm2675, %vm2676
    %v2678 = vsel %vm2677, %v2670, %v2674
    %v2679 = vand.u32 2147483647, %v2654
    %vm2680 = vcmp.eq.f32.partialorder %v2679, 8.507059e+37
    %v2681 = vand.u32 %v2654, 2147483648
    %v2682 = vor.u32 1.1754944e-38, %v2681
    %v2683 = vsel %vm2680, %v2682, %v2678
    %v2684 = vmul.f32 1.0, %v2683
    %v2685 = vadd.f32 %v2576, %v1145
    %v2686 = vadd.f32 %v2602, %v1146
    %v2687 = vmul.f32 %v2629, %v2685
    %v2688 = vmul.f32 %v2644, %v2686
    %v2689 = vadd.f32 %v323, %v2687
    %v2690 = vadd.f32 %v324, %v2688
    %v2691 = vtanh.pop %v2689
    %v2692 = vtanh.pop %v2690
    %v2693 = vsub.f32 1.0, %v2669
    %v2694 = vsub.f32 1.0, %v2684
    %v2695 = vmul.f32 %v2693, %v2691
    %v2696 = vmul.f32 %v2694, %v2692
    %v2697 = vmul.f32 %v2669, %v2443
    %v2698 = vmul.f32 %v2684, %v2444
    %v2699 = vadd.f32 %v2695, %v2697
    %v2700 = vadd.f32 %v2696, %v2698
    %2701 = vst [vmem:[#allocation2 + $0x60] sm:$0xff] %v2699
    %2702 = vst [vmem:[#allocation2 + $0x68] sm:$0xff] %v2700
    %v2703 = vpack.c.bf16 %v2699, %v2699
    %v2704 = vpack.c.bf16 %v2700, %v2700
    %2705 = vmatpush.bf16.msra.mxu0 %v758
    %2706 = vmatpush.bf16.msra.mxu0 %v752
    %2707 = vmatpush.bf16.msra.mxu0 %v746
    %2708 = vmatpush.bf16.msra.mxu0 %v740
    %2709 = vmatpush.bf16.msra.mxu0 %v734
    %2710 = vmatpush.bf16.msra.mxu0 %v728
    %2711 = vmatpush.bf16.msra.mxu0 %v722
    %2712 = vmatpush.bf16.msra.mxu0 %v716
    %2713 = vmatmul.bf16.gmra.mxu0 %v2703
    %v2714 = vpop.f32.mrf.mxu0
    %v2715 = vadd.f32 0.0, %v2714
    %v2716 = vpop.f32.mrf.mxu0
    %2717 = vdwg.mxu0
    %2718 = vmatpush.bf16.msra.mxu0 %v806
    %2719 = vmatpush.bf16.msra.mxu0 %v800
    %2720 = vmatpush.bf16.msra.mxu0 %v794
    %2721 = vmatpush.bf16.msra.mxu0 %v788
    %2722 = vmatpush.bf16.msra.mxu0 %v782
    %2723 = vmatpush.bf16.msra.mxu0 %v776
    %2724 = vmatpush.bf16.msra.mxu0 %v770
    %2725 = vmatpush.bf16.msra.mxu0 %v764
    %2726 = vmatmul.bf16.gmra.mxu0 %v2704
    %v2727 = vpop.f32.mrf.mxu0
    %v2728 = vadd.f32 %v2715, %v2727
    %v2729 = vpop.f32.mrf.mxu0
    %2730 = vdwg.mxu0
    %2731 = vmatpush.bf16.msra.mxu0 %v759
    %2732 = vmatpush.bf16.msra.mxu0 %v753
    %2733 = vmatpush.bf16.msra.mxu0 %v747
    %2734 = vmatpush.bf16.msra.mxu0 %v741
    %2735 = vmatpush.bf16.msra.mxu0 %v735
    %2736 = vmatpush.bf16.msra.mxu0 %v729
    %2737 = vmatpush.bf16.msra.mxu0 %v723
    %2738 = vmatpush.bf16.msra.mxu0 %v717
    %2739 = vmatmul.bf16.gmra.mxu0 %v2703
    %v2740 = vpop.f32.mrf.mxu0
    %v2741 = vadd.f32 0.0, %v2740
    %v2742 = vpop.f32.mrf.mxu0
    %2743 = vdwg.mxu0
    %2744 = vmatpush.bf16.msra.mxu0 %v807
    %2745 = vmatpush.bf16.msra.mxu0 %v801
    %2746 = vmatpush.bf16.msra.mxu0 %v795
    %2747 = vmatpush.bf16.msra.mxu0 %v789
    %2748 = vmatpush.bf16.msra.mxu0 %v783
    %2749 = vmatpush.bf16.msra.mxu0 %v777
    %2750 = vmatpush.bf16.msra.mxu0 %v771
    %2751 = vmatpush.bf16.msra.mxu0 %v765
    %2752 = vmatmul.bf16.gmra.mxu0 %v2704
    %v2753 = vpop.f32.mrf.mxu0
    %v2754 = vadd.f32 %v2741, %v2753
    %v2755 = vpop.f32.mrf.mxu0
    %2756 = vdwg.mxu0
    %2757 = vmatpush.bf16.msra.mxu0 %v760
    %2758 = vmatpush.bf16.msra.mxu0 %v754
    %2759 = vmatpush.bf16.msra.mxu0 %v748
    %2760 = vmatpush.bf16.msra.mxu0 %v742
    %2761 = vmatpush.bf16.msra.mxu0 %v736
    %2762 = vmatpush.bf16.msra.mxu0 %v730
    %2763 = vmatpush.bf16.msra.mxu0 %v724
    %2764 = vmatpush.bf16.msra.mxu0 %v718
    %2765 = vmatmul.bf16.gmra.mxu0 %v2703
    %v2766 = vpop.f32.mrf.mxu0
    %v2767 = vadd.f32 0.0, %v2766
    %v2768 = vpop.f32.mrf.mxu0
    %2769 = vdwg.mxu0
    %2770 = vmatpush.bf16.msra.mxu0 %v808
    %2771 = vmatpush.bf16.msra.mxu0 %v802
    %2772 = vmatpush.bf16.msra.mxu0 %v796
    %2773 = vmatpush.bf16.msra.mxu0 %v790
    %2774 = vmatpush.bf16.msra.mxu0 %v784
    %2775 = vmatpush.bf16.msra.mxu0 %v778
    %2776 = vmatpush.bf16.msra.mxu0 %v772
    %2777 = vmatpush.bf16.msra.mxu0 %v766
    %2778 = vmatmul.bf16.gmra.mxu0 %v2704
    %v2779 = vpop.f32.mrf.mxu0
    %v2780 = vadd.f32 %v2767, %v2779
    %v2781 = vpop.f32.mrf.mxu0
    %2782 = vdwg.mxu0
    %2783 = vmatpush.bf16.msra.mxu0 %v761
    %2784 = vmatpush.bf16.msra.mxu0 %v755
    %2785 = vmatpush.bf16.msra.mxu0 %v749
    %2786 = vmatpush.bf16.msra.mxu0 %v743
    %2787 = vmatpush.bf16.msra.mxu0 %v737
    %2788 = vmatpush.bf16.msra.mxu0 %v731
    %2789 = vmatpush.bf16.msra.mxu0 %v725
    %2790 = vmatpush.bf16.msra.mxu0 %v719
    %2791 = vmatmul.bf16.gmra.mxu0 %v2703
    %v2792 = vpop.f32.mrf.mxu0
    %v2793 = vadd.f32 0.0, %v2792
    %v2794 = vpop.f32.mrf.mxu0
    %2795 = vdwg.mxu0
    %2796 = vmatpush.bf16.msra.mxu0 %v809
    %2797 = vmatpush.bf16.msra.mxu0 %v803
    %2798 = vmatpush.bf16.msra.mxu0 %v797
    %2799 = vmatpush.bf16.msra.mxu0 %v791
    %2800 = vmatpush.bf16.msra.mxu0 %v785
    %2801 = vmatpush.bf16.msra.mxu0 %v779
    %2802 = vmatpush.bf16.msra.mxu0 %v773
    %2803 = vmatpush.bf16.msra.mxu0 %v767
    %2804 = vmatmul.bf16.gmra.mxu0 %v2704
    %v2805 = vpop.f32.mrf.mxu0
    %v2806 = vadd.f32 %v2793, %v2805
    %v2807 = vpop.f32.mrf.mxu0
    %2808 = vdwg.mxu0
    %2809 = vmatpush.bf16.msra.mxu0 %v762
    %2810 = vmatpush.bf16.msra.mxu0 %v756
    %2811 = vmatpush.bf16.msra.mxu0 %v750
    %2812 = vmatpush.bf16.msra.mxu0 %v744
    %2813 = vmatpush.bf16.msra.mxu0 %v738
    %2814 = vmatpush.bf16.msra.mxu0 %v732
    %2815 = vmatpush.bf16.msra.mxu0 %v726
    %2816 = vmatpush.bf16.msra.mxu0 %v720
    %2817 = vmatmul.bf16.gmra.mxu0 %v2703
    %v2818 = vpop.f32.mrf.mxu0
    %v2819 = vadd.f32 0.0, %v2818
    %v2820 = vpop.f32.mrf.mxu0
    %2821 = vdwg.mxu0
    %2822 = vmatpush.bf16.msra.mxu0 %v810
    %2823 = vmatpush.bf16.msra.mxu0 %v804
    %2824 = vmatpush.bf16.msra.mxu0 %v798
    %2825 = vmatpush.bf16.msra.mxu0 %v792
    %2826 = vmatpush.bf16.msra.mxu0 %v786
    %2827 = vmatpush.bf16.msra.mxu0 %v780
    %2828 = vmatpush.bf16.msra.mxu0 %v774
    %2829 = vmatpush.bf16.msra.mxu0 %v768
    %2830 = vmatmul.bf16.gmra.mxu0 %v2704
    %v2831 = vpop.f32.mrf.mxu0
    %v2832 = vadd.f32 %v2819, %v2831
    %v2833 = vpop.f32.mrf.mxu0
    %2834 = vdwg.mxu0
    %2835 = vmatpush.bf16.msra.mxu0 %v763
    %2836 = vmatpush.bf16.msra.mxu0 %v757
    %2837 = vmatpush.bf16.msra.mxu0 %v751
    %2838 = vmatpush.bf16.msra.mxu0 %v745
    %2839 = vmatpush.bf16.msra.mxu0 %v739
    %2840 = vmatpush.bf16.msra.mxu0 %v733
    %2841 = vmatpush.bf16.msra.mxu0 %v727
    %2842 = vmatpush.bf16.msra.mxu0 %v721
    %2843 = vmatmul.bf16.gmra.mxu0 %v2703
    %v2844 = vpop.f32.mrf.mxu0
    %v2845 = vadd.f32 0.0, %v2844
    %v2846 = vpop.f32.mrf.mxu0
    %2847 = vdwg.mxu0
    %2848 = vmatpush.bf16.msra.mxu0 %v811
    %2849 = vmatpush.bf16.msra.mxu0 %v805
    %2850 = vmatpush.bf16.msra.mxu0 %v799
    %2851 = vmatpush.bf16.msra.mxu0 %v793
    %2852 = vmatpush.bf16.msra.mxu0 %v787
    %2853 = vmatpush.bf16.msra.mxu0 %v781
    %2854 = vmatpush.bf16.msra.mxu0 %v775
    %2855 = vmatpush.bf16.msra.mxu0 %v769
    %2856 = vmatmul.bf16.gmra.mxu0 %v2704
    %v2857 = vpop.f32.mrf.mxu0
    %v2858 = vadd.f32 %v2845, %v2857
    %v2859 = vpop.f32.mrf.mxu0
    %2860 = vdwg.mxu0
    %v2861 = vadd.f32 %v325, %v2728
    %v2862 = vadd.f32 %v326, %v2754
    %v2863 = vxor.u32 %v2861, 2147483648
    %v2864 = vxor.u32 %v2862, 2147483648
    %v2865 = vmul.f32 %v2863, 1.442695
    %v2866 = vpow.pop %v2865
    %v2867 = vmul.f32 %v2864, 1.442695
    %v2868 = vpow.pop %v2867
    %v2869 = vadd.f32 %v2866, 1.0
    %v2870 = vadd.f32 %v2868, 1.0
    %v2871 = vrcp.pop %v2869
    %v2872 = vmul.f32 %v2869, %v2871
    %v2873 = vsub.f32 1.0, %v2872
    %v2874 = vmul.f32 %v2871, %v2873
    %v2875 = vadd.f32 %v2871, %v2874
    %vm2876 = vweird.f32 %v2869
    %vm2877 = vweird.f32 %v2871
    %vm2878 = vmor %vm2876, %vm2877
    %v2879 = vsel %vm2878, %v2871, %v2875
    %v2880 = vand.u32 2147483647, %v2869
    %vm2881 = vcmp.eq.f32.partialorder %v2880, 8.507059e+37
    %v2882 = vand.u32 %v2869, 2147483648
    %v2883 = vor.u32 1.1754944e-38, %v2882
    %v2884 = vsel %vm2881, %v2883, %v2879
    %v2885 = vmul.f32 1.0, %v2884
    %v2886 = vrcp.pop %v2870
    %v2887 = vmul.f32 %v2870, %v2886
    %v2888 = vsub.f32 1.0, %v2887
    %v2889 = vmul.f32 %v2886, %v2888
    %v2890 = vadd.f32 %v2886, %v2889
    %vm2891 = vweird.f32 %v2870
    %vm2892 = vweird.f32 %v2886
    %vm2893 = vmor %vm2891, %vm2892
    %v2894 = vsel %vm2893, %v2886, %v2890
    %v2895 = vand.u32 2147483647, %v2870
    %vm2896 = vcmp.eq.f32.partialorder %v2895, 8.507059e+37
    %v2897 = vand.u32 %v2870, 2147483648
    %v2898 = vor.u32 1.1754944e-38, %v2897
    %v2899 = vsel %vm2896, %v2898, %v2894
    %v2900 = vmul.f32 1.0, %v2899
    %v2901 = vadd.f32 %v327, %v2780
    %v2902 = vadd.f32 %v328, %v2806
    %v2903 = vxor.u32 %v2901, 2147483648
    %v2904 = vxor.u32 %v2902, 2147483648
    %v2905 = vmul.f32 %v2903, 1.442695
    %v2906 = vpow.pop %v2905
    %v2907 = vmul.f32 %v2904, 1.442695
    %v2908 = vpow.pop %v2907
    %v2909 = vadd.f32 %v2906, 1.0
    %v2910 = vadd.f32 %v2908, 1.0
    %v2911 = vrcp.pop %v2909
    %v2912 = vmul.f32 %v2909, %v2911
    %v2913 = vsub.f32 1.0, %v2912
    %v2914 = vmul.f32 %v2911, %v2913
    %v2915 = vadd.f32 %v2911, %v2914
    %vm2916 = vweird.f32 %v2909
    %vm2917 = vweird.f32 %v2911
    %vm2918 = vmor %vm2916, %vm2917
    %v2919 = vsel %vm2918, %v2911, %v2915
    %v2920 = vand.u32 2147483647, %v2909
    %vm2921 = vcmp.eq.f32.partialorder %v2920, 8.507059e+37
    %v2922 = vand.u32 %v2909, 2147483648
    %v2923 = vor.u32 1.1754944e-38, %v2922
    %v2924 = vsel %vm2921, %v2923, %v2919
    %v2925 = vmul.f32 1.0, %v2924
    %v2926 = vrcp.pop %v2910
    %v2927 = vmul.f32 %v2910, %v2926
    %v2928 = vsub.f32 1.0, %v2927
    %v2929 = vmul.f32 %v2926, %v2928
    %v2930 = vadd.f32 %v2926, %v2929
    %vm2931 = vweird.f32 %v2910
    %vm2932 = vweird.f32 %v2926
    %vm2933 = vmor %vm2931, %vm2932
    %v2934 = vsel %vm2933, %v2926, %v2930
    %v2935 = vand.u32 2147483647, %v2910
    %vm2936 = vcmp.eq.f32.partialorder %v2935, 8.507059e+37
    %v2937 = vand.u32 %v2910, 2147483648
    %v2938 = vor.u32 1.1754944e-38, %v2937
    %v2939 = vsel %vm2936, %v2938, %v2934
    %v2940 = vmul.f32 1.0, %v2939
    %v2941 = vadd.f32 %v2832, %v1145
    %v2942 = vadd.f32 %v2858, %v1146
    %v2943 = vmul.f32 %v2885, %v2941
    %v2944 = vmul.f32 %v2900, %v2942
    %v2945 = vadd.f32 %v329, %v2943
    %v2946 = vadd.f32 %v330, %v2944
    %v2947 = vtanh.pop %v2945
    %v2948 = vtanh.pop %v2946
    %v2949 = vsub.f32 1.0, %v2925
    %v2950 = vsub.f32 1.0, %v2940
    %v2951 = vmul.f32 %v2949, %v2947
    %v2952 = vmul.f32 %v2950, %v2948
    %v2953 = vmul.f32 %v2925, %v2699
    %v2954 = vmul.f32 %v2940, %v2700
    %v2955 = vadd.f32 %v2951, %v2953
    %v2956 = vadd.f32 %v2952, %v2954
    %2957 = vst [vmem:[#allocation2 + $0x70] sm:$0xff] %v2955
    %2958 = vst [vmem:[#allocation2 + $0x78] sm:$0xff] %v2956
    %v2959 = vld [vmem:[#allocation2] sm:$0xff]
    %v2960 = vld [vmem:[#allocation2 + $0x8] sm:$0xff]
    %v2961 = vld [vmem:[#allocation2 + $0x10] sm:$0xff]
    %v2962 = vld [vmem:[#allocation2 + $0x18] sm:$0xff]
    %v2963 = vld [vmem:[#allocation2 + $0x20] sm:$0xff]
    %v2964 = vld [vmem:[#allocation2 + $0x28] sm:$0xff]
    %v2965 = vld [vmem:[#allocation2 + $0x30] sm:$0xff]
    %v2966 = vld [vmem:[#allocation2 + $0x38] sm:$0xff]
    %v2967 = vld [vmem:[#allocation2 + $0x40] sm:$0xff]
    %v2968 = vld [vmem:[#allocation2 + $0x48] sm:$0xff]
    %v2969 = vld [vmem:[#allocation2 + $0x50] sm:$0xff]
    %v2970 = vld [vmem:[#allocation2 + $0x58] sm:$0xff]
    %v2971 = vld [vmem:[#allocation2 + $0x60] sm:$0xff]
    %v2972 = vld [vmem:[#allocation2 + $0x68] sm:$0xff]
    %v2973 = vld [vmem:[#allocation2 + $0x70] sm:$0xff]
    %v2974 = vld [vmem:[#allocation2 + $0x78] sm:$0xff]
    %v2975 = vpack.c.bf16 %v2961, %v2959
    %v2976 = vpack.c.bf16 %v2962, %v2960
    %v2977 = vpack.c.bf16 %v2965, %v2963
    %v2978 = vpack.c.bf16 %v2966, %v2964
    %v2979 = vpack.c.bf16 %v2969, %v2967
    %v2980 = vpack.c.bf16 %v2970, %v2968
    %v2981 = vpack.c.bf16 %v2973, %v2971
    %v2982 = vpack.c.bf16 %v2974, %v2972
    %v2983 = vld [vmem:[#allocation6] sm:$0xff]
    %v2984 = vld [vmem:[#allocation6 + $0x8] sm:$0xf]
    %v2985 = vld [vmem:[#allocation6 + $0xc] sm:$0xff]
    %v2986 = vld [vmem:[#allocation6 + $0x14] sm:$0xf]
    %v2987 = vld [vmem:[#allocation6 + $0x18] sm:$0xff]
    %v2988 = vld [vmem:[#allocation6 + $0x20] sm:$0xf]
    %v2989 = vld [vmem:[#allocation6 + $0x24] sm:$0xff]
    %v2990 = vld [vmem:[#allocation6 + $0x2c] sm:$0xf]
    %v2991 = vld [vmem:[#allocation6 + $0x30] sm:$0xff]
    %v2992 = vld [vmem:[#allocation6 + $0x38] sm:$0xf]
    %v2993 = vld [vmem:[#allocation6 + $0x3c] sm:$0xff]
    %v2994 = vld [vmem:[#allocation6 + $0x44] sm:$0xf]
    %v2995 = vld [vmem:[#allocation6 + $0x48] sm:$0xff]
    %v2996 = vld [vmem:[#allocation6 + $0x50] sm:$0xf]
    %v2997 = vld [vmem:[#allocation6 + $0x54] sm:$0xff]
    %v2998 = vld [vmem:[#allocation6 + $0x5c] sm:$0xf]
    %v2999 = vld [vmem:[#allocation6 + $0x60] sm:$0xff]
    %v3000 = vld [vmem:[#allocation6 + $0x68] sm:$0xf]
    %v3001 = vld [vmem:[#allocation6 + $0x6c] sm:$0xff]
    %v3002 = vld [vmem:[#allocation6 + $0x74] sm:$0xf]
    %v3003 = vld [vmem:[#allocation6 + $0x78] sm:$0xff]
    %v3004 = vld [vmem:[#allocation6 + $0x80] sm:$0xf]
    %v3005 = vld [vmem:[#allocation6 + $0x84] sm:$0xff]
    %v3006 = vld [vmem:[#allocation6 + $0x8c] sm:$0xf]
    %v3007 = vld [vmem:[#allocation6 + $0x90] sm:$0xff]
    %v3008 = vld [vmem:[#allocation6 + $0x98] sm:$0xf]
    %v3009 = vld [vmem:[#allocation6 + $0x9c] sm:$0xff]
    %v3010 = vld [vmem:[#allocation6 + $0xa4] sm:$0xf]
    %v3011 = vld [vmem:[#allocation6 + $0xa8] sm:$0xff]
    %v3012 = vld [vmem:[#allocation6 + $0xb0] sm:$0xf]
    %v3013 = vld [vmem:[#allocation6 + $0xb4] sm:$0xff]
    %v3014 = vld [vmem:[#allocation6 + $0xbc] sm:$0xf]
    %v3015 = vld [vmem:[#allocation6 + $0xc0] sm:$0xff]
    %v3016 = vld [vmem:[#allocation6 + $0xc8] sm:$0xf]
    %v3017 = vld [vmem:[#allocation6 + $0xcc] sm:$0xff]
    %v3018 = vld [vmem:[#allocation6 + $0xd4] sm:$0xf]
    %v3019 = vld [vmem:[#allocation6 + $0xd8] sm:$0xff]
    %v3020 = vld [vmem:[#allocation6 + $0xe0] sm:$0xf]
    %v3021 = vld [vmem:[#allocation6 + $0xe4] sm:$0xff]
    %v3022 = vld [vmem:[#allocation6 + $0xec] sm:$0xf]
    %v3023 = vld [vmem:[#allocation6 + $0xf0] sm:$0xff]
    %v3024 = vld [vmem:[#allocation6 + $0xf8] sm:$0xf]
    %v3025 = vld [vmem:[#allocation6 + $0xfc] sm:$0xff]
    %v3026 = vld [vmem:[#allocation6 + $0x104] sm:$0xf]
    %v3027 = vld [vmem:[#allocation6 + $0x108] sm:$0xff]
    %v3028 = vld [vmem:[#allocation6 + $0x110] sm:$0xf]
    %v3029 = vld [vmem:[#allocation6 + $0x114] sm:$0xff]
    %v3030 = vld [vmem:[#allocation6 + $0x11c] sm:$0xf]
    %v3031 = vld [vmem:[#allocation6 + $0x120] sm:$0xff]
    %v3032 = vld [vmem:[#allocation6 + $0x128] sm:$0xf]
    %v3033 = vld [vmem:[#allocation6 + $0x12c] sm:$0xff]
    %v3034 = vld [vmem:[#allocation6 + $0x134] sm:$0xf]
    %v3035 = vld [vmem:[#allocation6 + $0x138] sm:$0xff]
    %v3036 = vld [vmem:[#allocation6 + $0x140] sm:$0xf]
    %v3037 = vld [vmem:[#allocation6 + $0x144] sm:$0xff]
    %v3038 = vld [vmem:[#allocation6 + $0x14c] sm:$0xf]
    %v3039 = vld [vmem:[#allocation6 + $0x150] sm:$0xff]
    %v3040 = vld [vmem:[#allocation6 + $0x158] sm:$0xf]
    %v3041 = vld [vmem:[#allocation6 + $0x15c] sm:$0xff]
    %v3042 = vld [vmem:[#allocation6 + $0x164] sm:$0xf]
    %v3043 = vld [vmem:[#allocation6 + $0x168] sm:$0xff]
    %v3044 = vld [vmem:[#allocation6 + $0x170] sm:$0xf]
    %v3045 = vld [vmem:[#allocation6 + $0x174] sm:$0xff]
    %v3046 = vld [vmem:[#allocation6 + $0x17c] sm:$0xf]
    %v3047 = vld [vmem:[%s7] sm:$0x7]
    %v3049 = vperm.slane %v3047, 0
    %v3050 = vperm.slane %v3047, 1
    %v3051 = vperm.slane %v3047, 2
    %v3119 = vunpack.c.l.b16 %v2983
    %v3120 = vunpack.c.h.b16 %v2983
    %v3121 = vunpack.c.l.b16 %v2984
    %v3122 = vunpack.c.l.b16 %v2985
    %v3123 = vunpack.c.h.b16 %v2985
    %v3124 = vunpack.c.l.b16 %v2986
    %v3125 = vunpack.c.l.b16 %v2987
    %v3126 = vunpack.c.h.b16 %v2987
    %v3127 = vunpack.c.l.b16 %v2988
    %v3128 = vunpack.c.l.b16 %v2989
    %v3129 = vunpack.c.h.b16 %v2989
    %v3130 = vunpack.c.l.b16 %v2990
    %v3131 = vunpack.c.l.b16 %v2991
    %v3132 = vunpack.c.h.b16 %v2991
    %v3133 = vunpack.c.l.b16 %v2992
    %v3134 = vunpack.c.l.b16 %v2993
    %v3135 = vunpack.c.h.b16 %v2993
    %v3136 = vunpack.c.l.b16 %v2994
    %v3137 = vunpack.c.l.b16 %v2995
    %v3138 = vunpack.c.h.b16 %v2995
    %v3139 = vunpack.c.l.b16 %v2996
    %v3140 = vunpack.c.l.b16 %v2997
    %v3141 = vunpack.c.h.b16 %v2997
    %v3142 = vunpack.c.l.b16 %v2998
    %v3143 = vunpack.c.l.b16 %v2999
    %v3144 = vunpack.c.h.b16 %v2999
    %v3145 = vunpack.c.l.b16 %v3000
    %v3146 = vunpack.c.l.b16 %v3001
    %v3147 = vunpack.c.h.b16 %v3001
    %v3148 = vunpack.c.l.b16 %v3002
    %v3149 = vunpack.c.l.b16 %v3003
    %v3150 = vunpack.c.h.b16 %v3003
    %v3151 = vunpack.c.l.b16 %v3004
    %v3152 = vunpack.c.l.b16 %v3005
    %v3153 = vunpack.c.h.b16 %v3005
    %v3154 = vunpack.c.l.b16 %v3006
    %v3155 = vunpack.c.l.b16 %v3007
    %v3156 = vunpack.c.h.b16 %v3007
    %v3157 = vunpack.c.l.b16 %v3008
    %v3158 = vunpack.c.l.b16 %v3009
    %v3159 = vunpack.c.h.b16 %v3009
    %v3160 = vunpack.c.l.b16 %v3010
    %v3161 = vunpack.c.l.b16 %v3011
    %v3162 = vunpack.c.h.b16 %v3011
    %v3163 = vunpack.c.l.b16 %v3012
    %v3164 = vunpack.c.l.b16 %v3013
    %v3165 = vunpack.c.h.b16 %v3013
    %v3166 = vunpack.c.l.b16 %v3014
    %v3167 = vunpack.c.l.b16 %v3015
    %v3168 = vunpack.c.h.b16 %v3015
    %v3169 = vunpack.c.l.b16 %v3016
    %v3170 = vunpack.c.l.b16 %v3017
    %v3171 = vunpack.c.h.b16 %v3017
    %v3172 = vunpack.c.l.b16 %v3018
    %v3173 = vunpack.c.l.b16 %v3019
    %v3174 = vunpack.c.h.b16 %v3019
    %v3175 = vunpack.c.l.b16 %v3020
    %v3176 = vunpack.c.l.b16 %v3021
    %v3177 = vunpack.c.h.b16 %v3021
    %v3178 = vunpack.c.l.b16 %v3022
    %v3179 = vunpack.c.l.b16 %v3023
    %v3180 = vunpack.c.h.b16 %v3023
    %v3181 = vunpack.c.l.b16 %v3024
    %v3182 = vunpack.c.l.b16 %v3025
    %v3183 = vunpack.c.h.b16 %v3025
    %v3184 = vunpack.c.l.b16 %v3026
    %v3185 = vunpack.c.l.b16 %v3027
    %v3186 = vunpack.c.h.b16 %v3027
    %v3187 = vunpack.c.l.b16 %v3028
    %v3188 = vunpack.c.l.b16 %v3029
    %v3189 = vunpack.c.h.b16 %v3029
    %v3190 = vunpack.c.l.b16 %v3030
    %v3191 = vunpack.c.l.b16 %v3031
    %v3192 = vunpack.c.h.b16 %v3031
    %v3193 = vunpack.c.l.b16 %v3032
    %v3194 = vunpack.c.l.b16 %v3033
    %v3195 = vunpack.c.h.b16 %v3033
    %v3196 = vunpack.c.l.b16 %v3034
    %v3197 = vunpack.c.l.b16 %v3035
    %v3198 = vunpack.c.h.b16 %v3035
    %v3199 = vunpack.c.l.b16 %v3036
    %v3200 = vunpack.c.l.b16 %v3037
    %v3201 = vunpack.c.h.b16 %v3037
    %v3202 = vunpack.c.l.b16 %v3038
    %v3203 = vunpack.c.l.b16 %v3039
    %v3204 = vunpack.c.h.b16 %v3039
    %v3205 = vunpack.c.l.b16 %v3040
    %v3206 = vunpack.c.l.b16 %v3041
    %v3207 = vunpack.c.h.b16 %v3041
    %v3208 = vunpack.c.l.b16 %v3042
    %v3209 = vunpack.c.l.b16 %v3043
    %v3210 = vunpack.c.h.b16 %v3043
    %v3211 = vunpack.c.l.b16 %v3044
    %v3212 = vunpack.c.l.b16 %v3045
    %v3213 = vunpack.c.h.b16 %v3045
    %v3214 = vunpack.c.l.b16 %v3046
    %v3215 = vpack.c.b16 %v3122, %v3119
    %v3216 = vpack.c.b16 %v3123, %v3120
    %v3217 = vpack.c.b16 %v3124, %v3121
    %v3218 = vpack.c.b16 %v3128, %v3125
    %v3219 = vpack.c.b16 %v3129, %v3126
    %v3220 = vpack.c.b16 %v3130, %v3127
    %v3221 = vpack.c.b16 %v3134, %v3131
    %v3222 = vpack.c.b16 %v3135, %v3132
    %v3223 = vpack.c.b16 %v3136, %v3133
    %v3224 = vpack.c.b16 %v3140, %v3137
    %v3225 = vpack.c.b16 %v3141, %v3138
    %v3226 = vpack.c.b16 %v3142, %v3139
    %v3227 = vpack.c.b16 %v3146, %v3143
    %v3228 = vpack.c.b16 %v3147, %v3144
    %v3229 = vpack.c.b16 %v3148, %v3145
    %v3230 = vpack.c.b16 %v3152, %v3149
    %v3231 = vpack.c.b16 %v3153, %v3150
    %v3232 = vpack.c.b16 %v3154, %v3151
    %v3233 = vpack.c.b16 %v3158, %v3155
    %v3234 = vpack.c.b16 %v3159, %v3156
    %v3235 = vpack.c.b16 %v3160, %v3157
    %v3236 = vpack.c.b16 %v3164, %v3161
    %v3237 = vpack.c.b16 %v3165, %v3162
    %v3238 = vpack.c.b16 %v3166, %v3163
    %v3239 = vpack.c.b16 %v3170, %v3167
    %v3240 = vpack.c.b16 %v3171, %v3168
    %v3241 = vpack.c.b16 %v3172, %v3169
    %v3242 = vpack.c.b16 %v3176, %v3173
    %v3243 = vpack.c.b16 %v3177, %v3174
    %v3244 = vpack.c.b16 %v3178, %v3175
    %v3245 = vpack.c.b16 %v3182, %v3179
    %v3246 = vpack.c.b16 %v3183, %v3180
    %v3247 = vpack.c.b16 %v3184, %v3181
    %v3248 = vpack.c.b16 %v3188, %v3185
    %v3249 = vpack.c.b16 %v3189, %v3186
    %v3250 = vpack.c.b16 %v3190, %v3187
    %v3251 = vpack.c.b16 %v3194, %v3191
    %v3252 = vpack.c.b16 %v3195, %v3192
    %v3253 = vpack.c.b16 %v3196, %v3193
    %v3254 = vpack.c.b16 %v3200, %v3197
    %v3255 = vpack.c.b16 %v3201, %v3198
    %v3256 = vpack.c.b16 %v3202, %v3199
    %v3257 = vpack.c.b16 %v3206, %v3203
    %v3258 = vpack.c.b16 %v3207, %v3204
    %v3259 = vpack.c.b16 %v3208, %v3205
    %v3260 = vpack.c.b16 %v3212, %v3209
    %v3261 = vpack.c.b16 %v3213, %v3210
    %v3262 = vpack.c.b16 %v3214, %v3211
    %3311 = vmatpush.bf16.msra.mxu0 %v3236
    %3312 = vmatpush.bf16.msra.mxu0 %v3233
    %3313 = vmatpush.bf16.msra.mxu0 %v3230
    %3314 = vmatpush.bf16.msra.mxu0 %v3227
    %3315 = vmatpush.bf16.msra.mxu0 %v3224
    %3316 = vmatpush.bf16.msra.mxu0 %v3221
    %3317 = vmatpush.bf16.msra.mxu0 %v3218
    %3318 = vmatpush.bf16.msra.mxu0 %v3215
    %3319 = vmatmul.bf16.gmra.mxu0 %v2975
    %v3320 = vpop.f32.mrf.mxu0
    %v3321 = vadd.f32 %v3049, %v3320
    %v3322 = vpop.f32.mrf.mxu0
    %v3323 = vadd.f32 %v3049, %v3322
    %3324 = vmatmul.bf16.gmra.mxu0 %v2977
    %v3325 = vpop.f32.mrf.mxu0
    %v3326 = vadd.f32 %v3049, %v3325
    %v3327 = vpop.f32.mrf.mxu0
    %v3328 = vadd.f32 %v3049, %v3327
    %3329 = vmatmul.bf16.gmra.mxu0 %v2979
    %v3330 = vpop.f32.mrf.mxu0
    %v3331 = vadd.f32 %v3049, %v3330
    %v3332 = vpop.f32.mrf.mxu0
    %v3333 = vadd.f32 %v3049, %v3332
    %3334 = vmatmul.bf16.gmra.mxu0 %v2981
    %v3335 = vpop.f32.mrf.mxu0
    %v3336 = vadd.f32 %v3049, %v3335
    %v3337 = vpop.f32.mrf.mxu0
    %v3338 = vadd.f32 %v3049, %v3337
    %3339 = vdwg.mxu0
    %3340 = vmatpush.bf16.msra.mxu0 %v3260
    %3341 = vmatpush.bf16.msra.mxu0 %v3257
    %3342 = vmatpush.bf16.msra.mxu0 %v3254
    %3343 = vmatpush.bf16.msra.mxu0 %v3251
    %3344 = vmatpush.bf16.msra.mxu0 %v3248
    %3345 = vmatpush.bf16.msra.mxu0 %v3245
    %3346 = vmatpush.bf16.msra.mxu0 %v3242
    %3347 = vmatpush.bf16.msra.mxu0 %v3239
    %3348 = vmatmul.bf16.gmra.mxu0 %v2976
    %v3349 = vpop.f32.mrf.mxu0
    %v3350 = vadd.f32 %v3321, %v3349
    %v3351 = vpop.f32.mrf.mxu0
    %v3352 = vadd.f32 %v3323, %v3351
    %3353 = vmatmul.bf16.gmra.mxu0 %v2978
    %v3354 = vpop.f32.mrf.mxu0
    %v3355 = vadd.f32 %v3326, %v3354
    %v3356 = vpop.f32.mrf.mxu0
    %v3357 = vadd.f32 %v3328, %v3356
    %3358 = vmatmul.bf16.gmra.mxu0 %v2980
    %v3359 = vpop.f32.mrf.mxu0
    %v3360 = vadd.f32 %v3331, %v3359
    %v3361 = vpop.f32.mrf.mxu0
    %v3362 = vadd.f32 %v3333, %v3361
    %3363 = vmatmul.bf16.gmra.mxu0 %v2982
    %v3364 = vpop.f32.mrf.mxu0
    %v3365 = vadd.f32 %v3336, %v3364
    %v3366 = vpop.f32.mrf.mxu0
    %v3367 = vadd.f32 %v3338, %v3366
    %3368 = vdwg.mxu0
    %3369 = vmatpush.bf16.msra.mxu0 %v3237
    %3370 = vmatpush.bf16.msra.mxu0 %v3234
    %3371 = vmatpush.bf16.msra.mxu0 %v3231
    %3372 = vmatpush.bf16.msra.mxu0 %v3228
    %3373 = vmatpush.bf16.msra.mxu0 %v3225
    %3374 = vmatpush.bf16.msra.mxu0 %v3222
    %3375 = vmatpush.bf16.msra.mxu0 %v3219
    %3376 = vmatpush.bf16.msra.mxu0 %v3216
    %3377 = vmatmul.bf16.gmra.mxu0 %v2975
    %v3378 = vpop.f32.mrf.mxu0
    %v3379 = vadd.f32 %v3050, %v3378
    %v3380 = vpop.f32.mrf.mxu0
    %v3381 = vadd.f32 %v3050, %v3380
    %3382 = vmatmul.bf16.gmra.mxu0 %v2977
    %v3383 = vpop.f32.mrf.mxu0
    %v3384 = vadd.f32 %v3050, %v3383
    %v3385 = vpop.f32.mrf.mxu0
    %v3386 = vadd.f32 %v3050, %v3385
    %3387 = vmatmul.bf16.gmra.mxu0 %v2979
    %v3388 = vpop.f32.mrf.mxu0
    %v3389 = vadd.f32 %v3050, %v3388
    %v3390 = vpop.f32.mrf.mxu0
    %v3391 = vadd.f32 %v3050, %v3390
    %3392 = vmatmul.bf16.gmra.mxu0 %v2981
    %v3393 = vpop.f32.mrf.mxu0
    %v3394 = vadd.f32 %v3050, %v3393
    %v3395 = vpop.f32.mrf.mxu0
    %v3396 = vadd.f32 %v3050, %v3395
    %3397 = vdwg.mxu0
    %3398 = vmatpush.bf16.msra.mxu0 %v3261
    %3399 = vmatpush.bf16.msra.mxu0 %v3258
    %3400 = vmatpush.bf16.msra.mxu0 %v3255
    %3401 = vmatpush.bf16.msra.mxu0 %v3252
    %3402 = vmatpush.bf16.msra.mxu0 %v3249
    %3403 = vmatpush.bf16.msra.mxu0 %v3246
    %3404 = vmatpush.bf16.msra.mxu0 %v3243
    %3405 = vmatpush.bf16.msra.mxu0 %v3240
    %3406 = vmatmul.bf16.gmra.mxu0 %v2976
    %v3407 = vpop.f32.mrf.mxu0
    %v3408 = vadd.f32 %v3379, %v3407
    %v3409 = vpop.f32.mrf.mxu0
    %v3410 = vadd.f32 %v3381, %v3409
    %3411 = vmatmul.bf16.gmra.mxu0 %v2978
    %v3412 = vpop.f32.mrf.mxu0
    %v3413 = vadd.f32 %v3384, %v3412
    %v3414 = vpop.f32.mrf.mxu0
    %v3415 = vadd.f32 %v3386, %v3414
    %3416 = vmatmul.bf16.gmra.mxu0 %v2980
    %v3417 = vpop.f32.mrf.mxu0
    %v3418 = vadd.f32 %v3389, %v3417
    %v3419 = vpop.f32.mrf.mxu0
    %v3420 = vadd.f32 %v3391, %v3419
    %3421 = vmatmul.bf16.gmra.mxu0 %v2982
    %v3422 = vpop.f32.mrf.mxu0
    %v3423 = vadd.f32 %v3394, %v3422
    %v3424 = vpop.f32.mrf.mxu0
    %v3425 = vadd.f32 %v3396, %v3424
    %3426 = vdwg.mxu0
    %3427 = vmatpush.bf16.msra.mxu0 %v3238
    %3428 = vmatpush.bf16.msra.mxu0 %v3235
    %3429 = vmatpush.bf16.msra.mxu0 %v3232
    %3430 = vmatpush.bf16.msra.mxu0 %v3229
    %3431 = vmatpush.bf16.msra.mxu0 %v3226
    %3432 = vmatpush.bf16.msra.mxu0 %v3223
    %3433 = vmatpush.bf16.msra.mxu0 %v3220
    %3434 = vmatpush.bf16.msra.mxu0 %v3217
    %3435 = vmatmul.bf16.gmra.mxu0 %v2975
    %v3436 = vpop.f32.mrf.mxu0
    %v3437 = vadd.f32 %v3051, %v3436
    %v3438 = vpop.f32.mrf.mxu0
    %v3439 = vadd.f32 %v3051, %v3438
    %3440 = vmatmul.bf16.gmra.mxu0 %v2977
    %v3441 = vpop.f32.mrf.mxu0
    %v3442 = vadd.f32 %v3051, %v3441
    %v3443 = vpop.f32.mrf.mxu0
    %v3444 = vadd.f32 %v3051, %v3443
    %3445 = vmatmul.bf16.gmra.mxu0 %v2979
    %v3446 = vpop.f32.mrf.mxu0
    %v3447 = vadd.f32 %v3051, %v3446
    %v3448 = vpop.f32.mrf.mxu0
    %v3449 = vadd.f32 %v3051, %v3448
    %3450 = vmatmul.bf16.gmra.mxu0 %v2981
    %v3451 = vpop.f32.mrf.mxu0
    %v3452 = vadd.f32 %v3051, %v3451
    %v3453 = vpop.f32.mrf.mxu0
    %v3454 = vadd.f32 %v3051, %v3453
    %3455 = vdwg.mxu0
    %3456 = vmatpush.bf16.msra.mxu0 %v3262
    %3457 = vmatpush.bf16.msra.mxu0 %v3259
    %3458 = vmatpush.bf16.msra.mxu0 %v3256
    %3459 = vmatpush.bf16.msra.mxu0 %v3253
    %3460 = vmatpush.bf16.msra.mxu0 %v3250
    %3461 = vmatpush.bf16.msra.mxu0 %v3247
    %3462 = vmatpush.bf16.msra.mxu0 %v3244
    %3463 = vmatpush.bf16.msra.mxu0 %v3241
    %3464 = vmatmul.bf16.gmra.mxu0 %v2976
    %v3465 = vpop.f32.mrf.mxu0
    %v3466 = vadd.f32 %v3437, %v3465
    %v3467 = vpop.f32.mrf.mxu0
    %v3468 = vadd.f32 %v3439, %v3467
    %3469 = vmatmul.bf16.gmra.mxu0 %v2978
    %v3470 = vpop.f32.mrf.mxu0
    %v3471 = vadd.f32 %v3442, %v3470
    %v3472 = vpop.f32.mrf.mxu0
    %v3473 = vadd.f32 %v3444, %v3472
    %3474 = vmatmul.bf16.gmra.mxu0 %v2980
    %v3475 = vpop.f32.mrf.mxu0
    %v3476 = vadd.f32 %v3447, %v3475
    %v3477 = vpop.f32.mrf.mxu0
    %v3478 = vadd.f32 %v3449, %v3477
    %3479 = vmatmul.bf16.gmra.mxu0 %v2982
    %v3480 = vpop.f32.mrf.mxu0
    %v3481 = vadd.f32 %v3452, %v3480
    %v3482 = vpop.f32.mrf.mxu0
    %v3483 = vadd.f32 %v3454, %v3482
    %3484 = vdwg.mxu0
    %v3485 = vld [vmem:[%s6] sm:$0xff]
    %v3486 = vld [vmem:[%s6 + $0x8] sm:$0xf]
    %v3487 = vld [vmem:[%s6 + $0xc] sm:$0xff]
    %v3488 = vld [vmem:[%s6 + $0x14] sm:$0xf]
    %v3489 = vld [vmem:[%s6 + $0x18] sm:$0xff]
    %v3490 = vld [vmem:[%s6 + $0x20] sm:$0xf]
    %v3491 = vld [vmem:[%s6 + $0x24] sm:$0xff]
    %v3492 = vld [vmem:[%s6 + $0x2c] sm:$0xf]
    %v3493 = vld [vmem:[%s6 + $0x30] sm:$0xff]
    %v3494 = vld [vmem:[%s6 + $0x38] sm:$0xf]
    %v3495 = vld [vmem:[%s6 + $0x3c] sm:$0xff]
    %v3496 = vld [vmem:[%s6 + $0x44] sm:$0xf]
    %v3497 = vld [vmem:[%s6 + $0x48] sm:$0xff]
    %v3498 = vld [vmem:[%s6 + $0x50] sm:$0xf]
    %v3499 = vld [vmem:[%s6 + $0x54] sm:$0xff]
    %v3500 = vld [vmem:[%s6 + $0x5c] sm:$0xf]
    %v3501 = vld [vmem:[%s6 + $0x60] sm:$0xff]
    %v3502 = vld [vmem:[%s6 + $0x68] sm:$0xf]
    %v3503 = vld [vmem:[%s6 + $0x6c] sm:$0xff]
    %v3504 = vld [vmem:[%s6 + $0x74] sm:$0xf]
    %v3505 = vld [vmem:[%s6 + $0x78] sm:$0xff]
    %v3506 = vld [vmem:[%s6 + $0x80] sm:$0xf]
    %v3507 = vld [vmem:[%s6 + $0x84] sm:$0xff]
    %v3508 = vld [vmem:[%s6 + $0x8c] sm:$0xf]
    %v3509 = vld [vmem:[%s6 + $0x90] sm:$0xff]
    %v3510 = vld [vmem:[%s6 + $0x98] sm:$0xf]
    %v3511 = vld [vmem:[%s6 + $0x9c] sm:$0xff]
    %v3512 = vld [vmem:[%s6 + $0xa4] sm:$0xf]
    %v3513 = vld [vmem:[%s6 + $0xa8] sm:$0xff]
    %v3514 = vld [vmem:[%s6 + $0xb0] sm:$0xf]
    %v3515 = vld [vmem:[%s6 + $0xb4] sm:$0xff]
    %v3516 = vld [vmem:[%s6 + $0xbc] sm:$0xf]
    %v3517 = vld [vmem:[%s8] sm:$0x1]
    %v3550 = vunpack.c.l.b16 %v3485
    %v3551 = vunpack.c.h.b16 %v3485
    %v3552 = vunpack.c.l.b16 %v3486
    %v3553 = vunpack.c.l.b16 %v3487
    %v3554 = vunpack.c.h.b16 %v3487
    %v3555 = vunpack.c.l.b16 %v3488
    %v3556 = vunpack.c.l.b16 %v3489
    %v3557 = vunpack.c.h.b16 %v3489
    %v3558 = vunpack.c.l.b16 %v3490
    %v3559 = vunpack.c.l.b16 %v3491
    %v3560 = vunpack.c.h.b16 %v3491
    %v3561 = vunpack.c.l.b16 %v3492
    %v3562 = vunpack.c.l.b16 %v3493
    %v3563 = vunpack.c.h.b16 %v3493
    %v3564 = vunpack.c.l.b16 %v3494
    %v3565 = vunpack.c.l.b16 %v3495
    %v3566 = vunpack.c.h.b16 %v3495
    %v3567 = vunpack.c.l.b16 %v3496
    %v3568 = vunpack.c.l.b16 %v3497
    %v3569 = vunpack.c.h.b16 %v3497
    %v3570 = vunpack.c.l.b16 %v3498
    %v3571 = vunpack.c.l.b16 %v3499
    %v3572 = vunpack.c.h.b16 %v3499
    %v3573 = vunpack.c.l.b16 %v3500
    %v3574 = vunpack.c.l.b16 %v3501
    %v3575 = vunpack.c.h.b16 %v3501
    %v3576 = vunpack.c.l.b16 %v3502
    %v3577 = vunpack.c.l.b16 %v3503
    %v3578 = vunpack.c.h.b16 %v3503
    %v3579 = vunpack.c.l.b16 %v3504
    %v3580 = vunpack.c.l.b16 %v3505
    %v3581 = vunpack.c.h.b16 %v3505
    %v3582 = vunpack.c.l.b16 %v3506
    %v3583 = vunpack.c.l.b16 %v3507
    %v3584 = vunpack.c.h.b16 %v3507
    %v3585 = vunpack.c.l.b16 %v3508
    %v3586 = vunpack.c.l.b16 %v3509
    %v3587 = vunpack.c.h.b16 %v3509
    %v3588 = vunpack.c.l.b16 %v3510
    %v3589 = vunpack.c.l.b16 %v3511
    %v3590 = vunpack.c.h.b16 %v3511
    %v3591 = vunpack.c.l.b16 %v3512
    %v3592 = vunpack.c.l.b16 %v3513
    %v3593 = vunpack.c.h.b16 %v3513
    %v3594 = vunpack.c.l.b16 %v3514
    %v3595 = vunpack.c.l.b16 %v3515
    %v3596 = vunpack.c.h.b16 %v3515
    %v3597 = vunpack.c.l.b16 %v3516
    %v3598 = vpack.c.b16 %v3553, %v3550
    %v3599 = vpack.c.b16 %v3554, %v3551
    %v3600 = vpack.c.b16 %v3555, %v3552
    %v3601 = vpack.c.b16 %v3559, %v3556
    %v3602 = vpack.c.b16 %v3560, %v3557
    %v3603 = vpack.c.b16 %v3561, %v3558
    %v3604 = vpack.c.b16 %v3565, %v3562
    %v3605 = vpack.c.b16 %v3566, %v3563
    %v3606 = vpack.c.b16 %v3567, %v3564
    %v3607 = vpack.c.b16 %v3571, %v3568
    %v3608 = vpack.c.b16 %v3572, %v3569
    %v3609 = vpack.c.b16 %v3573, %v3570
    %v3610 = vpack.c.b16 %v3577, %v3574
    %v3611 = vpack.c.b16 %v3578, %v3575
    %v3612 = vpack.c.b16 %v3579, %v3576
    %v3613 = vpack.c.b16 %v3583, %v3580
    %v3614 = vpack.c.b16 %v3584, %v3581
    %v3615 = vpack.c.b16 %v3585, %v3582
    %v3616 = vpack.c.b16 %v3589, %v3586
    %v3617 = vpack.c.b16 %v3590, %v3587
    %v3618 = vpack.c.b16 %v3591, %v3588
    %v3619 = vpack.c.b16 %v3595, %v3592
    %v3620 = vpack.c.b16 %v3596, %v3593
    %v3621 = vpack.c.b16 %v3597, %v3594
    %3646 = vmatpush.bf16.msra.mxu0 %v3619
    %3647 = vmatpush.bf16.msra.mxu0 %v3616
    %3648 = vmatpush.bf16.msra.mxu0 %v3613
    %3649 = vmatpush.bf16.msra.mxu0 %v3610
    %3650 = vmatpush.bf16.msra.mxu0 %v3607
    %3651 = vmatpush.bf16.msra.mxu0 %v3604
    %3652 = vmatpush.bf16.msra.mxu0 %v3601
    %3653 = vmatpush.bf16.msra.mxu0 %v3598
    %3654 = vmatmul.bf16.gmra.mxu0 0
    %v3655 = vpop.f32.mrf.mxu0
    %v3656 = vadd.f32 0.0, %v3655
    %v3657 = vpop.f32.mrf.mxu0
    %3658 = vdwg.mxu0
    %3659 = vmatpush.bf16.msra.mxu0 %v3620
    %3660 = vmatpush.bf16.msra.mxu0 %v3617
    %3661 = vmatpush.bf16.msra.mxu0 %v3614
    %3662 = vmatpush.bf16.msra.mxu0 %v3611
    %3663 = vmatpush.bf16.msra.mxu0 %v3608
    %3664 = vmatpush.bf16.msra.mxu0 %v3605
    %3665 = vmatpush.bf16.msra.mxu0 %v3602
    %3666 = vmatpush.bf16.msra.mxu0 %v3599
    %3667 = vmatmul.bf16.gmra.mxu0 0
    %v3668 = vpop.f32.mrf.mxu0
    %v3669 = vadd.f32 0.0, %v3668
    %v3670 = vpop.f32.mrf.mxu0
    %3671 = vdwg.mxu0
    %3672 = vmatpush.bf16.msra.mxu0 %v3621
    %3673 = vmatpush.bf16.msra.mxu0 %v3618
    %3674 = vmatpush.bf16.msra.mxu0 %v3615
    %3675 = vmatpush.bf16.msra.mxu0 %v3612
    %3676 = vmatpush.bf16.msra.mxu0 %v3609
    %3677 = vmatpush.bf16.msra.mxu0 %v3606
    %3678 = vmatpush.bf16.msra.mxu0 %v3603
    %3679 = vmatpush.bf16.msra.mxu0 %v3600
    %3680 = vmatmul.bf16.gmra.mxu0 0
    %v3681 = vpop.f32.mrf.mxu0
    %v3682 = vadd.f32 0.0, %v3681
    %v3683 = vpop.f32.mrf.mxu0
    %3684 = vdwg.mxu0
    %v3685 = vadd.f32 %v3350, %v3656
    %v3686 = vxor.u32 %v3685, 2147483648
    %v3687 = vmul.f32 %v3686, 1.442695
    %v3688 = vpow.pop %v3687
    %v3689 = vadd.f32 %v3688, 1.0
    %v3690 = vrcp.pop %v3689
    %v3691 = vmul.f32 %v3689, %v3690
    %v3692 = vsub.f32 1.0, %v3691
    %v3693 = vmul.f32 %v3690, %v3692
    %v3694 = vadd.f32 %v3690, %v3693
    %vm3695 = vweird.f32 %v3689
    %vm3696 = vweird.f32 %v3690
    %vm3697 = vmor %vm3695, %vm3696
    %v3698 = vsel %vm3697, %v3690, %v3694
    %v3699 = vand.u32 2147483647, %v3689
    %vm3700 = vcmp.eq.f32.partialorder %v3699, 8.507059e+37
    %v3701 = vand.u32 %v3689, 2147483648
    %v3702 = vor.u32 1.1754944e-38, %v3701
    %v3703 = vsel %vm3700, %v3702, %v3698
    %v3704 = vmul.f32 1.0, %v3703
    %v3705 = vadd.f32 %v3408, %v3669
    %v3706 = vxor.u32 %v3705, 2147483648
    %v3707 = vmul.f32 %v3706, 1.442695
    %v3708 = vpow.pop %v3707
    %v3709 = vadd.f32 %v3708, 1.0
    %v3710 = vrcp.pop %v3709
    %v3711 = vmul.f32 %v3709, %v3710
    %v3712 = vsub.f32 1.0, %v3711
    %v3713 = vmul.f32 %v3710, %v3712
    %v3714 = vadd.f32 %v3710, %v3713
    %vm3715 = vweird.f32 %v3709
    %vm3716 = vweird.f32 %v3710
    %vm3717 = vmor %vm3715, %vm3716
    %v3718 = vsel %vm3717, %v3710, %v3714
    %v3719 = vand.u32 2147483647, %v3709
    %vm3720 = vcmp.eq.f32.partialorder %v3719, 8.507059e+37
    %v3721 = vand.u32 %v3709, 2147483648
    %v3722 = vor.u32 1.1754944e-38, %v3721
    %v3723 = vsel %vm3720, %v3722, %v3718
    %v3724 = vmul.f32 1.0, %v3723
    %v3726 = vperm.slane %v3517, 0
    %v3728 = vadd.f32 %v3682, %v3726
    %v3729 = vmul.f32 %v3704, %v3728
    %v3730 = vadd.f32 %v3466, %v3729
    %v3731 = vtanh.pop %v3730
    %v3732 = vsub.f32 1.0, %v3724
    %v3733 = vmul.f32 %v3732, %v3731
    %v3734 = vmul.f32 %v3724, 0.0
    %v3735 = vadd.f32 %v3733, %v3734
    %3736 = vst [vmem:[#allocation2] sm:$0xff] %v3735
    %v3737 = vpack.c.bf16 %v3735, %v3735
    %3738 = vmatpush.bf16.msra.mxu0 %v3619
    %3739 = vmatpush.bf16.msra.mxu0 %v3616
    %3740 = vmatpush.bf16.msra.mxu0 %v3613
    %3741 = vmatpush.bf16.msra.mxu0 %v3610
    %3742 = vmatpush.bf16.msra.mxu0 %v3607
    %3743 = vmatpush.bf16.msra.mxu0 %v3604
    %3744 = vmatpush.bf16.msra.mxu0 %v3601
    %3745 = vmatpush.bf16.msra.mxu0 %v3598
    %3746 = vmatmul.bf16.gmra.mxu0 %v3737
    %v3747 = vpop.f32.mrf.mxu0
    %v3748 = vadd.f32 0.0, %v3747
    %v3749 = vpop.f32.mrf.mxu0
    %3750 = vdwg.mxu0
    %3751 = vmatpush.bf16.msra.mxu0 %v3620
    %3752 = vmatpush.bf16.msra.mxu0 %v3617
    %3753 = vmatpush.bf16.msra.mxu0 %v3614
    %3754 = vmatpush.bf16.msra.mxu0 %v3611
    %3755 = vmatpush.bf16.msra.mxu0 %v3608
    %3756 = vmatpush.bf16.msra.mxu0 %v3605
    %3757 = vmatpush.bf16.msra.mxu0 %v3602
    %3758 = vmatpush.bf16.msra.mxu0 %v3599
    %3759 = vmatmul.bf16.gmra.mxu0 %v3737
    %v3760 = vpop.f32.mrf.mxu0
    %v3761 = vadd.f32 0.0, %v3760
    %v3762 = vpop.f32.mrf.mxu0
    %3763 = vdwg.mxu0
    %3764 = vmatpush.bf16.msra.mxu0 %v3621
    %3765 = vmatpush.bf16.msra.mxu0 %v3618
    %3766 = vmatpush.bf16.msra.mxu0 %v3615
    %3767 = vmatpush.bf16.msra.mxu0 %v3612
    %3768 = vmatpush.bf16.msra.mxu0 %v3609
    %3769 = vmatpush.bf16.msra.mxu0 %v3606
    %3770 = vmatpush.bf16.msra.mxu0 %v3603
    %3771 = vmatpush.bf16.msra.mxu0 %v3600
    %3772 = vmatmul.bf16.gmra.mxu0 %v3737
    %v3773 = vpop.f32.mrf.mxu0
    %v3774 = vadd.f32 0.0, %v3773
    %v3775 = vpop.f32.mrf.mxu0
    %3776 = vdwg.mxu0
    %v3777 = vadd.f32 %v3352, %v3748
    %v3778 = vxor.u32 %v3777, 2147483648
    %v3779 = vmul.f32 %v3778, 1.442695
    %v3780 = vpow.pop %v3779
    %v3781 = vadd.f32 %v3780, 1.0
    %v3782 = vrcp.pop %v3781
    %v3783 = vmul.f32 %v3781, %v3782
    %v3784 = vsub.f32 1.0, %v3783
    %v3785 = vmul.f32 %v3782, %v3784
    %v3786 = vadd.f32 %v3782, %v3785
    %vm3787 = vweird.f32 %v3781
    %vm3788 = vweird.f32 %v3782
    %vm3789 = vmor %vm3787, %vm3788
    %v3790 = vsel %vm3789, %v3782, %v3786
    %v3791 = vand.u32 2147483647, %v3781
    %vm3792 = vcmp.eq.f32.partialorder %v3791, 8.507059e+37
    %v3793 = vand.u32 %v3781, 2147483648
    %v3794 = vor.u32 1.1754944e-38, %v3793
    %v3795 = vsel %vm3792, %v3794, %v3790
    %v3796 = vmul.f32 1.0, %v3795
    %v3797 = vadd.f32 %v3410, %v3761
    %v3798 = vxor.u32 %v3797, 2147483648
    %v3799 = vmul.f32 %v3798, 1.442695
    %v3800 = vpow.pop %v3799
    %v3801 = vadd.f32 %v3800, 1.0
    %v3802 = vrcp.pop %v3801
    %v3803 = vmul.f32 %v3801, %v3802
    %v3804 = vsub.f32 1.0, %v3803
    %v3805 = vmul.f32 %v3802, %v3804
    %v3806 = vadd.f32 %v3802, %v3805
    %vm3807 = vweird.f32 %v3801
    %vm3808 = vweird.f32 %v3802
    %vm3809 = vmor %vm3807, %vm3808
    %v3810 = vsel %vm3809, %v3802, %v3806
    %v3811 = vand.u32 2147483647, %v3801
    %vm3812 = vcmp.eq.f32.partialorder %v3811, 8.507059e+37
    %v3813 = vand.u32 %v3801, 2147483648
    %v3814 = vor.u32 1.1754944e-38, %v3813
    %v3815 = vsel %vm3812, %v3814, %v3810
    %v3816 = vmul.f32 1.0, %v3815
    %v3817 = vadd.f32 %v3774, %v3726
    %v3818 = vmul.f32 %v3796, %v3817
    %v3819 = vadd.f32 %v3468, %v3818
    %v3820 = vtanh.pop %v3819
    %v3821 = vsub.f32 1.0, %v3816
    %v3822 = vmul.f32 %v3821, %v3820
    %v3823 = vmul.f32 %v3816, %v3735
    %v3824 = vadd.f32 %v3822, %v3823
    %3825 = vst [vmem:[#allocation2 + $0x10] sm:$0xff] %v3824
    %v3826 = vpack.c.bf16 %v3824, %v3824
    %3827 = vmatpush.bf16.msra.mxu0 %v3619
    %3828 = vmatpush.bf16.msra.mxu0 %v3616
    %3829 = vmatpush.bf16.msra.mxu0 %v3613
    %3830 = vmatpush.bf16.msra.mxu0 %v3610
    %3831 = vmatpush.bf16.msra.mxu0 %v3607
    %3832 = vmatpush.bf16.msra.mxu0 %v3604
    %3833 = vmatpush.bf16.msra.mxu0 %v3601
    %3834 = vmatpush.bf16.msra.mxu0 %v3598
    %3835 = vmatmul.bf16.gmra.mxu0 %v3826
    %v3836 = vpop.f32.mrf.mxu0
    %v3837 = vadd.f32 0.0, %v3836
    %v3838 = vpop.f32.mrf.mxu0
    %3839 = vdwg.mxu0
    %3840 = vmatpush.bf16.msra.mxu0 %v3620
    %3841 = vmatpush.bf16.msra.mxu0 %v3617
    %3842 = vmatpush.bf16.msra.mxu0 %v3614
    %3843 = vmatpush.bf16.msra.mxu0 %v3611
    %3844 = vmatpush.bf16.msra.mxu0 %v3608
    %3845 = vmatpush.bf16.msra.mxu0 %v3605
    %3846 = vmatpush.bf16.msra.mxu0 %v3602
    %3847 = vmatpush.bf16.msra.mxu0 %v3599
    %3848 = vmatmul.bf16.gmra.mxu0 %v3826
    %v3849 = vpop.f32.mrf.mxu0
    %v3850 = vadd.f32 0.0, %v3849
    %v3851 = vpop.f32.mrf.mxu0
    %3852 = vdwg.mxu0
    %3853 = vmatpush.bf16.msra.mxu0 %v3621
    %3854 = vmatpush.bf16.msra.mxu0 %v3618
    %3855 = vmatpush.bf16.msra.mxu0 %v3615
    %3856 = vmatpush.bf16.msra.mxu0 %v3612
    %3857 = vmatpush.bf16.msra.mxu0 %v3609
    %3858 = vmatpush.bf16.msra.mxu0 %v3606
    %3859 = vmatpush.bf16.msra.mxu0 %v3603
    %3860 = vmatpush.bf16.msra.mxu0 %v3600
    %3861 = vmatmul.bf16.gmra.mxu0 %v3826
    %v3862 = vpop.f32.mrf.mxu0
    %v3863 = vadd.f32 0.0, %v3862
    %v3864 = vpop.f32.mrf.mxu0
    %3865 = vdwg.mxu0
    %v3866 = vadd.f32 %v3355, %v3837
    %v3867 = vxor.u32 %v3866, 2147483648
    %v3868 = vmul.f32 %v3867, 1.442695
    %v3869 = vpow.pop %v3868
    %v3870 = vadd.f32 %v3869, 1.0
    %v3871 = vrcp.pop %v3870
    %v3872 = vmul.f32 %v3870, %v3871
    %v3873 = vsub.f32 1.0, %v3872
    %v3874 = vmul.f32 %v3871, %v3873
    %v3875 = vadd.f32 %v3871, %v3874
    %vm3876 = vweird.f32 %v3870
    %vm3877 = vweird.f32 %v3871
    %vm3878 = vmor %vm3876, %vm3877
    %v3879 = vsel %vm3878, %v3871, %v3875
    %v3880 = vand.u32 2147483647, %v3870
    %vm3881 = vcmp.eq.f32.partialorder %v3880, 8.507059e+37
    %v3882 = vand.u32 %v3870, 2147483648
    %v3883 = vor.u32 1.1754944e-38, %v3882
    %v3884 = vsel %vm3881, %v3883, %v3879
    %v3885 = vmul.f32 1.0, %v3884
    %v3886 = vadd.f32 %v3413, %v3850
    %v3887 = vxor.u32 %v3886, 2147483648
    %v3888 = vmul.f32 %v3887, 1.442695
    %v3889 = vpow.pop %v3888
    %v3890 = vadd.f32 %v3889, 1.0
    %v3891 = vrcp.pop %v3890
    %v3892 = vmul.f32 %v3890, %v3891
    %v3893 = vsub.f32 1.0, %v3892
    %v3894 = vmul.f32 %v3891, %v3893
    %v3895 = vadd.f32 %v3891, %v3894
    %vm3896 = vweird.f32 %v3890
    %vm3897 = vweird.f32 %v3891
    %vm3898 = vmor %vm3896, %vm3897
    %v3899 = vsel %vm3898, %v3891, %v3895
    %v3900 = vand.u32 2147483647, %v3890
    %vm3901 = vcmp.eq.f32.partialorder %v3900, 8.507059e+37
    %v3902 = vand.u32 %v3890, 2147483648
    %v3903 = vor.u32 1.1754944e-38, %v3902
    %v3904 = vsel %vm3901, %v3903, %v3899
    %v3905 = vmul.f32 1.0, %v3904
    %v3906 = vadd.f32 %v3863, %v3726
    %v3907 = vmul.f32 %v3885, %v3906
    %v3908 = vadd.f32 %v3471, %v3907
    %v3909 = vtanh.pop %v3908
    %v3910 = vsub.f32 1.0, %v3905
    %v3911 = vmul.f32 %v3910, %v3909
    %v3912 = vmul.f32 %v3905, %v3824
    %v3913 = vadd.f32 %v3911, %v3912
    %3914 = vst [vmem:[#allocation2 + $0x20] sm:$0xff] %v3913
    %v3915 = vpack.c.bf16 %v3913, %v3913
    %3916 = vmatpush.bf16.msra.mxu0 %v3619
    %3917 = vmatpush.bf16.msra.mxu0 %v3616
    %3918 = vmatpush.bf16.msra.mxu0 %v3613
    %3919 = vmatpush.bf16.msra.mxu0 %v3610
    %3920 = vmatpush.bf16.msra.mxu0 %v3607
    %3921 = vmatpush.bf16.msra.mxu0 %v3604
    %3922 = vmatpush.bf16.msra.mxu0 %v3601
    %3923 = vmatpush.bf16.msra.mxu0 %v3598
    %3924 = vmatmul.bf16.gmra.mxu0 %v3915
    %v3925 = vpop.f32.mrf.mxu0
    %v3926 = vadd.f32 0.0, %v3925
    %v3927 = vpop.f32.mrf.mxu0
    %3928 = vdwg.mxu0
    %3929 = vmatpush.bf16.msra.mxu0 %v3620
    %3930 = vmatpush.bf16.msra.mxu0 %v3617
    %3931 = vmatpush.bf16.msra.mxu0 %v3614
    %3932 = vmatpush.bf16.msra.mxu0 %v3611
    %3933 = vmatpush.bf16.msra.mxu0 %v3608
    %3934 = vmatpush.bf16.msra.mxu0 %v3605
    %3935 = vmatpush.bf16.msra.mxu0 %v3602
    %3936 = vmatpush.bf16.msra.mxu0 %v3599
    %3937 = vmatmul.bf16.gmra.mxu0 %v3915
    %v3938 = vpop.f32.mrf.mxu0
    %v3939 = vadd.f32 0.0, %v3938
    %v3940 = vpop.f32.mrf.mxu0
    %3941 = vdwg.mxu0
    %3942 = vmatpush.bf16.msra.mxu0 %v3621
    %3943 = vmatpush.bf16.msra.mxu0 %v3618
    %3944 = vmatpush.bf16.msra.mxu0 %v3615
    %3945 = vmatpush.bf16.msra.mxu0 %v3612
    %3946 = vmatpush.bf16.msra.mxu0 %v3609
    %3947 = vmatpush.bf16.msra.mxu0 %v3606
    %3948 = vmatpush.bf16.msra.mxu0 %v3603
    %3949 = vmatpush.bf16.msra.mxu0 %v3600
    %3950 = vmatmul.bf16.gmra.mxu0 %v3915
    %v3951 = vpop.f32.mrf.mxu0
    %v3952 = vadd.f32 0.0, %v3951
    %v3953 = vpop.f32.mrf.mxu0
    %3954 = vdwg.mxu0
    %v3955 = vadd.f32 %v3357, %v3926
    %v3956 = vxor.u32 %v3955, 2147483648
    %v3957 = vmul.f32 %v3956, 1.442695
    %v3958 = vpow.pop %v3957
    %v3959 = vadd.f32 %v3958, 1.0
    %v3960 = vrcp.pop %v3959
    %v3961 = vmul.f32 %v3959, %v3960
    %v3962 = vsub.f32 1.0, %v3961
    %v3963 = vmul.f32 %v3960, %v3962
    %v3964 = vadd.f32 %v3960, %v3963
    %vm3965 = vweird.f32 %v3959
    %vm3966 = vweird.f32 %v3960
    %vm3967 = vmor %vm3965, %vm3966
    %v3968 = vsel %vm3967, %v3960, %v3964
    %v3969 = vand.u32 2147483647, %v3959
    %vm3970 = vcmp.eq.f32.partialorder %v3969, 8.507059e+37
    %v3971 = vand.u32 %v3959, 2147483648
    %v3972 = vor.u32 1.1754944e-38, %v3971
    %v3973 = vsel %vm3970, %v3972, %v3968
    %v3974 = vmul.f32 1.0, %v3973
    %v3975 = vadd.f32 %v3415, %v3939
    %v3976 = vxor.u32 %v3975, 2147483648
    %v3977 = vmul.f32 %v3976, 1.442695
    %v3978 = vpow.pop %v3977
    %v3979 = vadd.f32 %v3978, 1.0
    %v3980 = vrcp.pop %v3979
    %v3981 = vmul.f32 %v3979, %v3980
    %v3982 = vsub.f32 1.0, %v3981
    %v3983 = vmul.f32 %v3980, %v3982
    %v3984 = vadd.f32 %v3980, %v3983
    %vm3985 = vweird.f32 %v3979
    %vm3986 = vweird.f32 %v3980
    %vm3987 = vmor %vm3985, %vm3986
    %v3988 = vsel %vm3987, %v3980, %v3984
    %v3989 = vand.u32 2147483647, %v3979
    %vm3990 = vcmp.eq.f32.partialorder %v3989, 8.507059e+37
    %v3991 = vand.u32 %v3979, 2147483648
    %v3992 = vor.u32 1.1754944e-38, %v3991
    %v3993 = vsel %vm3990, %v3992, %v3988
    %v3994 = vmul.f32 1.0, %v3993
    %v3995 = vadd.f32 %v3952, %v3726
    %v3996 = vmul.f32 %v3974, %v3995
    %v3997 = vadd.f32 %v3473, %v3996
    %v3998 = vtanh.pop %v3997
    %v3999 = vsub.f32 1.0, %v3994
    %v4000 = vmul.f32 %v3999, %v3998
    %v4001 = vmul.f32 %v3994, %v3913
    %v4002 = vadd.f32 %v4000, %v4001
    %4003 = vst [vmem:[#allocation2 + $0x30] sm:$0xff] %v4002
    %v4004 = vpack.c.bf16 %v4002, %v4002
    %4005 = vmatpush.bf16.msra.mxu0 %v3619
    %4006 = vmatpush.bf16.msra.mxu0 %v3616
    %4007 = vmatpush.bf16.msra.mxu0 %v3613
    %4008 = vmatpush.bf16.msra.mxu0 %v3610
    %4009 = vmatpush.bf16.msra.mxu0 %v3607
    %4010 = vmatpush.bf16.msra.mxu0 %v3604
    %4011 = vmatpush.bf16.msra.mxu0 %v3601
    %4012 = vmatpush.bf16.msra.mxu0 %v3598
    %4013 = vmatmul.bf16.gmra.mxu0 %v4004
    %v4014 = vpop.f32.mrf.mxu0
    %v4015 = vadd.f32 0.0, %v4014
    %v4016 = vpop.f32.mrf.mxu0
    %4017 = vdwg.mxu0
    %4018 = vmatpush.bf16.msra.mxu0 %v3620
    %4019 = vmatpush.bf16.msra.mxu0 %v3617
    %4020 = vmatpush.bf16.msra.mxu0 %v3614
    %4021 = vmatpush.bf16.msra.mxu0 %v3611
    %4022 = vmatpush.bf16.msra.mxu0 %v3608
    %4023 = vmatpush.bf16.msra.mxu0 %v3605
    %4024 = vmatpush.bf16.msra.mxu0 %v3602
    %4025 = vmatpush.bf16.msra.mxu0 %v3599
    %4026 = vmatmul.bf16.gmra.mxu0 %v4004
    %v4027 = vpop.f32.mrf.mxu0
    %v4028 = vadd.f32 0.0, %v4027
    %v4029 = vpop.f32.mrf.mxu0
    %4030 = vdwg.mxu0
    %4031 = vmatpush.bf16.msra.mxu0 %v3621
    %4032 = vmatpush.bf16.msra.mxu0 %v3618
    %4033 = vmatpush.bf16.msra.mxu0 %v3615
    %4034 = vmatpush.bf16.msra.mxu0 %v3612
    %4035 = vmatpush.bf16.msra.mxu0 %v3609
    %4036 = vmatpush.bf16.msra.mxu0 %v3606
    %4037 = vmatpush.bf16.msra.mxu0 %v3603
    %4038 = vmatpush.bf16.msra.mxu0 %v3600
    %4039 = vmatmul.bf16.gmra.mxu0 %v4004
    %v4040 = vpop.f32.mrf.mxu0
    %v4041 = vadd.f32 0.0, %v4040
    %v4042 = vpop.f32.mrf.mxu0
    %4043 = vdwg.mxu0
    %v4044 = vadd.f32 %v3360, %v4015
    %v4045 = vxor.u32 %v4044, 2147483648
    %v4046 = vmul.f32 %v4045, 1.442695
    %v4047 = vpow.pop %v4046
    %v4048 = vadd.f32 %v4047, 1.0
    %v4049 = vrcp.pop %v4048
    %v4050 = vmul.f32 %v4048, %v4049
    %v4051 = vsub.f32 1.0, %v4050
    %v4052 = vmul.f32 %v4049, %v4051
    %v4053 = vadd.f32 %v4049, %v4052
    %vm4054 = vweird.f32 %v4048
    %vm4055 = vweird.f32 %v4049
    %vm4056 = vmor %vm4054, %vm4055
    %v4057 = vsel %vm4056, %v4049, %v4053
    %v4058 = vand.u32 2147483647, %v4048
    %vm4059 = vcmp.eq.f32.partialorder %v4058, 8.507059e+37
    %v4060 = vand.u32 %v4048, 2147483648
    %v4061 = vor.u32 1.1754944e-38, %v4060
    %v4062 = vsel %vm4059, %v4061, %v4057
    %v4063 = vmul.f32 1.0, %v4062
    %v4064 = vadd.f32 %v3418, %v4028
    %v4065 = vxor.u32 %v4064, 2147483648
    %v4066 = vmul.f32 %v4065, 1.442695
    %v4067 = vpow.pop %v4066
    %v4068 = vadd.f32 %v4067, 1.0
    %v4069 = vrcp.pop %v4068
    %v4070 = vmul.f32 %v4068, %v4069
    %v4071 = vsub.f32 1.0, %v4070
    %v4072 = vmul.f32 %v4069, %v4071
    %v4073 = vadd.f32 %v4069, %v4072
    %vm4074 = vweird.f32 %v4068
    %vm4075 = vweird.f32 %v4069
    %vm4076 = vmor %vm4074, %vm4075
    %v4077 = vsel %vm4076, %v4069, %v4073
    %v4078 = vand.u32 2147483647, %v4068
    %vm4079 = vcmp.eq.f32.partialorder %v4078, 8.507059e+37
    %v4080 = vand.u32 %v4068, 2147483648
    %v4081 = vor.u32 1.1754944e-38, %v4080
    %v4082 = vsel %vm4079, %v4081, %v4077
    %v4083 = vmul.f32 1.0, %v4082
    %v4084 = vadd.f32 %v4041, %v3726
    %v4085 = vmul.f32 %v4063, %v4084
    %v4086 = vadd.f32 %v3476, %v4085
    %v4087 = vtanh.pop %v4086
    %v4088 = vsub.f32 1.0, %v4083
    %v4089 = vmul.f32 %v4088, %v4087
    %v4090 = vmul.f32 %v4083, %v4002
    %v4091 = vadd.f32 %v4089, %v4090
    %4092 = vst [vmem:[#allocation2 + $0x40] sm:$0xff] %v4091
    %v4093 = vpack.c.bf16 %v4091, %v4091
    %4094 = vmatpush.bf16.msra.mxu0 %v3619
    %4095 = vmatpush.bf16.msra.mxu0 %v3616
    %4096 = vmatpush.bf16.msra.mxu0 %v3613
    %4097 = vmatpush.bf16.msra.mxu0 %v3610
    %4098 = vmatpush.bf16.msra.mxu0 %v3607
    %4099 = vmatpush.bf16.msra.mxu0 %v3604
    %4100 = vmatpush.bf16.msra.mxu0 %v3601
    %4101 = vmatpush.bf16.msra.mxu0 %v3598
    %4102 = vmatmul.bf16.gmra.mxu0 %v4093
    %v4103 = vpop.f32.mrf.mxu0
    %v4104 = vadd.f32 0.0, %v4103
    %v4105 = vpop.f32.mrf.mxu0
    %4106 = vdwg.mxu0
    %4107 = vmatpush.bf16.msra.mxu0 %v3620
    %4108 = vmatpush.bf16.msra.mxu0 %v3617
    %4109 = vmatpush.bf16.msra.mxu0 %v3614
    %4110 = vmatpush.bf16.msra.mxu0 %v3611
    %4111 = vmatpush.bf16.msra.mxu0 %v3608
    %4112 = vmatpush.bf16.msra.mxu0 %v3605
    %4113 = vmatpush.bf16.msra.mxu0 %v3602
    %4114 = vmatpush.bf16.msra.mxu0 %v3599
    %4115 = vmatmul.bf16.gmra.mxu0 %v4093
    %v4116 = vpop.f32.mrf.mxu0
    %v4117 = vadd.f32 0.0, %v4116
    %v4118 = vpop.f32.mrf.mxu0
    %4119 = vdwg.mxu0
    %4120 = vmatpush.bf16.msra.mxu0 %v3621
    %4121 = vmatpush.bf16.msra.mxu0 %v3618
    %4122 = vmatpush.bf16.msra.mxu0 %v3615
    %4123 = vmatpush.bf16.msra.mxu0 %v3612
    %4124 = vmatpush.bf16.msra.mxu0 %v3609
    %4125 = vmatpush.bf16.msra.mxu0 %v3606
    %4126 = vmatpush.bf16.msra.mxu0 %v3603
    %4127 = vmatpush.bf16.msra.mxu0 %v3600
    %4128 = vmatmul.bf16.gmra.mxu0 %v4093
    %v4129 = vpop.f32.mrf.mxu0
    %v4130 = vadd.f32 0.0, %v4129
    %v4131 = vpop.f32.mrf.mxu0
    %4132 = vdwg.mxu0
    %v4133 = vadd.f32 %v3362, %v4104
    %v4134 = vxor.u32 %v4133, 2147483648
    %v4135 = vmul.f32 %v4134, 1.442695
    %v4136 = vpow.pop %v4135
    %v4137 = vadd.f32 %v4136, 1.0
    %v4138 = vrcp.pop %v4137
    %v4139 = vmul.f32 %v4137, %v4138
    %v4140 = vsub.f32 1.0, %v4139
    %v4141 = vmul.f32 %v4138, %v4140
    %v4142 = vadd.f32 %v4138, %v4141
    %vm4143 = vweird.f32 %v4137
    %vm4144 = vweird.f32 %v4138
    %vm4145 = vmor %vm4143, %vm4144
    %v4146 = vsel %vm4145, %v4138, %v4142
    %v4147 = vand.u32 2147483647, %v4137
    %vm4148 = vcmp.eq.f32.partialorder %v4147, 8.507059e+37
    %v4149 = vand.u32 %v4137, 2147483648
    %v4150 = vor.u32 1.1754944e-38, %v4149
    %v4151 = vsel %vm4148, %v4150, %v4146
    %v4152 = vmul.f32 1.0, %v4151
    %v4153 = vadd.f32 %v3420, %v4117
    %v4154 = vxor.u32 %v4153, 2147483648
    %v4155 = vmul.f32 %v4154, 1.442695
    %v4156 = vpow.pop %v4155
    %v4157 = vadd.f32 %v4156, 1.0
    %v4158 = vrcp.pop %v4157
    %v4159 = vmul.f32 %v4157, %v4158
    %v4160 = vsub.f32 1.0, %v4159
    %v4161 = vmul.f32 %v4158, %v4160
    %v4162 = vadd.f32 %v4158, %v4161
    %vm4163 = vweird.f32 %v4157
    %vm4164 = vweird.f32 %v4158
    %vm4165 = vmor %vm4163, %vm4164
    %v4166 = vsel %vm4165, %v4158, %v4162
    %v4167 = vand.u32 2147483647, %v4157
    %vm4168 = vcmp.eq.f32.partialorder %v4167, 8.507059e+37
    %v4169 = vand.u32 %v4157, 2147483648
    %v4170 = vor.u32 1.1754944e-38, %v4169
    %v4171 = vsel %vm4168, %v4170, %v4166
    %v4172 = vmul.f32 1.0, %v4171
    %v4173 = vadd.f32 %v4130, %v3726
    %v4174 = vmul.f32 %v4152, %v4173
    %v4175 = vadd.f32 %v3478, %v4174
    %v4176 = vtanh.pop %v4175
    %v4177 = vsub.f32 1.0, %v4172
    %v4178 = vmul.f32 %v4177, %v4176
    %v4179 = vmul.f32 %v4172, %v4091
    %v4180 = vadd.f32 %v4178, %v4179
    %4181 = vst [vmem:[#allocation2 + $0x50] sm:$0xff] %v4180
    %v4182 = vpack.c.bf16 %v4180, %v4180
    %4183 = vmatpush.bf16.msra.mxu0 %v3619
    %4184 = vmatpush.bf16.msra.mxu0 %v3616
    %4185 = vmatpush.bf16.msra.mxu0 %v3613
    %4186 = vmatpush.bf16.msra.mxu0 %v3610
    %4187 = vmatpush.bf16.msra.mxu0 %v3607
    %4188 = vmatpush.bf16.msra.mxu0 %v3604
    %4189 = vmatpush.bf16.msra.mxu0 %v3601
    %4190 = vmatpush.bf16.msra.mxu0 %v3598
    %4191 = vmatmul.bf16.gmra.mxu0 %v4182
    %v4192 = vpop.f32.mrf.mxu0
    %v4193 = vadd.f32 0.0, %v4192
    %v4194 = vpop.f32.mrf.mxu0
    %4195 = vdwg.mxu0
    %4196 = vmatpush.bf16.msra.mxu0 %v3620
    %4197 = vmatpush.bf16.msra.mxu0 %v3617
    %4198 = vmatpush.bf16.msra.mxu0 %v3614
    %4199 = vmatpush.bf16.msra.mxu0 %v3611
    %4200 = vmatpush.bf16.msra.mxu0 %v3608
    %4201 = vmatpush.bf16.msra.mxu0 %v3605
    %4202 = vmatpush.bf16.msra.mxu0 %v3602
    %4203 = vmatpush.bf16.msra.mxu0 %v3599
    %4204 = vmatmul.bf16.gmra.mxu0 %v4182
    %v4205 = vpop.f32.mrf.mxu0
    %v4206 = vadd.f32 0.0, %v4205
    %v4207 = vpop.f32.mrf.mxu0
    %4208 = vdwg.mxu0
    %4209 = vmatpush.bf16.msra.mxu0 %v3621
    %4210 = vmatpush.bf16.msra.mxu0 %v3618
    %4211 = vmatpush.bf16.msra.mxu0 %v3615
    %4212 = vmatpush.bf16.msra.mxu0 %v3612
    %4213 = vmatpush.bf16.msra.mxu0 %v3609
    %4214 = vmatpush.bf16.msra.mxu0 %v3606
    %4215 = vmatpush.bf16.msra.mxu0 %v3603
    %4216 = vmatpush.bf16.msra.mxu0 %v3600
    %4217 = vmatmul.bf16.gmra.mxu0 %v4182
    %v4218 = vpop.f32.mrf.mxu0
    %v4219 = vadd.f32 0.0, %v4218
    %v4220 = vpop.f32.mrf.mxu0
    %4221 = vdwg.mxu0
    %v4222 = vadd.f32 %v3365, %v4193
    %v4223 = vxor.u32 %v4222, 2147483648
    %v4224 = vmul.f32 %v4223, 1.442695
    %v4225 = vpow.pop %v4224
    %v4226 = vadd.f32 %v4225, 1.0
    %v4227 = vrcp.pop %v4226
    %v4228 = vmul.f32 %v4226, %v4227
    %v4229 = vsub.f32 1.0, %v4228
    %v4230 = vmul.f32 %v4227, %v4229
    %v4231 = vadd.f32 %v4227, %v4230
    %vm4232 = vweird.f32 %v4226
    %vm4233 = vweird.f32 %v4227
    %vm4234 = vmor %vm4232, %vm4233
    %v4235 = vsel %vm4234, %v4227, %v4231
    %v4236 = vand.u32 2147483647, %v4226
    %vm4237 = vcmp.eq.f32.partialorder %v4236, 8.507059e+37
    %v4238 = vand.u32 %v4226, 2147483648
    %v4239 = vor.u32 1.1754944e-38, %v4238
    %v4240 = vsel %vm4237, %v4239, %v4235
    %v4241 = vmul.f32 1.0, %v4240
    %v4242 = vadd.f32 %v3423, %v4206
    %v4243 = vxor.u32 %v4242, 2147483648
    %v4244 = vmul.f32 %v4243, 1.442695
    %v4245 = vpow.pop %v4244
    %v4246 = vadd.f32 %v4245, 1.0
    %v4247 = vrcp.pop %v4246
    %v4248 = vmul.f32 %v4246, %v4247
    %v4249 = vsub.f32 1.0, %v4248
    %v4250 = vmul.f32 %v4247, %v4249
    %v4251 = vadd.f32 %v4247, %v4250
    %vm4252 = vweird.f32 %v4246
    %vm4253 = vweird.f32 %v4247
    %vm4254 = vmor %vm4252, %vm4253
    %v4255 = vsel %vm4254, %v4247, %v4251
    %v4256 = vand.u32 2147483647, %v4246
    %vm4257 = vcmp.eq.f32.partialorder %v4256, 8.507059e+37
    %v4258 = vand.u32 %v4246, 2147483648
    %v4259 = vor.u32 1.1754944e-38, %v4258
    %v4260 = vsel %vm4257, %v4259, %v4255
    %v4261 = vmul.f32 1.0, %v4260
    %v4262 = vadd.f32 %v4219, %v3726
    %v4263 = vmul.f32 %v4241, %v4262
    %v4264 = vadd.f32 %v3481, %v4263
    %v4265 = vtanh.pop %v4264
    %v4266 = vsub.f32 1.0, %v4261
    %v4267 = vmul.f32 %v4266, %v4265
    %v4268 = vmul.f32 %v4261, %v4180
    %v4269 = vadd.f32 %v4267, %v4268
    %4270 = vst [vmem:[#allocation2 + $0x60] sm:$0xff] %v4269
    %v4271 = vpack.c.bf16 %v4269, %v4269
    %4272 = vmatpush.bf16.msra.mxu0 %v3619
    %4273 = vmatpush.bf16.msra.mxu0 %v3616
    %4274 = vmatpush.bf16.msra.mxu0 %v3613
    %4275 = vmatpush.bf16.msra.mxu0 %v3610
    %4276 = vmatpush.bf16.msra.mxu0 %v3607
    %4277 = vmatpush.bf16.msra.mxu0 %v3604
    %4278 = vmatpush.bf16.msra.mxu0 %v3601
    %4279 = vmatpush.bf16.msra.mxu0 %v3598
    %4280 = vmatmul.bf16.gmra.mxu0 %v4271
    %v4281 = vpop.f32.mrf.mxu0
    %v4282 = vadd.f32 0.0, %v4281
    %v4283 = vpop.f32.mrf.mxu0
    %4284 = vdwg.mxu0
    %4285 = vmatpush.bf16.msra.mxu0 %v3620
    %4286 = vmatpush.bf16.msra.mxu0 %v3617
    %4287 = vmatpush.bf16.msra.mxu0 %v3614
    %4288 = vmatpush.bf16.msra.mxu0 %v3611
    %4289 = vmatpush.bf16.msra.mxu0 %v3608
    %4290 = vmatpush.bf16.msra.mxu0 %v3605
    %4291 = vmatpush.bf16.msra.mxu0 %v3602
    %4292 = vmatpush.bf16.msra.mxu0 %v3599
    %4293 = vmatmul.bf16.gmra.mxu0 %v4271
    %v4294 = vpop.f32.mrf.mxu0
    %v4295 = vadd.f32 0.0, %v4294
    %v4296 = vpop.f32.mrf.mxu0
    %4297 = vdwg.mxu0
    %4298 = vmatpush.bf16.msra.mxu0 %v3621
    %4299 = vmatpush.bf16.msra.mxu0 %v3618
    %4300 = vmatpush.bf16.msra.mxu0 %v3615
    %4301 = vmatpush.bf16.msra.mxu0 %v3612
    %4302 = vmatpush.bf16.msra.mxu0 %v3609
    %4303 = vmatpush.bf16.msra.mxu0 %v3606
    %4304 = vmatpush.bf16.msra.mxu0 %v3603
    %4305 = vmatpush.bf16.msra.mxu0 %v3600
    %4306 = vmatmul.bf16.gmra.mxu0 %v4271
    %v4307 = vpop.f32.mrf.mxu0
    %v4308 = vadd.f32 0.0, %v4307
    %v4309 = vpop.f32.mrf.mxu0
    %4310 = vdwg.mxu0
    %v4311 = vadd.f32 %v3367, %v4282
    %v4312 = vxor.u32 %v4311, 2147483648
    %v4313 = vmul.f32 %v4312, 1.442695
    %v4314 = vpow.pop %v4313
    %v4315 = vadd.f32 %v4314, 1.0
    %v4316 = vrcp.pop %v4315
    %v4317 = vmul.f32 %v4315, %v4316
    %v4318 = vsub.f32 1.0, %v4317
    %v4319 = vmul.f32 %v4316, %v4318
    %v4320 = vadd.f32 %v4316, %v4319
    %vm4321 = vweird.f32 %v4315
    %vm4322 = vweird.f32 %v4316
    %vm4323 = vmor %vm4321, %vm4322
    %v4324 = vsel %vm4323, %v4316, %v4320
    %v4325 = vand.u32 2147483647, %v4315
    %vm4326 = vcmp.eq.f32.partialorder %v4325, 8.507059e+37
    %v4327 = vand.u32 %v4315, 2147483648
    %v4328 = vor.u32 1.1754944e-38, %v4327
    %v4329 = vsel %vm4326, %v4328, %v4324
    %v4330 = vmul.f32 1.0, %v4329
    %v4331 = vadd.f32 %v3425, %v4295
    %v4332 = vxor.u32 %v4331, 2147483648
    %v4333 = vmul.f32 %v4332, 1.442695
    %v4334 = vpow.pop %v4333
    %v4335 = vadd.f32 %v4334, 1.0
    %v4336 = vrcp.pop %v4335
    %v4337 = vmul.f32 %v4335, %v4336
    %v4338 = vsub.f32 1.0, %v4337
    %v4339 = vmul.f32 %v4336, %v4338
    %v4340 = vadd.f32 %v4336, %v4339
    %vm4341 = vweird.f32 %v4335
    %vm4342 = vweird.f32 %v4336
    %vm4343 = vmor %vm4341, %vm4342
    %v4344 = vsel %vm4343, %v4336, %v4340
    %v4345 = vand.u32 2147483647, %v4335
    %vm4346 = vcmp.eq.f32.partialorder %v4345, 8.507059e+37
    %v4347 = vand.u32 %v4335, 2147483648
    %v4348 = vor.u32 1.1754944e-38, %v4347
    %v4349 = vsel %vm4346, %v4348, %v4344
    %v4350 = vmul.f32 1.0, %v4349
    %v4351 = vadd.f32 %v4308, %v3726
    %v4352 = vmul.f32 %v4330, %v4351
    %v4353 = vadd.f32 %v3483, %v4352
    %v4354 = vtanh.pop %v4353
    %v4355 = vsub.f32 1.0, %v4350
    %v4356 = vmul.f32 %v4355, %v4354
    %v4357 = vmul.f32 %v4350, %v4269
    %v4358 = vadd.f32 %v4356, %v4357
    %4359 = vst [vmem:[#allocation2 + $0x70] sm:$0xff] %v4358
    %v4360 = vld [vmem:[#allocation2] sm:$0xff]
    %v4361 = vld [vmem:[#allocation2 + $0x10] sm:$0xff]
    %v4362 = vld [vmem:[#allocation2 + $0x20] sm:$0xff]
    %v4363 = vld [vmem:[#allocation2 + $0x30] sm:$0xff]
    %v4364 = vld [vmem:[#allocation2 + $0x40] sm:$0xff]
    %v4365 = vld [vmem:[#allocation2 + $0x50] sm:$0xff]
    %v4366 = vld [vmem:[#allocation2 + $0x60] sm:$0xff]
    %v4367 = vld [vmem:[#allocation2 + $0x70] sm:$0xff]
    %v4368 = vpack.c.bf16 %v4361, %v4360
    %v4369 = vpack.c.bf16 %v4363, %v4362
    %v4370 = vpack.c.bf16 %v4365, %v4364
    %v4371 = vpack.c.bf16 %v4367, %v4366
    %v4372 = vld [vmem:[#allocation8] sm:$0xff]
    %v4373 = vld [vmem:[#allocation8 + $0x8] sm:$0xf]
    %v4374 = vld [vmem:[#allocation8 + $0xc] sm:$0xff]
    %v4375 = vld [vmem:[#allocation8 + $0x14] sm:$0xf]
    %v4376 = vld [vmem:[#allocation8 + $0x18] sm:$0xff]
    %v4377 = vld [vmem:[#allocation8 + $0x20] sm:$0xf]
    %v4378 = vld [vmem:[#allocation8 + $0x24] sm:$0xff]
    %v4379 = vld [vmem:[#allocation8 + $0x2c] sm:$0xf]
    %v4380 = vld [vmem:[#allocation8 + $0x30] sm:$0xff]
    %v4381 = vld [vmem:[#allocation8 + $0x38] sm:$0xf]
    %v4382 = vld [vmem:[#allocation8 + $0x3c] sm:$0xff]
    %v4383 = vld [vmem:[#allocation8 + $0x44] sm:$0xf]
    %v4384 = vld [vmem:[#allocation8 + $0x48] sm:$0xff]
    %v4385 = vld [vmem:[#allocation8 + $0x50] sm:$0xf]
    %v4386 = vld [vmem:[#allocation8 + $0x54] sm:$0xff]
    %v4387 = vld [vmem:[#allocation8 + $0x5c] sm:$0xf]
    %v4388 = vld [vmem:[#allocation8 + $0x60] sm:$0xff]
    %v4389 = vld [vmem:[#allocation8 + $0x68] sm:$0xf]
    %v4390 = vld [vmem:[#allocation8 + $0x6c] sm:$0xff]
    %v4391 = vld [vmem:[#allocation8 + $0x74] sm:$0xf]
    %v4392 = vld [vmem:[#allocation8 + $0x78] sm:$0xff]
    %v4393 = vld [vmem:[#allocation8 + $0x80] sm:$0xf]
    %v4394 = vld [vmem:[#allocation8 + $0x84] sm:$0xff]
    %v4395 = vld [vmem:[#allocation8 + $0x8c] sm:$0xf]
    %v4396 = vld [vmem:[#allocation8 + $0x90] sm:$0xff]
    %v4397 = vld [vmem:[#allocation8 + $0x98] sm:$0xf]
    %v4398 = vld [vmem:[#allocation8 + $0x9c] sm:$0xff]
    %v4399 = vld [vmem:[#allocation8 + $0xa4] sm:$0xf]
    %v4400 = vld [vmem:[#allocation8 + $0xa8] sm:$0xff]
    %v4401 = vld [vmem:[#allocation8 + $0xb0] sm:$0xf]
    %v4402 = vld [vmem:[#allocation8 + $0xb4] sm:$0xff]
    %v4403 = vld [vmem:[#allocation8 + $0xbc] sm:$0xf]
    %v4404 = vld [vmem:[%s11] sm:$0x7]
    %v4406 = vperm.slane %v4404, 0
    %v4407 = vperm.slane %v4404, 1
    %v4408 = vperm.slane %v4404, 2
    %v4444 = vunpack.c.l.b16 %v4372
    %v4445 = vunpack.c.h.b16 %v4372
    %v4446 = vunpack.c.l.b16 %v4373
    %v4447 = vunpack.c.l.b16 %v4374
    %v4448 = vunpack.c.h.b16 %v4374
    %v4449 = vunpack.c.l.b16 %v4375
    %v4450 = vunpack.c.l.b16 %v4376
    %v4451 = vunpack.c.h.b16 %v4376
    %v4452 = vunpack.c.l.b16 %v4377
    %v4453 = vunpack.c.l.b16 %v4378
    %v4454 = vunpack.c.h.b16 %v4378
    %v4455 = vunpack.c.l.b16 %v4379
    %v4456 = vunpack.c.l.b16 %v4380
    %v4457 = vunpack.c.h.b16 %v4380
    %v4458 = vunpack.c.l.b16 %v4381
    %v4459 = vunpack.c.l.b16 %v4382
    %v4460 = vunpack.c.h.b16 %v4382
    %v4461 = vunpack.c.l.b16 %v4383
    %v4462 = vunpack.c.l.b16 %v4384
    %v4463 = vunpack.c.h.b16 %v4384
    %v4464 = vunpack.c.l.b16 %v4385
    %v4465 = vunpack.c.l.b16 %v4386
    %v4466 = vunpack.c.h.b16 %v4386
    %v4467 = vunpack.c.l.b16 %v4387
    %v4468 = vunpack.c.l.b16 %v4388
    %v4469 = vunpack.c.h.b16 %v4388
    %v4470 = vunpack.c.l.b16 %v4389
    %v4471 = vunpack.c.l.b16 %v4390
    %v4472 = vunpack.c.h.b16 %v4390
    %v4473 = vunpack.c.l.b16 %v4391
    %v4474 = vunpack.c.l.b16 %v4392
    %v4475 = vunpack.c.h.b16 %v4392
    %v4476 = vunpack.c.l.b16 %v4393
    %v4477 = vunpack.c.l.b16 %v4394
    %v4478 = vunpack.c.h.b16 %v4394
    %v4479 = vunpack.c.l.b16 %v4395
    %v4480 = vunpack.c.l.b16 %v4396
    %v4481 = vunpack.c.h.b16 %v4396
    %v4482 = vunpack.c.l.b16 %v4397
    %v4483 = vunpack.c.l.b16 %v4398
    %v4484 = vunpack.c.h.b16 %v4398
    %v4485 = vunpack.c.l.b16 %v4399
    %v4486 = vunpack.c.l.b16 %v4400
    %v4487 = vunpack.c.h.b16 %v4400
    %v4488 = vunpack.c.l.b16 %v4401
    %v4489 = vunpack.c.l.b16 %v4402
    %v4490 = vunpack.c.h.b16 %v4402
    %v4491 = vunpack.c.l.b16 %v4403
    %v4492 = vpack.c.b16 %v4447, %v4444
    %v4493 = vpack.c.b16 %v4448, %v4445
    %v4494 = vpack.c.b16 %v4449, %v4446
    %v4495 = vpack.c.b16 %v4453, %v4450
    %v4496 = vpack.c.b16 %v4454, %v4451
    %v4497 = vpack.c.b16 %v4455, %v4452
    %v4498 = vpack.c.b16 %v4459, %v4456
    %v4499 = vpack.c.b16 %v4460, %v4457
    %v4500 = vpack.c.b16 %v4461, %v4458
    %v4501 = vpack.c.b16 %v4465, %v4462
    %v4502 = vpack.c.b16 %v4466, %v4463
    %v4503 = vpack.c.b16 %v4467, %v4464
    %v4504 = vpack.c.b16 %v4471, %v4468
    %v4505 = vpack.c.b16 %v4472, %v4469
    %v4506 = vpack.c.b16 %v4473, %v4470
    %v4507 = vpack.c.b16 %v4477, %v4474
    %v4508 = vpack.c.b16 %v4478, %v4475
    %v4509 = vpack.c.b16 %v4479, %v4476
    %v4510 = vpack.c.b16 %v4483, %v4480
    %v4511 = vpack.c.b16 %v4484, %v4481
    %v4512 = vpack.c.b16 %v4485, %v4482
    %v4513 = vpack.c.b16 %v4489, %v4486
    %v4514 = vpack.c.b16 %v4490, %v4487
    %v4515 = vpack.c.b16 %v4491, %v4488
    %4540 = vmatpush.bf16.msra.mxu0 %v4513
    %4541 = vmatpush.bf16.msra.mxu0 %v4510
    %4542 = vmatpush.bf16.msra.mxu0 %v4507
    %4543 = vmatpush.bf16.msra.mxu0 %v4504
    %4544 = vmatpush.bf16.msra.mxu0 %v4501
    %4545 = vmatpush.bf16.msra.mxu0 %v4498
    %4546 = vmatpush.bf16.msra.mxu0 %v4495
    %4547 = vmatpush.bf16.msra.mxu0 %v4492
    %4548 = vmatmul.bf16.gmra.mxu0 %v4368
    %v4549 = vpop.f32.mrf.mxu0
    %v4550 = vadd.f32 %v4406, %v4549
    %v4551 = vpop.f32.mrf.mxu0
    %v4552 = vadd.f32 %v4406, %v4551
    %4553 = vmatmul.bf16.gmra.mxu0 %v4369
    %v4554 = vpop.f32.mrf.mxu0
    %v4555 = vadd.f32 %v4406, %v4554
    %v4556 = vpop.f32.mrf.mxu0
    %v4557 = vadd.f32 %v4406, %v4556
    %4558 = vmatmul.bf16.gmra.mxu0 %v4370
    %v4559 = vpop.f32.mrf.mxu0
    %v4560 = vadd.f32 %v4406, %v4559
    %v4561 = vpop.f32.mrf.mxu0
    %v4562 = vadd.f32 %v4406, %v4561
    %4563 = vmatmul.bf16.gmra.mxu0 %v4371
    %v4564 = vpop.f32.mrf.mxu0
    %v4565 = vadd.f32 %v4406, %v4564
    %v4566 = vpop.f32.mrf.mxu0
    %v4567 = vadd.f32 %v4406, %v4566
    %4568 = vdwg.mxu0
    %4569 = vmatpush.bf16.msra.mxu0 %v4514
    %4570 = vmatpush.bf16.msra.mxu0 %v4511
    %4571 = vmatpush.bf16.msra.mxu0 %v4508
    %4572 = vmatpush.bf16.msra.mxu0 %v4505
    %4573 = vmatpush.bf16.msra.mxu0 %v4502
    %4574 = vmatpush.bf16.msra.mxu0 %v4499
    %4575 = vmatpush.bf16.msra.mxu0 %v4496
    %4576 = vmatpush.bf16.msra.mxu0 %v4493
    %4577 = vmatmul.bf16.gmra.mxu0 %v4368
    %v4578 = vpop.f32.mrf.mxu0
    %v4579 = vadd.f32 %v4407, %v4578
    %v4580 = vpop.f32.mrf.mxu0
    %v4581 = vadd.f32 %v4407, %v4580
    %4582 = vmatmul.bf16.gmra.mxu0 %v4369
    %v4583 = vpop.f32.mrf.mxu0
    %v4584 = vadd.f32 %v4407, %v4583
    %v4585 = vpop.f32.mrf.mxu0
    %v4586 = vadd.f32 %v4407, %v4585
    %4587 = vmatmul.bf16.gmra.mxu0 %v4370
    %v4588 = vpop.f32.mrf.mxu0
    %v4589 = vadd.f32 %v4407, %v4588
    %v4590 = vpop.f32.mrf.mxu0
    %v4591 = vadd.f32 %v4407, %v4590
    %4592 = vmatmul.bf16.gmra.mxu0 %v4371
    %v4593 = vpop.f32.mrf.mxu0
    %v4594 = vadd.f32 %v4407, %v4593
    %v4595 = vpop.f32.mrf.mxu0
    %v4596 = vadd.f32 %v4407, %v4595
    %4597 = vdwg.mxu0
    %4598 = vmatpush.bf16.msra.mxu0 %v4515
    %4599 = vmatpush.bf16.msra.mxu0 %v4512
    %4600 = vmatpush.bf16.msra.mxu0 %v4509
    %4601 = vmatpush.bf16.msra.mxu0 %v4506
    %4602 = vmatpush.bf16.msra.mxu0 %v4503
    %4603 = vmatpush.bf16.msra.mxu0 %v4500
    %4604 = vmatpush.bf16.msra.mxu0 %v4497
    %4605 = vmatpush.bf16.msra.mxu0 %v4494
    %4606 = vmatmul.bf16.gmra.mxu0 %v4368
    %v4607 = vpop.f32.mrf.mxu0
    %v4608 = vadd.f32 %v4408, %v4607
    %v4609 = vpop.f32.mrf.mxu0
    %v4610 = vadd.f32 %v4408, %v4609
    %4611 = vmatmul.bf16.gmra.mxu0 %v4369
    %v4612 = vpop.f32.mrf.mxu0
    %v4613 = vadd.f32 %v4408, %v4612
    %v4614 = vpop.f32.mrf.mxu0
    %v4615 = vadd.f32 %v4408, %v4614
    %4616 = vmatmul.bf16.gmra.mxu0 %v4370
    %v4617 = vpop.f32.mrf.mxu0
    %v4618 = vadd.f32 %v4408, %v4617
    %v4619 = vpop.f32.mrf.mxu0
    %v4620 = vadd.f32 %v4408, %v4619
    %4621 = vmatmul.bf16.gmra.mxu0 %v4371
    %v4622 = vpop.f32.mrf.mxu0
    %v4623 = vadd.f32 %v4408, %v4622
    %v4624 = vpop.f32.mrf.mxu0
    %v4625 = vadd.f32 %v4408, %v4624
    %4626 = vdwg.mxu0
    %v4627 = vld [vmem:[#allocation9] sm:$0xff]
    %v4628 = vld [vmem:[#allocation9 + $0x8] sm:$0xf]
    %v4629 = vld [vmem:[#allocation9 + $0xc] sm:$0xff]
    %v4630 = vld [vmem:[#allocation9 + $0x14] sm:$0xf]
    %v4631 = vld [vmem:[#allocation9 + $0x18] sm:$0xff]
    %v4632 = vld [vmem:[#allocation9 + $0x20] sm:$0xf]
    %v4633 = vld [vmem:[#allocation9 + $0x24] sm:$0xff]
    %v4634 = vld [vmem:[#allocation9 + $0x2c] sm:$0xf]
    %v4635 = vld [vmem:[#allocation9 + $0x30] sm:$0xff]
    %v4636 = vld [vmem:[#allocation9 + $0x38] sm:$0xf]
    %v4637 = vld [vmem:[#allocation9 + $0x3c] sm:$0xff]
    %v4638 = vld [vmem:[#allocation9 + $0x44] sm:$0xf]
    %v4639 = vld [vmem:[#allocation9 + $0x48] sm:$0xff]
    %v4640 = vld [vmem:[#allocation9 + $0x50] sm:$0xf]
    %v4641 = vld [vmem:[#allocation9 + $0x54] sm:$0xff]
    %v4642 = vld [vmem:[#allocation9 + $0x5c] sm:$0xf]
    %v4643 = vld [vmem:[#allocation9 + $0x60] sm:$0xff]
    %v4644 = vld [vmem:[#allocation9 + $0x68] sm:$0xf]
    %v4645 = vld [vmem:[#allocation9 + $0x6c] sm:$0xff]
    %v4646 = vld [vmem:[#allocation9 + $0x74] sm:$0xf]
    %v4647 = vld [vmem:[#allocation9 + $0x78] sm:$0xff]
    %v4648 = vld [vmem:[#allocation9 + $0x80] sm:$0xf]
    %v4649 = vld [vmem:[#allocation9 + $0x84] sm:$0xff]
    %v4650 = vld [vmem:[#allocation9 + $0x8c] sm:$0xf]
    %v4651 = vld [vmem:[#allocation9 + $0x90] sm:$0xff]
    %v4652 = vld [vmem:[#allocation9 + $0x98] sm:$0xf]
    %v4653 = vld [vmem:[#allocation9 + $0x9c] sm:$0xff]
    %v4654 = vld [vmem:[#allocation9 + $0xa4] sm:$0xf]
    %v4655 = vld [vmem:[#allocation9 + $0xa8] sm:$0xff]
    %v4656 = vld [vmem:[#allocation9 + $0xb0] sm:$0xf]
    %v4657 = vld [vmem:[#allocation9 + $0xb4] sm:$0xff]
    %v4658 = vld [vmem:[#allocation9 + $0xbc] sm:$0xf]
    %v4659 = vld [vmem:[%s12] sm:$0x1]
    %v4692 = vunpack.c.l.b16 %v4627
    %v4693 = vunpack.c.h.b16 %v4627
    %v4694 = vunpack.c.l.b16 %v4628
    %v4695 = vunpack.c.l.b16 %v4629
    %v4696 = vunpack.c.h.b16 %v4629
    %v4697 = vunpack.c.l.b16 %v4630
    %v4698 = vunpack.c.l.b16 %v4631
    %v4699 = vunpack.c.h.b16 %v4631
    %v4700 = vunpack.c.l.b16 %v4632
    %v4701 = vunpack.c.l.b16 %v4633
    %v4702 = vunpack.c.h.b16 %v4633
    %v4703 = vunpack.c.l.b16 %v4634
    %v4704 = vunpack.c.l.b16 %v4635
    %v4705 = vunpack.c.h.b16 %v4635
    %v4706 = vunpack.c.l.b16 %v4636
    %v4707 = vunpack.c.l.b16 %v4637
    %v4708 = vunpack.c.h.b16 %v4637
    %v4709 = vunpack.c.l.b16 %v4638
    %v4710 = vunpack.c.l.b16 %v4639
    %v4711 = vunpack.c.h.b16 %v4639
    %v4712 = vunpack.c.l.b16 %v4640
    %v4713 = vunpack.c.l.b16 %v4641
    %v4714 = vunpack.c.h.b16 %v4641
    %v4715 = vunpack.c.l.b16 %v4642
    %v4716 = vunpack.c.l.b16 %v4643
    %v4717 = vunpack.c.h.b16 %v4643
    %v4718 = vunpack.c.l.b16 %v4644
    %v4719 = vunpack.c.l.b16 %v4645
    %v4720 = vunpack.c.h.b16 %v4645
    %v4721 = vunpack.c.l.b16 %v4646
    %v4722 = vunpack.c.l.b16 %v4647
    %v4723 = vunpack.c.h.b16 %v4647
    %v4724 = vunpack.c.l.b16 %v4648
    %v4725 = vunpack.c.l.b16 %v4649
    %v4726 = vunpack.c.h.b16 %v4649
    %v4727 = vunpack.c.l.b16 %v4650
    %v4728 = vunpack.c.l.b16 %v4651
    %v4729 = vunpack.c.h.b16 %v4651
    %v4730 = vunpack.c.l.b16 %v4652
    %v4731 = vunpack.c.l.b16 %v4653
    %v4732 = vunpack.c.h.b16 %v4653
    %v4733 = vunpack.c.l.b16 %v4654
    %v4734 = vunpack.c.l.b16 %v4655
    %v4735 = vunpack.c.h.b16 %v4655
    %v4736 = vunpack.c.l.b16 %v4656
    %v4737 = vunpack.c.l.b16 %v4657
    %v4738 = vunpack.c.h.b16 %v4657
    %v4739 = vunpack.c.l.b16 %v4658
    %v4740 = vpack.c.b16 %v4695, %v4692
    %v4741 = vpack.c.b16 %v4696, %v4693
    %v4742 = vpack.c.b16 %v4697, %v4694
    %v4743 = vpack.c.b16 %v4701, %v4698
    %v4744 = vpack.c.b16 %v4702, %v4699
    %v4745 = vpack.c.b16 %v4703, %v4700
    %v4746 = vpack.c.b16 %v4707, %v4704
    %v4747 = vpack.c.b16 %v4708, %v4705
    %v4748 = vpack.c.b16 %v4709, %v4706
    %v4749 = vpack.c.b16 %v4713, %v4710
    %v4750 = vpack.c.b16 %v4714, %v4711
    %v4751 = vpack.c.b16 %v4715, %v4712
    %v4752 = vpack.c.b16 %v4719, %v4716
    %v4753 = vpack.c.b16 %v4720, %v4717
    %v4754 = vpack.c.b16 %v4721, %v4718
    %v4755 = vpack.c.b16 %v4725, %v4722
    %v4756 = vpack.c.b16 %v4726, %v4723
    %v4757 = vpack.c.b16 %v4727, %v4724
    %v4758 = vpack.c.b16 %v4731, %v4728
    %v4759 = vpack.c.b16 %v4732, %v4729
    %v4760 = vpack.c.b16 %v4733, %v4730
    %v4761 = vpack.c.b16 %v4737, %v4734
    %v4762 = vpack.c.b16 %v4738, %v4735
    %v4763 = vpack.c.b16 %v4739, %v4736
    %4788 = vmatpush.bf16.msra.mxu0 %v4761
    %4789 = vmatpush.bf16.msra.mxu0 %v4758
    %4790 = vmatpush.bf16.msra.mxu0 %v4755
    %4791 = vmatpush.bf16.msra.mxu0 %v4752
    %4792 = vmatpush.bf16.msra.mxu0 %v4749
    %4793 = vmatpush.bf16.msra.mxu0 %v4746
    %4794 = vmatpush.bf16.msra.mxu0 %v4743
    %4795 = vmatpush.bf16.msra.mxu0 %v4740
    %4796 = vmatmul.bf16.gmra.mxu0 0
    %v4797 = vpop.f32.mrf.mxu0
    %v4798 = vadd.f32 0.0, %v4797
    %v4799 = vpop.f32.mrf.mxu0
    %4800 = vdwg.mxu0
    %4801 = vmatpush.bf16.msra.mxu0 %v4762
    %4802 = vmatpush.bf16.msra.mxu0 %v4759
    %4803 = vmatpush.bf16.msra.mxu0 %v4756
    %4804 = vmatpush.bf16.msra.mxu0 %v4753
    %4805 = vmatpush.bf16.msra.mxu0 %v4750
    %4806 = vmatpush.bf16.msra.mxu0 %v4747
    %4807 = vmatpush.bf16.msra.mxu0 %v4744
    %4808 = vmatpush.bf16.msra.mxu0 %v4741
    %4809 = vmatmul.bf16.gmra.mxu0 0
    %v4810 = vpop.f32.mrf.mxu0
    %v4811 = vadd.f32 0.0, %v4810
    %v4812 = vpop.f32.mrf.mxu0
    %4813 = vdwg.mxu0
    %4814 = vmatpush.bf16.msra.mxu0 %v4763
    %4815 = vmatpush.bf16.msra.mxu0 %v4760
    %4816 = vmatpush.bf16.msra.mxu0 %v4757
    %4817 = vmatpush.bf16.msra.mxu0 %v4754
    %4818 = vmatpush.bf16.msra.mxu0 %v4751
    %4819 = vmatpush.bf16.msra.mxu0 %v4748
    %4820 = vmatpush.bf16.msra.mxu0 %v4745
    %4821 = vmatpush.bf16.msra.mxu0 %v4742
    %4822 = vmatmul.bf16.gmra.mxu0 0
    %v4823 = vpop.f32.mrf.mxu0
    %v4824 = vadd.f32 0.0, %v4823
    %v4825 = vpop.f32.mrf.mxu0
    %4826 = vdwg.mxu0
    %v4827 = vadd.f32 %v4550, %v4798
    %v4828 = vxor.u32 %v4827, 2147483648
    %v4829 = vmul.f32 %v4828, 1.442695
    %v4830 = vpow.pop %v4829
    %v4831 = vadd.f32 %v4830, 1.0
    %v4832 = vrcp.pop %v4831
    %v4833 = vmul.f32 %v4831, %v4832
    %v4834 = vsub.f32 1.0, %v4833
    %v4835 = vmul.f32 %v4832, %v4834
    %v4836 = vadd.f32 %v4832, %v4835
    %vm4837 = vweird.f32 %v4831
    %vm4838 = vweird.f32 %v4832
    %vm4839 = vmor %vm4837, %vm4838
    %v4840 = vsel %vm4839, %v4832, %v4836
    %v4841 = vand.u32 2147483647, %v4831
    %vm4842 = vcmp.eq.f32.partialorder %v4841, 8.507059e+37
    %v4843 = vand.u32 %v4831, 2147483648
    %v4844 = vor.u32 1.1754944e-38, %v4843
    %v4845 = vsel %vm4842, %v4844, %v4840
    %v4846 = vmul.f32 1.0, %v4845
    %v4847 = vadd.f32 %v4579, %v4811
    %v4848 = vxor.u32 %v4847, 2147483648
    %v4849 = vmul.f32 %v4848, 1.442695
    %v4850 = vpow.pop %v4849
    %v4851 = vadd.f32 %v4850, 1.0
    %v4852 = vrcp.pop %v4851
    %v4853 = vmul.f32 %v4851, %v4852
    %v4854 = vsub.f32 1.0, %v4853
    %v4855 = vmul.f32 %v4852, %v4854
    %v4856 = vadd.f32 %v4852, %v4855
    %vm4857 = vweird.f32 %v4851
    %vm4858 = vweird.f32 %v4852
    %vm4859 = vmor %vm4857, %vm4858
    %v4860 = vsel %vm4859, %v4852, %v4856
    %v4861 = vand.u32 2147483647, %v4851
    %vm4862 = vcmp.eq.f32.partialorder %v4861, 8.507059e+37
    %v4863 = vand.u32 %v4851, 2147483648
    %v4864 = vor.u32 1.1754944e-38, %v4863
    %v4865 = vsel %vm4862, %v4864, %v4860
    %v4866 = vmul.f32 1.0, %v4865
    %v4868 = vperm.slane %v4659, 0
    %v4870 = vadd.f32 %v4824, %v4868
    %v4871 = vmul.f32 %v4846, %v4870
    %v4872 = vadd.f32 %v4608, %v4871
    %v4873 = vtanh.pop %v4872
    %v4874 = vsub.f32 1.0, %v4866
    %v4875 = vmul.f32 %v4874, %v4873
    %v4876 = vmul.f32 %v4866, 0.0
    %v4877 = vadd.f32 %v4875, %v4876
    %4878 = vst [vmem:[#allocation2] sm:$0xff] %v4877
    %v4879 = vpack.c.bf16 %v4877, %v4877
    %4880 = vmatpush.bf16.msra.mxu0 %v4761
    %4881 = vmatpush.bf16.msra.mxu0 %v4758
    %4882 = vmatpush.bf16.msra.mxu0 %v4755
    %4883 = vmatpush.bf16.msra.mxu0 %v4752
    %4884 = vmatpush.bf16.msra.mxu0 %v4749
    %4885 = vmatpush.bf16.msra.mxu0 %v4746
    %4886 = vmatpush.bf16.msra.mxu0 %v4743
    %4887 = vmatpush.bf16.msra.mxu0 %v4740
    %4888 = vmatmul.bf16.gmra.mxu0 %v4879
    %v4889 = vpop.f32.mrf.mxu0
    %v4890 = vadd.f32 0.0, %v4889
    %v4891 = vpop.f32.mrf.mxu0
    %4892 = vdwg.mxu0
    %4893 = vmatpush.bf16.msra.mxu0 %v4762
    %4894 = vmatpush.bf16.msra.mxu0 %v4759
    %4895 = vmatpush.bf16.msra.mxu0 %v4756
    %4896 = vmatpush.bf16.msra.mxu0 %v4753
    %4897 = vmatpush.bf16.msra.mxu0 %v4750
    %4898 = vmatpush.bf16.msra.mxu0 %v4747
    %4899 = vmatpush.bf16.msra.mxu0 %v4744
    %4900 = vmatpush.bf16.msra.mxu0 %v4741
    %4901 = vmatmul.bf16.gmra.mxu0 %v4879
    %v4902 = vpop.f32.mrf.mxu0
    %v4903 = vadd.f32 0.0, %v4902
    %v4904 = vpop.f32.mrf.mxu0
    %4905 = vdwg.mxu0
    %4906 = vmatpush.bf16.msra.mxu0 %v4763
    %4907 = vmatpush.bf16.msra.mxu0 %v4760
    %4908 = vmatpush.bf16.msra.mxu0 %v4757
    %4909 = vmatpush.bf16.msra.mxu0 %v4754
    %4910 = vmatpush.bf16.msra.mxu0 %v4751
    %4911 = vmatpush.bf16.msra.mxu0 %v4748
    %4912 = vmatpush.bf16.msra.mxu0 %v4745
    %4913 = vmatpush.bf16.msra.mxu0 %v4742
    %4914 = vmatmul.bf16.gmra.mxu0 %v4879
    %v4915 = vpop.f32.mrf.mxu0
    %v4916 = vadd.f32 0.0, %v4915
    %v4917 = vpop.f32.mrf.mxu0
    %4918 = vdwg.mxu0
    %v4919 = vadd.f32 %v4552, %v4890
    %v4920 = vxor.u32 %v4919, 2147483648
    %v4921 = vmul.f32 %v4920, 1.442695
    %v4922 = vpow.pop %v4921
    %v4923 = vadd.f32 %v4922, 1.0
    %v4924 = vrcp.pop %v4923
    %v4925 = vmul.f32 %v4923, %v4924
    %v4926 = vsub.f32 1.0, %v4925
    %v4927 = vmul.f32 %v4924, %v4926
    %v4928 = vadd.f32 %v4924, %v4927
    %vm4929 = vweird.f32 %v4923
    %vm4930 = vweird.f32 %v4924
    %vm4931 = vmor %vm4929, %vm4930
    %v4932 = vsel %vm4931, %v4924, %v4928
    %v4933 = vand.u32 2147483647, %v4923
    %vm4934 = vcmp.eq.f32.partialorder %v4933, 8.507059e+37
    %v4935 = vand.u32 %v4923, 2147483648
    %v4936 = vor.u32 1.1754944e-38, %v4935
    %v4937 = vsel %vm4934, %v4936, %v4932
    %v4938 = vmul.f32 1.0, %v4937
    %v4939 = vadd.f32 %v4581, %v4903
    %v4940 = vxor.u32 %v4939, 2147483648
    %v4941 = vmul.f32 %v4940, 1.442695
    %v4942 = vpow.pop %v4941
    %v4943 = vadd.f32 %v4942, 1.0
    %v4944 = vrcp.pop %v4943
    %v4945 = vmul.f32 %v4943, %v4944
    %v4946 = vsub.f32 1.0, %v4945
    %v4947 = vmul.f32 %v4944, %v4946
    %v4948 = vadd.f32 %v4944, %v4947
    %vm4949 = vweird.f32 %v4943
    %vm4950 = vweird.f32 %v4944
    %vm4951 = vmor %vm4949, %vm4950
    %v4952 = vsel %vm4951, %v4944, %v4948
    %v4953 = vand.u32 2147483647, %v4943
    %vm4954 = vcmp.eq.f32.partialorder %v4953, 8.507059e+37
    %v4955 = vand.u32 %v4943, 2147483648
    %v4956 = vor.u32 1.1754944e-38, %v4955
    %v4957 = vsel %vm4954, %v4956, %v4952
    %v4958 = vmul.f32 1.0, %v4957
    %v4959 = vadd.f32 %v4916, %v4868
    %v4960 = vmul.f32 %v4938, %v4959
    %v4961 = vadd.f32 %v4610, %v4960
    %v4962 = vtanh.pop %v4961
    %v4963 = vsub.f32 1.0, %v4958
    %v4964 = vmul.f32 %v4963, %v4962
    %v4965 = vmul.f32 %v4958, %v4877
    %v4966 = vadd.f32 %v4964, %v4965
    %4967 = vst [vmem:[#allocation2 + $0x10] sm:$0xff] %v4966
    %v4968 = vpack.c.bf16 %v4966, %v4966
    %4969 = vmatpush.bf16.msra.mxu0 %v4761
    %4970 = vmatpush.bf16.msra.mxu0 %v4758
    %4971 = vmatpush.bf16.msra.mxu0 %v4755
    %4972 = vmatpush.bf16.msra.mxu0 %v4752
    %4973 = vmatpush.bf16.msra.mxu0 %v4749
    %4974 = vmatpush.bf16.msra.mxu0 %v4746
    %4975 = vmatpush.bf16.msra.mxu0 %v4743
    %4976 = vmatpush.bf16.msra.mxu0 %v4740
    %4977 = vmatmul.bf16.gmra.mxu0 %v4968
    %v4978 = vpop.f32.mrf.mxu0
    %v4979 = vadd.f32 0.0, %v4978
    %v4980 = vpop.f32.mrf.mxu0
    %4981 = vdwg.mxu0
    %4982 = vmatpush.bf16.msra.mxu0 %v4762
    %4983 = vmatpush.bf16.msra.mxu0 %v4759
    %4984 = vmatpush.bf16.msra.mxu0 %v4756
    %4985 = vmatpush.bf16.msra.mxu0 %v4753
    %4986 = vmatpush.bf16.msra.mxu0 %v4750
    %4987 = vmatpush.bf16.msra.mxu0 %v4747
    %4988 = vmatpush.bf16.msra.mxu0 %v4744
    %4989 = vmatpush.bf16.msra.mxu0 %v4741
    %4990 = vmatmul.bf16.gmra.mxu0 %v4968
    %v4991 = vpop.f32.mrf.mxu0
    %v4992 = vadd.f32 0.0, %v4991
    %v4993 = vpop.f32.mrf.mxu0
    %4994 = vdwg.mxu0
    %4995 = vmatpush.bf16.msra.mxu0 %v4763
    %4996 = vmatpush.bf16.msra.mxu0 %v4760
    %4997 = vmatpush.bf16.msra.mxu0 %v4757
    %4998 = vmatpush.bf16.msra.mxu0 %v4754
    %4999 = vmatpush.bf16.msra.mxu0 %v4751
    %5000 = vmatpush.bf16.msra.mxu0 %v4748
    %5001 = vmatpush.bf16.msra.mxu0 %v4745
    %5002 = vmatpush.bf16.msra.mxu0 %v4742
    %5003 = vmatmul.bf16.gmra.mxu0 %v4968
    %v5004 = vpop.f32.mrf.mxu0
    %v5005 = vadd.f32 0.0, %v5004
    %v5006 = vpop.f32.mrf.mxu0
    %5007 = vdwg.mxu0
    %v5008 = vadd.f32 %v4555, %v4979
    %v5009 = vxor.u32 %v5008, 2147483648
    %v5010 = vmul.f32 %v5009, 1.442695
    %v5011 = vpow.pop %v5010
    %v5012 = vadd.f32 %v5011, 1.0
    %v5013 = vrcp.pop %v5012
    %v5014 = vmul.f32 %v5012, %v5013
    %v5015 = vsub.f32 1.0, %v5014
    %v5016 = vmul.f32 %v5013, %v5015
    %v5017 = vadd.f32 %v5013, %v5016
    %vm5018 = vweird.f32 %v5012
    %vm5019 = vweird.f32 %v5013
    %vm5020 = vmor %vm5018, %vm5019
    %v5021 = vsel %vm5020, %v5013, %v5017
    %v5022 = vand.u32 2147483647, %v5012
    %vm5023 = vcmp.eq.f32.partialorder %v5022, 8.507059e+37
    %v5024 = vand.u32 %v5012, 2147483648
    %v5025 = vor.u32 1.1754944e-38, %v5024
    %v5026 = vsel %vm5023, %v5025, %v5021
    %v5027 = vmul.f32 1.0, %v5026
    %v5028 = vadd.f32 %v4584, %v4992
    %v5029 = vxor.u32 %v5028, 2147483648
    %v5030 = vmul.f32 %v5029, 1.442695
    %v5031 = vpow.pop %v5030
    %v5032 = vadd.f32 %v5031, 1.0
    %v5033 = vrcp.pop %v5032
    %v5034 = vmul.f32 %v5032, %v5033
    %v5035 = vsub.f32 1.0, %v5034
    %v5036 = vmul.f32 %v5033, %v5035
    %v5037 = vadd.f32 %v5033, %v5036
    %vm5038 = vweird.f32 %v5032
    %vm5039 = vweird.f32 %v5033
    %vm5040 = vmor %vm5038, %vm5039
    %v5041 = vsel %vm5040, %v5033, %v5037
    %v5042 = vand.u32 2147483647, %v5032
    %vm5043 = vcmp.eq.f32.partialorder %v5042, 8.507059e+37
    %v5044 = vand.u32 %v5032, 2147483648
    %v5045 = vor.u32 1.1754944e-38, %v5044
    %v5046 = vsel %vm5043, %v5045, %v5041
    %v5047 = vmul.f32 1.0, %v5046
    %v5048 = vadd.f32 %v5005, %v4868
    %v5049 = vmul.f32 %v5027, %v5048
    %v5050 = vadd.f32 %v4613, %v5049
    %v5051 = vtanh.pop %v5050
    %v5052 = vsub.f32 1.0, %v5047
    %v5053 = vmul.f32 %v5052, %v5051
    %v5054 = vmul.f32 %v5047, %v4966
    %v5055 = vadd.f32 %v5053, %v5054
    %5056 = vst [vmem:[#allocation2 + $0x20] sm:$0xff] %v5055
    %v5057 = vpack.c.bf16 %v5055, %v5055
    %5058 = vmatpush.bf16.msra.mxu0 %v4761
    %5059 = vmatpush.bf16.msra.mxu0 %v4758
    %5060 = vmatpush.bf16.msra.mxu0 %v4755
    %5061 = vmatpush.bf16.msra.mxu0 %v4752
    %5062 = vmatpush.bf16.msra.mxu0 %v4749
    %5063 = vmatpush.bf16.msra.mxu0 %v4746
    %5064 = vmatpush.bf16.msra.mxu0 %v4743
    %5065 = vmatpush.bf16.msra.mxu0 %v4740
    %5066 = vmatmul.bf16.gmra.mxu0 %v5057
    %v5067 = vpop.f32.mrf.mxu0
    %v5068 = vadd.f32 0.0, %v5067
    %v5069 = vpop.f32.mrf.mxu0
    %5070 = vdwg.mxu0
    %5071 = vmatpush.bf16.msra.mxu0 %v4762
    %5072 = vmatpush.bf16.msra.mxu0 %v4759
    %5073 = vmatpush.bf16.msra.mxu0 %v4756
    %5074 = vmatpush.bf16.msra.mxu0 %v4753
    %5075 = vmatpush.bf16.msra.mxu0 %v4750
    %5076 = vmatpush.bf16.msra.mxu0 %v4747
    %5077 = vmatpush.bf16.msra.mxu0 %v4744
    %5078 = vmatpush.bf16.msra.mxu0 %v4741
    %5079 = vmatmul.bf16.gmra.mxu0 %v5057
    %v5080 = vpop.f32.mrf.mxu0
    %v5081 = vadd.f32 0.0, %v5080
    %v5082 = vpop.f32.mrf.mxu0
    %5083 = vdwg.mxu0
    %5084 = vmatpush.bf16.msra.mxu0 %v4763
    %5085 = vmatpush.bf16.msra.mxu0 %v4760
    %5086 = vmatpush.bf16.msra.mxu0 %v4757
    %5087 = vmatpush.bf16.msra.mxu0 %v4754
    %5088 = vmatpush.bf16.msra.mxu0 %v4751
    %5089 = vmatpush.bf16.msra.mxu0 %v4748
    %5090 = vmatpush.bf16.msra.mxu0 %v4745
    %5091 = vmatpush.bf16.msra.mxu0 %v4742
    %5092 = vmatmul.bf16.gmra.mxu0 %v5057
    %v5093 = vpop.f32.mrf.mxu0
    %v5094 = vadd.f32 0.0, %v5093
    %v5095 = vpop.f32.mrf.mxu0
    %5096 = vdwg.mxu0
    %v5097 = vadd.f32 %v4557, %v5068
    %v5098 = vxor.u32 %v5097, 2147483648
    %v5099 = vmul.f32 %v5098, 1.442695
    %v5100 = vpow.pop %v5099
    %v5101 = vadd.f32 %v5100, 1.0
    %v5102 = vrcp.pop %v5101
    %v5103 = vmul.f32 %v5101, %v5102
    %v5104 = vsub.f32 1.0, %v5103
    %v5105 = vmul.f32 %v5102, %v5104
    %v5106 = vadd.f32 %v5102, %v5105
    %vm5107 = vweird.f32 %v5101
    %vm5108 = vweird.f32 %v5102
    %vm5109 = vmor %vm5107, %vm5108
    %v5110 = vsel %vm5109, %v5102, %v5106
    %v5111 = vand.u32 2147483647, %v5101
    %vm5112 = vcmp.eq.f32.partialorder %v5111, 8.507059e+37
    %v5113 = vand.u32 %v5101, 2147483648
    %v5114 = vor.u32 1.1754944e-38, %v5113
    %v5115 = vsel %vm5112, %v5114, %v5110
    %v5116 = vmul.f32 1.0, %v5115
    %v5117 = vadd.f32 %v4586, %v5081
    %v5118 = vxor.u32 %v5117, 2147483648
    %v5119 = vmul.f32 %v5118, 1.442695
    %v5120 = vpow.pop %v5119
    %v5121 = vadd.f32 %v5120, 1.0
    %v5122 = vrcp.pop %v5121
    %v5123 = vmul.f32 %v5121, %v5122
    %v5124 = vsub.f32 1.0, %v5123
    %v5125 = vmul.f32 %v5122, %v5124
    %v5126 = vadd.f32 %v5122, %v5125
    %vm5127 = vweird.f32 %v5121
    %vm5128 = vweird.f32 %v5122
    %vm5129 = vmor %vm5127, %vm5128
    %v5130 = vsel %vm5129, %v5122, %v5126
    %v5131 = vand.u32 2147483647, %v5121
    %vm5132 = vcmp.eq.f32.partialorder %v5131, 8.507059e+37
    %v5133 = vand.u32 %v5121, 2147483648
    %v5134 = vor.u32 1.1754944e-38, %v5133
    %v5135 = vsel %vm5132, %v5134, %v5130
    %v5136 = vmul.f32 1.0, %v5135
    %v5137 = vadd.f32 %v5094, %v4868
    %v5138 = vmul.f32 %v5116, %v5137
    %v5139 = vadd.f32 %v4615, %v5138
    %v5140 = vtanh.pop %v5139
    %v5141 = vsub.f32 1.0, %v5136
    %v5142 = vmul.f32 %v5141, %v5140
    %v5143 = vmul.f32 %v5136, %v5055
    %v5144 = vadd.f32 %v5142, %v5143
    %5145 = vst [vmem:[#allocation2 + $0x30] sm:$0xff] %v5144
    %v5146 = vpack.c.bf16 %v5144, %v5144
    %5147 = vmatpush.bf16.msra.mxu0 %v4761
    %5148 = vmatpush.bf16.msra.mxu0 %v4758
    %5149 = vmatpush.bf16.msra.mxu0 %v4755
    %5150 = vmatpush.bf16.msra.mxu0 %v4752
    %5151 = vmatpush.bf16.msra.mxu0 %v4749
    %5152 = vmatpush.bf16.msra.mxu0 %v4746
    %5153 = vmatpush.bf16.msra.mxu0 %v4743
    %5154 = vmatpush.bf16.msra.mxu0 %v4740
    %5155 = vmatmul.bf16.gmra.mxu0 %v5146
    %v5156 = vpop.f32.mrf.mxu0
    %v5157 = vadd.f32 0.0, %v5156
    %v5158 = vpop.f32.mrf.mxu0
    %5159 = vdwg.mxu0
    %5160 = vmatpush.bf16.msra.mxu0 %v4762
    %5161 = vmatpush.bf16.msra.mxu0 %v4759
    %5162 = vmatpush.bf16.msra.mxu0 %v4756
    %5163 = vmatpush.bf16.msra.mxu0 %v4753
    %5164 = vmatpush.bf16.msra.mxu0 %v4750
    %5165 = vmatpush.bf16.msra.mxu0 %v4747
    %5166 = vmatpush.bf16.msra.mxu0 %v4744
    %5167 = vmatpush.bf16.msra.mxu0 %v4741
    %5168 = vmatmul.bf16.gmra.mxu0 %v5146
    %v5169 = vpop.f32.mrf.mxu0
    %v5170 = vadd.f32 0.0, %v5169
    %v5171 = vpop.f32.mrf.mxu0
    %5172 = vdwg.mxu0
    %5173 = vmatpush.bf16.msra.mxu0 %v4763
    %5174 = vmatpush.bf16.msra.mxu0 %v4760
    %5175 = vmatpush.bf16.msra.mxu0 %v4757
    %5176 = vmatpush.bf16.msra.mxu0 %v4754
    %5177 = vmatpush.bf16.msra.mxu0 %v4751
    %5178 = vmatpush.bf16.msra.mxu0 %v4748
    %5179 = vmatpush.bf16.msra.mxu0 %v4745
    %5180 = vmatpush.bf16.msra.mxu0 %v4742
    %5181 = vmatmul.bf16.gmra.mxu0 %v5146
    %v5182 = vpop.f32.mrf.mxu0
    %v5183 = vadd.f32 0.0, %v5182
    %v5184 = vpop.f32.mrf.mxu0
    %5185 = vdwg.mxu0
    %v5186 = vadd.f32 %v4560, %v5157
    %v5187 = vxor.u32 %v5186, 2147483648
    %v5188 = vmul.f32 %v5187, 1.442695
    %v5189 = vpow.pop %v5188
    %v5190 = vadd.f32 %v5189, 1.0
    %v5191 = vrcp.pop %v5190
    %v5192 = vmul.f32 %v5190, %v5191
    %v5193 = vsub.f32 1.0, %v5192
    %v5194 = vmul.f32 %v5191, %v5193
    %v5195 = vadd.f32 %v5191, %v5194
    %vm5196 = vweird.f32 %v5190
    %vm5197 = vweird.f32 %v5191
    %vm5198 = vmor %vm5196, %vm5197
    %v5199 = vsel %vm5198, %v5191, %v5195
    %v5200 = vand.u32 2147483647, %v5190
    %vm5201 = vcmp.eq.f32.partialorder %v5200, 8.507059e+37
    %v5202 = vand.u32 %v5190, 2147483648
    %v5203 = vor.u32 1.1754944e-38, %v5202
    %v5204 = vsel %vm5201, %v5203, %v5199
    %v5205 = vmul.f32 1.0, %v5204
    %v5206 = vadd.f32 %v4589, %v5170
    %v5207 = vxor.u32 %v5206, 2147483648
    %v5208 = vmul.f32 %v5207, 1.442695
    %v5209 = vpow.pop %v5208
    %v5210 = vadd.f32 %v5209, 1.0
    %v5211 = vrcp.pop %v5210
    %v5212 = vmul.f32 %v5210, %v5211
    %v5213 = vsub.f32 1.0, %v5212
    %v5214 = vmul.f32 %v5211, %v5213
    %v5215 = vadd.f32 %v5211, %v5214
    %vm5216 = vweird.f32 %v5210
    %vm5217 = vweird.f32 %v5211
    %vm5218 = vmor %vm5216, %vm5217
    %v5219 = vsel %vm5218, %v5211, %v5215
    %v5220 = vand.u32 2147483647, %v5210
    %vm5221 = vcmp.eq.f32.partialorder %v5220, 8.507059e+37
    %v5222 = vand.u32 %v5210, 2147483648
    %v5223 = vor.u32 1.1754944e-38, %v5222
    %v5224 = vsel %vm5221, %v5223, %v5219
    %v5225 = vmul.f32 1.0, %v5224
    %v5226 = vadd.f32 %v5183, %v4868
    %v5227 = vmul.f32 %v5205, %v5226
    %v5228 = vadd.f32 %v4618, %v5227
    %v5229 = vtanh.pop %v5228
    %v5230 = vsub.f32 1.0, %v5225
    %v5231 = vmul.f32 %v5230, %v5229
    %v5232 = vmul.f32 %v5225, %v5144
    %v5233 = vadd.f32 %v5231, %v5232
    %5234 = vst [vmem:[#allocation2 + $0x40] sm:$0xff] %v5233
    %v5235 = vpack.c.bf16 %v5233, %v5233
    %5236 = vmatpush.bf16.msra.mxu0 %v4761
    %5237 = vmatpush.bf16.msra.mxu0 %v4758
    %5238 = vmatpush.bf16.msra.mxu0 %v4755
    %5239 = vmatpush.bf16.msra.mxu0 %v4752
    %5240 = vmatpush.bf16.msra.mxu0 %v4749
    %5241 = vmatpush.bf16.msra.mxu0 %v4746
    %5242 = vmatpush.bf16.msra.mxu0 %v4743
    %5243 = vmatpush.bf16.msra.mxu0 %v4740
    %5244 = vmatmul.bf16.gmra.mxu0 %v5235
    %v5245 = vpop.f32.mrf.mxu0
    %v5246 = vadd.f32 0.0, %v5245
    %v5247 = vpop.f32.mrf.mxu0
    %5248 = vdwg.mxu0
    %5249 = vmatpush.bf16.msra.mxu0 %v4762
    %5250 = vmatpush.bf16.msra.mxu0 %v4759
    %5251 = vmatpush.bf16.msra.mxu0 %v4756
    %5252 = vmatpush.bf16.msra.mxu0 %v4753
    %5253 = vmatpush.bf16.msra.mxu0 %v4750
    %5254 = vmatpush.bf16.msra.mxu0 %v4747
    %5255 = vmatpush.bf16.msra.mxu0 %v4744
    %5256 = vmatpush.bf16.msra.mxu0 %v4741
    %5257 = vmatmul.bf16.gmra.mxu0 %v5235
    %v5258 = vpop.f32.mrf.mxu0
    %v5259 = vadd.f32 0.0, %v5258
    %v5260 = vpop.f32.mrf.mxu0
    %5261 = vdwg.mxu0
    %5262 = vmatpush.bf16.msra.mxu0 %v4763
    %5263 = vmatpush.bf16.msra.mxu0 %v4760
    %5264 = vmatpush.bf16.msra.mxu0 %v4757
    %5265 = vmatpush.bf16.msra.mxu0 %v4754
    %5266 = vmatpush.bf16.msra.mxu0 %v4751
    %5267 = vmatpush.bf16.msra.mxu0 %v4748
    %5268 = vmatpush.bf16.msra.mxu0 %v4745
    %5269 = vmatpush.bf16.msra.mxu0 %v4742
    %5270 = vmatmul.bf16.gmra.mxu0 %v5235
    %v5271 = vpop.f32.mrf.mxu0
    %v5272 = vadd.f32 0.0, %v5271
    %v5273 = vpop.f32.mrf.mxu0
    %5274 = vdwg.mxu0
    %v5275 = vadd.f32 %v4562, %v5246
    %v5276 = vxor.u32 %v5275, 2147483648
    %v5277 = vmul.f32 %v5276, 1.442695
    %v5278 = vpow.pop %v5277
    %v5279 = vadd.f32 %v5278, 1.0
    %v5280 = vrcp.pop %v5279
    %v5281 = vmul.f32 %v5279, %v5280
    %v5282 = vsub.f32 1.0, %v5281
    %v5283 = vmul.f32 %v5280, %v5282
    %v5284 = vadd.f32 %v5280, %v5283
    %vm5285 = vweird.f32 %v5279
    %vm5286 = vweird.f32 %v5280
    %vm5287 = vmor %vm5285, %vm5286
    %v5288 = vsel %vm5287, %v5280, %v5284
    %v5289 = vand.u32 2147483647, %v5279
    %vm5290 = vcmp.eq.f32.partialorder %v5289, 8.507059e+37
    %v5291 = vand.u32 %v5279, 2147483648
    %v5292 = vor.u32 1.1754944e-38, %v5291
    %v5293 = vsel %vm5290, %v5292, %v5288
    %v5294 = vmul.f32 1.0, %v5293
    %v5295 = vadd.f32 %v4591, %v5259
    %v5296 = vxor.u32 %v5295, 2147483648
    %v5297 = vmul.f32 %v5296, 1.442695
    %v5298 = vpow.pop %v5297
    %v5299 = vadd.f32 %v5298, 1.0
    %v5300 = vrcp.pop %v5299
    %v5301 = vmul.f32 %v5299, %v5300
    %v5302 = vsub.f32 1.0, %v5301
    %v5303 = vmul.f32 %v5300, %v5302
    %v5304 = vadd.f32 %v5300, %v5303
    %vm5305 = vweird.f32 %v5299
    %vm5306 = vweird.f32 %v5300
    %vm5307 = vmor %vm5305, %vm5306
    %v5308 = vsel %vm5307, %v5300, %v5304
    %v5309 = vand.u32 2147483647, %v5299
    %vm5310 = vcmp.eq.f32.partialorder %v5309, 8.507059e+37
    %v5311 = vand.u32 %v5299, 2147483648
    %v5312 = vor.u32 1.1754944e-38, %v5311
    %v5313 = vsel %vm5310, %v5312, %v5308
    %v5314 = vmul.f32 1.0, %v5313
    %v5315 = vadd.f32 %v5272, %v4868
    %v5316 = vmul.f32 %v5294, %v5315
    %v5317 = vadd.f32 %v4620, %v5316
    %v5318 = vtanh.pop %v5317
    %v5319 = vsub.f32 1.0, %v5314
    %v5320 = vmul.f32 %v5319, %v5318
    %v5321 = vmul.f32 %v5314, %v5233
    %v5322 = vadd.f32 %v5320, %v5321
    %5323 = vst [vmem:[#allocation2 + $0x50] sm:$0xff] %v5322
    %v5324 = vpack.c.bf16 %v5322, %v5322
    %5325 = vmatpush.bf16.msra.mxu0 %v4761
    %5326 = vmatpush.bf16.msra.mxu0 %v4758
    %5327 = vmatpush.bf16.msra.mxu0 %v4755
    %5328 = vmatpush.bf16.msra.mxu0 %v4752
    %5329 = vmatpush.bf16.msra.mxu0 %v4749
    %5330 = vmatpush.bf16.msra.mxu0 %v4746
    %5331 = vmatpush.bf16.msra.mxu0 %v4743
    %5332 = vmatpush.bf16.msra.mxu0 %v4740
    %5333 = vmatmul.bf16.gmra.mxu0 %v5324
    %v5334 = vpop.f32.mrf.mxu0
    %v5335 = vadd.f32 0.0, %v5334
    %v5336 = vpop.f32.mrf.mxu0
    %5337 = vdwg.mxu0
    %5338 = vmatpush.bf16.msra.mxu0 %v4762
    %5339 = vmatpush.bf16.msra.mxu0 %v4759
    %5340 = vmatpush.bf16.msra.mxu0 %v4756
    %5341 = vmatpush.bf16.msra.mxu0 %v4753
    %5342 = vmatpush.bf16.msra.mxu0 %v4750
    %5343 = vmatpush.bf16.msra.mxu0 %v4747
    %5344 = vmatpush.bf16.msra.mxu0 %v4744
    %5345 = vmatpush.bf16.msra.mxu0 %v4741
    %5346 = vmatmul.bf16.gmra.mxu0 %v5324
    %v5347 = vpop.f32.mrf.mxu0
    %v5348 = vadd.f32 0.0, %v5347
    %v5349 = vpop.f32.mrf.mxu0
    %5350 = vdwg.mxu0
    %5351 = vmatpush.bf16.msra.mxu0 %v4763
    %5352 = vmatpush.bf16.msra.mxu0 %v4760
    %5353 = vmatpush.bf16.msra.mxu0 %v4757
    %5354 = vmatpush.bf16.msra.mxu0 %v4754
    %5355 = vmatpush.bf16.msra.mxu0 %v4751
    %5356 = vmatpush.bf16.msra.mxu0 %v4748
    %5357 = vmatpush.bf16.msra.mxu0 %v4745
    %5358 = vmatpush.bf16.msra.mxu0 %v4742
    %5359 = vmatmul.bf16.gmra.mxu0 %v5324
    %v5360 = vpop.f32.mrf.mxu0
    %v5361 = vadd.f32 0.0, %v5360
    %v5362 = vpop.f32.mrf.mxu0
    %5363 = vdwg.mxu0
    %v5364 = vadd.f32 %v4565, %v5335
    %v5365 = vxor.u32 %v5364, 2147483648
    %v5366 = vmul.f32 %v5365, 1.442695
    %v5367 = vpow.pop %v5366
    %v5368 = vadd.f32 %v5367, 1.0
    %v5369 = vrcp.pop %v5368
    %v5370 = vmul.f32 %v5368, %v5369
    %v5371 = vsub.f32 1.0, %v5370
    %v5372 = vmul.f32 %v5369, %v5371
    %v5373 = vadd.f32 %v5369, %v5372
    %vm5374 = vweird.f32 %v5368
    %vm5375 = vweird.f32 %v5369
    %vm5376 = vmor %vm5374, %vm5375
    %v5377 = vsel %vm5376, %v5369, %v5373
    %v5378 = vand.u32 2147483647, %v5368
    %vm5379 = vcmp.eq.f32.partialorder %v5378, 8.507059e+37
    %v5380 = vand.u32 %v5368, 2147483648
    %v5381 = vor.u32 1.1754944e-38, %v5380
    %v5382 = vsel %vm5379, %v5381, %v5377
    %v5383 = vmul.f32 1.0, %v5382
    %v5384 = vadd.f32 %v4594, %v5348
    %v5385 = vxor.u32 %v5384, 2147483648
    %v5386 = vmul.f32 %v5385, 1.442695
    %v5387 = vpow.pop %v5386
    %v5388 = vadd.f32 %v5387, 1.0
    %v5389 = vrcp.pop %v5388
    %v5390 = vmul.f32 %v5388, %v5389
    %v5391 = vsub.f32 1.0, %v5390
    %v5392 = vmul.f32 %v5389, %v5391
    %v5393 = vadd.f32 %v5389, %v5392
    %vm5394 = vweird.f32 %v5388
    %vm5395 = vweird.f32 %v5389
    %vm5396 = vmor %vm5394, %vm5395
    %v5397 = vsel %vm5396, %v5389, %v5393
    %v5398 = vand.u32 2147483647, %v5388
    %vm5399 = vcmp.eq.f32.partialorder %v5398, 8.507059e+37
    %v5400 = vand.u32 %v5388, 2147483648
    %v5401 = vor.u32 1.1754944e-38, %v5400
    %v5402 = vsel %vm5399, %v5401, %v5397
    %v5403 = vmul.f32 1.0, %v5402
    %v5404 = vadd.f32 %v5361, %v4868
    %v5405 = vmul.f32 %v5383, %v5404
    %v5406 = vadd.f32 %v4623, %v5405
    %v5407 = vtanh.pop %v5406
    %v5408 = vsub.f32 1.0, %v5403
    %v5409 = vmul.f32 %v5408, %v5407
    %v5410 = vmul.f32 %v5403, %v5322
    %v5411 = vadd.f32 %v5409, %v5410
    %5412 = vst [vmem:[#allocation2 + $0x60] sm:$0xff] %v5411
    %v5413 = vpack.c.bf16 %v5411, %v5411
    %5414 = vmatpush.bf16.msra.mxu0 %v4761
    %5415 = vmatpush.bf16.msra.mxu0 %v4758
    %5416 = vmatpush.bf16.msra.mxu0 %v4755
    %5417 = vmatpush.bf16.msra.mxu0 %v4752
    %5418 = vmatpush.bf16.msra.mxu0 %v4749
    %5419 = vmatpush.bf16.msra.mxu0 %v4746
    %5420 = vmatpush.bf16.msra.mxu0 %v4743
    %5421 = vmatpush.bf16.msra.mxu0 %v4740
    %5422 = vmatmul.bf16.gmra.mxu0 %v5413
    %v5423 = vpop.f32.mrf.mxu0
    %v5424 = vadd.f32 0.0, %v5423
    %v5425 = vpop.f32.mrf.mxu0
    %5426 = vdwg.mxu0
    %5427 = vmatpush.bf16.msra.mxu0 %v4762
    %5428 = vmatpush.bf16.msra.mxu0 %v4759
    %5429 = vmatpush.bf16.msra.mxu0 %v4756
    %5430 = vmatpush.bf16.msra.mxu0 %v4753
    %5431 = vmatpush.bf16.msra.mxu0 %v4750
    %5432 = vmatpush.bf16.msra.mxu0 %v4747
    %5433 = vmatpush.bf16.msra.mxu0 %v4744
    %5434 = vmatpush.bf16.msra.mxu0 %v4741
    %5435 = vmatmul.bf16.gmra.mxu0 %v5413
    %v5436 = vpop.f32.mrf.mxu0
    %v5437 = vadd.f32 0.0, %v5436
    %v5438 = vpop.f32.mrf.mxu0
    %5439 = vdwg.mxu0
    %5440 = vmatpush.bf16.msra.mxu0 %v4763
    %5441 = vmatpush.bf16.msra.mxu0 %v4760
    %5442 = vmatpush.bf16.msra.mxu0 %v4757
    %5443 = vmatpush.bf16.msra.mxu0 %v4754
    %5444 = vmatpush.bf16.msra.mxu0 %v4751
    %5445 = vmatpush.bf16.msra.mxu0 %v4748
    %5446 = vmatpush.bf16.msra.mxu0 %v4745
    %5447 = vmatpush.bf16.msra.mxu0 %v4742
    %5448 = vmatmul.bf16.gmra.mxu0 %v5413
    %v5449 = vpop.f32.mrf.mxu0
    %v5450 = vadd.f32 0.0, %v5449
    %v5451 = vpop.f32.mrf.mxu0
    %5452 = vdwg.mxu0
    %v5453 = vadd.f32 %v4567, %v5424
    %v5454 = vxor.u32 %v5453, 2147483648
    %v5455 = vmul.f32 %v5454, 1.442695
    %v5456 = vpow.pop %v5455
    %v5457 = vadd.f32 %v5456, 1.0
    %v5458 = vrcp.pop %v5457
    %v5459 = vmul.f32 %v5457, %v5458
    %v5460 = vsub.f32 1.0, %v5459
    %v5461 = vmul.f32 %v5458, %v5460
    %v5462 = vadd.f32 %v5458, %v5461
    %vm5463 = vweird.f32 %v5457
    %vm5464 = vweird.f32 %v5458
    %vm5465 = vmor %vm5463, %vm5464
    %v5466 = vsel %vm5465, %v5458, %v5462
    %v5467 = vand.u32 2147483647, %v5457
    %vm5468 = vcmp.eq.f32.partialorder %v5467, 8.507059e+37
    %v5469 = vand.u32 %v5457, 2147483648
    %v5470 = vor.u32 1.1754944e-38, %v5469
    %v5471 = vsel %vm5468, %v5470, %v5466
    %v5472 = vmul.f32 1.0, %v5471
    %v5473 = vadd.f32 %v4596, %v5437
    %v5474 = vxor.u32 %v5473, 2147483648
    %v5475 = vmul.f32 %v5474, 1.442695
    %v5476 = vpow.pop %v5475
    %v5477 = vadd.f32 %v5476, 1.0
    %v5478 = vrcp.pop %v5477
    %v5479 = vmul.f32 %v5477, %v5478
    %v5480 = vsub.f32 1.0, %v5479
    %v5481 = vmul.f32 %v5478, %v5480
    %v5482 = vadd.f32 %v5478, %v5481
    %vm5483 = vweird.f32 %v5477
    %vm5484 = vweird.f32 %v5478
    %vm5485 = vmor %vm5483, %vm5484
    %v5486 = vsel %vm5485, %v5478, %v5482
    %v5487 = vand.u32 2147483647, %v5477
    %vm5488 = vcmp.eq.f32.partialorder %v5487, 8.507059e+37
    %v5489 = vand.u32 %v5477, 2147483648
    %v5490 = vor.u32 1.1754944e-38, %v5489
    %v5491 = vsel %vm5488, %v5490, %v5486
    %v5492 = vmul.f32 1.0, %v5491
    %v5493 = vadd.f32 %v5450, %v4868
    %v5494 = vmul.f32 %v5472, %v5493
    %v5495 = vadd.f32 %v4625, %v5494
    %v5496 = vtanh.pop %v5495
    %v5497 = vsub.f32 1.0, %v5492
    %v5498 = vmul.f32 %v5497, %v5496
    %v5499 = vmul.f32 %v5492, %v5411
    %v5500 = vadd.f32 %v5498, %v5499
    %5501 = vst [vmem:[#allocation2 + $0x70] sm:$0xff] %v5500
    %v5502 = vld [vmem:[#allocation2] sm:$0xff]
    %v5503 = vld [vmem:[#allocation2 + $0x10] sm:$0xff]
    %v5504 = vld [vmem:[#allocation2 + $0x20] sm:$0xff]
    %v5505 = vld [vmem:[#allocation2 + $0x30] sm:$0xff]
    %v5506 = vld [vmem:[#allocation2 + $0x40] sm:$0xff]
    %v5507 = vld [vmem:[#allocation2 + $0x50] sm:$0xff]
    %v5508 = vld [vmem:[#allocation2 + $0x60] sm:$0xff]
    %v5509 = vld [vmem:[#allocation2 + $0x70] sm:$0xff]
    %v5510 = vpack.c.bf16 %v5503, %v5502
    %v5511 = vpack.c.bf16 %v5505, %v5504
    %v5512 = vpack.c.bf16 %v5507, %v5506
    %v5513 = vpack.c.bf16 %v5509, %v5508
    %v5514 = vld [vmem:[#allocation11] sm:$0xff]
    %v5515 = vld [vmem:[#allocation11 + $0x8] sm:$0xff]
    %v5516 = vld [vmem:[#allocation11 + $0x10] sm:$0xff]
    %v5517 = vld [vmem:[#allocation11 + $0x18] sm:$0xff]
    %v5518 = vld [vmem:[#allocation11 + $0x20] sm:$0xff]
    %v5519 = vld [vmem:[#allocation11 + $0x28] sm:$0xff]
    %v5520 = vld [vmem:[#allocation11 + $0x30] sm:$0xff]
    %v5521 = vld [vmem:[#allocation11 + $0x38] sm:$0xff]
    %v5522 = vld [vmem:[#allocation11 + $0x40] sm:$0xff]
    %v5523 = vld [vmem:[#allocation11 + $0x48] sm:$0xff]
    %v5524 = vld [vmem:[#allocation11 + $0x50] sm:$0xff]
    %v5525 = vld [vmem:[#allocation11 + $0x58] sm:$0xff]
    %v5526 = vld [vmem:[#allocation11 + $0x60] sm:$0xff]
    %v5527 = vld [vmem:[#allocation11 + $0x68] sm:$0xff]
    %v5528 = vld [vmem:[#allocation11 + $0x70] sm:$0xff]
    %v5529 = vld [vmem:[#allocation11 + $0x78] sm:$0xff]
    %v5530 = vld [vmem:[#allocation11 + $0x80] sm:$0xff]
    %v5531 = vld [vmem:[#allocation11 + $0x88] sm:$0xff]
    %v5532 = vld [vmem:[#allocation11 + $0x90] sm:$0xff]
    %v5533 = vld [vmem:[#allocation11 + $0x98] sm:$0xff]
    %v5534 = vld [vmem:[#allocation11 + $0xa0] sm:$0xff]
    %v5535 = vld [vmem:[#allocation11 + $0xa8] sm:$0xff]
    %v5536 = vld [vmem:[#allocation11 + $0xb0] sm:$0xff]
    %v5537 = vld [vmem:[#allocation11 + $0xb8] sm:$0xff]
    %v5538 = vld [vmem:[#allocation11 + $0xc0] sm:$0xff]
    %v5539 = vld [vmem:[#allocation11 + $0xc8] sm:$0xff]
    %v5540 = vld [vmem:[#allocation11 + $0xd0] sm:$0xff]
    %v5541 = vld [vmem:[#allocation11 + $0xd8] sm:$0xff]
    %v5542 = vld [vmem:[#allocation11 + $0xe0] sm:$0xff]
    %v5543 = vld [vmem:[#allocation11 + $0xe8] sm:$0xff]
    %v5544 = vld [vmem:[#allocation11 + $0xf0] sm:$0xff]
    %v5545 = vld [vmem:[#allocation11 + $0xf8] sm:$0xff]
    %v5546 = vld [vmem:[#allocation11 + $0x100] sm:$0xff]
    %v5547 = vld [vmem:[#allocation11 + $0x108] sm:$0xff]
    %v5548 = vld [vmem:[#allocation11 + $0x110] sm:$0xff]
    %v5549 = vld [vmem:[#allocation11 + $0x118] sm:$0xff]
    %v5550 = vld [vmem:[#allocation11 + $0x120] sm:$0xff]
    %v5551 = vld [vmem:[#allocation11 + $0x128] sm:$0xff]
    %v5552 = vld [vmem:[#allocation11 + $0x130] sm:$0xff]
    %v5553 = vld [vmem:[#allocation11 + $0x138] sm:$0xff]
    %v5554 = vld [vmem:[#allocation11 + $0x140] sm:$0xff]
    %v5555 = vld [vmem:[#allocation11 + $0x148] sm:$0xff]
    %v5556 = vld [vmem:[#allocation11 + $0x150] sm:$0xff]
    %v5557 = vld [vmem:[#allocation11 + $0x158] sm:$0xff]
    %v5558 = vld [vmem:[#allocation11 + $0x160] sm:$0xff]
    %v5559 = vld [vmem:[#allocation11 + $0x168] sm:$0xff]
    %v5560 = vld [vmem:[#allocation11 + $0x170] sm:$0xff]
    %v5561 = vld [vmem:[#allocation11 + $0x178] sm:$0xff]
    %v5562 = vld [vmem:[%s15] sm:$0x3f]
    %v5564 = vperm.slane %v5562, 0
    %v5565 = vperm.slane %v5562, 1
    %v5566 = vperm.slane %v5562, 2
    %v5567 = vperm.slane %v5562, 3
    %v5568 = vperm.slane %v5562, 4
    %v5569 = vperm.slane %v5562, 5
    %v5624 = vunpack.c.l.b16 %v5514
    %v5625 = vunpack.c.h.b16 %v5514
    %v5626 = vunpack.c.l.b16 %v5515
    %v5627 = vunpack.c.h.b16 %v5515
    %v5628 = vunpack.c.l.b16 %v5516
    %v5629 = vunpack.c.h.b16 %v5516
    %v5630 = vunpack.c.l.b16 %v5517
    %v5631 = vunpack.c.h.b16 %v5517
    %v5632 = vunpack.c.l.b16 %v5518
    %v5633 = vunpack.c.h.b16 %v5518
    %v5634 = vunpack.c.l.b16 %v5519
    %v5635 = vunpack.c.h.b16 %v5519
    %v5636 = vunpack.c.l.b16 %v5520
    %v5637 = vunpack.c.h.b16 %v5520
    %v5638 = vunpack.c.l.b16 %v5521
    %v5639 = vunpack.c.h.b16 %v5521
    %v5640 = vunpack.c.l.b16 %v5522
    %v5641 = vunpack.c.h.b16 %v5522
    %v5642 = vunpack.c.l.b16 %v5523
    %v5643 = vunpack.c.h.b16 %v5523
    %v5644 = vunpack.c.l.b16 %v5524
    %v5645 = vunpack.c.h.b16 %v5524
    %v5646 = vunpack.c.l.b16 %v5525
    %v5647 = vunpack.c.h.b16 %v5525
    %v5648 = vunpack.c.l.b16 %v5526
    %v5649 = vunpack.c.h.b16 %v5526
    %v5650 = vunpack.c.l.b16 %v5527
    %v5651 = vunpack.c.h.b16 %v5527
    %v5652 = vunpack.c.l.b16 %v5528
    %v5653 = vunpack.c.h.b16 %v5528
    %v5654 = vunpack.c.l.b16 %v5529
    %v5655 = vunpack.c.h.b16 %v5529
    %v5656 = vunpack.c.l.b16 %v5530
    %v5657 = vunpack.c.h.b16 %v5530
    %v5658 = vunpack.c.l.b16 %v5531
    %v5659 = vunpack.c.h.b16 %v5531
    %v5660 = vunpack.c.l.b16 %v5532
    %v5661 = vunpack.c.h.b16 %v5532
    %v5662 = vunpack.c.l.b16 %v5533
    %v5663 = vunpack.c.h.b16 %v5533
    %v5664 = vunpack.c.l.b16 %v5534
    %v5665 = vunpack.c.h.b16 %v5534
    %v5666 = vunpack.c.l.b16 %v5535
    %v5667 = vunpack.c.h.b16 %v5535
    %v5668 = vunpack.c.l.b16 %v5536
    %v5669 = vunpack.c.h.b16 %v5536
    %v5670 = vunpack.c.l.b16 %v5537
    %v5671 = vunpack.c.h.b16 %v5537
    %v5672 = vunpack.c.l.b16 %v5538
    %v5673 = vunpack.c.h.b16 %v5538
    %v5674 = vunpack.c.l.b16 %v5539
    %v5675 = vunpack.c.h.b16 %v5539
    %v5676 = vunpack.c.l.b16 %v5540
    %v5677 = vunpack.c.h.b16 %v5540
    %v5678 = vunpack.c.l.b16 %v5541
    %v5679 = vunpack.c.h.b16 %v5541
    %v5680 = vunpack.c.l.b16 %v5542
    %v5681 = vunpack.c.h.b16 %v5542
    %v5682 = vunpack.c.l.b16 %v5543
    %v5683 = vunpack.c.h.b16 %v5543
    %v5684 = vunpack.c.l.b16 %v5544
    %v5685 = vunpack.c.h.b16 %v5544
    %v5686 = vunpack.c.l.b16 %v5545
    %v5687 = vunpack.c.h.b16 %v5545
    %v5688 = vunpack.c.l.b16 %v5546
    %v5689 = vunpack.c.h.b16 %v5546
    %v5690 = vunpack.c.l.b16 %v5547
    %v5691 = vunpack.c.h.b16 %v5547
    %v5692 = vunpack.c.l.b16 %v5548
    %v5693 = vunpack.c.h.b16 %v5548
    %v5694 = vunpack.c.l.b16 %v5549
    %v5695 = vunpack.c.h.b16 %v5549
    %v5696 = vunpack.c.l.b16 %v5550
    %v5697 = vunpack.c.h.b16 %v5550
    %v5698 = vunpack.c.l.b16 %v5551
    %v5699 = vunpack.c.h.b16 %v5551
    %v5700 = vunpack.c.l.b16 %v5552
    %v5701 = vunpack.c.h.b16 %v5552
    %v5702 = vunpack.c.l.b16 %v5553
    %v5703 = vunpack.c.h.b16 %v5553
    %v5704 = vunpack.c.l.b16 %v5554
    %v5705 = vunpack.c.h.b16 %v5554
    %v5706 = vunpack.c.l.b16 %v5555
    %v5707 = vunpack.c.h.b16 %v5555
    %v5708 = vunpack.c.l.b16 %v5556
    %v5709 = vunpack.c.h.b16 %v5556
    %v5710 = vunpack.c.l.b16 %v5557
    %v5711 = vunpack.c.h.b16 %v5557
    %v5712 = vunpack.c.l.b16 %v5558
    %v5713 = vunpack.c.h.b16 %v5558
    %v5714 = vunpack.c.l.b16 %v5559
    %v5715 = vunpack.c.h.b16 %v5559
    %v5716 = vunpack.c.l.b16 %v5560
    %v5717 = vunpack.c.h.b16 %v5560
    %v5718 = vunpack.c.l.b16 %v5561
    %v5719 = vunpack.c.h.b16 %v5561
    %v5720 = vpack.c.b16 %v5630, %v5624
    %v5721 = vpack.c.b16 %v5631, %v5625
    %v5722 = vpack.c.b16 %v5632, %v5626
    %v5723 = vpack.c.b16 %v5633, %v5627
    %v5724 = vpack.c.b16 %v5634, %v5628
    %v5725 = vpack.c.b16 %v5635, %v5629
    %v5726 = vpack.c.b16 %v5642, %v5636
    %v5727 = vpack.c.b16 %v5643, %v5637
    %v5728 = vpack.c.b16 %v5644, %v5638
    %v5729 = vpack.c.b16 %v5645, %v5639
    %v5730 = vpack.c.b16 %v5646, %v5640
    %v5731 = vpack.c.b16 %v5647, %v5641
    %v5732 = vpack.c.b16 %v5654, %v5648
    %v5733 = vpack.c.b16 %v5655, %v5649
    %v5734 = vpack.c.b16 %v5656, %v5650
    %v5735 = vpack.c.b16 %v5657, %v5651
    %v5736 = vpack.c.b16 %v5658, %v5652
    %v5737 = vpack.c.b16 %v5659, %v5653
    %v5738 = vpack.c.b16 %v5666, %v5660
    %v5739 = vpack.c.b16 %v5667, %v5661
    %v5740 = vpack.c.b16 %v5668, %v5662
    %v5741 = vpack.c.b16 %v5669, %v5663
    %v5742 = vpack.c.b16 %v5670, %v5664
    %v5743 = vpack.c.b16 %v5671, %v5665
    %v5744 = vpack.c.b16 %v5678, %v5672
    %v5745 = vpack.c.b16 %v5679, %v5673
    %v5746 = vpack.c.b16 %v5680, %v5674
    %v5747 = vpack.c.b16 %v5681, %v5675
    %v5748 = vpack.c.b16 %v5682, %v5676
    %v5749 = vpack.c.b16 %v5683, %v5677
    %v5750 = vpack.c.b16 %v5690, %v5684
    %v5751 = vpack.c.b16 %v5691, %v5685
    %v5752 = vpack.c.b16 %v5692, %v5686
    %v5753 = vpack.c.b16 %v5693, %v5687
    %v5754 = vpack.c.b16 %v5694, %v5688
    %v5755 = vpack.c.b16 %v5695, %v5689
    %v5756 = vpack.c.b16 %v5702, %v5696
    %v5757 = vpack.c.b16 %v5703, %v5697
    %v5758 = vpack.c.b16 %v5704, %v5698
    %v5759 = vpack.c.b16 %v5705, %v5699
    %v5760 = vpack.c.b16 %v5706, %v5700
    %v5761 = vpack.c.b16 %v5707, %v5701
    %v5762 = vpack.c.b16 %v5714, %v5708
    %v5763 = vpack.c.b16 %v5715, %v5709
    %v5764 = vpack.c.b16 %v5716, %v5710
    %v5765 = vpack.c.b16 %v5717, %v5711
    %v5766 = vpack.c.b16 %v5718, %v5712
    %v5767 = vpack.c.b16 %v5719, %v5713
    %5816 = vmatpush.bf16.msra.mxu0 %v5762
    %5817 = vmatpush.bf16.msra.mxu0 %v5756
    %5818 = vmatpush.bf16.msra.mxu0 %v5750
    %5819 = vmatpush.bf16.msra.mxu0 %v5744
    %5820 = vmatpush.bf16.msra.mxu0 %v5738
    %5821 = vmatpush.bf16.msra.mxu0 %v5732
    %5822 = vmatpush.bf16.msra.mxu0 %v5726
    %5823 = vmatpush.bf16.msra.mxu0 %v5720
    %5824 = vmatmul.bf16.gmra.mxu0 %v5510
    %v5825 = vpop.f32.mrf.mxu0
    %v5826 = vadd.f32 %v5564, %v5825
    %v5827 = vpop.f32.mrf.mxu0
    %v5828 = vadd.f32 %v5564, %v5827
    %5829 = vmatmul.bf16.gmra.mxu0 %v5511
    %v5830 = vpop.f32.mrf.mxu0
    %v5831 = vadd.f32 %v5564, %v5830
    %v5832 = vpop.f32.mrf.mxu0
    %v5833 = vadd.f32 %v5564, %v5832
    %5834 = vmatmul.bf16.gmra.mxu0 %v5512
    %v5835 = vpop.f32.mrf.mxu0
    %v5836 = vadd.f32 %v5564, %v5835
    %v5837 = vpop.f32.mrf.mxu0
    %v5838 = vadd.f32 %v5564, %v5837
    %5839 = vmatmul.bf16.gmra.mxu0 %v5513
    %v5840 = vpop.f32.mrf.mxu0
    %v5841 = vadd.f32 %v5564, %v5840
    %v5842 = vpop.f32.mrf.mxu0
    %v5843 = vadd.f32 %v5564, %v5842
    %5844 = vdwg.mxu0
    %5845 = vmatpush.bf16.msra.mxu0 %v5763
    %5846 = vmatpush.bf16.msra.mxu0 %v5757
    %5847 = vmatpush.bf16.msra.mxu0 %v5751
    %5848 = vmatpush.bf16.msra.mxu0 %v5745
    %5849 = vmatpush.bf16.msra.mxu0 %v5739
    %5850 = vmatpush.bf16.msra.mxu0 %v5733
    %5851 = vmatpush.bf16.msra.mxu0 %v5727
    %5852 = vmatpush.bf16.msra.mxu0 %v5721
    %5853 = vmatmul.bf16.gmra.mxu0 %v5510
    %v5854 = vpop.f32.mrf.mxu0
    %v5855 = vadd.f32 %v5565, %v5854
    %v5856 = vpop.f32.mrf.mxu0
    %v5857 = vadd.f32 %v5565, %v5856
    %5858 = vmatmul.bf16.gmra.mxu0 %v5511
    %v5859 = vpop.f32.mrf.mxu0
    %v5860 = vadd.f32 %v5565, %v5859
    %v5861 = vpop.f32.mrf.mxu0
    %v5862 = vadd.f32 %v5565, %v5861
    %5863 = vmatmul.bf16.gmra.mxu0 %v5512
    %v5864 = vpop.f32.mrf.mxu0
    %v5865 = vadd.f32 %v5565, %v5864
    %v5866 = vpop.f32.mrf.mxu0
    %v5867 = vadd.f32 %v5565, %v5866
    %5868 = vmatmul.bf16.gmra.mxu0 %v5513
    %v5869 = vpop.f32.mrf.mxu0
    %v5870 = vadd.f32 %v5565, %v5869
    %v5871 = vpop.f32.mrf.mxu0
    %v5872 = vadd.f32 %v5565, %v5871
    %5873 = vdwg.mxu0
    %5874 = vmatpush.bf16.msra.mxu0 %v5764
    %5875 = vmatpush.bf16.msra.mxu0 %v5758
    %5876 = vmatpush.bf16.msra.mxu0 %v5752
    %5877 = vmatpush.bf16.msra.mxu0 %v5746
    %5878 = vmatpush.bf16.msra.mxu0 %v5740
    %5879 = vmatpush.bf16.msra.mxu0 %v5734
    %5880 = vmatpush.bf16.msra.mxu0 %v5728
    %5881 = vmatpush.bf16.msra.mxu0 %v5722
    %5882 = vmatmul.bf16.gmra.mxu0 %v5510
    %v5883 = vpop.f32.mrf.mxu0
    %v5884 = vadd.f32 %v5566, %v5883
    %v5885 = vpop.f32.mrf.mxu0
    %v5886 = vadd.f32 %v5566, %v5885
    %5887 = vmatmul.bf16.gmra.mxu0 %v5511
    %v5888 = vpop.f32.mrf.mxu0
    %v5889 = vadd.f32 %v5566, %v5888
    %v5890 = vpop.f32.mrf.mxu0
    %v5891 = vadd.f32 %v5566, %v5890
    %5892 = vmatmul.bf16.gmra.mxu0 %v5512
    %v5893 = vpop.f32.mrf.mxu0
    %v5894 = vadd.f32 %v5566, %v5893
    %v5895 = vpop.f32.mrf.mxu0
    %v5896 = vadd.f32 %v5566, %v5895
    %5897 = vmatmul.bf16.gmra.mxu0 %v5513
    %v5898 = vpop.f32.mrf.mxu0
    %v5899 = vadd.f32 %v5566, %v5898
    %v5900 = vpop.f32.mrf.mxu0
    %v5901 = vadd.f32 %v5566, %v5900
    %5902 = vdwg.mxu0
    %5903 = vmatpush.bf16.msra.mxu0 %v5765
    %5904 = vmatpush.bf16.msra.mxu0 %v5759
    %5905 = vmatpush.bf16.msra.mxu0 %v5753
    %5906 = vmatpush.bf16.msra.mxu0 %v5747
    %5907 = vmatpush.bf16.msra.mxu0 %v5741
    %5908 = vmatpush.bf16.msra.mxu0 %v5735
    %5909 = vmatpush.bf16.msra.mxu0 %v5729
    %5910 = vmatpush.bf16.msra.mxu0 %v5723
    %5911 = vmatmul.bf16.gmra.mxu0 %v5510
    %v5912 = vpop.f32.mrf.mxu0
    %v5913 = vadd.f32 %v5567, %v5912
    %v5914 = vpop.f32.mrf.mxu0
    %v5915 = vadd.f32 %v5567, %v5914
    %5916 = vmatmul.bf16.gmra.mxu0 %v5511
    %v5917 = vpop.f32.mrf.mxu0
    %v5918 = vadd.f32 %v5567, %v5917
    %v5919 = vpop.f32.mrf.mxu0
    %v5920 = vadd.f32 %v5567, %v5919
    %5921 = vmatmul.bf16.gmra.mxu0 %v5512
    %v5922 = vpop.f32.mrf.mxu0
    %v5923 = vadd.f32 %v5567, %v5922
    %v5924 = vpop.f32.mrf.mxu0
    %v5925 = vadd.f32 %v5567, %v5924
    %5926 = vmatmul.bf16.gmra.mxu0 %v5513
    %v5927 = vpop.f32.mrf.mxu0
    %v5928 = vadd.f32 %v5567, %v5927
    %v5929 = vpop.f32.mrf.mxu0
    %v5930 = vadd.f32 %v5567, %v5929
    %5931 = vdwg.mxu0
    %5932 = vmatpush.bf16.msra.mxu0 %v5766
    %5933 = vmatpush.bf16.msra.mxu0 %v5760
    %5934 = vmatpush.bf16.msra.mxu0 %v5754
    %5935 = vmatpush.bf16.msra.mxu0 %v5748
    %5936 = vmatpush.bf16.msra.mxu0 %v5742
    %5937 = vmatpush.bf16.msra.mxu0 %v5736
    %5938 = vmatpush.bf16.msra.mxu0 %v5730
    %5939 = vmatpush.bf16.msra.mxu0 %v5724
    %5940 = vmatmul.bf16.gmra.mxu0 %v5510
    %v5941 = vpop.f32.mrf.mxu0
    %v5942 = vadd.f32 %v5568, %v5941
    %v5943 = vpop.f32.mrf.mxu0
    %v5944 = vadd.f32 %v5568, %v5943
    %5945 = vmatmul.bf16.gmra.mxu0 %v5511
    %v5946 = vpop.f32.mrf.mxu0
    %v5947 = vadd.f32 %v5568, %v5946
    %v5948 = vpop.f32.mrf.mxu0
    %v5949 = vadd.f32 %v5568, %v5948
    %5950 = vmatmul.bf16.gmra.mxu0 %v5512
    %v5951 = vpop.f32.mrf.mxu0
    %v5952 = vadd.f32 %v5568, %v5951
    %v5953 = vpop.f32.mrf.mxu0
    %v5954 = vadd.f32 %v5568, %v5953
    %5955 = vmatmul.bf16.gmra.mxu0 %v5513
    %v5956 = vpop.f32.mrf.mxu0
    %v5957 = vadd.f32 %v5568, %v5956
    %v5958 = vpop.f32.mrf.mxu0
    %v5959 = vadd.f32 %v5568, %v5958
    %5960 = vdwg.mxu0
    %5961 = vmatpush.bf16.msra.mxu0 %v5767
    %5962 = vmatpush.bf16.msra.mxu0 %v5761
    %5963 = vmatpush.bf16.msra.mxu0 %v5755
    %5964 = vmatpush.bf16.msra.mxu0 %v5749
    %5965 = vmatpush.bf16.msra.mxu0 %v5743
    %5966 = vmatpush.bf16.msra.mxu0 %v5737
    %5967 = vmatpush.bf16.msra.mxu0 %v5731
    %5968 = vmatpush.bf16.msra.mxu0 %v5725
    %5969 = vmatmul.bf16.gmra.mxu0 %v5510
    %v5970 = vpop.f32.mrf.mxu0
    %v5971 = vadd.f32 %v5569, %v5970
    %v5972 = vpop.f32.mrf.mxu0
    %v5973 = vadd.f32 %v5569, %v5972
    %5974 = vmatmul.bf16.gmra.mxu0 %v5511
    %v5975 = vpop.f32.mrf.mxu0
    %v5976 = vadd.f32 %v5569, %v5975
    %v5977 = vpop.f32.mrf.mxu0
    %v5978 = vadd.f32 %v5569, %v5977
    %5979 = vmatmul.bf16.gmra.mxu0 %v5512
    %v5980 = vpop.f32.mrf.mxu0
    %v5981 = vadd.f32 %v5569, %v5980
    %v5982 = vpop.f32.mrf.mxu0
    %v5983 = vadd.f32 %v5569, %v5982
    %5984 = vmatmul.bf16.gmra.mxu0 %v5513
    %v5985 = vpop.f32.mrf.mxu0
    %v5986 = vadd.f32 %v5569, %v5985
    %v5987 = vpop.f32.mrf.mxu0
    %v5988 = vadd.f32 %v5569, %v5987
    %5989 = vdwg.mxu0
    %v5990 = vld [vmem:[#allocation12] sm:$0xff]
    %v5991 = vld [vmem:[#allocation12 + $0x8] sm:$0xff]
    %v5992 = vld [vmem:[#allocation12 + $0x10] sm:$0xff]
    %v5993 = vld [vmem:[#allocation12 + $0x18] sm:$0xff]
    %v5994 = vld [vmem:[#allocation12 + $0x20] sm:$0xff]
    %v5995 = vld [vmem:[#allocation12 + $0x28] sm:$0xff]
    %v5996 = vld [vmem:[#allocation12 + $0x30] sm:$0xff]
    %v5997 = vld [vmem:[#allocation12 + $0x38] sm:$0xff]
    %v5998 = vld [vmem:[#allocation12 + $0x40] sm:$0xff]
    %v5999 = vld [vmem:[#allocation12 + $0x48] sm:$0xff]
    %v6000 = vld [vmem:[#allocation12 + $0x50] sm:$0xff]
    %v6001 = vld [vmem:[#allocation12 + $0x58] sm:$0xff]
    %v6002 = vld [vmem:[#allocation12 + $0x60] sm:$0xff]
    %v6003 = vld [vmem:[#allocation12 + $0x68] sm:$0xff]
    %v6004 = vld [vmem:[#allocation12 + $0x70] sm:$0xff]
    %v6005 = vld [vmem:[#allocation12 + $0x78] sm:$0xff]
    %v6006 = vld [vmem:[#allocation12 + $0x80] sm:$0xff]
    %v6007 = vld [vmem:[#allocation12 + $0x88] sm:$0xff]
    %v6008 = vld [vmem:[#allocation12 + $0x90] sm:$0xff]
    %v6009 = vld [vmem:[#allocation12 + $0x98] sm:$0xff]
    %v6010 = vld [vmem:[#allocation12 + $0xa0] sm:$0xff]
    %v6011 = vld [vmem:[#allocation12 + $0xa8] sm:$0xff]
    %v6012 = vld [vmem:[#allocation12 + $0xb0] sm:$0xff]
    %v6013 = vld [vmem:[#allocation12 + $0xb8] sm:$0xff]
    %v6014 = vld [vmem:[#allocation12 + $0xc0] sm:$0xff]
    %v6015 = vld [vmem:[#allocation12 + $0xc8] sm:$0xff]
    %v6016 = vld [vmem:[#allocation12 + $0xd0] sm:$0xff]
    %v6017 = vld [vmem:[#allocation12 + $0xd8] sm:$0xff]
    %v6018 = vld [vmem:[#allocation12 + $0xe0] sm:$0xff]
    %v6019 = vld [vmem:[#allocation12 + $0xe8] sm:$0xff]
    %v6020 = vld [vmem:[#allocation12 + $0xf0] sm:$0xff]
    %v6021 = vld [vmem:[#allocation12 + $0xf8] sm:$0xff]
    %v6022 = vld [vmem:[#allocation12 + $0x100] sm:$0xff]
    %v6023 = vld [vmem:[#allocation12 + $0x108] sm:$0xff]
    %v6024 = vld [vmem:[#allocation12 + $0x110] sm:$0xff]
    %v6025 = vld [vmem:[#allocation12 + $0x118] sm:$0xff]
    %v6026 = vld [vmem:[#allocation12 + $0x120] sm:$0xff]
    %v6027 = vld [vmem:[#allocation12 + $0x128] sm:$0xff]
    %v6028 = vld [vmem:[#allocation12 + $0x130] sm:$0xff]
    %v6029 = vld [vmem:[#allocation12 + $0x138] sm:$0xff]
    %v6030 = vld [vmem:[#allocation12 + $0x140] sm:$0xff]
    %v6031 = vld [vmem:[#allocation12 + $0x148] sm:$0xff]
    %v6032 = vld [vmem:[#allocation12 + $0x150] sm:$0xff]
    %v6033 = vld [vmem:[#allocation12 + $0x158] sm:$0xff]
    %v6034 = vld [vmem:[#allocation12 + $0x160] sm:$0xff]
    %v6035 = vld [vmem:[#allocation12 + $0x168] sm:$0xff]
    %v6036 = vld [vmem:[#allocation12 + $0x170] sm:$0xff]
    %v6037 = vld [vmem:[#allocation12 + $0x178] sm:$0xff]
    %v6038 = vld [vmem:[#allocation12 + $0x180] sm:$0xff]
    %v6039 = vld [vmem:[#allocation12 + $0x188] sm:$0xff]
    %v6040 = vld [vmem:[#allocation12 + $0x190] sm:$0xff]
    %v6041 = vld [vmem:[#allocation12 + $0x198] sm:$0xff]
    %v6042 = vld [vmem:[#allocation12 + $0x1a0] sm:$0xff]
    %v6043 = vld [vmem:[#allocation12 + $0x1a8] sm:$0xff]
    %v6044 = vld [vmem:[#allocation12 + $0x1b0] sm:$0xff]
    %v6045 = vld [vmem:[#allocation12 + $0x1b8] sm:$0xff]
    %v6046 = vld [vmem:[#allocation12 + $0x1c0] sm:$0xff]
    %v6047 = vld [vmem:[#allocation12 + $0x1c8] sm:$0xff]
    %v6048 = vld [vmem:[#allocation12 + $0x1d0] sm:$0xff]
    %v6049 = vld [vmem:[#allocation12 + $0x1d8] sm:$0xff]
    %v6050 = vld [vmem:[#allocation12 + $0x1e0] sm:$0xff]
    %v6051 = vld [vmem:[#allocation12 + $0x1e8] sm:$0xff]
    %v6052 = vld [vmem:[#allocation12 + $0x1f0] sm:$0xff]
    %v6053 = vld [vmem:[#allocation12 + $0x1f8] sm:$0xff]
    %v6054 = vld [vmem:[#allocation12 + $0x200] sm:$0xff]
    %v6055 = vld [vmem:[#allocation12 + $0x208] sm:$0xff]
    %v6056 = vld [vmem:[#allocation12 + $0x210] sm:$0xff]
    %v6057 = vld [vmem:[#allocation12 + $0x218] sm:$0xff]
    %v6058 = vld [vmem:[#allocation12 + $0x220] sm:$0xff]
    %v6059 = vld [vmem:[#allocation12 + $0x228] sm:$0xff]
    %v6060 = vld [vmem:[#allocation12 + $0x230] sm:$0xff]
    %v6061 = vld [vmem:[#allocation12 + $0x238] sm:$0xff]
    %v6062 = vld [vmem:[#allocation12 + $0x240] sm:$0xff]
    %v6063 = vld [vmem:[#allocation12 + $0x248] sm:$0xff]
    %v6064 = vld [vmem:[#allocation12 + $0x250] sm:$0xff]
    %v6065 = vld [vmem:[#allocation12 + $0x258] sm:$0xff]
    %v6066 = vld [vmem:[#allocation12 + $0x260] sm:$0xff]
    %v6067 = vld [vmem:[#allocation12 + $0x268] sm:$0xff]
    %v6068 = vld [vmem:[#allocation12 + $0x270] sm:$0xff]
    %v6069 = vld [vmem:[#allocation12 + $0x278] sm:$0xff]
    %v6070 = vld [vmem:[#allocation12 + $0x280] sm:$0xff]
    %v6071 = vld [vmem:[#allocation12 + $0x288] sm:$0xff]
    %v6072 = vld [vmem:[#allocation12 + $0x290] sm:$0xff]
    %v6073 = vld [vmem:[#allocation12 + $0x298] sm:$0xff]
    %v6074 = vld [vmem:[#allocation12 + $0x2a0] sm:$0xff]
    %v6075 = vld [vmem:[#allocation12 + $0x2a8] sm:$0xff]
    %v6076 = vld [vmem:[#allocation12 + $0x2b0] sm:$0xff]
    %v6077 = vld [vmem:[#allocation12 + $0x2b8] sm:$0xff]
    %v6078 = vld [vmem:[#allocation12 + $0x2c0] sm:$0xff]
    %v6079 = vld [vmem:[#allocation12 + $0x2c8] sm:$0xff]
    %v6080 = vld [vmem:[#allocation12 + $0x2d0] sm:$0xff]
    %v6081 = vld [vmem:[#allocation12 + $0x2d8] sm:$0xff]
    %v6082 = vld [vmem:[#allocation12 + $0x2e0] sm:$0xff]
    %v6083 = vld [vmem:[#allocation12 + $0x2e8] sm:$0xff]
    %v6084 = vld [vmem:[#allocation12 + $0x2f0] sm:$0xff]
    %v6085 = vld [vmem:[#allocation12 + $0x2f8] sm:$0xff]
    %v6086 = vld [vmem:[%s16] sm:$0x3]
    %v6183 = vunpack.c.l.b16 %v5990
    %v6184 = vunpack.c.h.b16 %v5990
    %v6185 = vunpack.c.l.b16 %v5991
    %v6186 = vunpack.c.h.b16 %v5991
    %v6187 = vunpack.c.l.b16 %v5992
    %v6188 = vunpack.c.h.b16 %v5992
    %v6189 = vunpack.c.l.b16 %v5993
    %v6190 = vunpack.c.h.b16 %v5993
    %v6191 = vunpack.c.l.b16 %v5994
    %v6192 = vunpack.c.h.b16 %v5994
    %v6193 = vunpack.c.l.b16 %v5995
    %v6194 = vunpack.c.h.b16 %v5995
    %v6195 = vunpack.c.l.b16 %v5996
    %v6196 = vunpack.c.h.b16 %v5996
    %v6197 = vunpack.c.l.b16 %v5997
    %v6198 = vunpack.c.h.b16 %v5997
    %v6199 = vunpack.c.l.b16 %v5998
    %v6200 = vunpack.c.h.b16 %v5998
    %v6201 = vunpack.c.l.b16 %v5999
    %v6202 = vunpack.c.h.b16 %v5999
    %v6203 = vunpack.c.l.b16 %v6000
    %v6204 = vunpack.c.h.b16 %v6000
    %v6205 = vunpack.c.l.b16 %v6001
    %v6206 = vunpack.c.h.b16 %v6001
    %v6207 = vunpack.c.l.b16 %v6002
    %v6208 = vunpack.c.h.b16 %v6002
    %v6209 = vunpack.c.l.b16 %v6003
    %v6210 = vunpack.c.h.b16 %v6003
    %v6211 = vunpack.c.l.b16 %v6004
    %v6212 = vunpack.c.h.b16 %v6004
    %v6213 = vunpack.c.l.b16 %v6005
    %v6214 = vunpack.c.h.b16 %v6005
    %v6215 = vunpack.c.l.b16 %v6006
    %v6216 = vunpack.c.h.b16 %v6006
    %v6217 = vunpack.c.l.b16 %v6007
    %v6218 = vunpack.c.h.b16 %v6007
    %v6219 = vunpack.c.l.b16 %v6008
    %v6220 = vunpack.c.h.b16 %v6008
    %v6221 = vunpack.c.l.b16 %v6009
    %v6222 = vunpack.c.h.b16 %v6009
    %v6223 = vunpack.c.l.b16 %v6010
    %v6224 = vunpack.c.h.b16 %v6010
    %v6225 = vunpack.c.l.b16 %v6011
    %v6226 = vunpack.c.h.b16 %v6011
    %v6227 = vunpack.c.l.b16 %v6012
    %v6228 = vunpack.c.h.b16 %v6012
    %v6229 = vunpack.c.l.b16 %v6013
    %v6230 = vunpack.c.h.b16 %v6013
    %v6231 = vunpack.c.l.b16 %v6014
    %v6232 = vunpack.c.h.b16 %v6014
    %v6233 = vunpack.c.l.b16 %v6015
    %v6234 = vunpack.c.h.b16 %v6015
    %v6235 = vunpack.c.l.b16 %v6016
    %v6236 = vunpack.c.h.b16 %v6016
    %v6237 = vunpack.c.l.b16 %v6017
    %v6238 = vunpack.c.h.b16 %v6017
    %v6239 = vunpack.c.l.b16 %v6018
    %v6240 = vunpack.c.h.b16 %v6018
    %v6241 = vunpack.c.l.b16 %v6019
    %v6242 = vunpack.c.h.b16 %v6019
    %v6243 = vunpack.c.l.b16 %v6020
    %v6244 = vunpack.c.h.b16 %v6020
    %v6245 = vunpack.c.l.b16 %v6021
    %v6246 = vunpack.c.h.b16 %v6021
    %v6247 = vunpack.c.l.b16 %v6022
    %v6248 = vunpack.c.h.b16 %v6022
    %v6249 = vunpack.c.l.b16 %v6023
    %v6250 = vunpack.c.h.b16 %v6023
    %v6251 = vunpack.c.l.b16 %v6024
    %v6252 = vunpack.c.h.b16 %v6024
    %v6253 = vunpack.c.l.b16 %v6025
    %v6254 = vunpack.c.h.b16 %v6025
    %v6255 = vunpack.c.l.b16 %v6026
    %v6256 = vunpack.c.h.b16 %v6026
    %v6257 = vunpack.c.l.b16 %v6027
    %v6258 = vunpack.c.h.b16 %v6027
    %v6259 = vunpack.c.l.b16 %v6028
    %v6260 = vunpack.c.h.b16 %v6028
    %v6261 = vunpack.c.l.b16 %v6029
    %v6262 = vunpack.c.h.b16 %v6029
    %v6263 = vunpack.c.l.b16 %v6030
    %v6264 = vunpack.c.h.b16 %v6030
    %v6265 = vunpack.c.l.b16 %v6031
    %v6266 = vunpack.c.h.b16 %v6031
    %v6267 = vunpack.c.l.b16 %v6032
    %v6268 = vunpack.c.h.b16 %v6032
    %v6269 = vunpack.c.l.b16 %v6033
    %v6270 = vunpack.c.h.b16 %v6033
    %v6271 = vunpack.c.l.b16 %v6034
    %v6272 = vunpack.c.h.b16 %v6034
    %v6273 = vunpack.c.l.b16 %v6035
    %v6274 = vunpack.c.h.b16 %v6035
    %v6275 = vunpack.c.l.b16 %v6036
    %v6276 = vunpack.c.h.b16 %v6036
    %v6277 = vunpack.c.l.b16 %v6037
    %v6278 = vunpack.c.h.b16 %v6037
    %v6279 = vunpack.c.l.b16 %v6038
    %v6280 = vunpack.c.h.b16 %v6038
    %v6281 = vunpack.c.l.b16 %v6039
    %v6282 = vunpack.c.h.b16 %v6039
    %v6283 = vunpack.c.l.b16 %v6040
    %v6284 = vunpack.c.h.b16 %v6040
    %v6285 = vunpack.c.l.b16 %v6041
    %v6286 = vunpack.c.h.b16 %v6041
    %v6287 = vunpack.c.l.b16 %v6042
    %v6288 = vunpack.c.h.b16 %v6042
    %v6289 = vunpack.c.l.b16 %v6043
    %v6290 = vunpack.c.h.b16 %v6043
    %v6291 = vunpack.c.l.b16 %v6044
    %v6292 = vunpack.c.h.b16 %v6044
    %v6293 = vunpack.c.l.b16 %v6045
    %v6294 = vunpack.c.h.b16 %v6045
    %v6295 = vunpack.c.l.b16 %v6046
    %v6296 = vunpack.c.h.b16 %v6046
    %v6297 = vunpack.c.l.b16 %v6047
    %v6298 = vunpack.c.h.b16 %v6047
    %v6299 = vunpack.c.l.b16 %v6048
    %v6300 = vunpack.c.h.b16 %v6048
    %v6301 = vunpack.c.l.b16 %v6049
    %v6302 = vunpack.c.h.b16 %v6049
    %v6303 = vunpack.c.l.b16 %v6050
    %v6304 = vunpack.c.h.b16 %v6050
    %v6305 = vunpack.c.l.b16 %v6051
    %v6306 = vunpack.c.h.b16 %v6051
    %v6307 = vunpack.c.l.b16 %v6052
    %v6308 = vunpack.c.h.b16 %v6052
    %v6309 = vunpack.c.l.b16 %v6053
    %v6310 = vunpack.c.h.b16 %v6053
    %v6311 = vunpack.c.l.b16 %v6054
    %v6312 = vunpack.c.h.b16 %v6054
    %v6313 = vunpack.c.l.b16 %v6055
    %v6314 = vunpack.c.h.b16 %v6055
    %v6315 = vunpack.c.l.b16 %v6056
    %v6316 = vunpack.c.h.b16 %v6056
    %v6317 = vunpack.c.l.b16 %v6057
    %v6318 = vunpack.c.h.b16 %v6057
    %v6319 = vunpack.c.l.b16 %v6058
    %v6320 = vunpack.c.h.b16 %v6058
    %v6321 = vunpack.c.l.b16 %v6059
    %v6322 = vunpack.c.h.b16 %v6059
    %v6323 = vunpack.c.l.b16 %v6060
    %v6324 = vunpack.c.h.b16 %v6060
    %v6325 = vunpack.c.l.b16 %v6061
    %v6326 = vunpack.c.h.b16 %v6061
    %v6327 = vunpack.c.l.b16 %v6062
    %v6328 = vunpack.c.h.b16 %v6062
    %v6329 = vunpack.c.l.b16 %v6063
    %v6330 = vunpack.c.h.b16 %v6063
    %v6331 = vunpack.c.l.b16 %v6064
    %v6332 = vunpack.c.h.b16 %v6064
    %v6333 = vunpack.c.l.b16 %v6065
    %v6334 = vunpack.c.h.b16 %v6065
    %v6335 = vunpack.c.l.b16 %v6066
    %v6336 = vunpack.c.h.b16 %v6066
    %v6337 = vunpack.c.l.b16 %v6067
    %v6338 = vunpack.c.h.b16 %v6067
    %v6339 = vunpack.c.l.b16 %v6068
    %v6340 = vunpack.c.h.b16 %v6068
    %v6341 = vunpack.c.l.b16 %v6069
    %v6342 = vunpack.c.h.b16 %v6069
    %v6343 = vunpack.c.l.b16 %v6070
    %v6344 = vunpack.c.h.b16 %v6070
    %v6345 = vunpack.c.l.b16 %v6071
    %v6346 = vunpack.c.h.b16 %v6071
    %v6347 = vunpack.c.l.b16 %v6072
    %v6348 = vunpack.c.h.b16 %v6072
    %v6349 = vunpack.c.l.b16 %v6073
    %v6350 = vunpack.c.h.b16 %v6073
    %v6351 = vunpack.c.l.b16 %v6074
    %v6352 = vunpack.c.h.b16 %v6074
    %v6353 = vunpack.c.l.b16 %v6075
    %v6354 = vunpack.c.h.b16 %v6075
    %v6355 = vunpack.c.l.b16 %v6076
    %v6356 = vunpack.c.h.b16 %v6076
    %v6357 = vunpack.c.l.b16 %v6077
    %v6358 = vunpack.c.h.b16 %v6077
    %v6359 = vunpack.c.l.b16 %v6078
    %v6360 = vunpack.c.h.b16 %v6078
    %v6361 = vunpack.c.l.b16 %v6079
    %v6362 = vunpack.c.h.b16 %v6079
    %v6363 = vunpack.c.l.b16 %v6080
    %v6364 = vunpack.c.h.b16 %v6080
    %v6365 = vunpack.c.l.b16 %v6081
    %v6366 = vunpack.c.h.b16 %v6081
    %v6367 = vunpack.c.l.b16 %v6082
    %v6368 = vunpack.c.h.b16 %v6082
    %v6369 = vunpack.c.l.b16 %v6083
    %v6370 = vunpack.c.h.b16 %v6083
    %v6371 = vunpack.c.l.b16 %v6084
    %v6372 = vunpack.c.h.b16 %v6084
    %v6373 = vunpack.c.l.b16 %v6085
    %v6374 = vunpack.c.h.b16 %v6085
    %v6375 = vpack.c.b16 %v6189, %v6183
    %v6376 = vpack.c.b16 %v6190, %v6184
    %v6377 = vpack.c.b16 %v6191, %v6185
    %v6378 = vpack.c.b16 %v6192, %v6186
    %v6379 = vpack.c.b16 %v6193, %v6187
    %v6380 = vpack.c.b16 %v6194, %v6188
    %v6381 = vpack.c.b16 %v6201, %v6195
    %v6382 = vpack.c.b16 %v6202, %v6196
    %v6383 = vpack.c.b16 %v6203, %v6197
    %v6384 = vpack.c.b16 %v6204, %v6198
    %v6385 = vpack.c.b16 %v6205, %v6199
    %v6386 = vpack.c.b16 %v6206, %v6200
    %v6387 = vpack.c.b16 %v6213, %v6207
    %v6388 = vpack.c.b16 %v6214, %v6208
    %v6389 = vpack.c.b16 %v6215, %v6209
    %v6390 = vpack.c.b16 %v6216, %v6210
    %v6391 = vpack.c.b16 %v6217, %v6211
    %v6392 = vpack.c.b16 %v6218, %v6212
    %v6393 = vpack.c.b16 %v6225, %v6219
    %v6394 = vpack.c.b16 %v6226, %v6220
    %v6395 = vpack.c.b16 %v6227, %v6221
    %v6396 = vpack.c.b16 %v6228, %v6222
    %v6397 = vpack.c.b16 %v6229, %v6223
    %v6398 = vpack.c.b16 %v6230, %v6224
    %v6399 = vpack.c.b16 %v6237, %v6231
    %v6400 = vpack.c.b16 %v6238, %v6232
    %v6401 = vpack.c.b16 %v6239, %v6233
    %v6402 = vpack.c.b16 %v6240, %v6234
    %v6403 = vpack.c.b16 %v6241, %v6235
    %v6404 = vpack.c.b16 %v6242, %v6236
    %v6405 = vpack.c.b16 %v6249, %v6243
    %v6406 = vpack.c.b16 %v6250, %v6244
    %v6407 = vpack.c.b16 %v6251, %v6245
    %v6408 = vpack.c.b16 %v6252, %v6246
    %v6409 = vpack.c.b16 %v6253, %v6247
    %v6410 = vpack.c.b16 %v6254, %v6248
    %v6411 = vpack.c.b16 %v6261, %v6255
    %v6412 = vpack.c.b16 %v6262, %v6256
    %v6413 = vpack.c.b16 %v6263, %v6257
    %v6414 = vpack.c.b16 %v6264, %v6258
    %v6415 = vpack.c.b16 %v6265, %v6259
    %v6416 = vpack.c.b16 %v6266, %v6260
    %v6417 = vpack.c.b16 %v6273, %v6267
    %v6418 = vpack.c.b16 %v6274, %v6268
    %v6419 = vpack.c.b16 %v6275, %v6269
    %v6420 = vpack.c.b16 %v6276, %v6270
    %v6421 = vpack.c.b16 %v6277, %v6271
    %v6422 = vpack.c.b16 %v6278, %v6272
    %v6423 = vpack.c.b16 %v6285, %v6279
    %v6424 = vpack.c.b16 %v6286, %v6280
    %v6425 = vpack.c.b16 %v6287, %v6281
    %v6426 = vpack.c.b16 %v6288, %v6282
    %v6427 = vpack.c.b16 %v6289, %v6283
    %v6428 = vpack.c.b16 %v6290, %v6284
    %v6429 = vpack.c.b16 %v6297, %v6291
    %v6430 = vpack.c.b16 %v6298, %v6292
    %v6431 = vpack.c.b16 %v6299, %v6293
    %v6432 = vpack.c.b16 %v6300, %v6294
    %v6433 = vpack.c.b16 %v6301, %v6295
    %v6434 = vpack.c.b16 %v6302, %v6296
    %v6435 = vpack.c.b16 %v6309, %v6303
    %v6436 = vpack.c.b16 %v6310, %v6304
    %v6437 = vpack.c.b16 %v6311, %v6305
    %v6438 = vpack.c.b16 %v6312, %v6306
    %v6439 = vpack.c.b16 %v6313, %v6307
    %v6440 = vpack.c.b16 %v6314, %v6308
    %v6441 = vpack.c.b16 %v6321, %v6315
    %v6442 = vpack.c.b16 %v6322, %v6316
    %v6443 = vpack.c.b16 %v6323, %v6317
    %v6444 = vpack.c.b16 %v6324, %v6318
    %v6445 = vpack.c.b16 %v6325, %v6319
    %v6446 = vpack.c.b16 %v6326, %v6320
    %v6447 = vpack.c.b16 %v6333, %v6327
    %v6448 = vpack.c.b16 %v6334, %v6328
    %v6449 = vpack.c.b16 %v6335, %v6329
    %v6450 = vpack.c.b16 %v6336, %v6330
    %v6451 = vpack.c.b16 %v6337, %v6331
    %v6452 = vpack.c.b16 %v6338, %v6332
    %v6453 = vpack.c.b16 %v6345, %v6339
    %v6454 = vpack.c.b16 %v6346, %v6340
    %v6455 = vpack.c.b16 %v6347, %v6341
    %v6456 = vpack.c.b16 %v6348, %v6342
    %v6457 = vpack.c.b16 %v6349, %v6343
    %v6458 = vpack.c.b16 %v6350, %v6344
    %v6459 = vpack.c.b16 %v6357, %v6351
    %v6460 = vpack.c.b16 %v6358, %v6352
    %v6461 = vpack.c.b16 %v6359, %v6353
    %v6462 = vpack.c.b16 %v6360, %v6354
    %v6463 = vpack.c.b16 %v6361, %v6355
    %v6464 = vpack.c.b16 %v6362, %v6356
    %v6465 = vpack.c.b16 %v6369, %v6363
    %v6466 = vpack.c.b16 %v6370, %v6364
    %v6467 = vpack.c.b16 %v6371, %v6365
    %v6468 = vpack.c.b16 %v6372, %v6366
    %v6469 = vpack.c.b16 %v6373, %v6367
    %v6470 = vpack.c.b16 %v6374, %v6368
    %6567 = vmatpush.bf16.msra.mxu0 %v6417
    %6568 = vmatpush.bf16.msra.mxu0 %v6411
    %6569 = vmatpush.bf16.msra.mxu0 %v6405
    %6570 = vmatpush.bf16.msra.mxu0 %v6399
    %6571 = vmatpush.bf16.msra.mxu0 %v6393
    %6572 = vmatpush.bf16.msra.mxu0 %v6387
    %6573 = vmatpush.bf16.msra.mxu0 %v6381
    %6574 = vmatpush.bf16.msra.mxu0 %v6375
    %6575 = vmatmul.bf16.gmra.mxu0 0
    %v6576 = vpop.f32.mrf.mxu0
    %v6577 = vadd.f32 0.0, %v6576
    %v6578 = vpop.f32.mrf.mxu0
    %6579 = vdwg.mxu0
    %6580 = vmatpush.bf16.msra.mxu0 %v6465
    %6581 = vmatpush.bf16.msra.mxu0 %v6459
    %6582 = vmatpush.bf16.msra.mxu0 %v6453
    %6583 = vmatpush.bf16.msra.mxu0 %v6447
    %6584 = vmatpush.bf16.msra.mxu0 %v6441
    %6585 = vmatpush.bf16.msra.mxu0 %v6435
    %6586 = vmatpush.bf16.msra.mxu0 %v6429
    %6587 = vmatpush.bf16.msra.mxu0 %v6423
    %6588 = vmatmul.bf16.gmra.mxu0 0
    %v6589 = vpop.f32.mrf.mxu0
    %v6590 = vadd.f32 %v6577, %v6589
    %v6591 = vpop.f32.mrf.mxu0
    %6592 = vdwg.mxu0
    %6593 = vmatpush.bf16.msra.mxu0 %v6418
    %6594 = vmatpush.bf16.msra.mxu0 %v6412
    %6595 = vmatpush.bf16.msra.mxu0 %v6406
    %6596 = vmatpush.bf16.msra.mxu0 %v6400
    %6597 = vmatpush.bf16.msra.mxu0 %v6394
    %6598 = vmatpush.bf16.msra.mxu0 %v6388
    %6599 = vmatpush.bf16.msra.mxu0 %v6382
    %6600 = vmatpush.bf16.msra.mxu0 %v6376
    %6601 = vmatmul.bf16.gmra.mxu0 0
    %v6602 = vpop.f32.mrf.mxu0
    %v6603 = vadd.f32 0.0, %v6602
    %v6604 = vpop.f32.mrf.mxu0
    %6605 = vdwg.mxu0
    %6606 = vmatpush.bf16.msra.mxu0 %v6466
    %6607 = vmatpush.bf16.msra.mxu0 %v6460
    %6608 = vmatpush.bf16.msra.mxu0 %v6454
    %6609 = vmatpush.bf16.msra.mxu0 %v6448
    %6610 = vmatpush.bf16.msra.mxu0 %v6442
    %6611 = vmatpush.bf16.msra.mxu0 %v6436
    %6612 = vmatpush.bf16.msra.mxu0 %v6430
    %6613 = vmatpush.bf16.msra.mxu0 %v6424
    %6614 = vmatmul.bf16.gmra.mxu0 0
    %v6615 = vpop.f32.mrf.mxu0
    %v6616 = vadd.f32 %v6603, %v6615
    %v6617 = vpop.f32.mrf.mxu0
    %6618 = vdwg.mxu0
    %6619 = vmatpush.bf16.msra.mxu0 %v6419
    %6620 = vmatpush.bf16.msra.mxu0 %v6413
    %6621 = vmatpush.bf16.msra.mxu0 %v6407
    %6622 = vmatpush.bf16.msra.mxu0 %v6401
    %6623 = vmatpush.bf16.msra.mxu0 %v6395
    %6624 = vmatpush.bf16.msra.mxu0 %v6389
    %6625 = vmatpush.bf16.msra.mxu0 %v6383
    %6626 = vmatpush.bf16.msra.mxu0 %v6377
    %6627 = vmatmul.bf16.gmra.mxu0 0
    %v6628 = vpop.f32.mrf.mxu0
    %v6629 = vadd.f32 0.0, %v6628
    %v6630 = vpop.f32.mrf.mxu0
    %6631 = vdwg.mxu0
    %6632 = vmatpush.bf16.msra.mxu0 %v6467
    %6633 = vmatpush.bf16.msra.mxu0 %v6461
    %6634 = vmatpush.bf16.msra.mxu0 %v6455
    %6635 = vmatpush.bf16.msra.mxu0 %v6449
    %6636 = vmatpush.bf16.msra.mxu0 %v6443
    %6637 = vmatpush.bf16.msra.mxu0 %v6437
    %6638 = vmatpush.bf16.msra.mxu0 %v6431
    %6639 = vmatpush.bf16.msra.mxu0 %v6425
    %6640 = vmatmul.bf16.gmra.mxu0 0
    %v6641 = vpop.f32.mrf.mxu0
    %v6642 = vadd.f32 %v6629, %v6641
    %v6643 = vpop.f32.mrf.mxu0
    %6644 = vdwg.mxu0
    %6645 = vmatpush.bf16.msra.mxu0 %v6420
    %6646 = vmatpush.bf16.msra.mxu0 %v6414
    %6647 = vmatpush.bf16.msra.mxu0 %v6408
    %6648 = vmatpush.bf16.msra.mxu0 %v6402
    %6649 = vmatpush.bf16.msra.mxu0 %v6396
    %6650 = vmatpush.bf16.msra.mxu0 %v6390
    %6651 = vmatpush.bf16.msra.mxu0 %v6384
    %6652 = vmatpush.bf16.msra.mxu0 %v6378
    %6653 = vmatmul.bf16.gmra.mxu0 0
    %v6654 = vpop.f32.mrf.mxu0
    %v6655 = vadd.f32 0.0, %v6654
    %v6656 = vpop.f32.mrf.mxu0
    %6657 = vdwg.mxu0
    %6658 = vmatpush.bf16.msra.mxu0 %v6468
    %6659 = vmatpush.bf16.msra.mxu0 %v6462
    %6660 = vmatpush.bf16.msra.mxu0 %v6456
    %6661 = vmatpush.bf16.msra.mxu0 %v6450
    %6662 = vmatpush.bf16.msra.mxu0 %v6444
    %6663 = vmatpush.bf16.msra.mxu0 %v6438
    %6664 = vmatpush.bf16.msra.mxu0 %v6432
    %6665 = vmatpush.bf16.msra.mxu0 %v6426
    %6666 = vmatmul.bf16.gmra.mxu0 0
    %v6667 = vpop.f32.mrf.mxu0
    %v6668 = vadd.f32 %v6655, %v6667
    %v6669 = vpop.f32.mrf.mxu0
    %6670 = vdwg.mxu0
    %6671 = vmatpush.bf16.msra.mxu0 %v6421
    %6672 = vmatpush.bf16.msra.mxu0 %v6415
    %6673 = vmatpush.bf16.msra.mxu0 %v6409
    %6674 = vmatpush.bf16.msra.mxu0 %v6403
    %6675 = vmatpush.bf16.msra.mxu0 %v6397
    %6676 = vmatpush.bf16.msra.mxu0 %v6391
    %6677 = vmatpush.bf16.msra.mxu0 %v6385
    %6678 = vmatpush.bf16.msra.mxu0 %v6379
    %6679 = vmatmul.bf16.gmra.mxu0 0
    %v6680 = vpop.f32.mrf.mxu0
    %v6681 = vadd.f32 0.0, %v6680
    %v6682 = vpop.f32.mrf.mxu0
    %6683 = vdwg.mxu0
    %6684 = vmatpush.bf16.msra.mxu0 %v6469
    %6685 = vmatpush.bf16.msra.mxu0 %v6463
    %6686 = vmatpush.bf16.msra.mxu0 %v6457
    %6687 = vmatpush.bf16.msra.mxu0 %v6451
    %6688 = vmatpush.bf16.msra.mxu0 %v6445
    %6689 = vmatpush.bf16.msra.mxu0 %v6439
    %6690 = vmatpush.bf16.msra.mxu0 %v6433
    %6691 = vmatpush.bf16.msra.mxu0 %v6427
    %6692 = vmatmul.bf16.gmra.mxu0 0
    %v6693 = vpop.f32.mrf.mxu0
    %v6694 = vadd.f32 %v6681, %v6693
    %v6695 = vpop.f32.mrf.mxu0
    %6696 = vdwg.mxu0
    %6697 = vmatpush.bf16.msra.mxu0 %v6422
    %6698 = vmatpush.bf16.msra.mxu0 %v6416
    %6699 = vmatpush.bf16.msra.mxu0 %v6410
    %6700 = vmatpush.bf16.msra.mxu0 %v6404
    %6701 = vmatpush.bf16.msra.mxu0 %v6398
    %6702 = vmatpush.bf16.msra.mxu0 %v6392
    %6703 = vmatpush.bf16.msra.mxu0 %v6386
    %6704 = vmatpush.bf16.msra.mxu0 %v6380
    %6705 = vmatmul.bf16.gmra.mxu0 0
    %v6706 = vpop.f32.mrf.mxu0
    %v6707 = vadd.f32 0.0, %v6706
    %v6708 = vpop.f32.mrf.mxu0
    %6709 = vdwg.mxu0
    %6710 = vmatpush.bf16.msra.mxu0 %v6470
    %6711 = vmatpush.bf16.msra.mxu0 %v6464
    %6712 = vmatpush.bf16.msra.mxu0 %v6458
    %6713 = vmatpush.bf16.msra.mxu0 %v6452
    %6714 = vmatpush.bf16.msra.mxu0 %v6446
    %6715 = vmatpush.bf16.msra.mxu0 %v6440
    %6716 = vmatpush.bf16.msra.mxu0 %v6434
    %6717 = vmatpush.bf16.msra.mxu0 %v6428
    %6718 = vmatmul.bf16.gmra.mxu0 0
    %v6719 = vpop.f32.mrf.mxu0
    %v6720 = vadd.f32 %v6707, %v6719
    %v6721 = vpop.f32.mrf.mxu0
    %6722 = vdwg.mxu0
    %v6723 = vadd.f32 %v5826, %v6590
    %v6724 = vadd.f32 %v5855, %v6616
    %v6725 = vxor.u32 %v6723, 2147483648
    %v6726 = vxor.u32 %v6724, 2147483648
    %v6727 = vmul.f32 %v6725, 1.442695
    %v6728 = vpow.pop %v6727
    %v6729 = vmul.f32 %v6726, 1.442695
    %v6730 = vpow.pop %v6729
    %v6731 = vadd.f32 %v6728, 1.0
    %v6732 = vadd.f32 %v6730, 1.0
    %v6733 = vrcp.pop %v6731
    %v6734 = vmul.f32 %v6731, %v6733
    %v6735 = vsub.f32 1.0, %v6734
    %v6736 = vmul.f32 %v6733, %v6735
    %v6737 = vadd.f32 %v6733, %v6736
    %vm6738 = vweird.f32 %v6731
    %vm6739 = vweird.f32 %v6733
    %vm6740 = vmor %vm6738, %vm6739
    %v6741 = vsel %vm6740, %v6733, %v6737
    %v6742 = vand.u32 2147483647, %v6731
    %vm6743 = vcmp.eq.f32.partialorder %v6742, 8.507059e+37
    %v6744 = vand.u32 %v6731, 2147483648
    %v6745 = vor.u32 1.1754944e-38, %v6744
    %v6746 = vsel %vm6743, %v6745, %v6741
    %v6747 = vmul.f32 1.0, %v6746
    %v6748 = vrcp.pop %v6732
    %v6749 = vmul.f32 %v6732, %v6748
    %v6750 = vsub.f32 1.0, %v6749
    %v6751 = vmul.f32 %v6748, %v6750
    %v6752 = vadd.f32 %v6748, %v6751
    %vm6753 = vweird.f32 %v6732
    %vm6754 = vweird.f32 %v6748
    %vm6755 = vmor %vm6753, %vm6754
    %v6756 = vsel %vm6755, %v6748, %v6752
    %v6757 = vand.u32 2147483647, %v6732
    %vm6758 = vcmp.eq.f32.partialorder %v6757, 8.507059e+37
    %v6759 = vand.u32 %v6732, 2147483648
    %v6760 = vor.u32 1.1754944e-38, %v6759
    %v6761 = vsel %vm6758, %v6760, %v6756
    %v6762 = vmul.f32 1.0, %v6761
    %v6763 = vadd.f32 %v5884, %v6642
    %v6764 = vadd.f32 %v5913, %v6668
    %v6765 = vxor.u32 %v6763, 2147483648
    %v6766 = vxor.u32 %v6764, 2147483648
    %v6767 = vmul.f32 %v6765, 1.442695
    %v6768 = vpow.pop %v6767
    %v6769 = vmul.f32 %v6766, 1.442695
    %v6770 = vpow.pop %v6769
    %v6771 = vadd.f32 %v6768, 1.0
    %v6772 = vadd.f32 %v6770, 1.0
    %v6773 = vrcp.pop %v6771
    %v6774 = vmul.f32 %v6771, %v6773
    %v6775 = vsub.f32 1.0, %v6774
    %v6776 = vmul.f32 %v6773, %v6775
    %v6777 = vadd.f32 %v6773, %v6776
    %vm6778 = vweird.f32 %v6771
    %vm6779 = vweird.f32 %v6773
    %vm6780 = vmor %vm6778, %vm6779
    %v6781 = vsel %vm6780, %v6773, %v6777
    %v6782 = vand.u32 2147483647, %v6771
    %vm6783 = vcmp.eq.f32.partialorder %v6782, 8.507059e+37
    %v6784 = vand.u32 %v6771, 2147483648
    %v6785 = vor.u32 1.1754944e-38, %v6784
    %v6786 = vsel %vm6783, %v6785, %v6781
    %v6787 = vmul.f32 1.0, %v6786
    %v6788 = vrcp.pop %v6772
    %v6789 = vmul.f32 %v6772, %v6788
    %v6790 = vsub.f32 1.0, %v6789
    %v6791 = vmul.f32 %v6788, %v6790
    %v6792 = vadd.f32 %v6788, %v6791
    %vm6793 = vweird.f32 %v6772
    %vm6794 = vweird.f32 %v6788
    %vm6795 = vmor %vm6793, %vm6794
    %v6796 = vsel %vm6795, %v6788, %v6792
    %v6797 = vand.u32 2147483647, %v6772
    %vm6798 = vcmp.eq.f32.partialorder %v6797, 8.507059e+37
    %v6799 = vand.u32 %v6772, 2147483648
    %v6800 = vor.u32 1.1754944e-38, %v6799
    %v6801 = vsel %vm6798, %v6800, %v6796
    %v6802 = vmul.f32 1.0, %v6801
    %v6804 = vperm.slane %v6086, 0
    %v6805 = vperm.slane %v6086, 1
    %v6808 = vadd.f32 %v6694, %v6804
    %v6809 = vadd.f32 %v6720, %v6805
    %v6810 = vmul.f32 %v6747, %v6808
    %v6811 = vmul.f32 %v6762, %v6809
    %v6812 = vadd.f32 %v5942, %v6810
    %v6813 = vadd.f32 %v5971, %v6811
    %v6814 = vtanh.pop %v6812
    %v6815 = vtanh.pop %v6813
    %v6816 = vsub.f32 1.0, %v6787
    %v6817 = vsub.f32 1.0, %v6802
    %v6818 = vmul.f32 %v6816, %v6814
    %v6819 = vmul.f32 %v6817, %v6815
    %v6820 = vmul.f32 %v6787, 0.0
    %v6821 = vmul.f32 %v6802, 0.0
    %v6822 = vadd.f32 %v6818, %v6820
    %v6823 = vadd.f32 %v6819, %v6821
    %6824 = vst [vmem:[#allocation2] sm:$0xff] %v6822
    %6825 = vst [vmem:[#allocation2 + $0x8] sm:$0xff] %v6823
    %v6826 = vpack.c.bf16 %v6822, %v6822
    %v6827 = vpack.c.bf16 %v6823, %v6823
    %6828 = vmatpush.bf16.msra.mxu0 %v6417
    %6829 = vmatpush.bf16.msra.mxu0 %v6411
    %6830 = vmatpush.bf16.msra.mxu0 %v6405
    %6831 = vmatpush.bf16.msra.mxu0 %v6399
    %6832 = vmatpush.bf16.msra.mxu0 %v6393
    %6833 = vmatpush.bf16.msra.mxu0 %v6387
    %6834 = vmatpush.bf16.msra.mxu0 %v6381
    %6835 = vmatpush.bf16.msra.mxu0 %v6375
    %6836 = vmatmul.bf16.gmra.mxu0 %v6826
    %v6837 = vpop.f32.mrf.mxu0
    %v6838 = vadd.f32 0.0, %v6837
    %v6839 = vpop.f32.mrf.mxu0
    %6840 = vdwg.mxu0
    %6841 = vmatpush.bf16.msra.mxu0 %v6465
    %6842 = vmatpush.bf16.msra.mxu0 %v6459
    %6843 = vmatpush.bf16.msra.mxu0 %v6453
    %6844 = vmatpush.bf16.msra.mxu0 %v6447
    %6845 = vmatpush.bf16.msra.mxu0 %v6441
    %6846 = vmatpush.bf16.msra.mxu0 %v6435
    %6847 = vmatpush.bf16.msra.mxu0 %v6429
    %6848 = vmatpush.bf16.msra.mxu0 %v6423
    %6849 = vmatmul.bf16.gmra.mxu0 %v6827
    %v6850 = vpop.f32.mrf.mxu0
    %v6851 = vadd.f32 %v6838, %v6850
    %v6852 = vpop.f32.mrf.mxu0
    %6853 = vdwg.mxu0
    %6854 = vmatpush.bf16.msra.mxu0 %v6418
    %6855 = vmatpush.bf16.msra.mxu0 %v6412
    %6856 = vmatpush.bf16.msra.mxu0 %v6406
    %6857 = vmatpush.bf16.msra.mxu0 %v6400
    %6858 = vmatpush.bf16.msra.mxu0 %v6394
    %6859 = vmatpush.bf16.msra.mxu0 %v6388
    %6860 = vmatpush.bf16.msra.mxu0 %v6382
    %6861 = vmatpush.bf16.msra.mxu0 %v6376
    %6862 = vmatmul.bf16.gmra.mxu0 %v6826
    %v6863 = vpop.f32.mrf.mxu0
    %v6864 = vadd.f32 0.0, %v6863
    %v6865 = vpop.f32.mrf.mxu0
    %6866 = vdwg.mxu0
    %6867 = vmatpush.bf16.msra.mxu0 %v6466
    %6868 = vmatpush.bf16.msra.mxu0 %v6460
    %6869 = vmatpush.bf16.msra.mxu0 %v6454
    %6870 = vmatpush.bf16.msra.mxu0 %v6448
    %6871 = vmatpush.bf16.msra.mxu0 %v6442
    %6872 = vmatpush.bf16.msra.mxu0 %v6436
    %6873 = vmatpush.bf16.msra.mxu0 %v6430
    %6874 = vmatpush.bf16.msra.mxu0 %v6424
    %6875 = vmatmul.bf16.gmra.mxu0 %v6827
    %v6876 = vpop.f32.mrf.mxu0
    %v6877 = vadd.f32 %v6864, %v6876
    %v6878 = vpop.f32.mrf.mxu0
    %6879 = vdwg.mxu0
    %6880 = vmatpush.bf16.msra.mxu0 %v6419
    %6881 = vmatpush.bf16.msra.mxu0 %v6413
    %6882 = vmatpush.bf16.msra.mxu0 %v6407
    %6883 = vmatpush.bf16.msra.mxu0 %v6401
    %6884 = vmatpush.bf16.msra.mxu0 %v6395
    %6885 = vmatpush.bf16.msra.mxu0 %v6389
    %6886 = vmatpush.bf16.msra.mxu0 %v6383
    %6887 = vmatpush.bf16.msra.mxu0 %v6377
    %6888 = vmatmul.bf16.gmra.mxu0 %v6826
    %v6889 = vpop.f32.mrf.mxu0
    %v6890 = vadd.f32 0.0, %v6889
    %v6891 = vpop.f32.mrf.mxu0
    %6892 = vdwg.mxu0
    %6893 = vmatpush.bf16.msra.mxu0 %v6467
    %6894 = vmatpush.bf16.msra.mxu0 %v6461
    %6895 = vmatpush.bf16.msra.mxu0 %v6455
    %6896 = vmatpush.bf16.msra.mxu0 %v6449
    %6897 = vmatpush.bf16.msra.mxu0 %v6443
    %6898 = vmatpush.bf16.msra.mxu0 %v6437
    %6899 = vmatpush.bf16.msra.mxu0 %v6431
    %6900 = vmatpush.bf16.msra.mxu0 %v6425
    %6901 = vmatmul.bf16.gmra.mxu0 %v6827
    %v6902 = vpop.f32.mrf.mxu0
    %v6903 = vadd.f32 %v6890, %v6902
    %v6904 = vpop.f32.mrf.mxu0
    %6905 = vdwg.mxu0
    %6906 = vmatpush.bf16.msra.mxu0 %v6420
    %6907 = vmatpush.bf16.msra.mxu0 %v6414
    %6908 = vmatpush.bf16.msra.mxu0 %v6408
    %6909 = vmatpush.bf16.msra.mxu0 %v6402
    %6910 = vmatpush.bf16.msra.mxu0 %v6396
    %6911 = vmatpush.bf16.msra.mxu0 %v6390
    %6912 = vmatpush.bf16.msra.mxu0 %v6384
    %6913 = vmatpush.bf16.msra.mxu0 %v6378
    %6914 = vmatmul.bf16.gmra.mxu0 %v6826
    %v6915 = vpop.f32.mrf.mxu0
    %v6916 = vadd.f32 0.0, %v6915
    %v6917 = vpop.f32.mrf.mxu0
    %6918 = vdwg.mxu0
    %6919 = vmatpush.bf16.msra.mxu0 %v6468
    %6920 = vmatpush.bf16.msra.mxu0 %v6462
    %6921 = vmatpush.bf16.msra.mxu0 %v6456
    %6922 = vmatpush.bf16.msra.mxu0 %v6450
    %6923 = vmatpush.bf16.msra.mxu0 %v6444
    %6924 = vmatpush.bf16.msra.mxu0 %v6438
    %6925 = vmatpush.bf16.msra.mxu0 %v6432
    %6926 = vmatpush.bf16.msra.mxu0 %v6426
    %6927 = vmatmul.bf16.gmra.mxu0 %v6827
    %v6928 = vpop.f32.mrf.mxu0
    %v6929 = vadd.f32 %v6916, %v6928
    %v6930 = vpop.f32.mrf.mxu0
    %6931 = vdwg.mxu0
    %6932 = vmatpush.bf16.msra.mxu0 %v6421
    %6933 = vmatpush.bf16.msra.mxu0 %v6415
    %6934 = vmatpush.bf16.msra.mxu0 %v6409
    %6935 = vmatpush.bf16.msra.mxu0 %v6403
    %6936 = vmatpush.bf16.msra.mxu0 %v6397
    %6937 = vmatpush.bf16.msra.mxu0 %v6391
    %6938 = vmatpush.bf16.msra.mxu0 %v6385
    %6939 = vmatpush.bf16.msra.mxu0 %v6379
    %6940 = vmatmul.bf16.gmra.mxu0 %v6826
    %v6941 = vpop.f32.mrf.mxu0
    %v6942 = vadd.f32 0.0, %v6941
    %v6943 = vpop.f32.mrf.mxu0
    %6944 = vdwg.mxu0
    %6945 = vmatpush.bf16.msra.mxu0 %v6469
    %6946 = vmatpush.bf16.msra.mxu0 %v6463
    %6947 = vmatpush.bf16.msra.mxu0 %v6457
    %6948 = vmatpush.bf16.msra.mxu0 %v6451
    %6949 = vmatpush.bf16.msra.mxu0 %v6445
    %6950 = vmatpush.bf16.msra.mxu0 %v6439
    %6951 = vmatpush.bf16.msra.mxu0 %v6433
    %6952 = vmatpush.bf16.msra.mxu0 %v6427
    %6953 = vmatmul.bf16.gmra.mxu0 %v6827
    %v6954 = vpop.f32.mrf.mxu0
    %v6955 = vadd.f32 %v6942, %v6954
    %v6956 = vpop.f32.mrf.mxu0
    %6957 = vdwg.mxu0
    %6958 = vmatpush.bf16.msra.mxu0 %v6422
    %6959 = vmatpush.bf16.msra.mxu0 %v6416
    %6960 = vmatpush.bf16.msra.mxu0 %v6410
    %6961 = vmatpush.bf16.msra.mxu0 %v6404
    %6962 = vmatpush.bf16.msra.mxu0 %v6398
    %6963 = vmatpush.bf16.msra.mxu0 %v6392
    %6964 = vmatpush.bf16.msra.mxu0 %v6386
    %6965 = vmatpush.bf16.msra.mxu0 %v6380
    %6966 = vmatmul.bf16.gmra.mxu0 %v6826
    %v6967 = vpop.f32.mrf.mxu0
    %v6968 = vadd.f32 0.0, %v6967
    %v6969 = vpop.f32.mrf.mxu0
    %6970 = vdwg.mxu0
    %6971 = vmatpush.bf16.msra.mxu0 %v6470
    %6972 = vmatpush.bf16.msra.mxu0 %v6464
    %6973 = vmatpush.bf16.msra.mxu0 %v6458
    %6974 = vmatpush.bf16.msra.mxu0 %v6452
    %6975 = vmatpush.bf16.msra.mxu0 %v6446
    %6976 = vmatpush.bf16.msra.mxu0 %v6440
    %6977 = vmatpush.bf16.msra.mxu0 %v6434
    %6978 = vmatpush.bf16.msra.mxu0 %v6428
    %6979 = vmatmul.bf16.gmra.mxu0 %v6827
    %v6980 = vpop.f32.mrf.mxu0
    %v6981 = vadd.f32 %v6968, %v6980
    %v6982 = vpop.f32.mrf.mxu0
    %6983 = vdwg.mxu0
    %v6984 = vadd.f32 %v5828, %v6851
    %v6985 = vadd.f32 %v5857, %v6877
    %v6986 = vxor.u32 %v6984, 2147483648
    %v6987 = vxor.u32 %v6985, 2147483648
    %v6988 = vmul.f32 %v6986, 1.442695
    %v6989 = vpow.pop %v6988
    %v6990 = vmul.f32 %v6987, 1.442695
    %v6991 = vpow.pop %v6990
    %v6992 = vadd.f32 %v6989, 1.0
    %v6993 = vadd.f32 %v6991, 1.0
    %v6994 = vrcp.pop %v6992
    %v6995 = vmul.f32 %v6992, %v6994
    %v6996 = vsub.f32 1.0, %v6995
    %v6997 = vmul.f32 %v6994, %v6996
    %v6998 = vadd.f32 %v6994, %v6997
    %vm6999 = vweird.f32 %v6992
    %vm7000 = vweird.f32 %v6994
    %vm7001 = vmor %vm6999, %vm7000
    %v7002 = vsel %vm7001, %v6994, %v6998
    %v7003 = vand.u32 2147483647, %v6992
    %vm7004 = vcmp.eq.f32.partialorder %v7003, 8.507059e+37
    %v7005 = vand.u32 %v6992, 2147483648
    %v7006 = vor.u32 1.1754944e-38, %v7005
    %v7007 = vsel %vm7004, %v7006, %v7002
    %v7008 = vmul.f32 1.0, %v7007
    %v7009 = vrcp.pop %v6993
    %v7010 = vmul.f32 %v6993, %v7009
    %v7011 = vsub.f32 1.0, %v7010
    %v7012 = vmul.f32 %v7009, %v7011
    %v7013 = vadd.f32 %v7009, %v7012
    %vm7014 = vweird.f32 %v6993
    %vm7015 = vweird.f32 %v7009
    %vm7016 = vmor %vm7014, %vm7015
    %v7017 = vsel %vm7016, %v7009, %v7013
    %v7018 = vand.u32 2147483647, %v6993
    %vm7019 = vcmp.eq.f32.partialorder %v7018, 8.507059e+37
    %v7020 = vand.u32 %v6993, 2147483648
    %v7021 = vor.u32 1.1754944e-38, %v7020
    %v7022 = vsel %vm7019, %v7021, %v7017
    %v7023 = vmul.f32 1.0, %v7022
    %v7024 = vadd.f32 %v5886, %v6903
    %v7025 = vadd.f32 %v5915, %v6929
    %v7026 = vxor.u32 %v7024, 2147483648
    %v7027 = vxor.u32 %v7025, 2147483648
    %v7028 = vmul.f32 %v7026, 1.442695
    %v7029 = vpow.pop %v7028
    %v7030 = vmul.f32 %v7027, 1.442695
    %v7031 = vpow.pop %v7030
    %v7032 = vadd.f32 %v7029, 1.0
    %v7033 = vadd.f32 %v7031, 1.0
    %v7034 = vrcp.pop %v7032
    %v7035 = vmul.f32 %v7032, %v7034
    %v7036 = vsub.f32 1.0, %v7035
    %v7037 = vmul.f32 %v7034, %v7036
    %v7038 = vadd.f32 %v7034, %v7037
    %vm7039 = vweird.f32 %v7032
    %vm7040 = vweird.f32 %v7034
    %vm7041 = vmor %vm7039, %vm7040
    %v7042 = vsel %vm7041, %v7034, %v7038
    %v7043 = vand.u32 2147483647, %v7032
    %vm7044 = vcmp.eq.f32.partialorder %v7043, 8.507059e+37
    %v7045 = vand.u32 %v7032, 2147483648
    %v7046 = vor.u32 1.1754944e-38, %v7045
    %v7047 = vsel %vm7044, %v7046, %v7042
    %v7048 = vmul.f32 1.0, %v7047
    %v7049 = vrcp.pop %v7033
    %v7050 = vmul.f32 %v7033, %v7049
    %v7051 = vsub.f32 1.0, %v7050
    %v7052 = vmul.f32 %v7049, %v7051
    %v7053 = vadd.f32 %v7049, %v7052
    %vm7054 = vweird.f32 %v7033
    %vm7055 = vweird.f32 %v7049
    %vm7056 = vmor %vm7054, %vm7055
    %v7057 = vsel %vm7056, %v7049, %v7053
    %v7058 = vand.u32 2147483647, %v7033
    %vm7059 = vcmp.eq.f32.partialorder %v7058, 8.507059e+37
    %v7060 = vand.u32 %v7033, 2147483648
    %v7061 = vor.u32 1.1754944e-38, %v7060
    %v7062 = vsel %vm7059, %v7061, %v7057
    %v7063 = vmul.f32 1.0, %v7062
    %v7064 = vadd.f32 %v6955, %v6804
    %v7065 = vadd.f32 %v6981, %v6805
    %v7066 = vmul.f32 %v7008, %v7064
    %v7067 = vmul.f32 %v7023, %v7065
    %v7068 = vadd.f32 %v5944, %v7066
    %v7069 = vadd.f32 %v5973, %v7067
    %v7070 = vtanh.pop %v7068
    %v7071 = vtanh.pop %v7069
    %v7072 = vsub.f32 1.0, %v7048
    %v7073 = vsub.f32 1.0, %v7063
    %v7074 = vmul.f32 %v7072, %v7070
    %v7075 = vmul.f32 %v7073, %v7071
    %v7076 = vmul.f32 %v7048, %v6822
    %v7077 = vmul.f32 %v7063, %v6823
    %v7078 = vadd.f32 %v7074, %v7076
    %v7079 = vadd.f32 %v7075, %v7077
    %7080 = vst [vmem:[#allocation2 + $0x10] sm:$0xff] %v7078
    %7081 = vst [vmem:[#allocation2 + $0x18] sm:$0xff] %v7079
    %v7082 = vpack.c.bf16 %v7078, %v7078
    %v7083 = vpack.c.bf16 %v7079, %v7079
    %7084 = vmatpush.bf16.msra.mxu0 %v6417
    %7085 = vmatpush.bf16.msra.mxu0 %v6411
    %7086 = vmatpush.bf16.msra.mxu0 %v6405
    %7087 = vmatpush.bf16.msra.mxu0 %v6399
    %7088 = vmatpush.bf16.msra.mxu0 %v6393
    %7089 = vmatpush.bf16.msra.mxu0 %v6387
    %7090 = vmatpush.bf16.msra.mxu0 %v6381
    %7091 = vmatpush.bf16.msra.mxu0 %v6375
    %7092 = vmatmul.bf16.gmra.mxu0 %v7082
    %v7093 = vpop.f32.mrf.mxu0
    %v7094 = vadd.f32 0.0, %v7093
    %v7095 = vpop.f32.mrf.mxu0
    %7096 = vdwg.mxu0
    %7097 = vmatpush.bf16.msra.mxu0 %v6465
    %7098 = vmatpush.bf16.msra.mxu0 %v6459
    %7099 = vmatpush.bf16.msra.mxu0 %v6453
    %7100 = vmatpush.bf16.msra.mxu0 %v6447
    %7101 = vmatpush.bf16.msra.mxu0 %v6441
    %7102 = vmatpush.bf16.msra.mxu0 %v6435
    %7103 = vmatpush.bf16.msra.mxu0 %v6429
    %7104 = vmatpush.bf16.msra.mxu0 %v6423
    %7105 = vmatmul.bf16.gmra.mxu0 %v7083
    %v7106 = vpop.f32.mrf.mxu0
    %v7107 = vadd.f32 %v7094, %v7106
    %v7108 = vpop.f32.mrf.mxu0
    %7109 = vdwg.mxu0
    %7110 = vmatpush.bf16.msra.mxu0 %v6418
    %7111 = vmatpush.bf16.msra.mxu0 %v6412
    %7112 = vmatpush.bf16.msra.mxu0 %v6406
    %7113 = vmatpush.bf16.msra.mxu0 %v6400
    %7114 = vmatpush.bf16.msra.mxu0 %v6394
    %7115 = vmatpush.bf16.msra.mxu0 %v6388
    %7116 = vmatpush.bf16.msra.mxu0 %v6382
    %7117 = vmatpush.bf16.msra.mxu0 %v6376
    %7118 = vmatmul.bf16.gmra.mxu0 %v7082
    %v7119 = vpop.f32.mrf.mxu0
    %v7120 = vadd.f32 0.0, %v7119
    %v7121 = vpop.f32.mrf.mxu0
    %7122 = vdwg.mxu0
    %7123 = vmatpush.bf16.msra.mxu0 %v6466
    %7124 = vmatpush.bf16.msra.mxu0 %v6460
    %7125 = vmatpush.bf16.msra.mxu0 %v6454
    %7126 = vmatpush.bf16.msra.mxu0 %v6448
    %7127 = vmatpush.bf16.msra.mxu0 %v6442
    %7128 = vmatpush.bf16.msra.mxu0 %v6436
    %7129 = vmatpush.bf16.msra.mxu0 %v6430
    %7130 = vmatpush.bf16.msra.mxu0 %v6424
    %7131 = vmatmul.bf16.gmra.mxu0 %v7083
    %v7132 = vpop.f32.mrf.mxu0
    %v7133 = vadd.f32 %v7120, %v7132
    %v7134 = vpop.f32.mrf.mxu0
    %7135 = vdwg.mxu0
    %7136 = vmatpush.bf16.msra.mxu0 %v6419
    %7137 = vmatpush.bf16.msra.mxu0 %v6413
    %7138 = vmatpush.bf16.msra.mxu0 %v6407
    %7139 = vmatpush.bf16.msra.mxu0 %v6401
    %7140 = vmatpush.bf16.msra.mxu0 %v6395
    %7141 = vmatpush.bf16.msra.mxu0 %v6389
    %7142 = vmatpush.bf16.msra.mxu0 %v6383
    %7143 = vmatpush.bf16.msra.mxu0 %v6377
    %7144 = vmatmul.bf16.gmra.mxu0 %v7082
    %v7145 = vpop.f32.mrf.mxu0
    %v7146 = vadd.f32 0.0, %v7145
    %v7147 = vpop.f32.mrf.mxu0
    %7148 = vdwg.mxu0
    %7149 = vmatpush.bf16.msra.mxu0 %v6467
    %7150 = vmatpush.bf16.msra.mxu0 %v6461
    %7151 = vmatpush.bf16.msra.mxu0 %v6455
    %7152 = vmatpush.bf16.msra.mxu0 %v6449
    %7153 = vmatpush.bf16.msra.mxu0 %v6443
    %7154 = vmatpush.bf16.msra.mxu0 %v6437
    %7155 = vmatpush.bf16.msra.mxu0 %v6431
    %7156 = vmatpush.bf16.msra.mxu0 %v6425
    %7157 = vmatmul.bf16.gmra.mxu0 %v7083
    %v7158 = vpop.f32.mrf.mxu0
    %v7159 = vadd.f32 %v7146, %v7158
    %v7160 = vpop.f32.mrf.mxu0
    %7161 = vdwg.mxu0
    %7162 = vmatpush.bf16.msra.mxu0 %v6420
    %7163 = vmatpush.bf16.msra.mxu0 %v6414
    %7164 = vmatpush.bf16.msra.mxu0 %v6408
    %7165 = vmatpush.bf16.msra.mxu0 %v6402
    %7166 = vmatpush.bf16.msra.mxu0 %v6396
    %7167 = vmatpush.bf16.msra.mxu0 %v6390
    %7168 = vmatpush.bf16.msra.mxu0 %v6384
    %7169 = vmatpush.bf16.msra.mxu0 %v6378
    %7170 = vmatmul.bf16.gmra.mxu0 %v7082
    %v7171 = vpop.f32.mrf.mxu0
    %v7172 = vadd.f32 0.0, %v7171
    %v7173 = vpop.f32.mrf.mxu0
    %7174 = vdwg.mxu0
    %7175 = vmatpush.bf16.msra.mxu0 %v6468
    %7176 = vmatpush.bf16.msra.mxu0 %v6462
    %7177 = vmatpush.bf16.msra.mxu0 %v6456
    %7178 = vmatpush.bf16.msra.mxu0 %v6450
    %7179 = vmatpush.bf16.msra.mxu0 %v6444
    %7180 = vmatpush.bf16.msra.mxu0 %v6438
    %7181 = vmatpush.bf16.msra.mxu0 %v6432
    %7182 = vmatpush.bf16.msra.mxu0 %v6426
    %7183 = vmatmul.bf16.gmra.mxu0 %v7083
    %v7184 = vpop.f32.mrf.mxu0
    %v7185 = vadd.f32 %v7172, %v7184
    %v7186 = vpop.f32.mrf.mxu0
    %7187 = vdwg.mxu0
    %7188 = vmatpush.bf16.msra.mxu0 %v6421
    %7189 = vmatpush.bf16.msra.mxu0 %v6415
    %7190 = vmatpush.bf16.msra.mxu0 %v6409
    %7191 = vmatpush.bf16.msra.mxu0 %v6403
    %7192 = vmatpush.bf16.msra.mxu0 %v6397
    %7193 = vmatpush.bf16.msra.mxu0 %v6391
    %7194 = vmatpush.bf16.msra.mxu0 %v6385
    %7195 = vmatpush.bf16.msra.mxu0 %v6379
    %7196 = vmatmul.bf16.gmra.mxu0 %v7082
    %v7197 = vpop.f32.mrf.mxu0
    %v7198 = vadd.f32 0.0, %v7197
    %v7199 = vpop.f32.mrf.mxu0
    %7200 = vdwg.mxu0
    %7201 = vmatpush.bf16.msra.mxu0 %v6469
    %7202 = vmatpush.bf16.msra.mxu0 %v6463
    %7203 = vmatpush.bf16.msra.mxu0 %v6457
    %7204 = vmatpush.bf16.msra.mxu0 %v6451
    %7205 = vmatpush.bf16.msra.mxu0 %v6445
    %7206 = vmatpush.bf16.msra.mxu0 %v6439
    %7207 = vmatpush.bf16.msra.mxu0 %v6433
    %7208 = vmatpush.bf16.msra.mxu0 %v6427
    %7209 = vmatmul.bf16.gmra.mxu0 %v7083
    %v7210 = vpop.f32.mrf.mxu0
    %v7211 = vadd.f32 %v7198, %v7210
    %v7212 = vpop.f32.mrf.mxu0
    %7213 = vdwg.mxu0
    %7214 = vmatpush.bf16.msra.mxu0 %v6422
    %7215 = vmatpush.bf16.msra.mxu0 %v6416
    %7216 = vmatpush.bf16.msra.mxu0 %v6410
    %7217 = vmatpush.bf16.msra.mxu0 %v6404
    %7218 = vmatpush.bf16.msra.mxu0 %v6398
    %7219 = vmatpush.bf16.msra.mxu0 %v6392
    %7220 = vmatpush.bf16.msra.mxu0 %v6386
    %7221 = vmatpush.bf16.msra.mxu0 %v6380
    %7222 = vmatmul.bf16.gmra.mxu0 %v7082
    %v7223 = vpop.f32.mrf.mxu0
    %v7224 = vadd.f32 0.0, %v7223
    %v7225 = vpop.f32.mrf.mxu0
    %7226 = vdwg.mxu0
    %7227 = vmatpush.bf16.msra.mxu0 %v6470
    %7228 = vmatpush.bf16.msra.mxu0 %v6464
    %7229 = vmatpush.bf16.msra.mxu0 %v6458
    %7230 = vmatpush.bf16.msra.mxu0 %v6452
    %7231 = vmatpush.bf16.msra.mxu0 %v6446
    %7232 = vmatpush.bf16.msra.mxu0 %v6440
    %7233 = vmatpush.bf16.msra.mxu0 %v6434
    %7234 = vmatpush.bf16.msra.mxu0 %v6428
    %7235 = vmatmul.bf16.gmra.mxu0 %v7083
    %v7236 = vpop.f32.mrf.mxu0
    %v7237 = vadd.f32 %v7224, %v7236
    %v7238 = vpop.f32.mrf.mxu0
    %7239 = vdwg.mxu0
    %v7240 = vadd.f32 %v5831, %v7107
    %v7241 = vadd.f32 %v5860, %v7133
    %v7242 = vxor.u32 %v7240, 2147483648
    %v7243 = vxor.u32 %v7241, 2147483648
    %v7244 = vmul.f32 %v7242, 1.442695
    %v7245 = vpow.pop %v7244
    %v7246 = vmul.f32 %v7243, 1.442695
    %v7247 = vpow.pop %v7246
    %v7248 = vadd.f32 %v7245, 1.0
    %v7249 = vadd.f32 %v7247, 1.0
    %v7250 = vrcp.pop %v7248
    %v7251 = vmul.f32 %v7248, %v7250
    %v7252 = vsub.f32 1.0, %v7251
    %v7253 = vmul.f32 %v7250, %v7252
    %v7254 = vadd.f32 %v7250, %v7253
    %vm7255 = vweird.f32 %v7248
    %vm7256 = vweird.f32 %v7250
    %vm7257 = vmor %vm7255, %vm7256
    %v7258 = vsel %vm7257, %v7250, %v7254
    %v7259 = vand.u32 2147483647, %v7248
    %vm7260 = vcmp.eq.f32.partialorder %v7259, 8.507059e+37
    %v7261 = vand.u32 %v7248, 2147483648
    %v7262 = vor.u32 1.1754944e-38, %v7261
    %v7263 = vsel %vm7260, %v7262, %v7258
    %v7264 = vmul.f32 1.0, %v7263
    %v7265 = vrcp.pop %v7249
    %v7266 = vmul.f32 %v7249, %v7265
    %v7267 = vsub.f32 1.0, %v7266
    %v7268 = vmul.f32 %v7265, %v7267
    %v7269 = vadd.f32 %v7265, %v7268
    %vm7270 = vweird.f32 %v7249
    %vm7271 = vweird.f32 %v7265
    %vm7272 = vmor %vm7270, %vm7271
    %v7273 = vsel %vm7272, %v7265, %v7269
    %v7274 = vand.u32 2147483647, %v7249
    %vm7275 = vcmp.eq.f32.partialorder %v7274, 8.507059e+37
    %v7276 = vand.u32 %v7249, 2147483648
    %v7277 = vor.u32 1.1754944e-38, %v7276
    %v7278 = vsel %vm7275, %v7277, %v7273
    %v7279 = vmul.f32 1.0, %v7278
    %v7280 = vadd.f32 %v5889, %v7159
    %v7281 = vadd.f32 %v5918, %v7185
    %v7282 = vxor.u32 %v7280, 2147483648
    %v7283 = vxor.u32 %v7281, 2147483648
    %v7284 = vmul.f32 %v7282, 1.442695
    %v7285 = vpow.pop %v7284
    %v7286 = vmul.f32 %v7283, 1.442695
    %v7287 = vpow.pop %v7286
    %v7288 = vadd.f32 %v7285, 1.0
    %v7289 = vadd.f32 %v7287, 1.0
    %v7290 = vrcp.pop %v7288
    %v7291 = vmul.f32 %v7288, %v7290
    %v7292 = vsub.f32 1.0, %v7291
    %v7293 = vmul.f32 %v7290, %v7292
    %v7294 = vadd.f32 %v7290, %v7293
    %vm7295 = vweird.f32 %v7288
    %vm7296 = vweird.f32 %v7290
    %vm7297 = vmor %vm7295, %vm7296
    %v7298 = vsel %vm7297, %v7290, %v7294
    %v7299 = vand.u32 2147483647, %v7288
    %vm7300 = vcmp.eq.f32.partialorder %v7299, 8.507059e+37
    %v7301 = vand.u32 %v7288, 2147483648
    %v7302 = vor.u32 1.1754944e-38, %v7301
    %v7303 = vsel %vm7300, %v7302, %v7298
    %v7304 = vmul.f32 1.0, %v7303
    %v7305 = vrcp.pop %v7289
    %v7306 = vmul.f32 %v7289, %v7305
    %v7307 = vsub.f32 1.0, %v7306
    %v7308 = vmul.f32 %v7305, %v7307
    %v7309 = vadd.f32 %v7305, %v7308
    %vm7310 = vweird.f32 %v7289
    %vm7311 = vweird.f32 %v7305
    %vm7312 = vmor %vm7310, %vm7311
    %v7313 = vsel %vm7312, %v7305, %v7309
    %v7314 = vand.u32 2147483647, %v7289
    %vm7315 = vcmp.eq.f32.partialorder %v7314, 8.507059e+37
    %v7316 = vand.u32 %v7289, 2147483648
    %v7317 = vor.u32 1.1754944e-38, %v7316
    %v7318 = vsel %vm7315, %v7317, %v7313
    %v7319 = vmul.f32 1.0, %v7318
    %v7320 = vadd.f32 %v7211, %v6804
    %v7321 = vadd.f32 %v7237, %v6805
    %v7322 = vmul.f32 %v7264, %v7320
    %v7323 = vmul.f32 %v7279, %v7321
    %v7324 = vadd.f32 %v5947, %v7322
    %v7325 = vadd.f32 %v5976, %v7323
    %v7326 = vtanh.pop %v7324
    %v7327 = vtanh.pop %v7325
    %v7328 = vsub.f32 1.0, %v7304
    %v7329 = vsub.f32 1.0, %v7319
    %v7330 = vmul.f32 %v7328, %v7326
    %v7331 = vmul.f32 %v7329, %v7327
    %v7332 = vmul.f32 %v7304, %v7078
    %v7333 = vmul.f32 %v7319, %v7079
    %v7334 = vadd.f32 %v7330, %v7332
    %v7335 = vadd.f32 %v7331, %v7333
    %7336 = vst [vmem:[#allocation2 + $0x20] sm:$0xff] %v7334
    %7337 = vst [vmem:[#allocation2 + $0x28] sm:$0xff] %v7335
    %v7338 = vpack.c.bf16 %v7334, %v7334
    %v7339 = vpack.c.bf16 %v7335, %v7335
    %7340 = vmatpush.bf16.msra.mxu0 %v6417
    %7341 = vmatpush.bf16.msra.mxu0 %v6411
    %7342 = vmatpush.bf16.msra.mxu0 %v6405
    %7343 = vmatpush.bf16.msra.mxu0 %v6399
    %7344 = vmatpush.bf16.msra.mxu0 %v6393
    %7345 = vmatpush.bf16.msra.mxu0 %v6387
    %7346 = vmatpush.bf16.msra.mxu0 %v6381
    %7347 = vmatpush.bf16.msra.mxu0 %v6375
    %7348 = vmatmul.bf16.gmra.mxu0 %v7338
    %v7349 = vpop.f32.mrf.mxu0
    %v7350 = vadd.f32 0.0, %v7349
    %v7351 = vpop.f32.mrf.mxu0
    %7352 = vdwg.mxu0
    %7353 = vmatpush.bf16.msra.mxu0 %v6465
    %7354 = vmatpush.bf16.msra.mxu0 %v6459
    %7355 = vmatpush.bf16.msra.mxu0 %v6453
    %7356 = vmatpush.bf16.msra.mxu0 %v6447
    %7357 = vmatpush.bf16.msra.mxu0 %v6441
    %7358 = vmatpush.bf16.msra.mxu0 %v6435
    %7359 = vmatpush.bf16.msra.mxu0 %v6429
    %7360 = vmatpush.bf16.msra.mxu0 %v6423
    %7361 = vmatmul.bf16.gmra.mxu0 %v7339
    %v7362 = vpop.f32.mrf.mxu0
    %v7363 = vadd.f32 %v7350, %v7362
    %v7364 = vpop.f32.mrf.mxu0
    %7365 = vdwg.mxu0
    %7366 = vmatpush.bf16.msra.mxu0 %v6418
    %7367 = vmatpush.bf16.msra.mxu0 %v6412
    %7368 = vmatpush.bf16.msra.mxu0 %v6406
    %7369 = vmatpush.bf16.msra.mxu0 %v6400
    %7370 = vmatpush.bf16.msra.mxu0 %v6394
    %7371 = vmatpush.bf16.msra.mxu0 %v6388
    %7372 = vmatpush.bf16.msra.mxu0 %v6382
    %7373 = vmatpush.bf16.msra.mxu0 %v6376
    %7374 = vmatmul.bf16.gmra.mxu0 %v7338
    %v7375 = vpop.f32.mrf.mxu0
    %v7376 = vadd.f32 0.0, %v7375
    %v7377 = vpop.f32.mrf.mxu0
    %7378 = vdwg.mxu0
    %7379 = vmatpush.bf16.msra.mxu0 %v6466
    %7380 = vmatpush.bf16.msra.mxu0 %v6460
    %7381 = vmatpush.bf16.msra.mxu0 %v6454
    %7382 = vmatpush.bf16.msra.mxu0 %v6448
    %7383 = vmatpush.bf16.msra.mxu0 %v6442
    %7384 = vmatpush.bf16.msra.mxu0 %v6436
    %7385 = vmatpush.bf16.msra.mxu0 %v6430
    %7386 = vmatpush.bf16.msra.mxu0 %v6424
    %7387 = vmatmul.bf16.gmra.mxu0 %v7339
    %v7388 = vpop.f32.mrf.mxu0
    %v7389 = vadd.f32 %v7376, %v7388
    %v7390 = vpop.f32.mrf.mxu0
    %7391 = vdwg.mxu0
    %7392 = vmatpush.bf16.msra.mxu0 %v6419
    %7393 = vmatpush.bf16.msra.mxu0 %v6413
    %7394 = vmatpush.bf16.msra.mxu0 %v6407
    %7395 = vmatpush.bf16.msra.mxu0 %v6401
    %7396 = vmatpush.bf16.msra.mxu0 %v6395
    %7397 = vmatpush.bf16.msra.mxu0 %v6389
    %7398 = vmatpush.bf16.msra.mxu0 %v6383
    %7399 = vmatpush.bf16.msra.mxu0 %v6377
    %7400 = vmatmul.bf16.gmra.mxu0 %v7338
    %v7401 = vpop.f32.mrf.mxu0
    %v7402 = vadd.f32 0.0, %v7401
    %v7403 = vpop.f32.mrf.mxu0
    %7404 = vdwg.mxu0
    %7405 = vmatpush.bf16.msra.mxu0 %v6467
    %7406 = vmatpush.bf16.msra.mxu0 %v6461
    %7407 = vmatpush.bf16.msra.mxu0 %v6455
    %7408 = vmatpush.bf16.msra.mxu0 %v6449
    %7409 = vmatpush.bf16.msra.mxu0 %v6443
    %7410 = vmatpush.bf16.msra.mxu0 %v6437
    %7411 = vmatpush.bf16.msra.mxu0 %v6431
    %7412 = vmatpush.bf16.msra.mxu0 %v6425
    %7413 = vmatmul.bf16.gmra.mxu0 %v7339
    %v7414 = vpop.f32.mrf.mxu0
    %v7415 = vadd.f32 %v7402, %v7414
    %v7416 = vpop.f32.mrf.mxu0
    %7417 = vdwg.mxu0
    %7418 = vmatpush.bf16.msra.mxu0 %v6420
    %7419 = vmatpush.bf16.msra.mxu0 %v6414
    %7420 = vmatpush.bf16.msra.mxu0 %v6408
    %7421 = vmatpush.bf16.msra.mxu0 %v6402
    %7422 = vmatpush.bf16.msra.mxu0 %v6396
    %7423 = vmatpush.bf16.msra.mxu0 %v6390
    %7424 = vmatpush.bf16.msra.mxu0 %v6384
    %7425 = vmatpush.bf16.msra.mxu0 %v6378
    %7426 = vmatmul.bf16.gmra.mxu0 %v7338
    %v7427 = vpop.f32.mrf.mxu0
    %v7428 = vadd.f32 0.0, %v7427
    %v7429 = vpop.f32.mrf.mxu0
    %7430 = vdwg.mxu0
    %7431 = vmatpush.bf16.msra.mxu0 %v6468
    %7432 = vmatpush.bf16.msra.mxu0 %v6462
    %7433 = vmatpush.bf16.msra.mxu0 %v6456
    %7434 = vmatpush.bf16.msra.mxu0 %v6450
    %7435 = vmatpush.bf16.msra.mxu0 %v6444
    %7436 = vmatpush.bf16.msra.mxu0 %v6438
    %7437 = vmatpush.bf16.msra.mxu0 %v6432
    %7438 = vmatpush.bf16.msra.mxu0 %v6426
    %7439 = vmatmul.bf16.gmra.mxu0 %v7339
    %v7440 = vpop.f32.mrf.mxu0
    %v7441 = vadd.f32 %v7428, %v7440
    %v7442 = vpop.f32.mrf.mxu0
    %7443 = vdwg.mxu0
    %7444 = vmatpush.bf16.msra.mxu0 %v6421
    %7445 = vmatpush.bf16.msra.mxu0 %v6415
    %7446 = vmatpush.bf16.msra.mxu0 %v6409
    %7447 = vmatpush.bf16.msra.mxu0 %v6403
    %7448 = vmatpush.bf16.msra.mxu0 %v6397
    %7449 = vmatpush.bf16.msra.mxu0 %v6391
    %7450 = vmatpush.bf16.msra.mxu0 %v6385
    %7451 = vmatpush.bf16.msra.mxu0 %v6379
    %7452 = vmatmul.bf16.gmra.mxu0 %v7338
    %v7453 = vpop.f32.mrf.mxu0
    %v7454 = vadd.f32 0.0, %v7453
    %v7455 = vpop.f32.mrf.mxu0
    %7456 = vdwg.mxu0
    %7457 = vmatpush.bf16.msra.mxu0 %v6469
    %7458 = vmatpush.bf16.msra.mxu0 %v6463
    %7459 = vmatpush.bf16.msra.mxu0 %v6457
    %7460 = vmatpush.bf16.msra.mxu0 %v6451
    %7461 = vmatpush.bf16.msra.mxu0 %v6445
    %7462 = vmatpush.bf16.msra.mxu0 %v6439
    %7463 = vmatpush.bf16.msra.mxu0 %v6433
    %7464 = vmatpush.bf16.msra.mxu0 %v6427
    %7465 = vmatmul.bf16.gmra.mxu0 %v7339
    %v7466 = vpop.f32.mrf.mxu0
    %v7467 = vadd.f32 %v7454, %v7466
    %v7468 = vpop.f32.mrf.mxu0
    %7469 = vdwg.mxu0
    %7470 = vmatpush.bf16.msra.mxu0 %v6422
    %7471 = vmatpush.bf16.msra.mxu0 %v6416
    %7472 = vmatpush.bf16.msra.mxu0 %v6410
    %7473 = vmatpush.bf16.msra.mxu0 %v6404
    %7474 = vmatpush.bf16.msra.mxu0 %v6398
    %7475 = vmatpush.bf16.msra.mxu0 %v6392
    %7476 = vmatpush.bf16.msra.mxu0 %v6386
    %7477 = vmatpush.bf16.msra.mxu0 %v6380
    %7478 = vmatmul.bf16.gmra.mxu0 %v7338
    %v7479 = vpop.f32.mrf.mxu0
    %v7480 = vadd.f32 0.0, %v7479
    %v7481 = vpop.f32.mrf.mxu0
    %7482 = vdwg.mxu0
    %7483 = vmatpush.bf16.msra.mxu0 %v6470
    %7484 = vmatpush.bf16.msra.mxu0 %v6464
    %7485 = vmatpush.bf16.msra.mxu0 %v6458
    %7486 = vmatpush.bf16.msra.mxu0 %v6452
    %7487 = vmatpush.bf16.msra.mxu0 %v6446
    %7488 = vmatpush.bf16.msra.mxu0 %v6440
    %7489 = vmatpush.bf16.msra.mxu0 %v6434
    %7490 = vmatpush.bf16.msra.mxu0 %v6428
    %7491 = vmatmul.bf16.gmra.mxu0 %v7339
    %v7492 = vpop.f32.mrf.mxu0
    %v7493 = vadd.f32 %v7480, %v7492
    %v7494 = vpop.f32.mrf.mxu0
    %7495 = vdwg.mxu0
    %v7496 = vadd.f32 %v5833, %v7363
    %v7497 = vadd.f32 %v5862, %v7389
    %v7498 = vxor.u32 %v7496, 2147483648
    %v7499 = vxor.u32 %v7497, 2147483648
    %v7500 = vmul.f32 %v7498, 1.442695
    %v7501 = vpow.pop %v7500
    %v7502 = vmul.f32 %v7499, 1.442695
    %v7503 = vpow.pop %v7502
    %v7504 = vadd.f32 %v7501, 1.0
    %v7505 = vadd.f32 %v7503, 1.0
    %v7506 = vrcp.pop %v7504
    %v7507 = vmul.f32 %v7504, %v7506
    %v7508 = vsub.f32 1.0, %v7507
    %v7509 = vmul.f32 %v7506, %v7508
    %v7510 = vadd.f32 %v7506, %v7509
    %vm7511 = vweird.f32 %v7504
    %vm7512 = vweird.f32 %v7506
    %vm7513 = vmor %vm7511, %vm7512
    %v7514 = vsel %vm7513, %v7506, %v7510
    %v7515 = vand.u32 2147483647, %v7504
    %vm7516 = vcmp.eq.f32.partialorder %v7515, 8.507059e+37
    %v7517 = vand.u32 %v7504, 2147483648
    %v7518 = vor.u32 1.1754944e-38, %v7517
    %v7519 = vsel %vm7516, %v7518, %v7514
    %v7520 = vmul.f32 1.0, %v7519
    %v7521 = vrcp.pop %v7505
    %v7522 = vmul.f32 %v7505, %v7521
    %v7523 = vsub.f32 1.0, %v7522
    %v7524 = vmul.f32 %v7521, %v7523
    %v7525 = vadd.f32 %v7521, %v7524
    %vm7526 = vweird.f32 %v7505
    %vm7527 = vweird.f32 %v7521
    %vm7528 = vmor %vm7526, %vm7527
    %v7529 = vsel %vm7528, %v7521, %v7525
    %v7530 = vand.u32 2147483647, %v7505
    %vm7531 = vcmp.eq.f32.partialorder %v7530, 8.507059e+37
    %v7532 = vand.u32 %v7505, 2147483648
    %v7533 = vor.u32 1.1754944e-38, %v7532
    %v7534 = vsel %vm7531, %v7533, %v7529
    %v7535 = vmul.f32 1.0, %v7534
    %v7536 = vadd.f32 %v5891, %v7415
    %v7537 = vadd.f32 %v5920, %v7441
    %v7538 = vxor.u32 %v7536, 2147483648
    %v7539 = vxor.u32 %v7537, 2147483648
    %v7540 = vmul.f32 %v7538, 1.442695
    %v7541 = vpow.pop %v7540
    %v7542 = vmul.f32 %v7539, 1.442695
    %v7543 = vpow.pop %v7542
    %v7544 = vadd.f32 %v7541, 1.0
    %v7545 = vadd.f32 %v7543, 1.0
    %v7546 = vrcp.pop %v7544
    %v7547 = vmul.f32 %v7544, %v7546
    %v7548 = vsub.f32 1.0, %v7547
    %v7549 = vmul.f32 %v7546, %v7548
    %v7550 = vadd.f32 %v7546, %v7549
    %vm7551 = vweird.f32 %v7544
    %vm7552 = vweird.f32 %v7546
    %vm7553 = vmor %vm7551, %vm7552
    %v7554 = vsel %vm7553, %v7546, %v7550
    %v7555 = vand.u32 2147483647, %v7544
    %vm7556 = vcmp.eq.f32.partialorder %v7555, 8.507059e+37
    %v7557 = vand.u32 %v7544, 2147483648
    %v7558 = vor.u32 1.1754944e-38, %v7557
    %v7559 = vsel %vm7556, %v7558, %v7554
    %v7560 = vmul.f32 1.0, %v7559
    %v7561 = vrcp.pop %v7545
    %v7562 = vmul.f32 %v7545, %v7561
    %v7563 = vsub.f32 1.0, %v7562
    %v7564 = vmul.f32 %v7561, %v7563
    %v7565 = vadd.f32 %v7561, %v7564
    %vm7566 = vweird.f32 %v7545
    %vm7567 = vweird.f32 %v7561
    %vm7568 = vmor %vm7566, %vm7567
    %v7569 = vsel %vm7568, %v7561, %v7565
    %v7570 = vand.u32 2147483647, %v7545
    %vm7571 = vcmp.eq.f32.partialorder %v7570, 8.507059e+37
    %v7572 = vand.u32 %v7545, 2147483648
    %v7573 = vor.u32 1.1754944e-38, %v7572
    %v7574 = vsel %vm7571, %v7573, %v7569
    %v7575 = vmul.f32 1.0, %v7574
    %v7576 = vadd.f32 %v7467, %v6804
    %v7577 = vadd.f32 %v7493, %v6805
    %v7578 = vmul.f32 %v7520, %v7576
    %v7579 = vmul.f32 %v7535, %v7577
    %v7580 = vadd.f32 %v5949, %v7578
    %v7581 = vadd.f32 %v5978, %v7579
    %v7582 = vtanh.pop %v7580
    %v7583 = vtanh.pop %v7581
    %v7584 = vsub.f32 1.0, %v7560
    %v7585 = vsub.f32 1.0, %v7575
    %v7586 = vmul.f32 %v7584, %v7582
    %v7587 = vmul.f32 %v7585, %v7583
    %v7588 = vmul.f32 %v7560, %v7334
    %v7589 = vmul.f32 %v7575, %v7335
    %v7590 = vadd.f32 %v7586, %v7588
    %v7591 = vadd.f32 %v7587, %v7589
    %7592 = vst [vmem:[#allocation2 + $0x30] sm:$0xff] %v7590
    %7593 = vst [vmem:[#allocation2 + $0x38] sm:$0xff] %v7591
    %v7594 = vpack.c.bf16 %v7590, %v7590
    %v7595 = vpack.c.bf16 %v7591, %v7591
    %7596 = vmatpush.bf16.msra.mxu0 %v6417
    %7597 = vmatpush.bf16.msra.mxu0 %v6411
    %7598 = vmatpush.bf16.msra.mxu0 %v6405
    %7599 = vmatpush.bf16.msra.mxu0 %v6399
    %7600 = vmatpush.bf16.msra.mxu0 %v6393
    %7601 = vmatpush.bf16.msra.mxu0 %v6387
    %7602 = vmatpush.bf16.msra.mxu0 %v6381
    %7603 = vmatpush.bf16.msra.mxu0 %v6375
    %7604 = vmatmul.bf16.gmra.mxu0 %v7594
    %v7605 = vpop.f32.mrf.mxu0
    %v7606 = vadd.f32 0.0, %v7605
    %v7607 = vpop.f32.mrf.mxu0
    %7608 = vdwg.mxu0
    %7609 = vmatpush.bf16.msra.mxu0 %v6465
    %7610 = vmatpush.bf16.msra.mxu0 %v6459
    %7611 = vmatpush.bf16.msra.mxu0 %v6453
    %7612 = vmatpush.bf16.msra.mxu0 %v6447
    %7613 = vmatpush.bf16.msra.mxu0 %v6441
    %7614 = vmatpush.bf16.msra.mxu0 %v6435
    %7615 = vmatpush.bf16.msra.mxu0 %v6429
    %7616 = vmatpush.bf16.msra.mxu0 %v6423
    %7617 = vmatmul.bf16.gmra.mxu0 %v7595
    %v7618 = vpop.f32.mrf.mxu0
    %v7619 = vadd.f32 %v7606, %v7618
    %v7620 = vpop.f32.mrf.mxu0
    %7621 = vdwg.mxu0
    %7622 = vmatpush.bf16.msra.mxu0 %v6418
    %7623 = vmatpush.bf16.msra.mxu0 %v6412
    %7624 = vmatpush.bf16.msra.mxu0 %v6406
    %7625 = vmatpush.bf16.msra.mxu0 %v6400
    %7626 = vmatpush.bf16.msra.mxu0 %v6394
    %7627 = vmatpush.bf16.msra.mxu0 %v6388
    %7628 = vmatpush.bf16.msra.mxu0 %v6382
    %7629 = vmatpush.bf16.msra.mxu0 %v6376
    %7630 = vmatmul.bf16.gmra.mxu0 %v7594
    %v7631 = vpop.f32.mrf.mxu0
    %v7632 = vadd.f32 0.0, %v7631
    %v7633 = vpop.f32.mrf.mxu0
    %7634 = vdwg.mxu0
    %7635 = vmatpush.bf16.msra.mxu0 %v6466
    %7636 = vmatpush.bf16.msra.mxu0 %v6460
    %7637 = vmatpush.bf16.msra.mxu0 %v6454
    %7638 = vmatpush.bf16.msra.mxu0 %v6448
    %7639 = vmatpush.bf16.msra.mxu0 %v6442
    %7640 = vmatpush.bf16.msra.mxu0 %v6436
    %7641 = vmatpush.bf16.msra.mxu0 %v6430
    %7642 = vmatpush.bf16.msra.mxu0 %v6424
    %7643 = vmatmul.bf16.gmra.mxu0 %v7595
    %v7644 = vpop.f32.mrf.mxu0
    %v7645 = vadd.f32 %v7632, %v7644
    %v7646 = vpop.f32.mrf.mxu0
    %7647 = vdwg.mxu0
    %7648 = vmatpush.bf16.msra.mxu0 %v6419
    %7649 = vmatpush.bf16.msra.mxu0 %v6413
    %7650 = vmatpush.bf16.msra.mxu0 %v6407
    %7651 = vmatpush.bf16.msra.mxu0 %v6401
    %7652 = vmatpush.bf16.msra.mxu0 %v6395
    %7653 = vmatpush.bf16.msra.mxu0 %v6389
    %7654 = vmatpush.bf16.msra.mxu0 %v6383
    %7655 = vmatpush.bf16.msra.mxu0 %v6377
    %7656 = vmatmul.bf16.gmra.mxu0 %v7594
    %v7657 = vpop.f32.mrf.mxu0
    %v7658 = vadd.f32 0.0, %v7657
    %v7659 = vpop.f32.mrf.mxu0
    %7660 = vdwg.mxu0
    %7661 = vmatpush.bf16.msra.mxu0 %v6467
    %7662 = vmatpush.bf16.msra.mxu0 %v6461
    %7663 = vmatpush.bf16.msra.mxu0 %v6455
    %7664 = vmatpush.bf16.msra.mxu0 %v6449
    %7665 = vmatpush.bf16.msra.mxu0 %v6443
    %7666 = vmatpush.bf16.msra.mxu0 %v6437
    %7667 = vmatpush.bf16.msra.mxu0 %v6431
    %7668 = vmatpush.bf16.msra.mxu0 %v6425
    %7669 = vmatmul.bf16.gmra.mxu0 %v7595
    %v7670 = vpop.f32.mrf.mxu0
    %v7671 = vadd.f32 %v7658, %v7670
    %v7672 = vpop.f32.mrf.mxu0
    %7673 = vdwg.mxu0
    %7674 = vmatpush.bf16.msra.mxu0 %v6420
    %7675 = vmatpush.bf16.msra.mxu0 %v6414
    %7676 = vmatpush.bf16.msra.mxu0 %v6408
    %7677 = vmatpush.bf16.msra.mxu0 %v6402
    %7678 = vmatpush.bf16.msra.mxu0 %v6396
    %7679 = vmatpush.bf16.msra.mxu0 %v6390
    %7680 = vmatpush.bf16.msra.mxu0 %v6384
    %7681 = vmatpush.bf16.msra.mxu0 %v6378
    %7682 = vmatmul.bf16.gmra.mxu0 %v7594
    %v7683 = vpop.f32.mrf.mxu0
    %v7684 = vadd.f32 0.0, %v7683
    %v7685 = vpop.f32.mrf.mxu0
    %7686 = vdwg.mxu0
    %7687 = vmatpush.bf16.msra.mxu0 %v6468
    %7688 = vmatpush.bf16.msra.mxu0 %v6462
    %7689 = vmatpush.bf16.msra.mxu0 %v6456
    %7690 = vmatpush.bf16.msra.mxu0 %v6450
    %7691 = vmatpush.bf16.msra.mxu0 %v6444
    %7692 = vmatpush.bf16.msra.mxu0 %v6438
    %7693 = vmatpush.bf16.msra.mxu0 %v6432
    %7694 = vmatpush.bf16.msra.mxu0 %v6426
    %7695 = vmatmul.bf16.gmra.mxu0 %v7595
    %v7696 = vpop.f32.mrf.mxu0
    %v7697 = vadd.f32 %v7684, %v7696
    %v7698 = vpop.f32.mrf.mxu0
    %7699 = vdwg.mxu0
    %7700 = vmatpush.bf16.msra.mxu0 %v6421
    %7701 = vmatpush.bf16.msra.mxu0 %v6415
    %7702 = vmatpush.bf16.msra.mxu0 %v6409
    %7703 = vmatpush.bf16.msra.mxu0 %v6403
    %7704 = vmatpush.bf16.msra.mxu0 %v6397
    %7705 = vmatpush.bf16.msra.mxu0 %v6391
    %7706 = vmatpush.bf16.msra.mxu0 %v6385
    %7707 = vmatpush.bf16.msra.mxu0 %v6379
    %7708 = vmatmul.bf16.gmra.mxu0 %v7594
    %v7709 = vpop.f32.mrf.mxu0
    %v7710 = vadd.f32 0.0, %v7709
    %v7711 = vpop.f32.mrf.mxu0
    %7712 = vdwg.mxu0
    %7713 = vmatpush.bf16.msra.mxu0 %v6469
    %7714 = vmatpush.bf16.msra.mxu0 %v6463
    %7715 = vmatpush.bf16.msra.mxu0 %v6457
    %7716 = vmatpush.bf16.msra.mxu0 %v6451
    %7717 = vmatpush.bf16.msra.mxu0 %v6445
    %7718 = vmatpush.bf16.msra.mxu0 %v6439
    %7719 = vmatpush.bf16.msra.mxu0 %v6433
    %7720 = vmatpush.bf16.msra.mxu0 %v6427
    %7721 = vmatmul.bf16.gmra.mxu0 %v7595
    %v7722 = vpop.f32.mrf.mxu0
    %v7723 = vadd.f32 %v7710, %v7722
    %v7724 = vpop.f32.mrf.mxu0
    %7725 = vdwg.mxu0
    %7726 = vmatpush.bf16.msra.mxu0 %v6422
    %7727 = vmatpush.bf16.msra.mxu0 %v6416
    %7728 = vmatpush.bf16.msra.mxu0 %v6410
    %7729 = vmatpush.bf16.msra.mxu0 %v6404
    %7730 = vmatpush.bf16.msra.mxu0 %v6398
    %7731 = vmatpush.bf16.msra.mxu0 %v6392
    %7732 = vmatpush.bf16.msra.mxu0 %v6386
    %7733 = vmatpush.bf16.msra.mxu0 %v6380
    %7734 = vmatmul.bf16.gmra.mxu0 %v7594
    %v7735 = vpop.f32.mrf.mxu0
    %v7736 = vadd.f32 0.0, %v7735
    %v7737 = vpop.f32.mrf.mxu0
    %7738 = vdwg.mxu0
    %7739 = vmatpush.bf16.msra.mxu0 %v6470
    %7740 = vmatpush.bf16.msra.mxu0 %v6464
    %7741 = vmatpush.bf16.msra.mxu0 %v6458
    %7742 = vmatpush.bf16.msra.mxu0 %v6452
    %7743 = vmatpush.bf16.msra.mxu0 %v6446
    %7744 = vmatpush.bf16.msra.mxu0 %v6440
    %7745 = vmatpush.bf16.msra.mxu0 %v6434
    %7746 = vmatpush.bf16.msra.mxu0 %v6428
    %7747 = vmatmul.bf16.gmra.mxu0 %v7595
    %v7748 = vpop.f32.mrf.mxu0
    %v7749 = vadd.f32 %v7736, %v7748
    %v7750 = vpop.f32.mrf.mxu0
    %7751 = vdwg.mxu0
    %v7752 = vadd.f32 %v5836, %v7619
    %v7753 = vadd.f32 %v5865, %v7645
    %v7754 = vxor.u32 %v7752, 2147483648
    %v7755 = vxor.u32 %v7753, 2147483648
    %v7756 = vmul.f32 %v7754, 1.442695
    %v7757 = vpow.pop %v7756
    %v7758 = vmul.f32 %v7755, 1.442695
    %v7759 = vpow.pop %v7758
    %v7760 = vadd.f32 %v7757, 1.0
    %v7761 = vadd.f32 %v7759, 1.0
    %v7762 = vrcp.pop %v7760
    %v7763 = vmul.f32 %v7760, %v7762
    %v7764 = vsub.f32 1.0, %v7763
    %v7765 = vmul.f32 %v7762, %v7764
    %v7766 = vadd.f32 %v7762, %v7765
    %vm7767 = vweird.f32 %v7760
    %vm7768 = vweird.f32 %v7762
    %vm7769 = vmor %vm7767, %vm7768
    %v7770 = vsel %vm7769, %v7762, %v7766
    %v7771 = vand.u32 2147483647, %v7760
    %vm7772 = vcmp.eq.f32.partialorder %v7771, 8.507059e+37
    %v7773 = vand.u32 %v7760, 2147483648
    %v7774 = vor.u32 1.1754944e-38, %v7773
    %v7775 = vsel %vm7772, %v7774, %v7770
    %v7776 = vmul.f32 1.0, %v7775
    %v7777 = vrcp.pop %v7761
    %v7778 = vmul.f32 %v7761, %v7777
    %v7779 = vsub.f32 1.0, %v7778
    %v7780 = vmul.f32 %v7777, %v7779
    %v7781 = vadd.f32 %v7777, %v7780
    %vm7782 = vweird.f32 %v7761
    %vm7783 = vweird.f32 %v7777
    %vm7784 = vmor %vm7782, %vm7783
    %v7785 = vsel %vm7784, %v7777, %v7781
    %v7786 = vand.u32 2147483647, %v7761
    %vm7787 = vcmp.eq.f32.partialorder %v7786, 8.507059e+37
    %v7788 = vand.u32 %v7761, 2147483648
    %v7789 = vor.u32 1.1754944e-38, %v7788
    %v7790 = vsel %vm7787, %v7789, %v7785
    %v7791 = vmul.f32 1.0, %v7790
    %v7792 = vadd.f32 %v5894, %v7671
    %v7793 = vadd.f32 %v5923, %v7697
    %v7794 = vxor.u32 %v7792, 2147483648
    %v7795 = vxor.u32 %v7793, 2147483648
    %v7796 = vmul.f32 %v7794, 1.442695
    %v7797 = vpow.pop %v7796
    %v7798 = vmul.f32 %v7795, 1.442695
    %v7799 = vpow.pop %v7798
    %v7800 = vadd.f32 %v7797, 1.0
    %v7801 = vadd.f32 %v7799, 1.0
    %v7802 = vrcp.pop %v7800
    %v7803 = vmul.f32 %v7800, %v7802
    %v7804 = vsub.f32 1.0, %v7803
    %v7805 = vmul.f32 %v7802, %v7804
    %v7806 = vadd.f32 %v7802, %v7805
    %vm7807 = vweird.f32 %v7800
    %vm7808 = vweird.f32 %v7802
    %vm7809 = vmor %vm7807, %vm7808
    %v7810 = vsel %vm7809, %v7802, %v7806
    %v7811 = vand.u32 2147483647, %v7800
    %vm7812 = vcmp.eq.f32.partialorder %v7811, 8.507059e+37
    %v7813 = vand.u32 %v7800, 2147483648
    %v7814 = vor.u32 1.1754944e-38, %v7813
    %v7815 = vsel %vm7812, %v7814, %v7810
    %v7816 = vmul.f32 1.0, %v7815
    %v7817 = vrcp.pop %v7801
    %v7818 = vmul.f32 %v7801, %v7817
    %v7819 = vsub.f32 1.0, %v7818
    %v7820 = vmul.f32 %v7817, %v7819
    %v7821 = vadd.f32 %v7817, %v7820
    %vm7822 = vweird.f32 %v7801
    %vm7823 = vweird.f32 %v7817
    %vm7824 = vmor %vm7822, %vm7823
    %v7825 = vsel %vm7824, %v7817, %v7821
    %v7826 = vand.u32 2147483647, %v7801
    %vm7827 = vcmp.eq.f32.partialorder %v7826, 8.507059e+37
    %v7828 = vand.u32 %v7801, 2147483648
    %v7829 = vor.u32 1.1754944e-38, %v7828
    %v7830 = vsel %vm7827, %v7829, %v7825
    %v7831 = vmul.f32 1.0, %v7830
    %v7832 = vadd.f32 %v7723, %v6804
    %v7833 = vadd.f32 %v7749, %v6805
    %v7834 = vmul.f32 %v7776, %v7832
    %v7835 = vmul.f32 %v7791, %v7833
    %v7836 = vadd.f32 %v5952, %v7834
    %v7837 = vadd.f32 %v5981, %v7835
    %v7838 = vtanh.pop %v7836
    %v7839 = vtanh.pop %v7837
    %v7840 = vsub.f32 1.0, %v7816
    %v7841 = vsub.f32 1.0, %v7831
    %v7842 = vmul.f32 %v7840, %v7838
    %v7843 = vmul.f32 %v7841, %v7839
    %v7844 = vmul.f32 %v7816, %v7590
    %v7845 = vmul.f32 %v7831, %v7591
    %v7846 = vadd.f32 %v7842, %v7844
    %v7847 = vadd.f32 %v7843, %v7845
    %7848 = vst [vmem:[#allocation2 + $0x40] sm:$0xff] %v7846
    %7849 = vst [vmem:[#allocation2 + $0x48] sm:$0xff] %v7847
    %v7850 = vpack.c.bf16 %v7846, %v7846
    %v7851 = vpack.c.bf16 %v7847, %v7847
    %7852 = vmatpush.bf16.msra.mxu0 %v6417
    %7853 = vmatpush.bf16.msra.mxu0 %v6411
    %7854 = vmatpush.bf16.msra.mxu0 %v6405
    %7855 = vmatpush.bf16.msra.mxu0 %v6399
    %7856 = vmatpush.bf16.msra.mxu0 %v6393
    %7857 = vmatpush.bf16.msra.mxu0 %v6387
    %7858 = vmatpush.bf16.msra.mxu0 %v6381
    %7859 = vmatpush.bf16.msra.mxu0 %v6375
    %7860 = vmatmul.bf16.gmra.mxu0 %v7850
    %v7861 = vpop.f32.mrf.mxu0
    %v7862 = vadd.f32 0.0, %v7861
    %v7863 = vpop.f32.mrf.mxu0
    %7864 = vdwg.mxu0
    %7865 = vmatpush.bf16.msra.mxu0 %v6465
    %7866 = vmatpush.bf16.msra.mxu0 %v6459
    %7867 = vmatpush.bf16.msra.mxu0 %v6453
    %7868 = vmatpush.bf16.msra.mxu0 %v6447
    %7869 = vmatpush.bf16.msra.mxu0 %v6441
    %7870 = vmatpush.bf16.msra.mxu0 %v6435
    %7871 = vmatpush.bf16.msra.mxu0 %v6429
    %7872 = vmatpush.bf16.msra.mxu0 %v6423
    %7873 = vmatmul.bf16.gmra.mxu0 %v7851
    %v7874 = vpop.f32.mrf.mxu0
    %v7875 = vadd.f32 %v7862, %v7874
    %v7876 = vpop.f32.mrf.mxu0
    %7877 = vdwg.mxu0
    %7878 = vmatpush.bf16.msra.mxu0 %v6418
    %7879 = vmatpush.bf16.msra.mxu0 %v6412
    %7880 = vmatpush.bf16.msra.mxu0 %v6406
    %7881 = vmatpush.bf16.msra.mxu0 %v6400
    %7882 = vmatpush.bf16.msra.mxu0 %v6394
    %7883 = vmatpush.bf16.msra.mxu0 %v6388
    %7884 = vmatpush.bf16.msra.mxu0 %v6382
    %7885 = vmatpush.bf16.msra.mxu0 %v6376
    %7886 = vmatmul.bf16.gmra.mxu0 %v7850
    %v7887 = vpop.f32.mrf.mxu0
    %v7888 = vadd.f32 0.0, %v7887
    %v7889 = vpop.f32.mrf.mxu0
    %7890 = vdwg.mxu0
    %7891 = vmatpush.bf16.msra.mxu0 %v6466
    %7892 = vmatpush.bf16.msra.mxu0 %v6460
    %7893 = vmatpush.bf16.msra.mxu0 %v6454
    %7894 = vmatpush.bf16.msra.mxu0 %v6448
    %7895 = vmatpush.bf16.msra.mxu0 %v6442
    %7896 = vmatpush.bf16.msra.mxu0 %v6436
    %7897 = vmatpush.bf16.msra.mxu0 %v6430
    %7898 = vmatpush.bf16.msra.mxu0 %v6424
    %7899 = vmatmul.bf16.gmra.mxu0 %v7851
    %v7900 = vpop.f32.mrf.mxu0
    %v7901 = vadd.f32 %v7888, %v7900
    %v7902 = vpop.f32.mrf.mxu0
    %7903 = vdwg.mxu0
    %7904 = vmatpush.bf16.msra.mxu0 %v6419
    %7905 = vmatpush.bf16.msra.mxu0 %v6413
    %7906 = vmatpush.bf16.msra.mxu0 %v6407
    %7907 = vmatpush.bf16.msra.mxu0 %v6401
    %7908 = vmatpush.bf16.msra.mxu0 %v6395
    %7909 = vmatpush.bf16.msra.mxu0 %v6389
    %7910 = vmatpush.bf16.msra.mxu0 %v6383
    %7911 = vmatpush.bf16.msra.mxu0 %v6377
    %7912 = vmatmul.bf16.gmra.mxu0 %v7850
    %v7913 = vpop.f32.mrf.mxu0
    %v7914 = vadd.f32 0.0, %v7913
    %v7915 = vpop.f32.mrf.mxu0
    %7916 = vdwg.mxu0
    %7917 = vmatpush.bf16.msra.mxu0 %v6467
    %7918 = vmatpush.bf16.msra.mxu0 %v6461
    %7919 = vmatpush.bf16.msra.mxu0 %v6455
    %7920 = vmatpush.bf16.msra.mxu0 %v6449
    %7921 = vmatpush.bf16.msra.mxu0 %v6443
    %7922 = vmatpush.bf16.msra.mxu0 %v6437
    %7923 = vmatpush.bf16.msra.mxu0 %v6431
    %7924 = vmatpush.bf16.msra.mxu0 %v6425
    %7925 = vmatmul.bf16.gmra.mxu0 %v7851
    %v7926 = vpop.f32.mrf.mxu0
    %v7927 = vadd.f32 %v7914, %v7926
    %v7928 = vpop.f32.mrf.mxu0
    %7929 = vdwg.mxu0
    %7930 = vmatpush.bf16.msra.mxu0 %v6420
    %7931 = vmatpush.bf16.msra.mxu0 %v6414
    %7932 = vmatpush.bf16.msra.mxu0 %v6408
    %7933 = vmatpush.bf16.msra.mxu0 %v6402
    %7934 = vmatpush.bf16.msra.mxu0 %v6396
    %7935 = vmatpush.bf16.msra.mxu0 %v6390
    %7936 = vmatpush.bf16.msra.mxu0 %v6384
    %7937 = vmatpush.bf16.msra.mxu0 %v6378
    %7938 = vmatmul.bf16.gmra.mxu0 %v7850
    %v7939 = vpop.f32.mrf.mxu0
    %v7940 = vadd.f32 0.0, %v7939
    %v7941 = vpop.f32.mrf.mxu0
    %7942 = vdwg.mxu0
    %7943 = vmatpush.bf16.msra.mxu0 %v6468
    %7944 = vmatpush.bf16.msra.mxu0 %v6462
    %7945 = vmatpush.bf16.msra.mxu0 %v6456
    %7946 = vmatpush.bf16.msra.mxu0 %v6450
    %7947 = vmatpush.bf16.msra.mxu0 %v6444
    %7948 = vmatpush.bf16.msra.mxu0 %v6438
    %7949 = vmatpush.bf16.msra.mxu0 %v6432
    %7950 = vmatpush.bf16.msra.mxu0 %v6426
    %7951 = vmatmul.bf16.gmra.mxu0 %v7851
    %v7952 = vpop.f32.mrf.mxu0
    %v7953 = vadd.f32 %v7940, %v7952
    %v7954 = vpop.f32.mrf.mxu0
    %7955 = vdwg.mxu0
    %7956 = vmatpush.bf16.msra.mxu0 %v6421
    %7957 = vmatpush.bf16.msra.mxu0 %v6415
    %7958 = vmatpush.bf16.msra.mxu0 %v6409
    %7959 = vmatpush.bf16.msra.mxu0 %v6403
    %7960 = vmatpush.bf16.msra.mxu0 %v6397
    %7961 = vmatpush.bf16.msra.mxu0 %v6391
    %7962 = vmatpush.bf16.msra.mxu0 %v6385
    %7963 = vmatpush.bf16.msra.mxu0 %v6379
    %7964 = vmatmul.bf16.gmra.mxu0 %v7850
    %v7965 = vpop.f32.mrf.mxu0
    %v7966 = vadd.f32 0.0, %v7965
    %v7967 = vpop.f32.mrf.mxu0
    %7968 = vdwg.mxu0
    %7969 = vmatpush.bf16.msra.mxu0 %v6469
    %7970 = vmatpush.bf16.msra.mxu0 %v6463
    %7971 = vmatpush.bf16.msra.mxu0 %v6457
    %7972 = vmatpush.bf16.msra.mxu0 %v6451
    %7973 = vmatpush.bf16.msra.mxu0 %v6445
    %7974 = vmatpush.bf16.msra.mxu0 %v6439
    %7975 = vmatpush.bf16.msra.mxu0 %v6433
    %7976 = vmatpush.bf16.msra.mxu0 %v6427
    %7977 = vmatmul.bf16.gmra.mxu0 %v7851
    %v7978 = vpop.f32.mrf.mxu0
    %v7979 = vadd.f32 %v7966, %v7978
    %v7980 = vpop.f32.mrf.mxu0
    %7981 = vdwg.mxu0
    %7982 = vmatpush.bf16.msra.mxu0 %v6422
    %7983 = vmatpush.bf16.msra.mxu0 %v6416
    %7984 = vmatpush.bf16.msra.mxu0 %v6410
    %7985 = vmatpush.bf16.msra.mxu0 %v6404
    %7986 = vmatpush.bf16.msra.mxu0 %v6398
    %7987 = vmatpush.bf16.msra.mxu0 %v6392
    %7988 = vmatpush.bf16.msra.mxu0 %v6386
    %7989 = vmatpush.bf16.msra.mxu0 %v6380
    %7990 = vmatmul.bf16.gmra.mxu0 %v7850
    %v7991 = vpop.f32.mrf.mxu0
    %v7992 = vadd.f32 0.0, %v7991
    %v7993 = vpop.f32.mrf.mxu0
    %7994 = vdwg.mxu0
    %7995 = vmatpush.bf16.msra.mxu0 %v6470
    %7996 = vmatpush.bf16.msra.mxu0 %v6464
    %7997 = vmatpush.bf16.msra.mxu0 %v6458
    %7998 = vmatpush.bf16.msra.mxu0 %v6452
    %7999 = vmatpush.bf16.msra.mxu0 %v6446
    %8000 = vmatpush.bf16.msra.mxu0 %v6440
    %8001 = vmatpush.bf16.msra.mxu0 %v6434
    %8002 = vmatpush.bf16.msra.mxu0 %v6428
    %8003 = vmatmul.bf16.gmra.mxu0 %v7851
    %v8004 = vpop.f32.mrf.mxu0
    %v8005 = vadd.f32 %v7992, %v8004
    %v8006 = vpop.f32.mrf.mxu0
    %8007 = vdwg.mxu0
    %v8008 = vadd.f32 %v5838, %v7875
    %v8009 = vadd.f32 %v5867, %v7901
    %v8010 = vxor.u32 %v8008, 2147483648
    %v8011 = vxor.u32 %v8009, 2147483648
    %v8012 = vmul.f32 %v8010, 1.442695
    %v8013 = vpow.pop %v8012
    %v8014 = vmul.f32 %v8011, 1.442695
    %v8015 = vpow.pop %v8014
    %v8016 = vadd.f32 %v8013, 1.0
    %v8017 = vadd.f32 %v8015, 1.0
    %v8018 = vrcp.pop %v8016
    %v8019 = vmul.f32 %v8016, %v8018
    %v8020 = vsub.f32 1.0, %v8019
    %v8021 = vmul.f32 %v8018, %v8020
    %v8022 = vadd.f32 %v8018, %v8021
    %vm8023 = vweird.f32 %v8016
    %vm8024 = vweird.f32 %v8018
    %vm8025 = vmor %vm8023, %vm8024
    %v8026 = vsel %vm8025, %v8018, %v8022
    %v8027 = vand.u32 2147483647, %v8016
    %vm8028 = vcmp.eq.f32.partialorder %v8027, 8.507059e+37
    %v8029 = vand.u32 %v8016, 2147483648
    %v8030 = vor.u32 1.1754944e-38, %v8029
    %v8031 = vsel %vm8028, %v8030, %v8026
    %v8032 = vmul.f32 1.0, %v8031
    %v8033 = vrcp.pop %v8017
    %v8034 = vmul.f32 %v8017, %v8033
    %v8035 = vsub.f32 1.0, %v8034
    %v8036 = vmul.f32 %v8033, %v8035
    %v8037 = vadd.f32 %v8033, %v8036
    %vm8038 = vweird.f32 %v8017
    %vm8039 = vweird.f32 %v8033
    %vm8040 = vmor %vm8038, %vm8039
    %v8041 = vsel %vm8040, %v8033, %v8037
    %v8042 = vand.u32 2147483647, %v8017
    %vm8043 = vcmp.eq.f32.partialorder %v8042, 8.507059e+37
    %v8044 = vand.u32 %v8017, 2147483648
    %v8045 = vor.u32 1.1754944e-38, %v8044
    %v8046 = vsel %vm8043, %v8045, %v8041
    %v8047 = vmul.f32 1.0, %v8046
    %v8048 = vadd.f32 %v5896, %v7927
    %v8049 = vadd.f32 %v5925, %v7953
    %v8050 = vxor.u32 %v8048, 2147483648
    %v8051 = vxor.u32 %v8049, 2147483648
    %v8052 = vmul.f32 %v8050, 1.442695
    %v8053 = vpow.pop %v8052
    %v8054 = vmul.f32 %v8051, 1.442695
    %v8055 = vpow.pop %v8054
    %v8056 = vadd.f32 %v8053, 1.0
    %v8057 = vadd.f32 %v8055, 1.0
    %v8058 = vrcp.pop %v8056
    %v8059 = vmul.f32 %v8056, %v8058
    %v8060 = vsub.f32 1.0, %v8059
    %v8061 = vmul.f32 %v8058, %v8060
    %v8062 = vadd.f32 %v8058, %v8061
    %vm8063 = vweird.f32 %v8056
    %vm8064 = vweird.f32 %v8058
    %vm8065 = vmor %vm8063, %vm8064
    %v8066 = vsel %vm8065, %v8058, %v8062
    %v8067 = vand.u32 2147483647, %v8056
    %vm8068 = vcmp.eq.f32.partialorder %v8067, 8.507059e+37
    %v8069 = vand.u32 %v8056, 2147483648
    %v8070 = vor.u32 1.1754944e-38, %v8069
    %v8071 = vsel %vm8068, %v8070, %v8066
    %v8072 = vmul.f32 1.0, %v8071
    %v8073 = vrcp.pop %v8057
    %v8074 = vmul.f32 %v8057, %v8073
    %v8075 = vsub.f32 1.0, %v8074
    %v8076 = vmul.f32 %v8073, %v8075
    %v8077 = vadd.f32 %v8073, %v8076
    %vm8078 = vweird.f32 %v8057
    %vm8079 = vweird.f32 %v8073
    %vm8080 = vmor %vm8078, %vm8079
    %v8081 = vsel %vm8080, %v8073, %v8077
    %v8082 = vand.u32 2147483647, %v8057
    %vm8083 = vcmp.eq.f32.partialorder %v8082, 8.507059e+37
    %v8084 = vand.u32 %v8057, 2147483648
    %v8085 = vor.u32 1.1754944e-38, %v8084
    %v8086 = vsel %vm8083, %v8085, %v8081
    %v8087 = vmul.f32 1.0, %v8086
    %v8088 = vadd.f32 %v7979, %v6804
    %v8089 = vadd.f32 %v8005, %v6805
    %v8090 = vmul.f32 %v8032, %v8088
    %v8091 = vmul.f32 %v8047, %v8089
    %v8092 = vadd.f32 %v5954, %v8090
    %v8093 = vadd.f32 %v5983, %v8091
    %v8094 = vtanh.pop %v8092
    %v8095 = vtanh.pop %v8093
    %v8096 = vsub.f32 1.0, %v8072
    %v8097 = vsub.f32 1.0, %v8087
    %v8098 = vmul.f32 %v8096, %v8094
    %v8099 = vmul.f32 %v8097, %v8095
    %v8100 = vmul.f32 %v8072, %v7846
    %v8101 = vmul.f32 %v8087, %v7847
    %v8102 = vadd.f32 %v8098, %v8100
    %v8103 = vadd.f32 %v8099, %v8101
    %8104 = vst [vmem:[#allocation2 + $0x50] sm:$0xff] %v8102
    %8105 = vst [vmem:[#allocation2 + $0x58] sm:$0xff] %v8103
    %v8106 = vpack.c.bf16 %v8102, %v8102
    %v8107 = vpack.c.bf16 %v8103, %v8103
    %8108 = vmatpush.bf16.msra.mxu0 %v6417
    %8109 = vmatpush.bf16.msra.mxu0 %v6411
    %8110 = vmatpush.bf16.msra.mxu0 %v6405
    %8111 = vmatpush.bf16.msra.mxu0 %v6399
    %8112 = vmatpush.bf16.msra.mxu0 %v6393
    %8113 = vmatpush.bf16.msra.mxu0 %v6387
    %8114 = vmatpush.bf16.msra.mxu0 %v6381
    %8115 = vmatpush.bf16.msra.mxu0 %v6375
    %8116 = vmatmul.bf16.gmra.mxu0 %v8106
    %v8117 = vpop.f32.mrf.mxu0
    %v8118 = vadd.f32 0.0, %v8117
    %v8119 = vpop.f32.mrf.mxu0
    %8120 = vdwg.mxu0
    %8121 = vmatpush.bf16.msra.mxu0 %v6465
    %8122 = vmatpush.bf16.msra.mxu0 %v6459
    %8123 = vmatpush.bf16.msra.mxu0 %v6453
    %8124 = vmatpush.bf16.msra.mxu0 %v6447
    %8125 = vmatpush.bf16.msra.mxu0 %v6441
    %8126 = vmatpush.bf16.msra.mxu0 %v6435
    %8127 = vmatpush.bf16.msra.mxu0 %v6429
    %8128 = vmatpush.bf16.msra.mxu0 %v6423
    %8129 = vmatmul.bf16.gmra.mxu0 %v8107
    %v8130 = vpop.f32.mrf.mxu0
    %v8131 = vadd.f32 %v8118, %v8130
    %v8132 = vpop.f32.mrf.mxu0
    %8133 = vdwg.mxu0
    %8134 = vmatpush.bf16.msra.mxu0 %v6418
    %8135 = vmatpush.bf16.msra.mxu0 %v6412
    %8136 = vmatpush.bf16.msra.mxu0 %v6406
    %8137 = vmatpush.bf16.msra.mxu0 %v6400
    %8138 = vmatpush.bf16.msra.mxu0 %v6394
    %8139 = vmatpush.bf16.msra.mxu0 %v6388
    %8140 = vmatpush.bf16.msra.mxu0 %v6382
    %8141 = vmatpush.bf16.msra.mxu0 %v6376
    %8142 = vmatmul.bf16.gmra.mxu0 %v8106
    %v8143 = vpop.f32.mrf.mxu0
    %v8144 = vadd.f32 0.0, %v8143
    %v8145 = vpop.f32.mrf.mxu0
    %8146 = vdwg.mxu0
    %8147 = vmatpush.bf16.msra.mxu0 %v6466
    %8148 = vmatpush.bf16.msra.mxu0 %v6460
    %8149 = vmatpush.bf16.msra.mxu0 %v6454
    %8150 = vmatpush.bf16.msra.mxu0 %v6448
    %8151 = vmatpush.bf16.msra.mxu0 %v6442
    %8152 = vmatpush.bf16.msra.mxu0 %v6436
    %8153 = vmatpush.bf16.msra.mxu0 %v6430
    %8154 = vmatpush.bf16.msra.mxu0 %v6424
    %8155 = vmatmul.bf16.gmra.mxu0 %v8107
    %v8156 = vpop.f32.mrf.mxu0
    %v8157 = vadd.f32 %v8144, %v8156
    %v8158 = vpop.f32.mrf.mxu0
    %8159 = vdwg.mxu0
    %8160 = vmatpush.bf16.msra.mxu0 %v6419
    %8161 = vmatpush.bf16.msra.mxu0 %v6413
    %8162 = vmatpush.bf16.msra.mxu0 %v6407
    %8163 = vmatpush.bf16.msra.mxu0 %v6401
    %8164 = vmatpush.bf16.msra.mxu0 %v6395
    %8165 = vmatpush.bf16.msra.mxu0 %v6389
    %8166 = vmatpush.bf16.msra.mxu0 %v6383
    %8167 = vmatpush.bf16.msra.mxu0 %v6377
    %8168 = vmatmul.bf16.gmra.mxu0 %v8106
    %v8169 = vpop.f32.mrf.mxu0
    %v8170 = vadd.f32 0.0, %v8169
    %v8171 = vpop.f32.mrf.mxu0
    %8172 = vdwg.mxu0
    %8173 = vmatpush.bf16.msra.mxu0 %v6467
    %8174 = vmatpush.bf16.msra.mxu0 %v6461
    %8175 = vmatpush.bf16.msra.mxu0 %v6455
    %8176 = vmatpush.bf16.msra.mxu0 %v6449
    %8177 = vmatpush.bf16.msra.mxu0 %v6443
    %8178 = vmatpush.bf16.msra.mxu0 %v6437
    %8179 = vmatpush.bf16.msra.mxu0 %v6431
    %8180 = vmatpush.bf16.msra.mxu0 %v6425
    %8181 = vmatmul.bf16.gmra.mxu0 %v8107
    %v8182 = vpop.f32.mrf.mxu0
    %v8183 = vadd.f32 %v8170, %v8182
    %v8184 = vpop.f32.mrf.mxu0
    %8185 = vdwg.mxu0
    %8186 = vmatpush.bf16.msra.mxu0 %v6420
    %8187 = vmatpush.bf16.msra.mxu0 %v6414
    %8188 = vmatpush.bf16.msra.mxu0 %v6408
    %8189 = vmatpush.bf16.msra.mxu0 %v6402
    %8190 = vmatpush.bf16.msra.mxu0 %v6396
    %8191 = vmatpush.bf16.msra.mxu0 %v6390
    %8192 = vmatpush.bf16.msra.mxu0 %v6384
    %8193 = vmatpush.bf16.msra.mxu0 %v6378
    %8194 = vmatmul.bf16.gmra.mxu0 %v8106
    %v8195 = vpop.f32.mrf.mxu0
    %v8196 = vadd.f32 0.0, %v8195
    %v8197 = vpop.f32.mrf.mxu0
    %8198 = vdwg.mxu0
    %8199 = vmatpush.bf16.msra.mxu0 %v6468
    %8200 = vmatpush.bf16.msra.mxu0 %v6462
    %8201 = vmatpush.bf16.msra.mxu0 %v6456
    %8202 = vmatpush.bf16.msra.mxu0 %v6450
    %8203 = vmatpush.bf16.msra.mxu0 %v6444
    %8204 = vmatpush.bf16.msra.mxu0 %v6438
    %8205 = vmatpush.bf16.msra.mxu0 %v6432
    %8206 = vmatpush.bf16.msra.mxu0 %v6426
    %8207 = vmatmul.bf16.gmra.mxu0 %v8107
    %v8208 = vpop.f32.mrf.mxu0
    %v8209 = vadd.f32 %v8196, %v8208
    %v8210 = vpop.f32.mrf.mxu0
    %8211 = vdwg.mxu0
    %8212 = vmatpush.bf16.msra.mxu0 %v6421
    %8213 = vmatpush.bf16.msra.mxu0 %v6415
    %8214 = vmatpush.bf16.msra.mxu0 %v6409
    %8215 = vmatpush.bf16.msra.mxu0 %v6403
    %8216 = vmatpush.bf16.msra.mxu0 %v6397
    %8217 = vmatpush.bf16.msra.mxu0 %v6391
    %8218 = vmatpush.bf16.msra.mxu0 %v6385
    %8219 = vmatpush.bf16.msra.mxu0 %v6379
    %8220 = vmatmul.bf16.gmra.mxu0 %v8106
    %v8221 = vpop.f32.mrf.mxu0
    %v8222 = vadd.f32 0.0, %v8221
    %v8223 = vpop.f32.mrf.mxu0
    %8224 = vdwg.mxu0
    %8225 = vmatpush.bf16.msra.mxu0 %v6469
    %8226 = vmatpush.bf16.msra.mxu0 %v6463
    %8227 = vmatpush.bf16.msra.mxu0 %v6457
    %8228 = vmatpush.bf16.msra.mxu0 %v6451
    %8229 = vmatpush.bf16.msra.mxu0 %v6445
    %8230 = vmatpush.bf16.msra.mxu0 %v6439
    %8231 = vmatpush.bf16.msra.mxu0 %v6433
    %8232 = vmatpush.bf16.msra.mxu0 %v6427
    %8233 = vmatmul.bf16.gmra.mxu0 %v8107
    %v8234 = vpop.f32.mrf.mxu0
    %v8235 = vadd.f32 %v8222, %v8234
    %v8236 = vpop.f32.mrf.mxu0
    %8237 = vdwg.mxu0
    %8238 = vmatpush.bf16.msra.mxu0 %v6422
    %8239 = vmatpush.bf16.msra.mxu0 %v6416
    %8240 = vmatpush.bf16.msra.mxu0 %v6410
    %8241 = vmatpush.bf16.msra.mxu0 %v6404
    %8242 = vmatpush.bf16.msra.mxu0 %v6398
    %8243 = vmatpush.bf16.msra.mxu0 %v6392
    %8244 = vmatpush.bf16.msra.mxu0 %v6386
    %8245 = vmatpush.bf16.msra.mxu0 %v6380
    %8246 = vmatmul.bf16.gmra.mxu0 %v8106
    %v8247 = vpop.f32.mrf.mxu0
    %v8248 = vadd.f32 0.0, %v8247
    %v8249 = vpop.f32.mrf.mxu0
    %8250 = vdwg.mxu0
    %8251 = vmatpush.bf16.msra.mxu0 %v6470
    %8252 = vmatpush.bf16.msra.mxu0 %v6464
    %8253 = vmatpush.bf16.msra.mxu0 %v6458
    %8254 = vmatpush.bf16.msra.mxu0 %v6452
    %8255 = vmatpush.bf16.msra.mxu0 %v6446
    %8256 = vmatpush.bf16.msra.mxu0 %v6440
    %8257 = vmatpush.bf16.msra.mxu0 %v6434
    %8258 = vmatpush.bf16.msra.mxu0 %v6428
    %8259 = vmatmul.bf16.gmra.mxu0 %v8107
    %v8260 = vpop.f32.mrf.mxu0
    %v8261 = vadd.f32 %v8248, %v8260
    %v8262 = vpop.f32.mrf.mxu0
    %8263 = vdwg.mxu0
    %v8264 = vadd.f32 %v5841, %v8131
    %v8265 = vadd.f32 %v5870, %v8157
    %v8266 = vxor.u32 %v8264, 2147483648
    %v8267 = vxor.u32 %v8265, 2147483648
    %v8268 = vmul.f32 %v8266, 1.442695
    %v8269 = vpow.pop %v8268
    %v8270 = vmul.f32 %v8267, 1.442695
    %v8271 = vpow.pop %v8270
    %v8272 = vadd.f32 %v8269, 1.0
    %v8273 = vadd.f32 %v8271, 1.0
    %v8274 = vrcp.pop %v8272
    %v8275 = vmul.f32 %v8272, %v8274
    %v8276 = vsub.f32 1.0, %v8275
    %v8277 = vmul.f32 %v8274, %v8276
    %v8278 = vadd.f32 %v8274, %v8277
    %vm8279 = vweird.f32 %v8272
    %vm8280 = vweird.f32 %v8274
    %vm8281 = vmor %vm8279, %vm8280
    %v8282 = vsel %vm8281, %v8274, %v8278
    %v8283 = vand.u32 2147483647, %v8272
    %vm8284 = vcmp.eq.f32.partialorder %v8283, 8.507059e+37
    %v8285 = vand.u32 %v8272, 2147483648
    %v8286 = vor.u32 1.1754944e-38, %v8285
    %v8287 = vsel %vm8284, %v8286, %v8282
    %v8288 = vmul.f32 1.0, %v8287
    %v8289 = vrcp.pop %v8273
    %v8290 = vmul.f32 %v8273, %v8289
    %v8291 = vsub.f32 1.0, %v8290
    %v8292 = vmul.f32 %v8289, %v8291
    %v8293 = vadd.f32 %v8289, %v8292
    %vm8294 = vweird.f32 %v8273
    %vm8295 = vweird.f32 %v8289
    %vm8296 = vmor %vm8294, %vm8295
    %v8297 = vsel %vm8296, %v8289, %v8293
    %v8298 = vand.u32 2147483647, %v8273
    %vm8299 = vcmp.eq.f32.partialorder %v8298, 8.507059e+37
    %v8300 = vand.u32 %v8273, 2147483648
    %v8301 = vor.u32 1.1754944e-38, %v8300
    %v8302 = vsel %vm8299, %v8301, %v8297
    %v8303 = vmul.f32 1.0, %v8302
    %v8304 = vadd.f32 %v5899, %v8183
    %v8305 = vadd.f32 %v5928, %v8209
    %v8306 = vxor.u32 %v8304, 2147483648
    %v8307 = vxor.u32 %v8305, 2147483648
    %v8308 = vmul.f32 %v8306, 1.442695
    %v8309 = vpow.pop %v8308
    %v8310 = vmul.f32 %v8307, 1.442695
    %v8311 = vpow.pop %v8310
    %v8312 = vadd.f32 %v8309, 1.0
    %v8313 = vadd.f32 %v8311, 1.0
    %v8314 = vrcp.pop %v8312
    %v8315 = vmul.f32 %v8312, %v8314
    %v8316 = vsub.f32 1.0, %v8315
    %v8317 = vmul.f32 %v8314, %v8316
    %v8318 = vadd.f32 %v8314, %v8317
    %vm8319 = vweird.f32 %v8312
    %vm8320 = vweird.f32 %v8314
    %vm8321 = vmor %vm8319, %vm8320
    %v8322 = vsel %vm8321, %v8314, %v8318
    %v8323 = vand.u32 2147483647, %v8312
    %vm8324 = vcmp.eq.f32.partialorder %v8323, 8.507059e+37
    %v8325 = vand.u32 %v8312, 2147483648
    %v8326 = vor.u32 1.1754944e-38, %v8325
    %v8327 = vsel %vm8324, %v8326, %v8322
    %v8328 = vmul.f32 1.0, %v8327
    %v8329 = vrcp.pop %v8313
    %v8330 = vmul.f32 %v8313, %v8329
    %v8331 = vsub.f32 1.0, %v8330
    %v8332 = vmul.f32 %v8329, %v8331
    %v8333 = vadd.f32 %v8329, %v8332
    %vm8334 = vweird.f32 %v8313
    %vm8335 = vweird.f32 %v8329
    %vm8336 = vmor %vm8334, %vm8335
    %v8337 = vsel %vm8336, %v8329, %v8333
    %v8338 = vand.u32 2147483647, %v8313
    %vm8339 = vcmp.eq.f32.partialorder %v8338, 8.507059e+37
    %v8340 = vand.u32 %v8313, 2147483648
    %v8341 = vor.u32 1.1754944e-38, %v8340
    %v8342 = vsel %vm8339, %v8341, %v8337
    %v8343 = vmul.f32 1.0, %v8342
    %v8344 = vadd.f32 %v8235, %v6804
    %v8345 = vadd.f32 %v8261, %v6805
    %v8346 = vmul.f32 %v8288, %v8344
    %v8347 = vmul.f32 %v8303, %v8345
    %v8348 = vadd.f32 %v5957, %v8346
    %v8349 = vadd.f32 %v5986, %v8347
    %v8350 = vtanh.pop %v8348
    %v8351 = vtanh.pop %v8349
    %v8352 = vsub.f32 1.0, %v8328
    %v8353 = vsub.f32 1.0, %v8343
    %v8354 = vmul.f32 %v8352, %v8350
    %v8355 = vmul.f32 %v8353, %v8351
    %v8356 = vmul.f32 %v8328, %v8102
    %v8357 = vmul.f32 %v8343, %v8103
    %v8358 = vadd.f32 %v8354, %v8356
    %v8359 = vadd.f32 %v8355, %v8357
    %8360 = vst [vmem:[#allocation2 + $0x60] sm:$0xff] %v8358
    %8361 = vst [vmem:[#allocation2 + $0x68] sm:$0xff] %v8359
    %v8362 = vpack.c.bf16 %v8358, %v8358
    %v8363 = vpack.c.bf16 %v8359, %v8359
    %8364 = vmatpush.bf16.msra.mxu0 %v6417
    %8365 = vmatpush.bf16.msra.mxu0 %v6411
    %8366 = vmatpush.bf16.msra.mxu0 %v6405
    %8367 = vmatpush.bf16.msra.mxu0 %v6399
    %8368 = vmatpush.bf16.msra.mxu0 %v6393
    %8369 = vmatpush.bf16.msra.mxu0 %v6387
    %8370 = vmatpush.bf16.msra.mxu0 %v6381
    %8371 = vmatpush.bf16.msra.mxu0 %v6375
    %8372 = vmatmul.bf16.gmra.mxu0 %v8362
    %v8373 = vpop.f32.mrf.mxu0
    %v8374 = vadd.f32 0.0, %v8373
    %v8375 = vpop.f32.mrf.mxu0
    %8376 = vdwg.mxu0
    %8377 = vmatpush.bf16.msra.mxu0 %v6465
    %8378 = vmatpush.bf16.msra.mxu0 %v6459
    %8379 = vmatpush.bf16.msra.mxu0 %v6453
    %8380 = vmatpush.bf16.msra.mxu0 %v6447
    %8381 = vmatpush.bf16.msra.mxu0 %v6441
    %8382 = vmatpush.bf16.msra.mxu0 %v6435
    %8383 = vmatpush.bf16.msra.mxu0 %v6429
    %8384 = vmatpush.bf16.msra.mxu0 %v6423
    %8385 = vmatmul.bf16.gmra.mxu0 %v8363
    %v8386 = vpop.f32.mrf.mxu0
    %v8387 = vadd.f32 %v8374, %v8386
    %v8388 = vpop.f32.mrf.mxu0
    %8389 = vdwg.mxu0
    %8390 = vmatpush.bf16.msra.mxu0 %v6418
    %8391 = vmatpush.bf16.msra.mxu0 %v6412
    %8392 = vmatpush.bf16.msra.mxu0 %v6406
    %8393 = vmatpush.bf16.msra.mxu0 %v6400
    %8394 = vmatpush.bf16.msra.mxu0 %v6394
    %8395 = vmatpush.bf16.msra.mxu0 %v6388
    %8396 = vmatpush.bf16.msra.mxu0 %v6382
    %8397 = vmatpush.bf16.msra.mxu0 %v6376
    %8398 = vmatmul.bf16.gmra.mxu0 %v8362
    %v8399 = vpop.f32.mrf.mxu0
    %v8400 = vadd.f32 0.0, %v8399
    %v8401 = vpop.f32.mrf.mxu0
    %8402 = vdwg.mxu0
    %8403 = vmatpush.bf16.msra.mxu0 %v6466
    %8404 = vmatpush.bf16.msra.mxu0 %v6460
    %8405 = vmatpush.bf16.msra.mxu0 %v6454
    %8406 = vmatpush.bf16.msra.mxu0 %v6448
    %8407 = vmatpush.bf16.msra.mxu0 %v6442
    %8408 = vmatpush.bf16.msra.mxu0 %v6436
    %8409 = vmatpush.bf16.msra.mxu0 %v6430
    %8410 = vmatpush.bf16.msra.mxu0 %v6424
    %8411 = vmatmul.bf16.gmra.mxu0 %v8363
    %v8412 = vpop.f32.mrf.mxu0
    %v8413 = vadd.f32 %v8400, %v8412
    %v8414 = vpop.f32.mrf.mxu0
    %8415 = vdwg.mxu0
    %8416 = vmatpush.bf16.msra.mxu0 %v6419
    %8417 = vmatpush.bf16.msra.mxu0 %v6413
    %8418 = vmatpush.bf16.msra.mxu0 %v6407
    %8419 = vmatpush.bf16.msra.mxu0 %v6401
    %8420 = vmatpush.bf16.msra.mxu0 %v6395
    %8421 = vmatpush.bf16.msra.mxu0 %v6389
    %8422 = vmatpush.bf16.msra.mxu0 %v6383
    %8423 = vmatpush.bf16.msra.mxu0 %v6377
    %8424 = vmatmul.bf16.gmra.mxu0 %v8362
    %v8425 = vpop.f32.mrf.mxu0
    %v8426 = vadd.f32 0.0, %v8425
    %v8427 = vpop.f32.mrf.mxu0
    %8428 = vdwg.mxu0
    %8429 = vmatpush.bf16.msra.mxu0 %v6467
    %8430 = vmatpush.bf16.msra.mxu0 %v6461
    %8431 = vmatpush.bf16.msra.mxu0 %v6455
    %8432 = vmatpush.bf16.msra.mxu0 %v6449
    %8433 = vmatpush.bf16.msra.mxu0 %v6443
    %8434 = vmatpush.bf16.msra.mxu0 %v6437
    %8435 = vmatpush.bf16.msra.mxu0 %v6431
    %8436 = vmatpush.bf16.msra.mxu0 %v6425
    %8437 = vmatmul.bf16.gmra.mxu0 %v8363
    %v8438 = vpop.f32.mrf.mxu0
    %v8439 = vadd.f32 %v8426, %v8438
    %v8440 = vpop.f32.mrf.mxu0
    %8441 = vdwg.mxu0
    %8442 = vmatpush.bf16.msra.mxu0 %v6420
    %8443 = vmatpush.bf16.msra.mxu0 %v6414
    %8444 = vmatpush.bf16.msra.mxu0 %v6408
    %8445 = vmatpush.bf16.msra.mxu0 %v6402
    %8446 = vmatpush.bf16.msra.mxu0 %v6396
    %8447 = vmatpush.bf16.msra.mxu0 %v6390
    %8448 = vmatpush.bf16.msra.mxu0 %v6384
    %8449 = vmatpush.bf16.msra.mxu0 %v6378
    %8450 = vmatmul.bf16.gmra.mxu0 %v8362
    %v8451 = vpop.f32.mrf.mxu0
    %v8452 = vadd.f32 0.0, %v8451
    %v8453 = vpop.f32.mrf.mxu0
    %8454 = vdwg.mxu0
    %8455 = vmatpush.bf16.msra.mxu0 %v6468
    %8456 = vmatpush.bf16.msra.mxu0 %v6462
    %8457 = vmatpush.bf16.msra.mxu0 %v6456
    %8458 = vmatpush.bf16.msra.mxu0 %v6450
    %8459 = vmatpush.bf16.msra.mxu0 %v6444
    %8460 = vmatpush.bf16.msra.mxu0 %v6438
    %8461 = vmatpush.bf16.msra.mxu0 %v6432
    %8462 = vmatpush.bf16.msra.mxu0 %v6426
    %8463 = vmatmul.bf16.gmra.mxu0 %v8363
    %v8464 = vpop.f32.mrf.mxu0
    %v8465 = vadd.f32 %v8452, %v8464
    %v8466 = vpop.f32.mrf.mxu0
    %8467 = vdwg.mxu0
    %8468 = vmatpush.bf16.msra.mxu0 %v6421
    %8469 = vmatpush.bf16.msra.mxu0 %v6415
    %8470 = vmatpush.bf16.msra.mxu0 %v6409
    %8471 = vmatpush.bf16.msra.mxu0 %v6403
    %8472 = vmatpush.bf16.msra.mxu0 %v6397
    %8473 = vmatpush.bf16.msra.mxu0 %v6391
    %8474 = vmatpush.bf16.msra.mxu0 %v6385
    %8475 = vmatpush.bf16.msra.mxu0 %v6379
    %8476 = vmatmul.bf16.gmra.mxu0 %v8362
    %v8477 = vpop.f32.mrf.mxu0
    %v8478 = vadd.f32 0.0, %v8477
    %v8479 = vpop.f32.mrf.mxu0
    %8480 = vdwg.mxu0
    %8481 = vmatpush.bf16.msra.mxu0 %v6469
    %8482 = vmatpush.bf16.msra.mxu0 %v6463
    %8483 = vmatpush.bf16.msra.mxu0 %v6457
    %8484 = vmatpush.bf16.msra.mxu0 %v6451
    %8485 = vmatpush.bf16.msra.mxu0 %v6445
    %8486 = vmatpush.bf16.msra.mxu0 %v6439
    %8487 = vmatpush.bf16.msra.mxu0 %v6433
    %8488 = vmatpush.bf16.msra.mxu0 %v6427
    %8489 = vmatmul.bf16.gmra.mxu0 %v8363
    %v8490 = vpop.f32.mrf.mxu0
    %v8491 = vadd.f32 %v8478, %v8490
    %v8492 = vpop.f32.mrf.mxu0
    %8493 = vdwg.mxu0
    %8494 = vmatpush.bf16.msra.mxu0 %v6422
    %8495 = vmatpush.bf16.msra.mxu0 %v6416
    %8496 = vmatpush.bf16.msra.mxu0 %v6410
    %8497 = vmatpush.bf16.msra.mxu0 %v6404
    %8498 = vmatpush.bf16.msra.mxu0 %v6398
    %8499 = vmatpush.bf16.msra.mxu0 %v6392
    %8500 = vmatpush.bf16.msra.mxu0 %v6386
    %8501 = vmatpush.bf16.msra.mxu0 %v6380
    %8502 = vmatmul.bf16.gmra.mxu0 %v8362
    %v8503 = vpop.f32.mrf.mxu0
    %v8504 = vadd.f32 0.0, %v8503
    %v8505 = vpop.f32.mrf.mxu0
    %8506 = vdwg.mxu0
    %8507 = vmatpush.bf16.msra.mxu0 %v6470
    %8508 = vmatpush.bf16.msra.mxu0 %v6464
    %8509 = vmatpush.bf16.msra.mxu0 %v6458
    %8510 = vmatpush.bf16.msra.mxu0 %v6452
    %8511 = vmatpush.bf16.msra.mxu0 %v6446
    %8512 = vmatpush.bf16.msra.mxu0 %v6440
    %8513 = vmatpush.bf16.msra.mxu0 %v6434
    %8514 = vmatpush.bf16.msra.mxu0 %v6428
    %8515 = vmatmul.bf16.gmra.mxu0 %v8363
    %v8516 = vpop.f32.mrf.mxu0
    %v8517 = vadd.f32 %v8504, %v8516
    %v8518 = vpop.f32.mrf.mxu0
    %8519 = vdwg.mxu0
    %v8520 = vadd.f32 %v5843, %v8387
    %v8521 = vadd.f32 %v5872, %v8413
    %v8522 = vxor.u32 %v8520, 2147483648
    %v8523 = vxor.u32 %v8521, 2147483648
    %v8524 = vmul.f32 %v8522, 1.442695
    %v8525 = vpow.pop %v8524
    %v8526 = vmul.f32 %v8523, 1.442695
    %v8527 = vpow.pop %v8526
    %v8528 = vadd.f32 %v8525, 1.0
    %v8529 = vadd.f32 %v8527, 1.0
    %v8530 = vrcp.pop %v8528
    %v8531 = vmul.f32 %v8528, %v8530
    %v8532 = vsub.f32 1.0, %v8531
    %v8533 = vmul.f32 %v8530, %v8532
    %v8534 = vadd.f32 %v8530, %v8533
    %vm8535 = vweird.f32 %v8528
    %vm8536 = vweird.f32 %v8530
    %vm8537 = vmor %vm8535, %vm8536
    %v8538 = vsel %vm8537, %v8530, %v8534
    %v8539 = vand.u32 2147483647, %v8528
    %vm8540 = vcmp.eq.f32.partialorder %v8539, 8.507059e+37
    %v8541 = vand.u32 %v8528, 2147483648
    %v8542 = vor.u32 1.1754944e-38, %v8541
    %v8543 = vsel %vm8540, %v8542, %v8538
    %v8544 = vmul.f32 1.0, %v8543
    %v8545 = vrcp.pop %v8529
    %v8546 = vmul.f32 %v8529, %v8545
    %v8547 = vsub.f32 1.0, %v8546
    %v8548 = vmul.f32 %v8545, %v8547
    %v8549 = vadd.f32 %v8545, %v8548
    %vm8550 = vweird.f32 %v8529
    %vm8551 = vweird.f32 %v8545
    %vm8552 = vmor %vm8550, %vm8551
    %v8553 = vsel %vm8552, %v8545, %v8549
    %v8554 = vand.u32 2147483647, %v8529
    %vm8555 = vcmp.eq.f32.partialorder %v8554, 8.507059e+37
    %v8556 = vand.u32 %v8529, 2147483648
    %v8557 = vor.u32 1.1754944e-38, %v8556
    %v8558 = vsel %vm8555, %v8557, %v8553
    %v8559 = vmul.f32 1.0, %v8558
    %v8560 = vadd.f32 %v5901, %v8439
    %v8561 = vadd.f32 %v5930, %v8465
    %v8562 = vxor.u32 %v8560, 2147483648
    %v8563 = vxor.u32 %v8561, 2147483648
    %v8564 = vmul.f32 %v8562, 1.442695
    %v8565 = vpow.pop %v8564
    %v8566 = vmul.f32 %v8563, 1.442695
    %v8567 = vpow.pop %v8566
    %v8568 = vadd.f32 %v8565, 1.0
    %v8569 = vadd.f32 %v8567, 1.0
    %v8570 = vrcp.pop %v8568
    %v8571 = vmul.f32 %v8568, %v8570
    %v8572 = vsub.f32 1.0, %v8571
    %v8573 = vmul.f32 %v8570, %v8572
    %v8574 = vadd.f32 %v8570, %v8573
    %vm8575 = vweird.f32 %v8568
    %vm8576 = vweird.f32 %v8570
    %vm8577 = vmor %vm8575, %vm8576
    %v8578 = vsel %vm8577, %v8570, %v8574
    %v8579 = vand.u32 2147483647, %v8568
    %vm8580 = vcmp.eq.f32.partialorder %v8579, 8.507059e+37
    %v8581 = vand.u32 %v8568, 2147483648
    %v8582 = vor.u32 1.1754944e-38, %v8581
    %v8583 = vsel %vm8580, %v8582, %v8578
    %v8584 = vmul.f32 1.0, %v8583
    %v8585 = vrcp.pop %v8569
    %v8586 = vmul.f32 %v8569, %v8585
    %v8587 = vsub.f32 1.0, %v8586
    %v8588 = vmul.f32 %v8585, %v8587
    %v8589 = vadd.f32 %v8585, %v8588
    %vm8590 = vweird.f32 %v8569
    %vm8591 = vweird.f32 %v8585
    %vm8592 = vmor %vm8590, %vm8591
    %v8593 = vsel %vm8592, %v8585, %v8589
    %v8594 = vand.u32 2147483647, %v8569
    %vm8595 = vcmp.eq.f32.partialorder %v8594, 8.507059e+37
    %v8596 = vand.u32 %v8569, 2147483648
    %v8597 = vor.u32 1.1754944e-38, %v8596
    %v8598 = vsel %vm8595, %v8597, %v8593
    %v8599 = vmul.f32 1.0, %v8598
    %v8600 = vadd.f32 %v8491, %v6804
    %v8601 = vadd.f32 %v8517, %v6805
    %v8602 = vmul.f32 %v8544, %v8600
    %v8603 = vmul.f32 %v8559, %v8601
    %v8604 = vadd.f32 %v5959, %v8602
    %v8605 = vadd.f32 %v5988, %v8603
    %v8606 = vtanh.pop %v8604
    %v8607 = vtanh.pop %v8605
    %v8608 = vsub.f32 1.0, %v8584
    %v8609 = vsub.f32 1.0, %v8599
    %v8610 = vmul.f32 %v8608, %v8606
    %v8611 = vmul.f32 %v8609, %v8607
    %v8612 = vmul.f32 %v8584, %v8358
    %v8613 = vmul.f32 %v8599, %v8359
    %v8614 = vadd.f32 %v8610, %v8612
    %v8615 = vadd.f32 %v8611, %v8613
    %8616 = vst [vmem:[#allocation2 + $0x70] sm:$0xff] %v8614
    %8617 = vst [vmem:[#allocation2 + $0x78] sm:$0xff] %v8615
    %v8618 = vld [vmem:[#allocation2] sm:$0xff]
    %v8619 = vld [vmem:[#allocation2 + $0x8] sm:$0xff]
    %v8620 = vld [vmem:[#allocation2 + $0x10] sm:$0xff]
    %v8621 = vld [vmem:[#allocation2 + $0x18] sm:$0xff]
    %v8622 = vld [vmem:[#allocation2 + $0x20] sm:$0xff]
    %v8623 = vld [vmem:[#allocation2 + $0x28] sm:$0xff]
    %v8624 = vld [vmem:[#allocation2 + $0x30] sm:$0xff]
    %v8625 = vld [vmem:[#allocation2 + $0x38] sm:$0xff]
    %v8626 = vld [vmem:[#allocation2 + $0x40] sm:$0xff]
    %v8627 = vld [vmem:[#allocation2 + $0x48] sm:$0xff]
    %v8628 = vld [vmem:[#allocation2 + $0x50] sm:$0xff]
    %v8629 = vld [vmem:[#allocation2 + $0x58] sm:$0xff]
    %v8630 = vld [vmem:[#allocation2 + $0x60] sm:$0xff]
    %v8631 = vld [vmem:[#allocation2 + $0x68] sm:$0xff]
    %v8632 = vld [vmem:[#allocation2 + $0x70] sm:$0xff]
    %v8633 = vld [vmem:[#allocation2 + $0x78] sm:$0xff]
    %v8634 = vld [vmem:[%s17] sm:$0xff]
    %v8635 = vld [vmem:[%s17 + $0x8] sm:$0xff]
    %v8636 = vld [vmem:[%s17 + $0x10] sm:$0xff]
    %v8637 = vld [vmem:[%s17 + $0x18] sm:$0xff]
    %v8638 = vld [vmem:[%s17 + $0x20] sm:$0xff]
    %v8639 = vld [vmem:[%s17 + $0x28] sm:$0xff]
    %v8640 = vld [vmem:[%s17 + $0x30] sm:$0xff]
    %v8641 = vld [vmem:[%s17 + $0x38] sm:$0xff]
    %v8642 = vld [vmem:[%s17 + $0x40] sm:$0xff]
    %v8643 = vld [vmem:[%s17 + $0x48] sm:$0xff]
    %v8644 = vld [vmem:[%s17 + $0x50] sm:$0xff]
    %v8645 = vld [vmem:[%s17 + $0x58] sm:$0xff]
    %v8646 = vld [vmem:[%s17 + $0x60] sm:$0xff]
    %v8647 = vld [vmem:[%s17 + $0x68] sm:$0xff]
    %v8648 = vld [vmem:[%s17 + $0x70] sm:$0xff]
    %v8649 = vld [vmem:[%s17 + $0x78] sm:$0xff]
    %v8650 = vld [vmem:[%s17 + $0x80] sm:$0xff]
    %v8651 = vld [vmem:[%s17 + $0x88] sm:$0xff]
    %v8652 = vld [vmem:[%s17 + $0x90] sm:$0xff]
    %v8653 = vld [vmem:[%s17 + $0x98] sm:$0xff]
    %v8654 = vld [vmem:[%s17 + $0xa0] sm:$0xff]
    %v8655 = vld [vmem:[%s17 + $0xa8] sm:$0xff]
    %v8656 = vld [vmem:[%s17 + $0xb0] sm:$0xff]
    %v8657 = vld [vmem:[%s17 + $0xb8] sm:$0xff]
    %v8658 = vld [vmem:[%s17 + $0xc0] sm:$0xff]
    %v8659 = vld [vmem:[%s17 + $0xc8] sm:$0xff]
    %v8660 = vld [vmem:[%s17 + $0xd0] sm:$0xff]
    %v8661 = vld [vmem:[%s17 + $0xd8] sm:$0xff]
    %v8662 = vld [vmem:[%s17 + $0xe0] sm:$0xff]
    %v8663 = vld [vmem:[%s17 + $0xe8] sm:$0xff]
    %v8664 = vld [vmem:[%s17 + $0xf0] sm:$0xff]
    %v8665 = vld [vmem:[%s17 + $0xf8] sm:$0xff]
    %v8666 = vld [vmem:[#allocation3] sm:$0x1]
    %v8668 = vperm.slane %v8666, 0
    %8670 = vmatpush.msra.mxu0 %v8649
    %8671 = vmatpush.msra.mxu0 %v8648
    %8672 = vmatpush.msra.mxu0 %v8647
    %8673 = vmatpush.msra.mxu0 %v8646
    %8674 = vmatpush.msra.mxu0 %v8645
    %8675 = vmatpush.msra.mxu0 %v8644
    %8676 = vmatpush.msra.mxu0 %v8643
    %8677 = vmatpush.msra.mxu0 %v8642
    %8678 = vmatpush.msra.mxu0 %v8641
    %8679 = vmatpush.msra.mxu0 %v8640
    %8680 = vmatpush.msra.mxu0 %v8639
    %8681 = vmatpush.msra.mxu0 %v8638
    %8682 = vmatpush.msra.mxu0 %v8637
    %8683 = vmatpush.msra.mxu0 %v8636
    %8684 = vmatpush.msra.mxu0 %v8635
    %8685 = vmatpush.msra.mxu0 %v8634
    %8686 = vmatmul.f32.gmra.mxu0 %v8618
    %v8687 = vpop.f32.mrf.mxu0
    %v8688 = vadd.f32 %v8668, %v8687
    %8689 = vmatmul.f32.gmra.mxu0 %v8620
    %v8690 = vpop.f32.mrf.mxu0
    %v8691 = vadd.f32 %v8668, %v8690
    %8692 = vmatmul.f32.gmra.mxu0 %v8622
    %v8693 = vpop.f32.mrf.mxu0
    %v8694 = vadd.f32 %v8668, %v8693
    %8695 = vmatmul.f32.gmra.mxu0 %v8624
    %v8696 = vpop.f32.mrf.mxu0
    %v8697 = vadd.f32 %v8668, %v8696
    %8698 = vmatmul.f32.gmra.mxu0 %v8626
    %v8699 = vpop.f32.mrf.mxu0
    %v8700 = vadd.f32 %v8668, %v8699
    %8701 = vmatmul.f32.gmra.mxu0 %v8628
    %v8702 = vpop.f32.mrf.mxu0
    %v8703 = vadd.f32 %v8668, %v8702
    %8704 = vmatmul.f32.gmra.mxu0 %v8630
    %v8705 = vpop.f32.mrf.mxu0
    %v8706 = vadd.f32 %v8668, %v8705
    %8707 = vmatmul.f32.gmra.mxu0 %v8632
    %v8708 = vpop.f32.mrf.mxu0
    %v8709 = vadd.f32 %v8668, %v8708
    %8710 = vdwg.mxu0
    %8711 = vmatpush.msra.mxu0 %v8665
    %8712 = vmatpush.msra.mxu0 %v8664
    %8713 = vmatpush.msra.mxu0 %v8663
    %8714 = vmatpush.msra.mxu0 %v8662
    %8715 = vmatpush.msra.mxu0 %v8661
    %8716 = vmatpush.msra.mxu0 %v8660
    %8717 = vmatpush.msra.mxu0 %v8659
    %8718 = vmatpush.msra.mxu0 %v8658
    %8719 = vmatpush.msra.mxu0 %v8657
    %8720 = vmatpush.msra.mxu0 %v8656
    %8721 = vmatpush.msra.mxu0 %v8655
    %8722 = vmatpush.msra.mxu0 %v8654
    %8723 = vmatpush.msra.mxu0 %v8653
    %8724 = vmatpush.msra.mxu0 %v8652
    %8725 = vmatpush.msra.mxu0 %v8651
    %8726 = vmatpush.msra.mxu0 %v8650
    %8727 = vmatmul.f32.gmra.mxu0 %v8619
    %v8728 = vpop.f32.mrf.mxu0
    %v8729 = vadd.f32 %v8688, %v8728
    %8730 = vmatmul.f32.gmra.mxu0 %v8621
    %v8731 = vpop.f32.mrf.mxu0
    %v8732 = vadd.f32 %v8691, %v8731
    %8733 = vmatmul.f32.gmra.mxu0 %v8623
    %v8734 = vpop.f32.mrf.mxu0
    %v8735 = vadd.f32 %v8694, %v8734
    %8736 = vmatmul.f32.gmra.mxu0 %v8625
    %v8737 = vpop.f32.mrf.mxu0
    %v8738 = vadd.f32 %v8697, %v8737
    %8739 = vmatmul.f32.gmra.mxu0 %v8627
    %v8740 = vpop.f32.mrf.mxu0
    %v8741 = vadd.f32 %v8700, %v8740
    %8742 = vmatmul.f32.gmra.mxu0 %v8629
    %v8743 = vpop.f32.mrf.mxu0
    %v8744 = vadd.f32 %v8703, %v8743
    %8745 = vmatmul.f32.gmra.mxu0 %v8631
    %v8746 = vpop.f32.mrf.mxu0
    %v8747 = vadd.f32 %v8706, %v8746
    %8748 = vmatmul.f32.gmra.mxu0 %v8633
    %v8749 = vpop.f32.mrf.mxu0
    %v8750 = vadd.f32 %v8709, %v8749
    %8751 = vdwg.mxu0
    %vm8752 = vcmask 7168
    %8753 = vst.msk [vmem:[%s19] sm:$0xff] %vm8752, %v8729
    %8754 = vst.msk [vmem:[%s19 + $0x8] sm:$0xff] %vm8752, %v8732
    %8755 = vst.msk [vmem:[%s19 + $0x10] sm:$0xff] %vm8752, %v8735
    %8756 = vst.msk [vmem:[%s19 + $0x18] sm:$0xff] %vm8752, %v8738
    %8757 = vst.msk [vmem:[%s19 + $0x20] sm:$0xff] %vm8752, %v8741
    %8758 = vst.msk [vmem:[%s19 + $0x28] sm:$0xff] %vm8752, %v8744
    %8759 = vst.msk [vmem:[%s19 + $0x30] sm:$0xff] %vm8752, %v8747
    %8760 = vst.msk [vmem:[%s19 + $0x38] sm:$0xff] %vm8752, %v8750
    // Predicated region
    $region102: #{tpu_custom_call.1} parent=1 // pred_check
      _
    $region103: #{tpu_custom_call.1} parent=1 // pred_check_branch
      %8762 = sbr.rel (0) target = $region105
    $region104: #{tpu_custom_call.1} parent=1 // pred_region
      _
    $region105: #{tpu_custom_call.1} parent=1 // pred_fallthru
      _
    // Predicated region
    $region106: #{tpu_custom_call.1} parent=1 // pred_check
      _
    $region107: #{tpu_custom_call.1} parent=1 // pred_check_branch
      %8764 = sbr.rel (0) target = $region109
    $region108: #{tpu_custom_call.1} parent=1 // pred_region
      _
    $region109: #{tpu_custom_call.1} parent=1 // pred_fallthru
      _
    %8765 = vsyncpa [#allocation5], 1
    %8766 = vsyncpa [#allocation7], 1
    %8767 = vsyncpa [#allocation10], 1
    %8768 = vsyncpa [#allocation13], 1

</llo_original>
